<compile_context>
chip_gen: v7x
topology: tpu7x:2x2x1
jax: 0.10.0
libtpu: 0.0.40
codegen_flags: <defaults>
</compile_context>

<pallas_src>
import functools
import math

import jax
import jax.numpy as jnp
from jax import lax
from jax.experimental import pallas as pl
from jax.experimental.pallas import tpu as pltpu


# ----------------------------------------------------------------------------- kernel
def encoder_block_kernel(
    ex_ref, it_ref,                                   # (1, L, D) activations
    wq_ref, wk_ref, wv_ref, bq_ref, bk_ref, bv_ref,   # attention in-proj
    wo_ref, bo_ref,                                   # attention out-proj
    ln1_g_ref, ln1_b_ref,                             # LayerNorm1
    w1_ref, b1_ref, w2_ref, b2_ref,                   # FFN
    ln2_g_ref, ln2_b_ref,                             # LayerNorm2
    out_ref,                                          # (1, L, D)
    *, n_heads,
):
    f32 = jnp.float32
    hi = lax.Precision.HIGHEST

    x_q = ex_ref[0].astype(f32)       # (L, D)  query input  (exercise)
    x_kv = it_ref[0].astype(f32)      # (L, D)  key/value input (interaction)
    L, D = x_q.shape
    dh = D // n_heads
    scale = 1.0 / math.sqrt(dh)

    def linear(x, w_ref, b_ref):
        # nn.Linear: x @ W^T + b   (contract x's feature dim with W's "in" dim)
        y = lax.dot_general(x, w_ref[...], (((1,), (1,)), ((), ())),
                            preferred_element_type=f32, precision=hi)
        return y + b_ref[...]         # (1, D) broadcasts over rows

    def layer_norm(x, g_ref, b_ref):
        mu = jnp.mean(x, axis=-1, keepdims=True)
        xc = x - mu
        var = jnp.mean(xc * xc, axis=-1, keepdims=True)
        return xc * lax.rsqrt(var + 1e-5) * g_ref[...] + b_ref[...]

    # ---- multi-head attention (causal "ut" mask, eval mode) ----
    q = linear(x_q, wq_ref, bq_ref)   # (L, D)
    k = linear(x_kv, wk_ref, bk_ref)  # (L, D)
    v = linear(x_kv, wv_ref, bv_ref)  # (L, D)

    # Causal mask built once in-register (no HBM traffic for it).
    row = lax.broadcasted_iota(jnp.int32, (L, L), 0)
    col = lax.broadcasted_iota(jnp.int32, (L, L), 1)
    allowed = col <= row              # position i attends to j <= i

    ctx_parts = []
    for h in range(n_heads):          # static unroll; n_heads is small & static
        sl = slice(h * dh, (h + 1) * dh)
        qh, kh, vh = q[:, sl], k[:, sl], v[:, sl]           # (L, dh)

        s = lax.dot_general(qh, kh, (((1,), (1,)), ((), ())),
                            preferred_element_type=f32, precision=hi) * scale
        s = jnp.where(allowed, s, jnp.float32(-1e30))
        s = s - jnp.max(s, axis=-1, keepdims=True)
        p = jnp.exp(s)
        p = p / jnp.sum(p, axis=-1, keepdims=True)          # (L, L)

        ctx_parts.append(
            jnp.dot(p, vh, preferred_element_type=f32, precision=hi))  # (L, dh)

    # Concat heads along the feature (lane) axis, then ONE dense out-projection.
    ctx = jnp.concatenate(ctx_parts, axis=1)                 # (L, D)
    attn_out = linear(ctx, wo_ref, bo_ref)                   # (L, D)

    # ---- residual + LN1, FFN, residual + LN2 ----
    x1 = layer_norm(attn_out + x_q, ln1_g_ref, ln1_b_ref)
    h1 = jnp.maximum(linear(x1, w1_ref, b1_ref), 0.0)        # ReLU
    ffn = linear(h1, w2_ref, b2_ref)                         # (dropout = identity in eval)
    y = layer_norm(ffn + x1, ln2_g_ref, ln2_b_ref)

    out_ref[0] = y.astype(out_ref.dtype)


# ----------------------------------------------------------------------------- wrapper
def encoder_block_forward(exercise, interaction, params, *, n_heads):
    """Fused EncoderBlock_layer forward.

    exercise, interaction: (B, L, D) float32
    params: dict of weights (see __main__)
    returns: (B, L, D) float32
    """
    B, L, D = exercise.shape
    assert D % n_heads == 0

    kernel = functools.partial(encoder_block_kernel, n_heads=n_heads)

    x_spec = pl.BlockSpec((1, L, D), lambda b: (b, 0, 0))
    w_spec = pl.BlockSpec((D, D), lambda b: (0, 0))   # constant index -> VMEM resident
    v_spec = pl.BlockSpec((1, D), lambda b: (0, 0))

    return pl.pallas_call(
        kernel,
        out_shape=jax.ShapeDtypeStruct((B, L, D), jnp.float32),
        grid_spec=pltpu.PrefetchScalarGridSpec(
            num_scalar_prefetch=0,
            grid=(B,),
            in_specs=[
                x_spec, x_spec,                              # exercise, interaction
                w_spec, w_spec, w_spec, v_spec, v_spec, v_spec,  # wq wk wv bq bk bv
                w_spec, v_spec,                              # wo bo
                v_spec, v_spec,                              # ln1 gamma/beta
                w_spec, v_spec, w_spec, v_spec,              # w1 b1 w2 b2
                v_spec, v_spec,                              # ln2 gamma/beta
            ],
            out_specs=pl.BlockSpec((1, L, D), lambda b: (b, 0, 0)),
        ),
        compiler_params=pltpu.CompilerParams(
            dimension_semantics=("parallel",),
            vmem_limit_bytes=32 * 1024 * 1024,
        ),
    )(
        exercise, interaction,
        params["wq"], params["wk"], params["wv"],
        params["bq"], params["bk"], params["bv"],
        params["wo"], params["bo"],
        params["ln1_g"], params["ln1_b"],
        params["w1"], params["b1"], params["w2"], params["b2"],
        params["ln2_g"], params["ln2_b"],
    )


# ----------------------------------------------------------------------------- reference
def ref_forward(exercise, interaction, params, *, n_heads):
    hi = lax.Precision.HIGHEST
    B, L, D = exercise.shape
    dh = D // n_heads

    def linear(x, w, b):
        return jnp.einsum("bld,ed->ble", x, w, precision=hi) + b

    def split(x):
        return x.reshape(B, L, n_heads, dh).transpose(0, 2, 1, 3)   # (B,H,L,dh)

    q = split(linear(exercise, params["wq"], params["bq"]))
    k = split(linear(interaction, params["wk"], params["bk"]))
    v = split(linear(interaction, params["wv"], params["bv"]))

    s = jnp.einsum("bhqd,bhkd->bhqk", q, k, precision=hi) / math.sqrt(dh)
    mask = jnp.tril(jnp.ones((L, L), dtype=bool))
    s = jnp.where(mask[None, None], s, -jnp.inf)
    p = jax.nn.softmax(s, axis=-1)
    ctx = jnp.einsum("bhqk,bhkd->bhqd", p, v, precision=hi)
    ctx = ctx.transpose(0, 2, 1, 3).reshape(B, L, D)
    attn = jnp.einsum("bld,ed->ble", ctx, params["wo"], precision=hi) + params["bo"]

    def layer_norm(x, g, b):
        mu = x.mean(-1, keepdims=True)
        var = ((x - mu) ** 2).mean(-1, keepdims=True)
        return (x - mu) / jnp.sqrt(var + 1e-5) * g + b

    x1 = layer_norm(attn + exercise, params["ln1_g"], params["ln1_b"])
    h1 = jax.nn.relu(linear(x1, params["w1"], params["b1"]))
    ffn = linear(h1, params["w2"], params["b2"])
    return layer_norm(ffn + x1, params["ln2_g"], params["ln2_b"])


# ----------------------------------------------------------------------------- main
if __name__ == "__main__":
    n_heads = 4
    n_dims = 32
    seq_len = 8
    batch = 2

    key = jax.random.PRNGKey(0)
    keys = jax.random.split(key, 20)

    def nrm(k, shape, scale=0.1):
        return scale * jax.random.normal(k, shape, jnp.float32)

    D = n_dims
    params = {
        "wq": nrm(keys[0], (D, D)), "wk": nrm(keys[1], (D, D)), "wv": nrm(keys[2], (D, D)),
        "bq": nrm(keys[3], (1, D)), "bk": nrm(keys[4], (1, D)), "bv": nrm(keys[5], (1, D)),
        "wo": nrm(keys[6], (D, D)), "bo": nrm(keys[7], (1, D)),
        "ln1_g": 1.0 + nrm(keys[8], (1, D)), "ln1_b": nrm(keys[9], (1, D)),
        "w1": nrm(keys[10], (D, D)), "b1": nrm(keys[11], (1, D)),
        "w2": nrm(keys[12], (D, D)), "b2": nrm(keys[13], (1, D)),
        "ln2_g": 1.0 + nrm(keys[14], (1, D)), "ln2_b": nrm(keys[15], (1, D)),
    }

    exercise = jax.random.normal(keys[16], (batch, seq_len, D), jnp.float32)
    interaction = jax.random.normal(keys[17], (batch, seq_len, D), jnp.float32)

    out = encoder_block_forward(exercise, interaction, params, n_heads=n_heads)
    out = jax.block_until_ready(out)

    ref = ref_forward(exercise, interaction, params, n_heads=n_heads)

    assert out.shape == (batch, seq_len, D), out.shape
    assert jnp.allclose(out, ref, atol=1e-4, rtol=1e-4), (
        "mismatch vs reference: max abs err = %e" % float(jnp.max(jnp.abs(out - ref))))
    # TODO(synk): dropout (attention + FFN) is eval-mode identity here; training-mode
    # stochastic dropout would need pltpu.prng_* and is intentionally not faked.
    print("KERNEL_OK")
</pallas_src>

<mosaic_0001>
module attributes {stable_mosaic.version = 11 : i64} {
  func.func @encoder_block_kernel(%arg0: i32, %arg1: memref<1x8x32xf32, #tpu.memory_space<vmem>>, %arg2: memref<1x8x32xf32, #tpu.memory_space<vmem>>, %arg3: memref<32x32xf32, #tpu.memory_space<vmem>>, %arg4: memref<32x32xf32, #tpu.memory_space<vmem>>, %arg5: memref<32x32xf32, #tpu.memory_space<vmem>>, %arg6: memref<1x32xf32, #tpu.memory_space<vmem>>, %arg7: memref<1x32xf32, #tpu.memory_space<vmem>>, %arg8: memref<1x32xf32, #tpu.memory_space<vmem>>, %arg9: memref<32x32xf32, #tpu.memory_space<vmem>>, %arg10: memref<1x32xf32, #tpu.memory_space<vmem>>, %arg11: memref<1x32xf32, #tpu.memory_space<vmem>>, %arg12: memref<1x32xf32, #tpu.memory_space<vmem>>, %arg13: memref<32x32xf32, #tpu.memory_space<vmem>>, %arg14: memref<1x32xf32, #tpu.memory_space<vmem>>, %arg15: memref<32x32xf32, #tpu.memory_space<vmem>>, %arg16: memref<1x32xf32, #tpu.memory_space<vmem>>, %arg17: memref<1x32xf32, #tpu.memory_space<vmem>>, %arg18: memref<1x32xf32, #tpu.memory_space<vmem>>, %arg19: memref<1x8x32xf32, #tpu.memory_space<vmem>>) attributes {dimension_semantics = [#tpu.dimension_semantics<parallel>], iteration_bounds = array<i64: 2>, scalar_prefetch = 0 : i64, scratch_operands = 0 : i64, tpu.core_type = #tpu.core_type<tc>, window_params = [{transform_indices = @transform_0, window_bounds = array<i64: 1, 8, 32>}, {transform_indices = @transform_1, window_bounds = array<i64: 1, 8, 32>}, {pipeline_mode = #tpu.pipeline_mode<synchronous>, transform_indices = @transform_2, window_bounds = array<i64: 32, 32>}, {pipeline_mode = #tpu.pipeline_mode<synchronous>, transform_indices = @transform_3, window_bounds = array<i64: 32, 32>}, {pipeline_mode = #tpu.pipeline_mode<synchronous>, transform_indices = @transform_4, window_bounds = array<i64: 32, 32>}, {pipeline_mode = #tpu.pipeline_mode<synchronous>, transform_indices = @transform_5, window_bounds = array<i64: 1, 32>}, {pipeline_mode = #tpu.pipeline_mode<synchronous>, transform_indices = @transform_6, window_bounds = array<i64: 1, 32>}, {pipeline_mode = #tpu.pipeline_mode<synchronous>, transform_indices = @transform_7, window_bounds = array<i64: 1, 32>}, {pipeline_mode = #tpu.pipeline_mode<synchronous>, transform_indices = @transform_8, window_bounds = array<i64: 32, 32>}, {pipeline_mode = #tpu.pipeline_mode<synchronous>, transform_indices = @transform_9, window_bounds = array<i64: 1, 32>}, {pipeline_mode = #tpu.pipeline_mode<synchronous>, transform_indices = @transform_10, window_bounds = array<i64: 1, 32>}, {pipeline_mode = #tpu.pipeline_mode<synchronous>, transform_indices = @transform_11, window_bounds = array<i64: 1, 32>}, {pipeline_mode = #tpu.pipeline_mode<synchronous>, transform_indices = @transform_12, window_bounds = array<i64: 32, 32>}, {pipeline_mode = #tpu.pipeline_mode<synchronous>, transform_indices = @transform_13, window_bounds = array<i64: 1, 32>}, {pipeline_mode = #tpu.pipeline_mode<synchronous>, transform_indices = @transform_14, window_bounds = array<i64: 32, 32>}, {pipeline_mode = #tpu.pipeline_mode<synchronous>, transform_indices = @transform_15, window_bounds = array<i64: 1, 32>}, {pipeline_mode = #tpu.pipeline_mode<synchronous>, transform_indices = @transform_16, window_bounds = array<i64: 1, 32>}, {pipeline_mode = #tpu.pipeline_mode<synchronous>, transform_indices = @transform_17, window_bounds = array<i64: 1, 32>}, {transform_indices = @transform_18, window_bounds = array<i64: 1, 8, 32>}]} {
    %c0 = arith.constant 0 : index
    %c0_0 = arith.constant 0 : index
    %c0_1 = arith.constant 0 : index
    %0 = vector.load %arg1[%c0, %c0_0, %c0_1] : memref<1x8x32xf32, #tpu.memory_space<vmem>>, vector<1x8x32xf32>
    %1 = vector.shape_cast %0 : vector<1x8x32xf32> to vector<8x32xf32>
    %c0_2 = arith.constant 0 : index
    %c0_3 = arith.constant 0 : index
    %c0_4 = arith.constant 0 : index
    %2 = vector.load %arg2[%c0_2, %c0_3, %c0_4] : memref<1x8x32xf32, #tpu.memory_space<vmem>>, vector<1x8x32xf32>
    %3 = vector.shape_cast %2 : vector<1x8x32xf32> to vector<8x32xf32>
    %c0_5 = arith.constant 0 : index
    %c0_6 = arith.constant 0 : index
    %4 = vector.load %arg3[%c0_5, %c0_6] : memref<32x32xf32, #tpu.memory_space<vmem>>, vector<32x32xf32>
    %cst = arith.constant dense<0.000000e+00> : vector<8x32xf32>
    %5 = tpu.matmul %1, %4, %cst {dimension_numbers = #tpu.dot_dimension_numbers<[1], [1], [0], [0], [0, 0, 1, 0], [], []>, precision = #tpu.contract_precision<fp32>} : vector<8x32xf32>, vector<32x32xf32>, vector<8x32xf32> -> vector<8x32xf32>
    %c0_7 = arith.constant 0 : index
    %c0_8 = arith.constant 0 : index
    %6 = vector.load %arg6[%c0_7, %c0_8] : memref<1x32xf32, #tpu.memory_space<vmem>>, vector<1x32xf32>
    %7 = vector.broadcast %6 : vector<1x32xf32> to vector<8x32xf32>
    %8 = arith.addf %5, %7 : vector<8x32xf32>
    %c0_9 = arith.constant 0 : index
    %c0_10 = arith.constant 0 : index
    %9 = vector.load %arg4[%c0_9, %c0_10] : memref<32x32xf32, #tpu.memory_space<vmem>>, vector<32x32xf32>
    %cst_11 = arith.constant dense<0.000000e+00> : vector<8x32xf32>
    %10 = tpu.matmul %3, %9, %cst_11 {dimension_numbers = #tpu.dot_dimension_numbers<[1], [1], [0], [0], [0, 0, 1, 0], [], []>, precision = #tpu.contract_precision<fp32>} : vector<8x32xf32>, vector<32x32xf32>, vector<8x32xf32> -> vector<8x32xf32>
    %c0_12 = arith.constant 0 : index
    %c0_13 = arith.constant 0 : index
    %11 = vector.load %arg7[%c0_12, %c0_13] : memref<1x32xf32, #tpu.memory_space<vmem>>, vector<1x32xf32>
    %12 = vector.broadcast %11 : vector<1x32xf32> to vector<8x32xf32>
    %13 = arith.addf %10, %12 : vector<8x32xf32>
    %c0_14 = arith.constant 0 : index
    %c0_15 = arith.constant 0 : index
    %14 = vector.load %arg5[%c0_14, %c0_15] : memref<32x32xf32, #tpu.memory_space<vmem>>, vector<32x32xf32>
    %cst_16 = arith.constant dense<0.000000e+00> : vector<8x32xf32>
    %15 = tpu.matmul %3, %14, %cst_16 {dimension_numbers = #tpu.dot_dimension_numbers<[1], [1], [0], [0], [0, 0, 1, 0], [], []>, precision = #tpu.contract_precision<fp32>} : vector<8x32xf32>, vector<32x32xf32>, vector<8x32xf32> -> vector<8x32xf32>
    %c0_17 = arith.constant 0 : index
    %c0_18 = arith.constant 0 : index
    %16 = vector.load %arg8[%c0_17, %c0_18] : memref<1x32xf32, #tpu.memory_space<vmem>>, vector<1x32xf32>
    %17 = vector.broadcast %16 : vector<1x32xf32> to vector<8x32xf32>
    %18 = arith.addf %15, %17 : vector<8x32xf32>
    %19 = tpu.iota {dimensions = array<i32: 0>} : vector<8x8xi32>
    %20 = tpu.iota {dimensions = array<i32: 1>} : vector<8x8xi32>
    %21 = arith.cmpi sle, %20, %19 : vector<8x8xi32>
    %22 = vector.extract_strided_slice %8 {offsets = [0, 0], sizes = [8, 8], strides = [1, 1]} : vector<8x32xf32> to vector<8x8xf32>
    %23 = vector.extract_strided_slice %13 {offsets = [0, 0], sizes = [8, 8], strides = [1, 1]} : vector<8x32xf32> to vector<8x8xf32>
    %24 = vector.extract_strided_slice %18 {offsets = [0, 0], sizes = [8, 8], strides = [1, 1]} : vector<8x32xf32> to vector<8x8xf32>
    %cst_19 = arith.constant dense<0.000000e+00> : vector<8x8xf32>
    %25 = tpu.matmul %22, %23, %cst_19 {dimension_numbers = #tpu.dot_dimension_numbers<[1], [1], [0], [0], [0, 0, 1, 0], [], []>, precision = #tpu.contract_precision<fp32>} : vector<8x8xf32>, vector<8x8xf32>, vector<8x8xf32> -> vector<8x8xf32>
    %cst_20 = arith.constant 0.353553385 : f32
    %26 = vector.broadcast %cst_20 : f32 to vector<8x8xf32>
    %27 = arith.mulf %25, %26 : vector<8x8xf32>
    %cst_21 = arith.constant -1.000000e+30 : f32
    %28 = vector.broadcast %cst_21 : f32 to vector<8x8xf32>
    %29 = arith.select %21, %27, %28 : vector<8x8xi1>, vector<8x8xf32>
    %cst_22 = arith.constant dense<0xFF800000> : vector<8xf32>
    %30 = vector.multi_reduction <maximumf>, %29, %cst_22 [1] : vector<8x8xf32> to vector<8xf32>
    %31 = vector.shape_cast %30 : vector<8xf32> to vector<8x1xf32>
    %32 = vector.broadcast %31 : vector<8x1xf32> to vector<8x8xf32>
    %33 = arith.subf %29, %32 : vector<8x8xf32>
    %34 = math.exp %33 : vector<8x8xf32>
    %cst_23 = arith.constant dense<0.000000e+00> : vector<8xf32>
    %35 = vector.multi_reduction <add>, %34, %cst_23 [1] : vector<8x8xf32> to vector<8xf32>
    %36 = vector.shape_cast %35 : vector<8xf32> to vector<8x1xf32>
    %37 = vector.broadcast %36 : vector<8x1xf32> to vector<8x8xf32>
    %38 = arith.divf %34, %37 : vector<8x8xf32>
    %cst_24 = arith.constant dense<0.000000e+00> : vector<8x8xf32>
    %39 = tpu.matmul %38, %24, %cst_24 {dimension_numbers = #tpu.dot_dimension_numbers<[1], [0], [0], [1], [0, 0, 1, 1], [], []>, precision = #tpu.contract_precision<fp32>} : vector<8x8xf32>, vector<8x8xf32>, vector<8x8xf32> -> vector<8x8xf32>
    %40 = vector.extract_strided_slice %8 {offsets = [0, 8], sizes = [8, 8], strides = [1, 1]} : vector<8x32xf32> to vector<8x8xf32>
    %41 = vector.extract_strided_slice %13 {offsets = [0, 8], sizes = [8, 8], strides = [1, 1]} : vector<8x32xf32> to vector<8x8xf32>
    %42 = vector.extract_strided_slice %18 {offsets = [0, 8], sizes = [8, 8], strides = [1, 1]} : vector<8x32xf32> to vector<8x8xf32>
    %cst_25 = arith.constant dense<0.000000e+00> : vector<8x8xf32>
    %43 = tpu.matmul %40, %41, %cst_25 {dimension_numbers = #tpu.dot_dimension_numbers<[1], [1], [0], [0], [0, 0, 1, 0], [], []>, precision = #tpu.contract_precision<fp32>} : vector<8x8xf32>, vector<8x8xf32>, vector<8x8xf32> -> vector<8x8xf32>
    %cst_26 = arith.constant 0.353553385 : f32
    %44 = vector.broadcast %cst_26 : f32 to vector<8x8xf32>
    %45 = arith.mulf %43, %44 : vector<8x8xf32>
    %cst_27 = arith.constant -1.000000e+30 : f32
    %46 = vector.broadcast %cst_27 : f32 to vector<8x8xf32>
    %47 = arith.select %21, %45, %46 : vector<8x8xi1>, vector<8x8xf32>
    %cst_28 = arith.constant dense<0xFF800000> : vector<8xf32>
    %48 = vector.multi_reduction <maximumf>, %47, %cst_28 [1] : vector<8x8xf32> to vector<8xf32>
    %49 = vector.shape_cast %48 : vector<8xf32> to vector<8x1xf32>
    %50 = vector.broadcast %49 : vector<8x1xf32> to vector<8x8xf32>
    %51 = arith.subf %47, %50 : vector<8x8xf32>
    %52 = math.exp %51 : vector<8x8xf32>
    %cst_29 = arith.constant dense<0.000000e+00> : vector<8xf32>
    %53 = vector.multi_reduction <add>, %52, %cst_29 [1] : vector<8x8xf32> to vector<8xf32>
    %54 = vector.shape_cast %53 : vector<8xf32> to vector<8x1xf32>
    %55 = vector.broadcast %54 : vector<8x1xf32> to vector<8x8xf32>
    %56 = arith.divf %52, %55 : vector<8x8xf32>
    %cst_30 = arith.constant dense<0.000000e+00> : vector<8x8xf32>
    %57 = tpu.matmul %56, %42, %cst_30 {dimension_numbers = #tpu.dot_dimension_numbers<[1], [0], [0], [1], [0, 0, 1, 1], [], []>, precision = #tpu.contract_precision<fp32>} : vector<8x8xf32>, vector<8x8xf32>, vector<8x8xf32> -> vector<8x8xf32>
    %58 = vector.extract_strided_slice %8 {offsets = [0, 16], sizes = [8, 8], strides = [1, 1]} : vector<8x32xf32> to vector<8x8xf32>
    %59 = vector.extract_strided_slice %13 {offsets = [0, 16], sizes = [8, 8], strides = [1, 1]} : vector<8x32xf32> to vector<8x8xf32>
    %60 = vector.extract_strided_slice %18 {offsets = [0, 16], sizes = [8, 8], strides = [1, 1]} : vector<8x32xf32> to vector<8x8xf32>
    %cst_31 = arith.constant dense<0.000000e+00> : vector<8x8xf32>
    %61 = tpu.matmul %58, %59, %cst_31 {dimension_numbers = #tpu.dot_dimension_numbers<[1], [1], [0], [0], [0, 0, 1, 0], [], []>, precision = #tpu.contract_precision<fp32>} : vector<8x8xf32>, vector<8x8xf32>, vector<8x8xf32> -> vector<8x8xf32>
    %cst_32 = arith.constant 0.353553385 : f32
    %62 = vector.broadcast %cst_32 : f32 to vector<8x8xf32>
    %63 = arith.mulf %61, %62 : vector<8x8xf32>
    %cst_33 = arith.constant -1.000000e+30 : f32
    %64 = vector.broadcast %cst_33 : f32 to vector<8x8xf32>
    %65 = arith.select %21, %63, %64 : vector<8x8xi1>, vector<8x8xf32>
    %cst_34 = arith.constant dense<0xFF800000> : vector<8xf32>
    %66 = vector.multi_reduction <maximumf>, %65, %cst_34 [1] : vector<8x8xf32> to vector<8xf32>
    %67 = vector.shape_cast %66 : vector<8xf32> to vector<8x1xf32>
    %68 = vector.broadcast %67 : vector<8x1xf32> to vector<8x8xf32>
    %69 = arith.subf %65, %68 : vector<8x8xf32>
    %70 = math.exp %69 : vector<8x8xf32>
    %cst_35 = arith.constant dense<0.000000e+00> : vector<8xf32>
    %71 = vector.multi_reduction <add>, %70, %cst_35 [1] : vector<8x8xf32> to vector<8xf32>
    %72 = vector.shape_cast %71 : vector<8xf32> to vector<8x1xf32>
    %73 = vector.broadcast %72 : vector<8x1xf32> to vector<8x8xf32>
    %74 = arith.divf %70, %73 : vector<8x8xf32>
    %cst_36 = arith.constant dense<0.000000e+00> : vector<8x8xf32>
    %75 = tpu.matmul %74, %60, %cst_36 {dimension_numbers = #tpu.dot_dimension_numbers<[1], [0], [0], [1], [0, 0, 1, 1], [], []>, precision = #tpu.contract_precision<fp32>} : vector<8x8xf32>, vector<8x8xf32>, vector<8x8xf32> -> vector<8x8xf32>
    %76 = vector.extract_strided_slice %8 {offsets = [0, 24], sizes = [8, 8], strides = [1, 1]} : vector<8x32xf32> to vector<8x8xf32>
    %77 = vector.extract_strided_slice %13 {offsets = [0, 24], sizes = [8, 8], strides = [1, 1]} : vector<8x32xf32> to vector<8x8xf32>
    %78 = vector.extract_strided_slice %18 {offsets = [0, 24], sizes = [8, 8], strides = [1, 1]} : vector<8x32xf32> to vector<8x8xf32>
    %cst_37 = arith.constant dense<0.000000e+00> : vector<8x8xf32>
    %79 = tpu.matmul %76, %77, %cst_37 {dimension_numbers = #tpu.dot_dimension_numbers<[1], [1], [0], [0], [0, 0, 1, 0], [], []>, precision = #tpu.contract_precision<fp32>} : vector<8x8xf32>, vector<8x8xf32>, vector<8x8xf32> -> vector<8x8xf32>
    %cst_38 = arith.constant 0.353553385 : f32
    %80 = vector.broadcast %cst_38 : f32 to vector<8x8xf32>
    %81 = arith.mulf %79, %80 : vector<8x8xf32>
    %cst_39 = arith.constant -1.000000e+30 : f32
    %82 = vector.broadcast %cst_39 : f32 to vector<8x8xf32>
    %83 = arith.select %21, %81, %82 : vector<8x8xi1>, vector<8x8xf32>
    %cst_40 = arith.constant dense<0xFF800000> : vector<8xf32>
    %84 = vector.multi_reduction <maximumf>, %83, %cst_40 [1] : vector<8x8xf32> to vector<8xf32>
    %85 = vector.shape_cast %84 : vector<8xf32> to vector<8x1xf32>
    %86 = vector.broadcast %85 : vector<8x1xf32> to vector<8x8xf32>
    %87 = arith.subf %83, %86 : vector<8x8xf32>
    %88 = math.exp %87 : vector<8x8xf32>
    %cst_41 = arith.constant dense<0.000000e+00> : vector<8xf32>
    %89 = vector.multi_reduction <add>, %88, %cst_41 [1] : vector<8x8xf32> to vector<8xf32>
    %90 = vector.shape_cast %89 : vector<8xf32> to vector<8x1xf32>
    %91 = vector.broadcast %90 : vector<8x1xf32> to vector<8x8xf32>
    %92 = arith.divf %88, %91 : vector<8x8xf32>
    %cst_42 = arith.constant dense<0.000000e+00> : vector<8x8xf32>
    %93 = tpu.matmul %92, %78, %cst_42 {dimension_numbers = #tpu.dot_dimension_numbers<[1], [0], [0], [1], [0, 0, 1, 1], [], []>, precision = #tpu.contract_precision<fp32>} : vector<8x8xf32>, vector<8x8xf32>, vector<8x8xf32> -> vector<8x8xf32>
    %94 = tpu.concatenate %39, %57, %75, %93 in 1 : vector<8x8xf32>, vector<8x8xf32>, vector<8x8xf32>, vector<8x8xf32> -> vector<8x32xf32>
    %c0_43 = arith.constant 0 : index
    %c0_44 = arith.constant 0 : index
    %95 = vector.load %arg9[%c0_43, %c0_44] : memref<32x32xf32, #tpu.memory_space<vmem>>, vector<32x32xf32>
    %cst_45 = arith.constant dense<0.000000e+00> : vector<8x32xf32>
    %96 = tpu.matmul %94, %95, %cst_45 {dimension_numbers = #tpu.dot_dimension_numbers<[1], [1], [0], [0], [0, 0, 1, 0], [], []>, precision = #tpu.contract_precision<fp32>} : vector<8x32xf32>, vector<32x32xf32>, vector<8x32xf32> -> vector<8x32xf32>
    %c0_46 = arith.constant 0 : index
    %c0_47 = arith.constant 0 : index
    %97 = vector.load %arg10[%c0_46, %c0_47] : memref<1x32xf32, #tpu.memory_space<vmem>>, vector<1x32xf32>
    %98 = vector.broadcast %97 : vector<1x32xf32> to vector<8x32xf32>
    %99 = arith.addf %96, %98 : vector<8x32xf32>
    %100 = arith.addf %99, %1 : vector<8x32xf32>
    %cst_48 = arith.constant dense<0.000000e+00> : vector<8xf32>
    %101 = vector.multi_reduction <add>, %100, %cst_48 [1] : vector<8x32xf32> to vector<8xf32>
    %102 = vector.shape_cast %101 : vector<8xf32> to vector<8x1xf32>
    %cst_49 = arith.constant 3.200000e+01 : f32
    %103 = vector.broadcast %cst_49 : f32 to vector<8x1xf32>
    %104 = arith.divf %102, %103 : vector<8x1xf32>
    %105 = vector.broadcast %104 : vector<8x1xf32> to vector<8x32xf32>
    %106 = arith.subf %100, %105 : vector<8x32xf32>
    %107 = arith.mulf %106, %106 : vector<8x32xf32>
    %cst_50 = arith.constant dense<0.000000e+00> : vector<8xf32>
    %108 = vector.multi_reduction <add>, %107, %cst_50 [1] : vector<8x32xf32> to vector<8xf32>
    %109 = vector.shape_cast %108 : vector<8xf32> to vector<8x1xf32>
    %cst_51 = arith.constant 3.200000e+01 : f32
    %110 = vector.broadcast %cst_51 : f32 to vector<8x1xf32>
    %111 = arith.divf %109, %110 : vector<8x1xf32>
    %cst_52 = arith.constant 9.99999974E-6 : f32
    %112 = vector.broadcast %cst_52 : f32 to vector<8x1xf32>
    %113 = arith.addf %111, %112 : vector<8x1xf32>
    %114 = math.rsqrt %113 : vector<8x1xf32>
    %115 = vector.broadcast %114 : vector<8x1xf32> to vector<8x32xf32>
    %116 = arith.mulf %106, %115 : vector<8x32xf32>
    %c0_53 = arith.constant 0 : index
    %c0_54 = arith.constant 0 : index
    %117 = vector.load %arg11[%c0_53, %c0_54] : memref<1x32xf32, #tpu.memory_space<vmem>>, vector<1x32xf32>
    %118 = vector.broadcast %117 : vector<1x32xf32> to vector<8x32xf32>
    %119 = arith.mulf %116, %118 : vector<8x32xf32>
    %c0_55 = arith.constant 0 : index
    %c0_56 = arith.constant 0 : index
    %120 = vector.load %arg12[%c0_55, %c0_56] : memref<1x32xf32, #tpu.memory_space<vmem>>, vector<1x32xf32>
    %121 = vector.broadcast %120 : vector<1x32xf32> to vector<8x32xf32>
    %122 = arith.addf %119, %121 : vector<8x32xf32>
    %c0_57 = arith.constant 0 : index
    %c0_58 = arith.constant 0 : index
    %123 = vector.load %arg13[%c0_57, %c0_58] : memref<32x32xf32, #tpu.memory_space<vmem>>, vector<32x32xf32>
    %cst_59 = arith.constant dense<0.000000e+00> : vector<8x32xf32>
    %124 = tpu.matmul %122, %123, %cst_59 {dimension_numbers = #tpu.dot_dimension_numbers<[1], [1], [0], [0], [0, 0, 1, 0], [], []>, precision = #tpu.contract_precision<fp32>} : vector<8x32xf32>, vector<32x32xf32>, vector<8x32xf32> -> vector<8x32xf32>
    %c0_60 = arith.constant 0 : index
    %c0_61 = arith.constant 0 : index
    %125 = vector.load %arg14[%c0_60, %c0_61] : memref<1x32xf32, #tpu.memory_space<vmem>>, vector<1x32xf32>
    %126 = vector.broadcast %125 : vector<1x32xf32> to vector<8x32xf32>
    %127 = arith.addf %124, %126 : vector<8x32xf32>
    %cst_62 = arith.constant 0.000000e+00 : f32
    %128 = vector.broadcast %cst_62 : f32 to vector<8x32xf32>
    %129 = arith.maximumf %127, %128 : vector<8x32xf32>
    %c0_63 = arith.constant 0 : index
    %c0_64 = arith.constant 0 : index
    %130 = vector.load %arg15[%c0_63, %c0_64] : memref<32x32xf32, #tpu.memory_space<vmem>>, vector<32x32xf32>
    %cst_65 = arith.constant dense<0.000000e+00> : vector<8x32xf32>
    %131 = tpu.matmul %129, %130, %cst_65 {dimension_numbers = #tpu.dot_dimension_numbers<[1], [1], [0], [0], [0, 0, 1, 0], [], []>, precision = #tpu.contract_precision<fp32>} : vector<8x32xf32>, vector<32x32xf32>, vector<8x32xf32> -> vector<8x32xf32>
    %c0_66 = arith.constant 0 : index
    %c0_67 = arith.constant 0 : index
    %132 = vector.load %arg16[%c0_66, %c0_67] : memref<1x32xf32, #tpu.memory_space<vmem>>, vector<1x32xf32>
    %133 = vector.broadcast %132 : vector<1x32xf32> to vector<8x32xf32>
    %134 = arith.addf %131, %133 : vector<8x32xf32>
    %135 = arith.addf %134, %122 : vector<8x32xf32>
    %cst_68 = arith.constant dense<0.000000e+00> : vector<8xf32>
    %136 = vector.multi_reduction <add>, %135, %cst_68 [1] : vector<8x32xf32> to vector<8xf32>
    %137 = vector.shape_cast %136 : vector<8xf32> to vector<8x1xf32>
    %cst_69 = arith.constant 3.200000e+01 : f32
    %138 = vector.broadcast %cst_69 : f32 to vector<8x1xf32>
    %139 = arith.divf %137, %138 : vector<8x1xf32>
    %140 = vector.broadcast %139 : vector<8x1xf32> to vector<8x32xf32>
    %141 = arith.subf %135, %140 : vector<8x32xf32>
    %142 = arith.mulf %141, %141 : vector<8x32xf32>
    %cst_70 = arith.constant dense<0.000000e+00> : vector<8xf32>
    %143 = vector.multi_reduction <add>, %142, %cst_70 [1] : vector<8x32xf32> to vector<8xf32>
    %144 = vector.shape_cast %143 : vector<8xf32> to vector<8x1xf32>
    %cst_71 = arith.constant 3.200000e+01 : f32
    %145 = vector.broadcast %cst_71 : f32 to vector<8x1xf32>
    %146 = arith.divf %144, %145 : vector<8x1xf32>
    %cst_72 = arith.constant 9.99999974E-6 : f32
    %147 = vector.broadcast %cst_72 : f32 to vector<8x1xf32>
    %148 = arith.addf %146, %147 : vector<8x1xf32>
    %149 = math.rsqrt %148 : vector<8x1xf32>
    %150 = vector.broadcast %149 : vector<8x1xf32> to vector<8x32xf32>
    %151 = arith.mulf %141, %150 : vector<8x32xf32>
    %c0_73 = arith.constant 0 : index
    %c0_74 = arith.constant 0 : index
    %152 = vector.load %arg17[%c0_73, %c0_74] : memref<1x32xf32, #tpu.memory_space<vmem>>, vector<1x32xf32>
    %153 = vector.broadcast %152 : vector<1x32xf32> to vector<8x32xf32>
    %154 = arith.mulf %151, %153 : vector<8x32xf32>
    %c0_75 = arith.constant 0 : index
    %c0_76 = arith.constant 0 : index
    %155 = vector.load %arg18[%c0_75, %c0_76] : memref<1x32xf32, #tpu.memory_space<vmem>>, vector<1x32xf32>
    %156 = vector.broadcast %155 : vector<1x32xf32> to vector<8x32xf32>
    %157 = arith.addf %154, %156 : vector<8x32xf32>
    %c0_77 = arith.constant 0 : index
    %c0_78 = arith.constant 0 : index
    %c0_79 = arith.constant 0 : index
    %158 = vector.load %arg19[%c0_77, %c0_78, %c0_79] : memref<1x8x32xf32, #tpu.memory_space<vmem>>, vector<1x8x32xf32>
    %159 = vector.shape_cast %158 : vector<1x8x32xf32> to vector<8x32xf32>
    %160 = vector.shape_cast %157 : vector<8x32xf32> to vector<1x8x32xf32>
    tpu.vector_store %arg19[%c0_77, %c0_78, %c0_79], %160 {strides = array<i32>} : memref<1x8x32xf32, #tpu.memory_space<vmem>>, vector<1x8x32xf32>,
    return
  }
  func.func @transform_0(%arg0: i32) -> (i32, i32, i32) {
    %c0_i32 = arith.constant 0 : i32
    %c0_i32_0 = arith.constant 0 : i32
    %c0_i32_1 = arith.constant 0 : i32
    return %arg0, %c0_i32, %c0_i32_0 : i32, i32, i32
  }
  func.func @transform_1(%arg0: i32) -> (i32, i32, i32) {
    %c0_i32 = arith.constant 0 : i32
    %c0_i32_0 = arith.constant 0 : i32
    %c0_i32_1 = arith.constant 0 : i32
    return %arg0, %c0_i32, %c0_i32_0 : i32, i32, i32
  }
  func.func @transform_2(%arg0: i32) -> (i32, i32) {
    %c0_i32 = arith.constant 0 : i32
    %c0_i32_0 = arith.constant 0 : i32
    %c0_i32_1 = arith.constant 0 : i32
    return %c0_i32, %c0_i32_0 : i32, i32
  }
  func.func @transform_3(%arg0: i32) -> (i32, i32) {
    %c0_i32 = arith.constant 0 : i32
    %c0_i32_0 = arith.constant 0 : i32
    %c0_i32_1 = arith.constant 0 : i32
    return %c0_i32, %c0_i32_0 : i32, i32
  }
  func.func @transform_4(%arg0: i32) -> (i32, i32) {
    %c0_i32 = arith.constant 0 : i32
    %c0_i32_0 = arith.constant 0 : i32
    %c0_i32_1 = arith.constant 0 : i32
    return %c0_i32, %c0_i32_0 : i32, i32
  }
  func.func @transform_5(%arg0: i32) -> (i32, i32) {
    %c0_i32 = arith.constant 0 : i32
    %c0_i32_0 = arith.constant 0 : i32
    %c0_i32_1 = arith.constant 0 : i32
    return %c0_i32, %c0_i32_0 : i32, i32
  }
  func.func @transform_6(%arg0: i32) -> (i32, i32) {
    %c0_i32 = arith.constant 0 : i32
    %c0_i32_0 = arith.constant 0 : i32
    %c0_i32_1 = arith.constant 0 : i32
    return %c0_i32, %c0_i32_0 : i32, i32
  }
  func.func @transform_7(%arg0: i32) -> (i32, i32) {
    %c0_i32 = arith.constant 0 : i32
    %c0_i32_0 = arith.constant 0 : i32
    %c0_i32_1 = arith.constant 0 : i32
    return %c0_i32, %c0_i32_0 : i32, i32
  }
  func.func @transform_8(%arg0: i32) -> (i32, i32) {
    %c0_i32 = arith.constant 0 : i32
    %c0_i32_0 = arith.constant 0 : i32
    %c0_i32_1 = arith.constant 0 : i32
    return %c0_i32, %c0_i32_0 : i32, i32
  }
  func.func @transform_9(%arg0: i32) -> (i32, i32) {
    %c0_i32 = arith.constant 0 : i32
    %c0_i32_0 = arith.constant 0 : i32
    %c0_i32_1 = arith.constant 0 : i32
    return %c0_i32, %c0_i32_0 : i32, i32
  }
  func.func @transform_10(%arg0: i32) -> (i32, i32) {
    %c0_i32 = arith.constant 0 : i32
    %c0_i32_0 = arith.constant 0 : i32
    %c0_i32_1 = arith.constant 0 : i32
    return %c0_i32, %c0_i32_0 : i32, i32
  }
  func.func @transform_11(%arg0: i32) -> (i32, i32) {
    %c0_i32 = arith.constant 0 : i32
    %c0_i32_0 = arith.constant 0 : i32
    %c0_i32_1 = arith.constant 0 : i32
    return %c0_i32, %c0_i32_0 : i32, i32
  }
  func.func @transform_12(%arg0: i32) -> (i32, i32) {
    %c0_i32 = arith.constant 0 : i32
    %c0_i32_0 = arith.constant 0 : i32
    %c0_i32_1 = arith.constant 0 : i32
    return %c0_i32, %c0_i32_0 : i32, i32
  }
  func.func @transform_13(%arg0: i32) -> (i32, i32) {
    %c0_i32 = arith.constant 0 : i32
    %c0_i32_0 = arith.constant 0 : i32
    %c0_i32_1 = arith.constant 0 : i32
    return %c0_i32, %c0_i32_0 : i32, i32
  }
  func.func @transform_14(%arg0: i32) -> (i32, i32) {
    %c0_i32 = arith.constant 0 : i32
    %c0_i32_0 = arith.constant 0 : i32
    %c0_i32_1 = arith.constant 0 : i32
    return %c0_i32, %c0_i32_0 : i32, i32
  }
  func.func @transform_15(%arg0: i32) -> (i32, i32) {
    %c0_i32 = arith.constant 0 : i32
    %c0_i32_0 = arith.constant 0 : i32
    %c0_i32_1 = arith.constant 0 : i32
    return %c0_i32, %c0_i32_0 : i32, i32
  }
  func.func @transform_16(%arg0: i32) -> (i32, i32) {
    %c0_i32 = arith.constant 0 : i32
    %c0_i32_0 = arith.constant 0 : i32
    %c0_i32_1 = arith.constant 0 : i32
    return %c0_i32, %c0_i32_0 : i32, i32
  }
  func.func @transform_17(%arg0: i32) -> (i32, i32) {
    %c0_i32 = arith.constant 0 : i32
    %c0_i32_0 = arith.constant 0 : i32
    %c0_i32_1 = arith.constant 0 : i32
    return %c0_i32, %c0_i32_0 : i32, i32
  }
  func.func @transform_18(%arg0: i32) -> (i32, i32, i32) {
    %c0_i32 = arith.constant 0 : i32
    %c0_i32_0 = arith.constant 0 : i32
    %c0_i32_1 = arith.constant 0 : i32
    return %arg0, %c0_i32, %c0_i32_0 : i32, i32, i32
  }
}

</mosaic_0001>

<llo_original>
// kernel: tpu_custom_call.1
$region0: #{tpu_custom_call.1}
  #allocation0 [shape = 'u32[]', space=smem, size = 0x4, offset = 0x4, fixed_abs, tag = 'smem constant byte address 0x4 - core index']
  #allocation1 [shape = 'u32[144,128]{1,0:T(1,128)}', space=vmem, size = 0x12000, scoped, tag = 'internal scratch']
  %s0 = inlined_call_operand.hbm [shape: f32[2,8,32], index: 0, kind: input, shape index: {}]
  %s1 = inlined_call_operand.hbm [shape: f32[2,8,32], index: 1, kind: input, shape index: {}]
  %s2 = inlined_call_operand.hbm [shape: f32[32,32], index: 2, kind: input, shape index: {}]
  %s3 = inlined_call_operand.hbm [shape: f32[32,32], index: 3, kind: input, shape index: {}]
  %s4 = inlined_call_operand.hbm [shape: f32[32,32], index: 4, kind: input, shape index: {}]
  %s5 = inlined_call_operand.vmem [shape: f32[1,32], index: 5, kind: input, shape index: {}]
  %s6 = inlined_call_operand.vmem [shape: f32[1,32], index: 6, kind: input, shape index: {}]
  %s7 = inlined_call_operand.vmem [shape: f32[1,32], index: 7, kind: input, shape index: {}]
  %s8 = inlined_call_operand.hbm [shape: f32[32,32], index: 8, kind: input, shape index: {}]
  %s9 = inlined_call_operand.vmem [shape: f32[1,32], index: 9, kind: input, shape index: {}]
  %s10 = inlined_call_operand.vmem [shape: f32[1,32], index: 10, kind: input, shape index: {}]
  %s11 = inlined_call_operand.vmem [shape: f32[1,32], index: 11, kind: input, shape index: {}]
  %s12 = inlined_call_operand.vmem [shape: f32[32,32], index: 12, kind: input, shape index: {}]
  %s13 = inlined_call_operand.vmem [shape: f32[1,32], index: 13, kind: input, shape index: {}]
  %s14 = inlined_call_operand.hbm [shape: f32[32,32], index: 14, kind: input, shape index: {}]
  %s15 = inlined_call_operand.vmem [shape: f32[1,32], index: 15, kind: input, shape index: {}]
  %s16 = inlined_call_operand.vmem [shape: f32[1,32], index: 16, kind: input, shape index: {}]
  %s17 = inlined_call_operand.vmem [shape: f32[1,32], index: 17, kind: input, shape index: {}]
  %s18 = inlined_call_operand.hbm [shape: f32[2,8,32], index: 18, kind: output, shape index: {}]
  %s19 = sld [smem:[#allocation0]]
  $region133: #{tpu_custom_call.1} parent=0
    _
  %s21 = ssub.s32 1, %s19
  %s22 = scalar_select 0, %s21, %s19
  $region1: #{tpu_custom_call.1} parent=0
    #allocation2 [shape = 'u8[8192]{0}', space=vmem, size = 0x2000, scoped, tag = 'input window, operand 0']
    #allocation3 [shape = 's32[2]{0}', space=sflag, size = 0x8, scoped, tag = 'scoped memory for tpu_custom_call.1']
    #allocation4 [shape = 's32[2]{0}', space=sflag, size = 0x8, scoped, tag = 'scoped memory for tpu_custom_call.1']
    #allocation5 [shape = 'u8[8192]{0}', space=vmem, size = 0x2000, scoped, tag = 'input window, operand 1']
    #allocation6 [shape = 's32[2]{0}', space=sflag, size = 0x8, scoped, tag = 'scoped memory for tpu_custom_call.1']
    #allocation7 [shape = 'u8[16384]{0}', space=vmem, size = 0x4000, scoped, tag = 'input window, operand 2, single buffered']
    #allocation8 [shape = 'u8[16384]{0}', space=vmem, size = 0x4000, scoped, tag = 'input window, operand 3, single buffered']
    #allocation9 [shape = 's32[1]{0}', space=sflag, size = 0x4, scoped, tag = 'scoped memory for tpu_custom_call.1']
    #allocation10 [shape = 'u8[16384]{0}', space=vmem, size = 0x4000, scoped, tag = 'input window, operand 4, single buffered']
    #allocation11 [shape = 'u8[16384]{0}', space=vmem, size = 0x4000, scoped, tag = 'input window, operand 8, single buffered']
    #allocation12 [shape = 's32[1]{0}', space=sflag, size = 0x4, scoped, tag = 'scoped memory for tpu_custom_call.1']
    #allocation13 [shape = 'u8[16384]{0}', space=vmem, size = 0x4000, scoped, tag = 'input window, operand 14, single buffered']
    #allocation14 [shape = 'u8[8192]{0}', space=vmem, size = 0x2000, scoped, tag = 'output window, operand 0']
    %23 = vsyncpa [#allocation3], 0
    %s24 = scalar_lea.sflag [#allocation3], 1
    %25 = vsyncpa %s24, 0
    %26 = vsyncpa [#allocation6], 0
    %s27 = scalar_lea.sflag [#allocation6], 1
    %28 = vsyncpa %s27, 0
    %29 = vsyncpa [#allocation9], 0
    %30 = vsyncpa [#allocation12], 0
    %31 = vsyncpa [#allocation4], 0
    %s32 = scalar_lea.sflag [#allocation4], 1
    %33 = vsyncpa %s32, 0
    loop: start=0, step=1, limit=4
    $region2: #{tpu_custom_call.1} parent=1 // loop_pre_header
      _
    $region3: #{tpu_custom_call.1} parent=1 // loop_header
      %s35 = sphi 0, %s39
      %p36 = scmp.ge.s32.totalorder %s35, 4
      %s45 = sphi 0, %s47
      %s48 = sphi 0, %s45
      %s49 = sphi 0, %s48
      %s65 = sphi 0, %s49
      %s71 = sphi 0, %s73
      %s74 = sphi 0, %s71
      %s75 = sphi 0, %s74
      %s91 = sphi 0, %s75
      %s95 = sphi 0, %s95
      %s97 = sphi 0, %s95
      %s98 = sphi 0, %s97
      %s112 = sphi 0, %s98
      %s116 = sphi 0, %s116
      %s118 = sphi 0, %s116
      %s119 = sphi 0, %s118
      %s133 = sphi 0, %s119
      %s137 = sphi 0, %s137
      %s139 = sphi 0, %s137
      %s140 = sphi 0, %s139
      %s154 = sphi 0, %s140
      %s158 = sphi 0, %s158
      %s160 = sphi 0, %s158
      %s161 = sphi 0, %s160
      %s175 = sphi 0, %s161
      %s179 = sphi 0, %s179
      %s181 = sphi 0, %s179
      %s182 = sphi 0, %s181
      %s196 = sphi 0, %s182
      %s200 = sphi 0, %s200
      %s202 = sphi 0, %s200
      %s203 = sphi 0, %s202
      %s217 = sphi 0, %s203
      %s221 = sphi 0, %s221
      %s223 = sphi 0, %s221
      %s224 = sphi 0, %s223
      %s238 = sphi 0, %s224
      %s242 = sphi 0, %s242
      %s244 = sphi 0, %s242
      %s245 = sphi 0, %s244
      %s259 = sphi 0, %s245
      %s263 = sphi 0, %s263
      %s265 = sphi 0, %s263
      %s266 = sphi 0, %s265
      %s280 = sphi 0, %s266
      %s284 = sphi 0, %s284
      %s286 = sphi 0, %s284
      %s287 = sphi 0, %s286
      %s301 = sphi 0, %s287
      %s305 = sphi 0, %s305
      %s307 = sphi 0, %s305
      %s308 = sphi 0, %s307
      %s322 = sphi 0, %s308
      %s326 = sphi 0, %s326
      %s328 = sphi 0, %s326
      %s329 = sphi 0, %s328
      %s343 = sphi 0, %s329
      %s347 = sphi 0, %s347
      %s349 = sphi 0, %s347
      %s350 = sphi 0, %s349
      %s364 = sphi 0, %s350
      %s368 = sphi 0, %s368
      %s370 = sphi 0, %s368
      %s371 = sphi 0, %s370
      %s385 = sphi 0, %s371
      %s389 = sphi 0, %s389
      %s391 = sphi 0, %s389
      %s392 = sphi 0, %s391
      %s406 = sphi 0, %s392
      %s410 = sphi 0, %s410
      %s412 = sphi 0, %s410
      %s413 = sphi 0, %s412
      %s427 = sphi 0, %s413
      %s433 = sphi 0, %s435
      %s436 = sphi 0, %s433
      %s437 = sphi 0, %s436
      %s453 = sphi 0, %s437
    $region4: #{tpu_custom_call.1} parent=1 // loop_header_branch
      %38 = sbr.rel (%p36) target = $region8
    $region5: #{tpu_custom_call.1} parent=1 // loop_body
      %s40 = ssub.s32 %s35, 1
      %s41 = ssub.s32 %s35, 2
      %s42 = sadd.s32 %s35, 1
      %s43 = ssub.s32 %s35, %s42
      %p44 = scmp.eq.s32.totalorder %s43, 0
      %s46 = sadd.s32 %s45, 1
      %s47 = scalar_select %p44, %s45, %s46
      %p50 = pneg %p44
      %p51 = scmp.eq.s32.totalorder %s35, 1
      %p52 = por %p50, %p51
      %p53 = scmp.ne.s32.totalorder %s45, %s48
      %p54 = scmp.eq.s32.totalorder %s35, 0
      %p55 = por %p53, %p54
      %p56 = scmp.ne.s32.totalorder %s45, %s48
      %p57 = scmp.eq.s32.totalorder %s40, 1
      %p58 = por %p56, %p57
      %p59 = scmp.ne.s32.totalorder %s48, %s49
      %p60 = scmp.eq.s32.totalorder %s40, 0
      %p61 = por %p59, %p60
      %p62 = scmp.ne.s32.totalorder %s48, %s49
      %p63 = scmp.eq.s32.totalorder %s41, 1
      %p64 = por %p62, %p63
      %p66 = scmp.ne.s32.totalorder %s49, %s65
      %p67 = scmp.eq.s32.totalorder %s41, 0
      %p68 = por %p66, %p67
      %s69 = ssub.s32 %s35, %s42
      %p70 = scmp.eq.s32.totalorder %s69, 0
      %s72 = sadd.s32 %s71, 1
      %s73 = scalar_select %p70, %s71, %s72
      %p76 = pneg %p70
      %p77 = scmp.eq.s32.totalorder %s35, 1
      %p78 = por %p76, %p77
      %p79 = scmp.ne.s32.totalorder %s71, %s74
      %p80 = scmp.eq.s32.totalorder %s35, 0
      %p81 = por %p79, %p80
      %p82 = scmp.ne.s32.totalorder %s71, %s74
      %p83 = scmp.eq.s32.totalorder %s40, 1
      %p84 = por %p82, %p83
      %p85 = scmp.ne.s32.totalorder %s74, %s75
      %p86 = scmp.eq.s32.totalorder %s40, 0
      %p87 = por %p85, %p86
      %p88 = scmp.ne.s32.totalorder %s74, %s75
      %p89 = scmp.eq.s32.totalorder %s41, 1
      %p90 = por %p88, %p89
      %p92 = scmp.ne.s32.totalorder %s75, %s91
      %p93 = scmp.eq.s32.totalorder %s41, 0
      %p94 = por %p92, %p93
      %s96 = sadd.s32 %s95, 1
      %p99 = scmp.eq.s32.totalorder %s35, 1
      %p100 = scmp.ne.s32.totalorder %s95, %s97
      %p101 = scmp.eq.s32.totalorder %s35, 0
      %p102 = por %p100, %p101
      %p103 = scmp.ne.s32.totalorder %s95, %s97
      %p104 = scmp.eq.s32.totalorder %s40, 1
      %p105 = por %p103, %p104
      %p106 = scmp.ne.s32.totalorder %s97, %s98
      %p107 = scmp.eq.s32.totalorder %s40, 0
      %p108 = por %p106, %p107
      %p109 = scmp.ne.s32.totalorder %s97, %s98
      %p110 = scmp.eq.s32.totalorder %s41, 1
      %p111 = por %p109, %p110
      %p113 = scmp.ne.s32.totalorder %s98, %s112
      %p114 = scmp.eq.s32.totalorder %s41, 0
      %p115 = por %p113, %p114
      %s117 = sadd.s32 %s116, 1
      %p120 = scmp.eq.s32.totalorder %s35, 1
      %p121 = scmp.ne.s32.totalorder %s116, %s118
      %p122 = scmp.eq.s32.totalorder %s35, 0
      %p123 = por %p121, %p122
      %p124 = scmp.ne.s32.totalorder %s116, %s118
      %p125 = scmp.eq.s32.totalorder %s40, 1
      %p126 = por %p124, %p125
      %p127 = scmp.ne.s32.totalorder %s118, %s119
      %p128 = scmp.eq.s32.totalorder %s40, 0
      %p129 = por %p127, %p128
      %p130 = scmp.ne.s32.totalorder %s118, %s119
      %p131 = scmp.eq.s32.totalorder %s41, 1
      %p132 = por %p130, %p131
      %p134 = scmp.ne.s32.totalorder %s119, %s133
      %p135 = scmp.eq.s32.totalorder %s41, 0
      %p136 = por %p134, %p135
      %s138 = sadd.s32 %s137, 1
      %p141 = scmp.eq.s32.totalorder %s35, 1
      %p142 = scmp.ne.s32.totalorder %s137, %s139
      %p143 = scmp.eq.s32.totalorder %s35, 0
      %p144 = por %p142, %p143
      %p145 = scmp.ne.s32.totalorder %s137, %s139
      %p146 = scmp.eq.s32.totalorder %s40, 1
      %p147 = por %p145, %p146
      %p148 = scmp.ne.s32.totalorder %s139, %s140
      %p149 = scmp.eq.s32.totalorder %s40, 0
      %p150 = por %p148, %p149
      %p151 = scmp.ne.s32.totalorder %s139, %s140
      %p152 = scmp.eq.s32.totalorder %s41, 1
      %p153 = por %p151, %p152
      %p155 = scmp.ne.s32.totalorder %s140, %s154
      %p156 = scmp.eq.s32.totalorder %s41, 0
      %p157 = por %p155, %p156
      %s159 = sadd.s32 %s158, 1
      %p162 = scmp.eq.s32.totalorder %s35, 1
      %p163 = scmp.ne.s32.totalorder %s158, %s160
      %p164 = scmp.eq.s32.totalorder %s35, 0
      %p165 = por %p163, %p164
      %p166 = scmp.ne.s32.totalorder %s158, %s160
      %p167 = scmp.eq.s32.totalorder %s40, 1
      %p168 = por %p166, %p167
      %p169 = scmp.ne.s32.totalorder %s160, %s161
      %p170 = scmp.eq.s32.totalorder %s40, 0
      %p171 = por %p169, %p170
      %p172 = scmp.ne.s32.totalorder %s160, %s161
      %p173 = scmp.eq.s32.totalorder %s41, 1
      %p174 = por %p172, %p173
      %p176 = scmp.ne.s32.totalorder %s161, %s175
      %p177 = scmp.eq.s32.totalorder %s41, 0
      %p178 = por %p176, %p177
      %s180 = sadd.s32 %s179, 1
      %p183 = scmp.eq.s32.totalorder %s35, 1
      %p184 = scmp.ne.s32.totalorder %s179, %s181
      %p185 = scmp.eq.s32.totalorder %s35, 0
      %p186 = por %p184, %p185
      %p187 = scmp.ne.s32.totalorder %s179, %s181
      %p188 = scmp.eq.s32.totalorder %s40, 1
      %p189 = por %p187, %p188
      %p190 = scmp.ne.s32.totalorder %s181, %s182
      %p191 = scmp.eq.s32.totalorder %s40, 0
      %p192 = por %p190, %p191
      %p193 = scmp.ne.s32.totalorder %s181, %s182
      %p194 = scmp.eq.s32.totalorder %s41, 1
      %p195 = por %p193, %p194
      %p197 = scmp.ne.s32.totalorder %s182, %s196
      %p198 = scmp.eq.s32.totalorder %s41, 0
      %p199 = por %p197, %p198
      %s201 = sadd.s32 %s200, 1
      %p204 = scmp.eq.s32.totalorder %s35, 1
      %p205 = scmp.ne.s32.totalorder %s200, %s202
      %p206 = scmp.eq.s32.totalorder %s35, 0
      %p207 = por %p205, %p206
      %p208 = scmp.ne.s32.totalorder %s200, %s202
      %p209 = scmp.eq.s32.totalorder %s40, 1
      %p210 = por %p208, %p209
      %p211 = scmp.ne.s32.totalorder %s202, %s203
      %p212 = scmp.eq.s32.totalorder %s40, 0
      %p213 = por %p211, %p212
      %p214 = scmp.ne.s32.totalorder %s202, %s203
      %p215 = scmp.eq.s32.totalorder %s41, 1
      %p216 = por %p214, %p215
      %p218 = scmp.ne.s32.totalorder %s203, %s217
      %p219 = scmp.eq.s32.totalorder %s41, 0
      %p220 = por %p218, %p219
      %s222 = sadd.s32 %s221, 1
      %p225 = scmp.eq.s32.totalorder %s35, 1
      %p226 = scmp.ne.s32.totalorder %s221, %s223
      %p227 = scmp.eq.s32.totalorder %s35, 0
      %p228 = por %p226, %p227
      %p229 = scmp.ne.s32.totalorder %s221, %s223
      %p230 = scmp.eq.s32.totalorder %s40, 1
      %p231 = por %p229, %p230
      %p232 = scmp.ne.s32.totalorder %s223, %s224
      %p233 = scmp.eq.s32.totalorder %s40, 0
      %p234 = por %p232, %p233
      %p235 = scmp.ne.s32.totalorder %s223, %s224
      %p236 = scmp.eq.s32.totalorder %s41, 1
      %p237 = por %p235, %p236
      %p239 = scmp.ne.s32.totalorder %s224, %s238
      %p240 = scmp.eq.s32.totalorder %s41, 0
      %p241 = por %p239, %p240
      %s243 = sadd.s32 %s242, 1
      %p246 = scmp.eq.s32.totalorder %s35, 1
      %p247 = scmp.ne.s32.totalorder %s242, %s244
      %p248 = scmp.eq.s32.totalorder %s35, 0
      %p249 = por %p247, %p248
      %p250 = scmp.ne.s32.totalorder %s242, %s244
      %p251 = scmp.eq.s32.totalorder %s40, 1
      %p252 = por %p250, %p251
      %p253 = scmp.ne.s32.totalorder %s244, %s245
      %p254 = scmp.eq.s32.totalorder %s40, 0
      %p255 = por %p253, %p254
      %p256 = scmp.ne.s32.totalorder %s244, %s245
      %p257 = scmp.eq.s32.totalorder %s41, 1
      %p258 = por %p256, %p257
      %p260 = scmp.ne.s32.totalorder %s245, %s259
      %p261 = scmp.eq.s32.totalorder %s41, 0
      %p262 = por %p260, %p261
      %s264 = sadd.s32 %s263, 1
      %p267 = scmp.eq.s32.totalorder %s35, 1
      %p268 = scmp.ne.s32.totalorder %s263, %s265
      %p269 = scmp.eq.s32.totalorder %s35, 0
      %p270 = por %p268, %p269
      %p271 = scmp.ne.s32.totalorder %s263, %s265
      %p272 = scmp.eq.s32.totalorder %s40, 1
      %p273 = por %p271, %p272
      %p274 = scmp.ne.s32.totalorder %s265, %s266
      %p275 = scmp.eq.s32.totalorder %s40, 0
      %p276 = por %p274, %p275
      %p277 = scmp.ne.s32.totalorder %s265, %s266
      %p278 = scmp.eq.s32.totalorder %s41, 1
      %p279 = por %p277, %p278
      %p281 = scmp.ne.s32.totalorder %s266, %s280
      %p282 = scmp.eq.s32.totalorder %s41, 0
      %p283 = por %p281, %p282
      %s285 = sadd.s32 %s284, 1
      %p288 = scmp.eq.s32.totalorder %s35, 1
      %p289 = scmp.ne.s32.totalorder %s284, %s286
      %p290 = scmp.eq.s32.totalorder %s35, 0
      %p291 = por %p289, %p290
      %p292 = scmp.ne.s32.totalorder %s284, %s286
      %p293 = scmp.eq.s32.totalorder %s40, 1
      %p294 = por %p292, %p293
      %p295 = scmp.ne.s32.totalorder %s286, %s287
      %p296 = scmp.eq.s32.totalorder %s40, 0
      %p297 = por %p295, %p296
      %p298 = scmp.ne.s32.totalorder %s286, %s287
      %p299 = scmp.eq.s32.totalorder %s41, 1
      %p300 = por %p298, %p299
      %p302 = scmp.ne.s32.totalorder %s287, %s301
      %p303 = scmp.eq.s32.totalorder %s41, 0
      %p304 = por %p302, %p303
      %s306 = sadd.s32 %s305, 1
      %p309 = scmp.eq.s32.totalorder %s35, 1
      %p310 = scmp.ne.s32.totalorder %s305, %s307
      %p311 = scmp.eq.s32.totalorder %s35, 0
      %p312 = por %p310, %p311
      %p313 = scmp.ne.s32.totalorder %s305, %s307
      %p314 = scmp.eq.s32.totalorder %s40, 1
      %p315 = por %p313, %p314
      %p316 = scmp.ne.s32.totalorder %s307, %s308
      %p317 = scmp.eq.s32.totalorder %s40, 0
      %p318 = por %p316, %p317
      %p319 = scmp.ne.s32.totalorder %s307, %s308
      %p320 = scmp.eq.s32.totalorder %s41, 1
      %p321 = por %p319, %p320
      %p323 = scmp.ne.s32.totalorder %s308, %s322
      %p324 = scmp.eq.s32.totalorder %s41, 0
      %p325 = por %p323, %p324
      %s327 = sadd.s32 %s326, 1
      %p330 = scmp.eq.s32.totalorder %s35, 1
      %p331 = scmp.ne.s32.totalorder %s326, %s328
      %p332 = scmp.eq.s32.totalorder %s35, 0
      %p333 = por %p331, %p332
      %p334 = scmp.ne.s32.totalorder %s326, %s328
      %p335 = scmp.eq.s32.totalorder %s40, 1
      %p336 = por %p334, %p335
      %p337 = scmp.ne.s32.totalorder %s328, %s329
      %p338 = scmp.eq.s32.totalorder %s40, 0
      %p339 = por %p337, %p338
      %p340 = scmp.ne.s32.totalorder %s328, %s329
      %p341 = scmp.eq.s32.totalorder %s41, 1
      %p342 = por %p340, %p341
      %p344 = scmp.ne.s32.totalorder %s329, %s343
      %p345 = scmp.eq.s32.totalorder %s41, 0
      %p346 = por %p344, %p345
      %s348 = sadd.s32 %s347, 1
      %p351 = scmp.eq.s32.totalorder %s35, 1
      %p352 = scmp.ne.s32.totalorder %s347, %s349
      %p353 = scmp.eq.s32.totalorder %s35, 0
      %p354 = por %p352, %p353
      %p355 = scmp.ne.s32.totalorder %s347, %s349
      %p356 = scmp.eq.s32.totalorder %s40, 1
      %p357 = por %p355, %p356
      %p358 = scmp.ne.s32.totalorder %s349, %s350
      %p359 = scmp.eq.s32.totalorder %s40, 0
      %p360 = por %p358, %p359
      %p361 = scmp.ne.s32.totalorder %s349, %s350
      %p362 = scmp.eq.s32.totalorder %s41, 1
      %p363 = por %p361, %p362
      %p365 = scmp.ne.s32.totalorder %s350, %s364
      %p366 = scmp.eq.s32.totalorder %s41, 0
      %p367 = por %p365, %p366
      %s369 = sadd.s32 %s368, 1
      %p372 = scmp.eq.s32.totalorder %s35, 1
      %p373 = scmp.ne.s32.totalorder %s368, %s370
      %p374 = scmp.eq.s32.totalorder %s35, 0
      %p375 = por %p373, %p374
      %p376 = scmp.ne.s32.totalorder %s368, %s370
      %p377 = scmp.eq.s32.totalorder %s40, 1
      %p378 = por %p376, %p377
      %p379 = scmp.ne.s32.totalorder %s370, %s371
      %p380 = scmp.eq.s32.totalorder %s40, 0
      %p381 = por %p379, %p380
      %p382 = scmp.ne.s32.totalorder %s370, %s371
      %p383 = scmp.eq.s32.totalorder %s41, 1
      %p384 = por %p382, %p383
      %p386 = scmp.ne.s32.totalorder %s371, %s385
      %p387 = scmp.eq.s32.totalorder %s41, 0
      %p388 = por %p386, %p387
      %s390 = sadd.s32 %s389, 1
      %p393 = scmp.eq.s32.totalorder %s35, 1
      %p394 = scmp.ne.s32.totalorder %s389, %s391
      %p395 = scmp.eq.s32.totalorder %s35, 0
      %p396 = por %p394, %p395
      %p397 = scmp.ne.s32.totalorder %s389, %s391
      %p398 = scmp.eq.s32.totalorder %s40, 1
      %p399 = por %p397, %p398
      %p400 = scmp.ne.s32.totalorder %s391, %s392
      %p401 = scmp.eq.s32.totalorder %s40, 0
      %p402 = por %p400, %p401
      %p403 = scmp.ne.s32.totalorder %s391, %s392
      %p404 = scmp.eq.s32.totalorder %s41, 1
      %p405 = por %p403, %p404
      %p407 = scmp.ne.s32.totalorder %s392, %s406
      %p408 = scmp.eq.s32.totalorder %s41, 0
      %p409 = por %p407, %p408
      %s411 = sadd.s32 %s410, 1
      %p414 = scmp.eq.s32.totalorder %s35, 1
      %p415 = scmp.ne.s32.totalorder %s410, %s412
      %p416 = scmp.eq.s32.totalorder %s35, 0
      %p417 = por %p415, %p416
      %p418 = scmp.ne.s32.totalorder %s410, %s412
      %p419 = scmp.eq.s32.totalorder %s40, 1
      %p420 = por %p418, %p419
      %p421 = scmp.ne.s32.totalorder %s412, %s413
      %p422 = scmp.eq.s32.totalorder %s40, 0
      %p423 = por %p421, %p422
      %p424 = scmp.ne.s32.totalorder %s412, %s413
      %p425 = scmp.eq.s32.totalorder %s41, 1
      %p426 = por %p424, %p425
      %p428 = scmp.ne.s32.totalorder %s413, %s427
      %p429 = scmp.eq.s32.totalorder %s41, 0
      %p430 = por %p428, %p429
      %s431 = ssub.s32 %s35, %s42
      %p432 = scmp.eq.s32.totalorder %s431, 0
      %s434 = sadd.s32 %s433, 1
      %s435 = scalar_select %p432, %s433, %s434
      %p438 = pneg %p432
      %p439 = scmp.eq.s32.totalorder %s35, 1
      %p440 = por %p438, %p439
      %p441 = scmp.ne.s32.totalorder %s433, %s436
      %p442 = scmp.eq.s32.totalorder %s35, 0
      %p443 = por %p441, %p442
      %p444 = scmp.ne.s32.totalorder %s433, %s436
      %p445 = scmp.eq.s32.totalorder %s40, 1
      %p446 = por %p444, %p445
      %p447 = scmp.ne.s32.totalorder %s436, %s437
      %p448 = scmp.eq.s32.totalorder %s40, 0
      %p449 = por %p447, %p448
      %p450 = scmp.ne.s32.totalorder %s436, %s437
      %p451 = scmp.eq.s32.totalorder %s41, 1
      %p452 = por %p450, %p451
      %p454 = scmp.ne.s32.totalorder %s437, %s453
      %p455 = scmp.eq.s32.totalorder %s41, 0
      %p456 = por %p454, %p455
      %p457 = scmp.le.s32.totalorder 1, %s35
      %p458 = scmp.lt.s32.totalorder %s35, 3
      %p459 = pnand %p457, %p458
      %p460 = pneg %p459
      // Predicated region
      $region9: #{tpu_custom_call.1} parent=5 // pred_check
        _
      $region10: #{tpu_custom_call.1} parent=5 // pred_check_branch
        %462 = sbr.rel (%p459) target = $region12
      $region11: #{tpu_custom_call.1} parent=5 // pred_region
        %s463 = ssub.s32 %s35, 1
        // Predicated region
        $region13: #{tpu_custom_call.1} parent=11 // pred_check
          %p464 = pneg %p108
        $region14: #{tpu_custom_call.1} parent=11 // pred_check_branch
          %466 = sbr.rel (%p464) target = $region16
        $region15: #{tpu_custom_call.1} parent=11 // pred_region
          %s468 = ssub.s32 512, 512
          %469 = vsyncadd [#allocation6], %s468
          %s470 = sshll.u32 [#allocation7], 4
          %s471 = int_to_ptr.vmem [resolvable:$true] %s470
          %476 = dma.hbm_to_vmem [thread:$0]  %s2, 512, %s471, [#allocation6], 128, 128, 8
        $region16: #{tpu_custom_call.1} parent=11 // pred_fallthru
          _
        // Predicated region
        $region17: #{tpu_custom_call.1} parent=11 // pred_check
          %p477 = pneg %p129
        $region18: #{tpu_custom_call.1} parent=11 // pred_check_branch
          %479 = sbr.rel (%p477) target = $region20
        $region19: #{tpu_custom_call.1} parent=11 // pred_region
          %s481 = ssub.s32 512, 512
          %482 = vsyncadd [#allocation9], %s481
          %s483 = sshll.u32 [#allocation8], 4
          %s484 = int_to_ptr.vmem [resolvable:$true] %s483
          %489 = dma.hbm_to_vmem [thread:$0]  %s3, 512, %s484, [#allocation9], 128, 128, 8
        $region20: #{tpu_custom_call.1} parent=11 // pred_fallthru
          _
        // Predicated region
        $region21: #{tpu_custom_call.1} parent=11 // pred_check
          %p490 = pneg %p150
        $region22: #{tpu_custom_call.1} parent=11 // pred_check_branch
          %492 = sbr.rel (%p490) target = $region24
        $region23: #{tpu_custom_call.1} parent=11 // pred_region
          %s494 = ssub.s32 512, 512
          %495 = vsyncadd [#allocation9], %s494
          %s496 = sshll.u32 [#allocation10], 4
          %s497 = int_to_ptr.vmem [resolvable:$true] %s496
          %502 = dma.hbm_to_vmem [thread:$0]  %s4, 512, %s497, [#allocation9], 128, 128, 8
        $region24: #{tpu_custom_call.1} parent=11 // pred_fallthru
          _
        // Predicated region
        $region25: #{tpu_custom_call.1} parent=11 // pred_check
          %p503 = pneg %p171
        $region26: #{tpu_custom_call.1} parent=11 // pred_check_branch
          %505 = sbr.rel (%p503) target = $region28
        $region27: #{tpu_custom_call.1} parent=11 // pred_region
          _
        $region28: #{tpu_custom_call.1} parent=11 // pred_fallthru
          _
        // Predicated region
        $region29: #{tpu_custom_call.1} parent=11 // pred_check
          %p506 = pneg %p192
        $region30: #{tpu_custom_call.1} parent=11 // pred_check_branch
          %508 = sbr.rel (%p506) target = $region32
        $region31: #{tpu_custom_call.1} parent=11 // pred_region
          _
        $region32: #{tpu_custom_call.1} parent=11 // pred_fallthru
          _
        // Predicated region
        $region33: #{tpu_custom_call.1} parent=11 // pred_check
          %p509 = pneg %p213
        $region34: #{tpu_custom_call.1} parent=11 // pred_check_branch
          %511 = sbr.rel (%p509) target = $region36
        $region35: #{tpu_custom_call.1} parent=11 // pred_region
          _
        $region36: #{tpu_custom_call.1} parent=11 // pred_fallthru
          _
        // Predicated region
        $region37: #{tpu_custom_call.1} parent=11 // pred_check
          %p512 = pneg %p234
        $region38: #{tpu_custom_call.1} parent=11 // pred_check_branch
          %514 = sbr.rel (%p512) target = $region40
        $region39: #{tpu_custom_call.1} parent=11 // pred_region
          %s516 = ssub.s32 512, 512
          %517 = vsyncadd [#allocation12], %s516
          %s518 = sshll.u32 [#allocation11], 4
          %s519 = int_to_ptr.vmem [resolvable:$true] %s518
          %524 = dma.hbm_to_vmem [thread:$0]  %s8, 512, %s519, [#allocation12], 128, 128, 8
        $region40: #{tpu_custom_call.1} parent=11 // pred_fallthru
          _
        // Predicated region
        $region41: #{tpu_custom_call.1} parent=11 // pred_check
          %p525 = pneg %p255
        $region42: #{tpu_custom_call.1} parent=11 // pred_check_branch
          %527 = sbr.rel (%p525) target = $region44
        $region43: #{tpu_custom_call.1} parent=11 // pred_region
          _
        $region44: #{tpu_custom_call.1} parent=11 // pred_fallthru
          _
        // Predicated region
        $region45: #{tpu_custom_call.1} parent=11 // pred_check
          %p528 = pneg %p276
        $region46: #{tpu_custom_call.1} parent=11 // pred_check_branch
          %530 = sbr.rel (%p528) target = $region48
        $region47: #{tpu_custom_call.1} parent=11 // pred_region
          _
        $region48: #{tpu_custom_call.1} parent=11 // pred_fallthru
          _
        // Predicated region
        $region49: #{tpu_custom_call.1} parent=11 // pred_check
          %p531 = pneg %p297
        $region50: #{tpu_custom_call.1} parent=11 // pred_check_branch
          %533 = sbr.rel (%p531) target = $region52
        $region51: #{tpu_custom_call.1} parent=11 // pred_region
          _
        $region52: #{tpu_custom_call.1} parent=11 // pred_fallthru
          _
        // Predicated region
        $region53: #{tpu_custom_call.1} parent=11 // pred_check
          %p534 = pneg %p318
        $region54: #{tpu_custom_call.1} parent=11 // pred_check_branch
          %536 = sbr.rel (%p534) target = $region56
        $region55: #{tpu_custom_call.1} parent=11 // pred_region
          _
        $region56: #{tpu_custom_call.1} parent=11 // pred_fallthru
          _
        // Predicated region
        $region57: #{tpu_custom_call.1} parent=11 // pred_check
          %p537 = pneg %p339
        $region58: #{tpu_custom_call.1} parent=11 // pred_check_branch
          %539 = sbr.rel (%p537) target = $region60
        $region59: #{tpu_custom_call.1} parent=11 // pred_region
          _
        $region60: #{tpu_custom_call.1} parent=11 // pred_fallthru
          _
        // Predicated region
        $region61: #{tpu_custom_call.1} parent=11 // pred_check
          %p540 = pneg %p360
        $region62: #{tpu_custom_call.1} parent=11 // pred_check_branch
          %542 = sbr.rel (%p540) target = $region64
        $region63: #{tpu_custom_call.1} parent=11 // pred_region
          %s544 = ssub.s32 512, 512
          %545 = vsyncadd [#allocation12], %s544
          %s546 = sshll.u32 [#allocation13], 4
          %s547 = int_to_ptr.vmem [resolvable:$true] %s546
          %552 = dma.hbm_to_vmem [thread:$0]  %s14, 512, %s547, [#allocation12], 128, 128, 8
        $region64: #{tpu_custom_call.1} parent=11 // pred_fallthru
          _
        // Predicated region
        $region65: #{tpu_custom_call.1} parent=11 // pred_check
          %p553 = pneg %p381
        $region66: #{tpu_custom_call.1} parent=11 // pred_check_branch
          %555 = sbr.rel (%p553) target = $region68
        $region67: #{tpu_custom_call.1} parent=11 // pred_region
          _
        $region68: #{tpu_custom_call.1} parent=11 // pred_fallthru
          _
        // Predicated region
        $region69: #{tpu_custom_call.1} parent=11 // pred_check
          %p556 = pneg %p402
        $region70: #{tpu_custom_call.1} parent=11 // pred_check_branch
          %558 = sbr.rel (%p556) target = $region72
        $region71: #{tpu_custom_call.1} parent=11 // pred_region
          _
        $region72: #{tpu_custom_call.1} parent=11 // pred_fallthru
          _
        // Predicated region
        $region73: #{tpu_custom_call.1} parent=11 // pred_check
          %p559 = pneg %p423
        $region74: #{tpu_custom_call.1} parent=11 // pred_check_branch
          %561 = sbr.rel (%p559) target = $region76
        $region75: #{tpu_custom_call.1} parent=11 // pred_region
          _
        $region76: #{tpu_custom_call.1} parent=11 // pred_fallthru
          _
      $region12: #{tpu_custom_call.1} parent=5 // pred_fallthru
        _
      %p562 = scmp.lt.s32.totalorder %s35, 2
      // Predicated region
      $region77: #{tpu_custom_call.1} parent=5 // pred_check
        %p563 = pneg %p562
      $region78: #{tpu_custom_call.1} parent=5 // pred_check_branch
        %565 = sbr.rel (%p563) target = $region80
      $region79: #{tpu_custom_call.1} parent=5 // pred_region
        // Predicated region
        $region81: #{tpu_custom_call.1} parent=79 // pred_check
          %p566 = pneg %p55
        $region82: #{tpu_custom_call.1} parent=79 // pred_check_branch
          %568 = sbr.rel (%p566) target = $region84
        $region83: #{tpu_custom_call.1} parent=79 // pred_region
          %s569 = sand.u32 %s45, 1
          %s570 = scalar_lea.sflag [#allocation3], %s569
          %s571 = sand.u32 %s45, 1
          %s572 = smul.addr %s571, 8
          %s573 = scalar_lea.vmem [#allocation2], %s572
          %s575 = ssub.s32 128, 128
          %576 = vsyncadd %s570, %s575
          %s577 = smul.addr %s35, 128
          %s578 = scalar_lea.hbm %s0, %s577
          %s580 = sshll.u32 %s573, 4
          %s581 = int_to_ptr.vmem [resolvable:$true] %s580
          %583 = dma.hbm_to_vmem [thread:$0]  %s578, 128, %s581, %s570
        $region84: #{tpu_custom_call.1} parent=79 // pred_fallthru
          _
        // Predicated region
        $region85: #{tpu_custom_call.1} parent=79 // pred_check
          %p584 = pneg %p81
        $region86: #{tpu_custom_call.1} parent=79 // pred_check_branch
          %586 = sbr.rel (%p584) target = $region88
        $region87: #{tpu_custom_call.1} parent=79 // pred_region
          %s587 = sand.u32 %s35, 1
          %s588 = scalar_lea.sflag [#allocation6], %s587
          %s589 = sand.u32 %s71, 1
          %s590 = smul.addr %s589, 8
          %s591 = scalar_lea.vmem [#allocation5], %s590
          %s593 = ssub.s32 128, 128
          %594 = vsyncadd %s588, %s593
          %s595 = smul.addr %s35, 128
          %s596 = scalar_lea.hbm %s1, %s595
          %s598 = sshll.u32 %s591, 4
          %s599 = int_to_ptr.vmem [resolvable:$true] %s598
          %601 = dma.hbm_to_vmem [thread:$0]  %s596, 128, %s599, %s588
        $region88: #{tpu_custom_call.1} parent=79 // pred_fallthru
          _
      $region80: #{tpu_custom_call.1} parent=5 // pred_fallthru
        _
      %p602 = scmp.le.s32.totalorder 1, %s35
      %p603 = scmp.lt.s32.totalorder %s35, 3
      %p604 = pnand %p602, %p603
      %p605 = pneg %p604
      // Predicated region
      $region89: #{tpu_custom_call.1} parent=5 // pred_check
        _
      $region90: #{tpu_custom_call.1} parent=5 // pred_check_branch
        %607 = sbr.rel (%p604) target = $region92
      $region91: #{tpu_custom_call.1} parent=5 // pred_region
        %s608 = ssub.s32 %s35, 1
        %s609 = sand.u32 %s48, 1
        %s610 = scalar_lea.sflag [#allocation3], %s609
        %s611 = sand.u32 %s48, 1
        %s612 = smul.addr %s611, 8
        %s613 = scalar_lea.vmem [#allocation2], %s612
        // Predicated region
        $region93: #{tpu_custom_call.1} parent=91 // pred_check
          %p614 = pneg %p61
        $region94: #{tpu_custom_call.1} parent=91 // pred_check_branch
          %616 = sbr.rel (%p614) target = $region96
        $region95: #{tpu_custom_call.1} parent=91 // pred_region
          %617 = dma.done %s610, 128
        $region96: #{tpu_custom_call.1} parent=91 // pred_fallthru
          _
        %s618 = sand.u32 %s40, 1
        %s619 = scalar_lea.sflag [#allocation6], %s618
        %s620 = sand.u32 %s74, 1
        %s621 = smul.addr %s620, 8
        %s622 = scalar_lea.vmem [#allocation5], %s621
        // Predicated region
        $region97: #{tpu_custom_call.1} parent=91 // pred_check
          %p623 = pneg %p87
        $region98: #{tpu_custom_call.1} parent=91 // pred_check_branch
          %625 = sbr.rel (%p623) target = $region100
        $region99: #{tpu_custom_call.1} parent=91 // pred_region
          %626 = dma.done %s619, 128
        $region100: #{tpu_custom_call.1} parent=91 // pred_fallthru
          _
        // Predicated region
        $region101: #{tpu_custom_call.1} parent=91 // pred_check
          %p627 = pneg %p108
        $region102: #{tpu_custom_call.1} parent=91 // pred_check_branch
          %629 = sbr.rel (%p627) target = $region104
        $region103: #{tpu_custom_call.1} parent=91 // pred_region
          %630 = dma.done [#allocation6], 512
        $region104: #{tpu_custom_call.1} parent=91 // pred_fallthru
          _
        // Predicated region
        $region105: #{tpu_custom_call.1} parent=91 // pred_check
          %p631 = pneg %p129
        $region106: #{tpu_custom_call.1} parent=91 // pred_check_branch
          %633 = sbr.rel (%p631) target = $region108
        $region107: #{tpu_custom_call.1} parent=91 // pred_region
          %634 = dma.done [#allocation9], 512
        $region108: #{tpu_custom_call.1} parent=91 // pred_fallthru
          _
        // Predicated region
        $region109: #{tpu_custom_call.1} parent=91 // pred_check
          %p635 = pneg %p150
        $region110: #{tpu_custom_call.1} parent=91 // pred_check_branch
          %637 = sbr.rel (%p635) target = $region112
        $region111: #{tpu_custom_call.1} parent=91 // pred_region
          %638 = dma.done [#allocation9], 512
        $region112: #{tpu_custom_call.1} parent=91 // pred_fallthru
          _
        // Predicated region
        $region113: #{tpu_custom_call.1} parent=91 // pred_check
          %p639 = pneg %p234
        $region114: #{tpu_custom_call.1} parent=91 // pred_check_branch
          %641 = sbr.rel (%p639) target = $region116
        $region115: #{tpu_custom_call.1} parent=91 // pred_region
          %642 = dma.done [#allocation12], 512
        $region116: #{tpu_custom_call.1} parent=91 // pred_fallthru
          _
        // Predicated region
        $region117: #{tpu_custom_call.1} parent=91 // pred_check
          %p643 = pneg %p360
        $region118: #{tpu_custom_call.1} parent=91 // pred_check_branch
          %645 = sbr.rel (%p643) target = $region120
        $region119: #{tpu_custom_call.1} parent=91 // pred_region
          %646 = dma.done [#allocation12], 512
        $region120: #{tpu_custom_call.1} parent=91 // pred_fallthru
          _
        %s647 = sand.u32 %s48, 1
        %s648 = scalar_lea.sflag [#allocation3], %s647
        %s649 = sand.u32 %s48, 1
        %s650 = smul.addr %s649, 8
        %s651 = scalar_lea.vmem [#allocation2], %s650
        %p652 = pneg %p61
        %p653 = pneg %p58
        %s654 = sand.u32 %s40, 1
        %s655 = scalar_lea.sflag [#allocation6], %s654
        %s656 = sand.u32 %s74, 1
        %s657 = smul.addr %s656, 8
        %s658 = scalar_lea.vmem [#allocation5], %s657
        %p659 = pneg %p87
        %p660 = pneg %p84
        %p661 = pneg %p108
        %p662 = pneg %p105
        %p663 = pneg %p129
        %p664 = pneg %p126
        %p665 = pneg %p150
        %p666 = pneg %p147
        %p667 = pneg %p171
        %p668 = pneg %p168
        %p669 = pneg %p192
        %p670 = pneg %p189
        %p671 = pneg %p213
        %p672 = pneg %p210
        %p673 = pneg %p234
        %p674 = pneg %p231
        %p675 = pneg %p255
        %p676 = pneg %p252
        %p677 = pneg %p276
        %p678 = pneg %p273
        %p679 = pneg %p297
        %p680 = pneg %p294
        %p681 = pneg %p318
        %p682 = pneg %p315
        %p683 = pneg %p339
        %p684 = pneg %p336
        %p685 = pneg %p360
        %p686 = pneg %p357
        %p687 = pneg %p381
        %p688 = pneg %p378
        %p689 = pneg %p402
        %p690 = pneg %p399
        %p691 = pneg %p423
        %p692 = pneg %p420
        %p693 = pneg %p449
        %p694 = pneg %p446
        %s695 = sand.u32 %s436, 1
        %s696 = scalar_lea.sflag [#allocation4], %s695
        %s697 = sand.u32 %s436, 1
        %s698 = smul.addr %s697, 8
        %s699 = scalar_lea.vmem [#allocation14], %s698
        %v700 = vld [vmem:[%s613] sm:$0xff]
        %v701 = vld [vmem:[%s622] sm:$0xff]
        %v702 = vld [vmem:[#allocation7] sm:$0xff]
        %v703 = vld [vmem:[#allocation7 + $0x8] sm:$0xff]
        %v704 = vld [vmem:[#allocation7 + $0x10] sm:$0xff]
        %v705 = vld [vmem:[#allocation7 + $0x18] sm:$0xff]
        %v706 = vld [vmem:[%s5] sm:$0x1]
        %v708 = vlaneseq
        %v709 = vshrl.u32 %v708, 7
        %v710 = vsub.s32 0, %v709
        %v711 = vrot.slane %v706, %v710
        %vm713 = vcmask 261120
        %v715 = vsel %vm713, %v700, 0
        %v718 = vsel %vm713, %v702, 0
        %v721 = vsel %vm713, %v703, 0
        %v724 = vsel %vm713, %v704, 0
        %v727 = vsel %vm713, %v705, 0
        %729 = vmatprep.subr.mxu0 0.0
        %v730 = vand.u32 %v718, 4294901760
        %731 = vmatpush1.xpose.msra.mxu0 %v730
        %732 = vmatprep.subr.mxu0 0.0
        %v733 = vand.u32 %v721, 4294901760
        %734 = vmatpush1.xpose.msra.mxu0 %v733
        %735 = vmatprep.subr.mxu0 0.0
        %v736 = vand.u32 %v724, 4294901760
        %737 = vmatpush1.xpose.msra.mxu0 %v736
        %738 = vmatprep.subr.mxu0 0.0
        %v739 = vand.u32 %v727, 4294901760
        %740 = vmatpush1.xpose.msra.mxu0 %v739
        %741 = vmatprep.subr.mxu0 0.0
        %742 = vmatpush1.xpose.msra.mxu0 0.0
        %743 = vmatprep.subr.mxu0 0.0
        %744 = vmatpush1.xpose.msra.mxu0 0.0
        %745 = vmatprep.subr.mxu0 0.0
        %746 = vmatpush1.xpose.msra.mxu0 0.0
        %747 = vmatprep.subr.mxu0 0.0
        %748 = vmatpush1.xpose.msra.mxu0 0.0
        %749 = vmatprep.subr.mxu0 0.0
        %750 = vmatpush1.xpose.msra.mxu0 0.0
        %751 = vmatprep.subr.mxu0 0.0
        %752 = vmatpush1.xpose.msra.mxu0 0.0
        %753 = vmatprep.subr.mxu0 0.0
        %754 = vmatpush1.xpose.msra.mxu0 0.0
        %755 = vmatprep.subr.mxu0 0.0
        %756 = vmatpush1.xpose.msra.mxu0 0.0
        %757 = vmatprep.subr.mxu0 0.0
        %758 = vmatpush1.xpose.msra.mxu0 0.0
        %759 = vmatprep.subr.mxu0 0.0
        %760 = vmatpush1.xpose.msra.mxu0 0.0
        %761 = vmatprep.subr.mxu0 0.0
        %762 = vmatpush1.xpose.msra.mxu0 0.0
        %763 = vmatprep.subr.mxu0 0.0
        %764 = vmatpush1.xpose.msra.mxu0 0.0
        %765 = vmatprep.subr.mxu0 0.0
        %766 = vmatpush1.xpose.msra.mxu0 0.0
        %767 = vmatprep.subr.mxu0 0.0
        %768 = vmatpush1.xpose.msra.mxu0 0.0
        %769 = vmatprep.subr.mxu0 0.0
        %770 = vmatpush1.xpose.msra.mxu0 0.0
        %771 = vmatprep.subr.mxu0 0.0
        %772 = vmatpush1.xpose.msra.mxu0 0.0
        %773 = vmatprep.subr.mxu0 0.0
        %774 = vmatpush1.xpose.msra.mxu0 0.0
        %775 = vmatprep.subr.mxu0 0.0
        %776 = vmatpush1.xpose.msra.mxu0 0.0
        %777 = vmatprep.subr.mxu0 0.0
        %778 = vmatpush1.xpose.msra.mxu0 0.0
        %779 = vmatprep.subr.mxu0 0.0
        %780 = vmatpush1.xpose.msra.mxu0 0.0
        %781 = vmatprep.subr.mxu0 0.0
        %782 = vmatpush1.xpose.msra.mxu0 0.0
        %783 = vmatprep.subr.mxu0 0.0
        %784 = vmatpush1.xpose.msra.mxu0 0.0
        %785 = vmatprep.subr.mxu0 0.0
        %786 = vmatpush1.xpose.msra.mxu0 0.0
        %787 = vmatprep.subr.mxu0 0.0
        %788 = vmatpush1.xpose.msra.mxu0 0.0
        %789 = vmatprep.subr.mxu0 0.0
        %790 = vmatpush1.xpose.msra.mxu0 0.0
        %791 = vmatprep.subr.mxu0 0.0
        %792 = vmatpush1.xpose.msra.mxu0 0.0
        %793 = vmatprep.subr.mxu0 0.0
        %794 = vmatpush1.xpose.msra.mxu0 0.0
        %795 = vmatprep.subr.mxu0 0.0
        %796 = vmatpush1.xpose.msra.mxu0 0.0
        %797 = vmatprep.mubr.f32.mxu0 0.0
        %v798 = vand.u32 %v715, 4294901760
        %v799 = vsub.f32 %v715, %v798
        %v800 = vand.u32 %v799, 4294901760
        %v801 = vsub.f32 %v799, %v800
        %v802 = vand.u32 %v801, 4294901760
        %803 = vmatmul.mubr.f32.gmra.mrb[0].mxu0 %v802
        %v804 = vpop.f32.mrb[0].mxu0
        %v805 = vadd.f32 %v711, %v804
        %v806 = vpop.f32.mrb[0].mxu0
        %807 = vdwg.mxu0
        %808 = vmatprep.subr.mxu0 0.0
        %v809 = vand.u32 %v718, 4294901760
        %v810 = vsub.f32 %v718, %v809
        %v811 = vand.u32 %v810, 4294901760
        %v812 = vsub.f32 %v810, %v811
        %v813 = vand.u32 %v812, 4294901760
        %814 = vmatpush1.xpose.msra.mxu0 %v813
        %815 = vmatprep.subr.mxu0 0.0
        %v816 = vand.u32 %v721, 4294901760
        %v817 = vsub.f32 %v721, %v816
        %v818 = vand.u32 %v817, 4294901760
        %v819 = vsub.f32 %v817, %v818
        %v820 = vand.u32 %v819, 4294901760
        %821 = vmatpush1.xpose.msra.mxu0 %v820
        %822 = vmatprep.subr.mxu0 0.0
        %v823 = vand.u32 %v724, 4294901760
        %v824 = vsub.f32 %v724, %v823
        %v825 = vand.u32 %v824, 4294901760
        %v826 = vsub.f32 %v824, %v825
        %v827 = vand.u32 %v826, 4294901760
        %828 = vmatpush1.xpose.msra.mxu0 %v827
        %829 = vmatprep.subr.mxu0 0.0
        %v830 = vand.u32 %v727, 4294901760
        %v831 = vsub.f32 %v727, %v830
        %v832 = vand.u32 %v831, 4294901760
        %v833 = vsub.f32 %v831, %v832
        %v834 = vand.u32 %v833, 4294901760
        %835 = vmatpush1.xpose.msra.mxu0 %v834
        %836 = vmatprep.subr.mxu0 0.0
        %837 = vmatpush1.xpose.msra.mxu0 0.0
        %838 = vmatprep.subr.mxu0 0.0
        %839 = vmatpush1.xpose.msra.mxu0 0.0
        %840 = vmatprep.subr.mxu0 0.0
        %841 = vmatpush1.xpose.msra.mxu0 0.0
        %842 = vmatprep.subr.mxu0 0.0
        %843 = vmatpush1.xpose.msra.mxu0 0.0
        %844 = vmatprep.subr.mxu0 0.0
        %845 = vmatpush1.xpose.msra.mxu0 0.0
        %846 = vmatprep.subr.mxu0 0.0
        %847 = vmatpush1.xpose.msra.mxu0 0.0
        %848 = vmatprep.subr.mxu0 0.0
        %849 = vmatpush1.xpose.msra.mxu0 0.0
        %850 = vmatprep.subr.mxu0 0.0
        %851 = vmatpush1.xpose.msra.mxu0 0.0
        %852 = vmatprep.subr.mxu0 0.0
        %853 = vmatpush1.xpose.msra.mxu0 0.0
        %854 = vmatprep.subr.mxu0 0.0
        %855 = vmatpush1.xpose.msra.mxu0 0.0
        %856 = vmatprep.subr.mxu0 0.0
        %857 = vmatpush1.xpose.msra.mxu0 0.0
        %858 = vmatprep.subr.mxu0 0.0
        %859 = vmatpush1.xpose.msra.mxu0 0.0
        %860 = vmatprep.subr.mxu0 0.0
        %861 = vmatpush1.xpose.msra.mxu0 0.0
        %862 = vmatprep.subr.mxu0 0.0
        %863 = vmatpush1.xpose.msra.mxu0 0.0
        %864 = vmatprep.subr.mxu0 0.0
        %865 = vmatpush1.xpose.msra.mxu0 0.0
        %866 = vmatprep.subr.mxu0 0.0
        %867 = vmatpush1.xpose.msra.mxu0 0.0
        %868 = vmatprep.subr.mxu0 0.0
        %869 = vmatpush1.xpose.msra.mxu0 0.0
        %870 = vmatprep.subr.mxu0 0.0
        %871 = vmatpush1.xpose.msra.mxu0 0.0
        %872 = vmatprep.subr.mxu0 0.0
        %873 = vmatpush1.xpose.msra.mxu0 0.0
        %874 = vmatprep.subr.mxu0 0.0
        %875 = vmatpush1.xpose.msra.mxu0 0.0
        %876 = vmatprep.subr.mxu0 0.0
        %877 = vmatpush1.xpose.msra.mxu0 0.0
        %878 = vmatprep.subr.mxu0 0.0
        %879 = vmatpush1.xpose.msra.mxu0 0.0
        %880 = vmatprep.subr.mxu0 0.0
        %881 = vmatpush1.xpose.msra.mxu0 0.0
        %882 = vmatprep.subr.mxu0 0.0
        %883 = vmatpush1.xpose.msra.mxu0 0.0
        %884 = vmatprep.subr.mxu0 0.0
        %885 = vmatpush1.xpose.msra.mxu0 0.0
        %886 = vmatprep.subr.mxu0 0.0
        %887 = vmatpush1.xpose.msra.mxu0 0.0
        %888 = vmatprep.subr.mxu0 0.0
        %889 = vmatpush1.xpose.msra.mxu0 0.0
        %890 = vmatprep.subr.mxu0 0.0
        %891 = vmatpush1.xpose.msra.mxu0 0.0
        %892 = vmatprep.mubr.f32.mxu0 0.0
        %v893 = vand.u32 %v715, 4294901760
        %894 = vmatmul.mubr.f32.gmra.mrb[0].mxu0 %v893
        %v895 = vpop.f32.mrb[0].mxu0
        %v896 = vadd.f32 %v805, %v895
        %v897 = vpop.f32.mrb[0].mxu0
        %898 = vdwg.mxu0
        %899 = vmatprep.subr.mxu0 0.0
        %v900 = vand.u32 %v718, 4294901760
        %v901 = vsub.f32 %v718, %v900
        %902 = vmatpush1.xpose.msra.mxu0 %v901
        %903 = vmatprep.subr.mxu0 0.0
        %v904 = vand.u32 %v721, 4294901760
        %v905 = vsub.f32 %v721, %v904
        %906 = vmatpush1.xpose.msra.mxu0 %v905
        %907 = vmatprep.subr.mxu0 0.0
        %v908 = vand.u32 %v724, 4294901760
        %v909 = vsub.f32 %v724, %v908
        %910 = vmatpush1.xpose.msra.mxu0 %v909
        %911 = vmatprep.subr.mxu0 0.0
        %v912 = vand.u32 %v727, 4294901760
        %v913 = vsub.f32 %v727, %v912
        %914 = vmatpush1.xpose.msra.mxu0 %v913
        %915 = vmatprep.subr.mxu0 0.0
        %916 = vmatpush1.xpose.msra.mxu0 0.0
        %917 = vmatprep.subr.mxu0 0.0
        %918 = vmatpush1.xpose.msra.mxu0 0.0
        %919 = vmatprep.subr.mxu0 0.0
        %920 = vmatpush1.xpose.msra.mxu0 0.0
        %921 = vmatprep.subr.mxu0 0.0
        %922 = vmatpush1.xpose.msra.mxu0 0.0
        %923 = vmatprep.subr.mxu0 0.0
        %924 = vmatpush1.xpose.msra.mxu0 0.0
        %925 = vmatprep.subr.mxu0 0.0
        %926 = vmatpush1.xpose.msra.mxu0 0.0
        %927 = vmatprep.subr.mxu0 0.0
        %928 = vmatpush1.xpose.msra.mxu0 0.0
        %929 = vmatprep.subr.mxu0 0.0
        %930 = vmatpush1.xpose.msra.mxu0 0.0
        %931 = vmatprep.subr.mxu0 0.0
        %932 = vmatpush1.xpose.msra.mxu0 0.0
        %933 = vmatprep.subr.mxu0 0.0
        %934 = vmatpush1.xpose.msra.mxu0 0.0
        %935 = vmatprep.subr.mxu0 0.0
        %936 = vmatpush1.xpose.msra.mxu0 0.0
        %937 = vmatprep.subr.mxu0 0.0
        %938 = vmatpush1.xpose.msra.mxu0 0.0
        %939 = vmatprep.subr.mxu0 0.0
        %940 = vmatpush1.xpose.msra.mxu0 0.0
        %941 = vmatprep.subr.mxu0 0.0
        %942 = vmatpush1.xpose.msra.mxu0 0.0
        %943 = vmatprep.subr.mxu0 0.0
        %944 = vmatpush1.xpose.msra.mxu0 0.0
        %945 = vmatprep.subr.mxu0 0.0
        %946 = vmatpush1.xpose.msra.mxu0 0.0
        %947 = vmatprep.subr.mxu0 0.0
        %948 = vmatpush1.xpose.msra.mxu0 0.0
        %949 = vmatprep.subr.mxu0 0.0
        %950 = vmatpush1.xpose.msra.mxu0 0.0
        %951 = vmatprep.subr.mxu0 0.0
        %952 = vmatpush1.xpose.msra.mxu0 0.0
        %953 = vmatprep.subr.mxu0 0.0
        %954 = vmatpush1.xpose.msra.mxu0 0.0
        %955 = vmatprep.subr.mxu0 0.0
        %956 = vmatpush1.xpose.msra.mxu0 0.0
        %957 = vmatprep.subr.mxu0 0.0
        %958 = vmatpush1.xpose.msra.mxu0 0.0
        %959 = vmatprep.subr.mxu0 0.0
        %960 = vmatpush1.xpose.msra.mxu0 0.0
        %961 = vmatprep.subr.mxu0 0.0
        %962 = vmatpush1.xpose.msra.mxu0 0.0
        %963 = vmatprep.subr.mxu0 0.0
        %964 = vmatpush1.xpose.msra.mxu0 0.0
        %965 = vmatprep.subr.mxu0 0.0
        %966 = vmatpush1.xpose.msra.mxu0 0.0
        %967 = vmatprep.subr.mxu0 0.0
        %968 = vmatpush1.xpose.msra.mxu0 0.0
        %969 = vmatprep.subr.mxu0 0.0
        %970 = vmatpush1.xpose.msra.mxu0 0.0
        %971 = vmatprep.mubr.f32.mxu0 0.0
        %v972 = vand.u32 %v715, 4294901760
        %v973 = vsub.f32 %v715, %v972
        %974 = vmatmul.mubr.f32.gmra.mrb[0].mxu0 %v973
        %v975 = vpop.f32.mrb[0].mxu0
        %v976 = vadd.f32 %v896, %v975
        %v977 = vpop.f32.mrb[0].mxu0
        %978 = vdwg.mxu0
        %979 = vmatprep.subr.mxu0 0.0
        %v980 = vand.u32 %v718, 4294901760
        %981 = vmatpush1.xpose.msra.mxu0 %v980
        %982 = vmatprep.subr.mxu0 0.0
        %v983 = vand.u32 %v721, 4294901760
        %984 = vmatpush1.xpose.msra.mxu0 %v983
        %985 = vmatprep.subr.mxu0 0.0
        %v986 = vand.u32 %v724, 4294901760
        %987 = vmatpush1.xpose.msra.mxu0 %v986
        %988 = vmatprep.subr.mxu0 0.0
        %v989 = vand.u32 %v727, 4294901760
        %990 = vmatpush1.xpose.msra.mxu0 %v989
        %991 = vmatprep.subr.mxu0 0.0
        %992 = vmatpush1.xpose.msra.mxu0 0.0
        %993 = vmatprep.subr.mxu0 0.0
        %994 = vmatpush1.xpose.msra.mxu0 0.0
        %995 = vmatprep.subr.mxu0 0.0
        %996 = vmatpush1.xpose.msra.mxu0 0.0
        %997 = vmatprep.subr.mxu0 0.0
        %998 = vmatpush1.xpose.msra.mxu0 0.0
        %999 = vmatprep.subr.mxu0 0.0
        %1000 = vmatpush1.xpose.msra.mxu0 0.0
        %1001 = vmatprep.subr.mxu0 0.0
        %1002 = vmatpush1.xpose.msra.mxu0 0.0
        %1003 = vmatprep.subr.mxu0 0.0
        %1004 = vmatpush1.xpose.msra.mxu0 0.0
        %1005 = vmatprep.subr.mxu0 0.0
        %1006 = vmatpush1.xpose.msra.mxu0 0.0
        %1007 = vmatprep.subr.mxu0 0.0
        %1008 = vmatpush1.xpose.msra.mxu0 0.0
        %1009 = vmatprep.subr.mxu0 0.0
        %1010 = vmatpush1.xpose.msra.mxu0 0.0
        %1011 = vmatprep.subr.mxu0 0.0
        %1012 = vmatpush1.xpose.msra.mxu0 0.0
        %1013 = vmatprep.subr.mxu0 0.0
        %1014 = vmatpush1.xpose.msra.mxu0 0.0
        %1015 = vmatprep.subr.mxu0 0.0
        %1016 = vmatpush1.xpose.msra.mxu0 0.0
        %1017 = vmatprep.subr.mxu0 0.0
        %1018 = vmatpush1.xpose.msra.mxu0 0.0
        %1019 = vmatprep.subr.mxu0 0.0
        %1020 = vmatpush1.xpose.msra.mxu0 0.0
        %1021 = vmatprep.subr.mxu0 0.0
        %1022 = vmatpush1.xpose.msra.mxu0 0.0
        %1023 = vmatprep.subr.mxu0 0.0
        %1024 = vmatpush1.xpose.msra.mxu0 0.0
        %1025 = vmatprep.subr.mxu0 0.0
        %1026 = vmatpush1.xpose.msra.mxu0 0.0
        %1027 = vmatprep.subr.mxu0 0.0
        %1028 = vmatpush1.xpose.msra.mxu0 0.0
        %1029 = vmatprep.subr.mxu0 0.0
        %1030 = vmatpush1.xpose.msra.mxu0 0.0
        %1031 = vmatprep.subr.mxu0 0.0
        %1032 = vmatpush1.xpose.msra.mxu0 0.0
        %1033 = vmatprep.subr.mxu0 0.0
        %1034 = vmatpush1.xpose.msra.mxu0 0.0
        %1035 = vmatprep.subr.mxu0 0.0
        %1036 = vmatpush1.xpose.msra.mxu0 0.0
        %1037 = vmatprep.subr.mxu0 0.0
        %1038 = vmatpush1.xpose.msra.mxu0 0.0
        %1039 = vmatprep.subr.mxu0 0.0
        %1040 = vmatpush1.xpose.msra.mxu0 0.0
        %1041 = vmatprep.subr.mxu0 0.0
        %1042 = vmatpush1.xpose.msra.mxu0 0.0
        %1043 = vmatprep.subr.mxu0 0.0
        %1044 = vmatpush1.xpose.msra.mxu0 0.0
        %1045 = vmatprep.subr.mxu0 0.0
        %1046 = vmatpush1.xpose.msra.mxu0 0.0
        %1047 = vmatprep.mubr.f32.mxu0 0.0
        %v1048 = vand.u32 %v715, 4294901760
        %v1049 = vsub.f32 %v715, %v1048
        %v1050 = vand.u32 %v1049, 4294901760
        %1051 = vmatmul.mubr.f32.gmra.mrb[0].mxu0 %v1050
        %v1052 = vpop.f32.mrb[0].mxu0
        %v1053 = vadd.f32 %v976, %v1052
        %v1054 = vpop.f32.mrb[0].mxu0
        %1055 = vdwg.mxu0
        %1056 = vmatprep.subr.mxu0 0.0
        %v1057 = vand.u32 %v718, 4294901760
        %v1058 = vsub.f32 %v718, %v1057
        %v1059 = vand.u32 %v1058, 4294901760
        %1060 = vmatpush1.xpose.msra.mxu0 %v1059
        %1061 = vmatprep.subr.mxu0 0.0
        %v1062 = vand.u32 %v721, 4294901760
        %v1063 = vsub.f32 %v721, %v1062
        %v1064 = vand.u32 %v1063, 4294901760
        %1065 = vmatpush1.xpose.msra.mxu0 %v1064
        %1066 = vmatprep.subr.mxu0 0.0
        %v1067 = vand.u32 %v724, 4294901760
        %v1068 = vsub.f32 %v724, %v1067
        %v1069 = vand.u32 %v1068, 4294901760
        %1070 = vmatpush1.xpose.msra.mxu0 %v1069
        %1071 = vmatprep.subr.mxu0 0.0
        %v1072 = vand.u32 %v727, 4294901760
        %v1073 = vsub.f32 %v727, %v1072
        %v1074 = vand.u32 %v1073, 4294901760
        %1075 = vmatpush1.xpose.msra.mxu0 %v1074
        %1076 = vmatprep.subr.mxu0 0.0
        %1077 = vmatpush1.xpose.msra.mxu0 0.0
        %1078 = vmatprep.subr.mxu0 0.0
        %1079 = vmatpush1.xpose.msra.mxu0 0.0
        %1080 = vmatprep.subr.mxu0 0.0
        %1081 = vmatpush1.xpose.msra.mxu0 0.0
        %1082 = vmatprep.subr.mxu0 0.0
        %1083 = vmatpush1.xpose.msra.mxu0 0.0
        %1084 = vmatprep.subr.mxu0 0.0
        %1085 = vmatpush1.xpose.msra.mxu0 0.0
        %1086 = vmatprep.subr.mxu0 0.0
        %1087 = vmatpush1.xpose.msra.mxu0 0.0
        %1088 = vmatprep.subr.mxu0 0.0
        %1089 = vmatpush1.xpose.msra.mxu0 0.0
        %1090 = vmatprep.subr.mxu0 0.0
        %1091 = vmatpush1.xpose.msra.mxu0 0.0
        %1092 = vmatprep.subr.mxu0 0.0
        %1093 = vmatpush1.xpose.msra.mxu0 0.0
        %1094 = vmatprep.subr.mxu0 0.0
        %1095 = vmatpush1.xpose.msra.mxu0 0.0
        %1096 = vmatprep.subr.mxu0 0.0
        %1097 = vmatpush1.xpose.msra.mxu0 0.0
        %1098 = vmatprep.subr.mxu0 0.0
        %1099 = vmatpush1.xpose.msra.mxu0 0.0
        %1100 = vmatprep.subr.mxu0 0.0
        %1101 = vmatpush1.xpose.msra.mxu0 0.0
        %1102 = vmatprep.subr.mxu0 0.0
        %1103 = vmatpush1.xpose.msra.mxu0 0.0
        %1104 = vmatprep.subr.mxu0 0.0
        %1105 = vmatpush1.xpose.msra.mxu0 0.0
        %1106 = vmatprep.subr.mxu0 0.0
        %1107 = vmatpush1.xpose.msra.mxu0 0.0
        %1108 = vmatprep.subr.mxu0 0.0
        %1109 = vmatpush1.xpose.msra.mxu0 0.0
        %1110 = vmatprep.subr.mxu0 0.0
        %1111 = vmatpush1.xpose.msra.mxu0 0.0
        %1112 = vmatprep.subr.mxu0 0.0
        %1113 = vmatpush1.xpose.msra.mxu0 0.0
        %1114 = vmatprep.subr.mxu0 0.0
        %1115 = vmatpush1.xpose.msra.mxu0 0.0
        %1116 = vmatprep.subr.mxu0 0.0
        %1117 = vmatpush1.xpose.msra.mxu0 0.0
        %1118 = vmatprep.subr.mxu0 0.0
        %1119 = vmatpush1.xpose.msra.mxu0 0.0
        %1120 = vmatprep.subr.mxu0 0.0
        %1121 = vmatpush1.xpose.msra.mxu0 0.0
        %1122 = vmatprep.subr.mxu0 0.0
        %1123 = vmatpush1.xpose.msra.mxu0 0.0
        %1124 = vmatprep.subr.mxu0 0.0
        %1125 = vmatpush1.xpose.msra.mxu0 0.0
        %1126 = vmatprep.subr.mxu0 0.0
        %1127 = vmatpush1.xpose.msra.mxu0 0.0
        %1128 = vmatprep.subr.mxu0 0.0
        %1129 = vmatpush1.xpose.msra.mxu0 0.0
        %1130 = vmatprep.subr.mxu0 0.0
        %1131 = vmatpush1.xpose.msra.mxu0 0.0
        %1132 = vmatprep.mubr.f32.mxu0 0.0
        %v1133 = vand.u32 %v715, 4294901760
        %1134 = vmatmul.mubr.f32.gmra.mrb[0].mxu0 %v1133
        %v1135 = vpop.f32.mrb[0].mxu0
        %v1136 = vadd.f32 %v1053, %v1135
        %v1137 = vpop.f32.mrb[0].mxu0
        %1138 = vdwg.mxu0
        %1139 = vmatprep.subr.mxu0 0.0
        %v1140 = vand.u32 %v718, 4294901760
        %1141 = vmatpush1.xpose.msra.mxu0 %v1140
        %1142 = vmatprep.subr.mxu0 0.0
        %v1143 = vand.u32 %v721, 4294901760
        %1144 = vmatpush1.xpose.msra.mxu0 %v1143
        %1145 = vmatprep.subr.mxu0 0.0
        %v1146 = vand.u32 %v724, 4294901760
        %1147 = vmatpush1.xpose.msra.mxu0 %v1146
        %1148 = vmatprep.subr.mxu0 0.0
        %v1149 = vand.u32 %v727, 4294901760
        %1150 = vmatpush1.xpose.msra.mxu0 %v1149
        %1151 = vmatprep.subr.mxu0 0.0
        %1152 = vmatpush1.xpose.msra.mxu0 0.0
        %1153 = vmatprep.subr.mxu0 0.0
        %1154 = vmatpush1.xpose.msra.mxu0 0.0
        %1155 = vmatprep.subr.mxu0 0.0
        %1156 = vmatpush1.xpose.msra.mxu0 0.0
        %1157 = vmatprep.subr.mxu0 0.0
        %1158 = vmatpush1.xpose.msra.mxu0 0.0
        %1159 = vmatprep.subr.mxu0 0.0
        %1160 = vmatpush1.xpose.msra.mxu0 0.0
        %1161 = vmatprep.subr.mxu0 0.0
        %1162 = vmatpush1.xpose.msra.mxu0 0.0
        %1163 = vmatprep.subr.mxu0 0.0
        %1164 = vmatpush1.xpose.msra.mxu0 0.0
        %1165 = vmatprep.subr.mxu0 0.0
        %1166 = vmatpush1.xpose.msra.mxu0 0.0
        %1167 = vmatprep.subr.mxu0 0.0
        %1168 = vmatpush1.xpose.msra.mxu0 0.0
        %1169 = vmatprep.subr.mxu0 0.0
        %1170 = vmatpush1.xpose.msra.mxu0 0.0
        %1171 = vmatprep.subr.mxu0 0.0
        %1172 = vmatpush1.xpose.msra.mxu0 0.0
        %1173 = vmatprep.subr.mxu0 0.0
        %1174 = vmatpush1.xpose.msra.mxu0 0.0
        %1175 = vmatprep.subr.mxu0 0.0
        %1176 = vmatpush1.xpose.msra.mxu0 0.0
        %1177 = vmatprep.subr.mxu0 0.0
        %1178 = vmatpush1.xpose.msra.mxu0 0.0
        %1179 = vmatprep.subr.mxu0 0.0
        %1180 = vmatpush1.xpose.msra.mxu0 0.0
        %1181 = vmatprep.subr.mxu0 0.0
        %1182 = vmatpush1.xpose.msra.mxu0 0.0
        %1183 = vmatprep.subr.mxu0 0.0
        %1184 = vmatpush1.xpose.msra.mxu0 0.0
        %1185 = vmatprep.subr.mxu0 0.0
        %1186 = vmatpush1.xpose.msra.mxu0 0.0
        %1187 = vmatprep.subr.mxu0 0.0
        %1188 = vmatpush1.xpose.msra.mxu0 0.0
        %1189 = vmatprep.subr.mxu0 0.0
        %1190 = vmatpush1.xpose.msra.mxu0 0.0
        %1191 = vmatprep.subr.mxu0 0.0
        %1192 = vmatpush1.xpose.msra.mxu0 0.0
        %1193 = vmatprep.subr.mxu0 0.0
        %1194 = vmatpush1.xpose.msra.mxu0 0.0
        %1195 = vmatprep.subr.mxu0 0.0
        %1196 = vmatpush1.xpose.msra.mxu0 0.0
        %1197 = vmatprep.subr.mxu0 0.0
        %1198 = vmatpush1.xpose.msra.mxu0 0.0
        %1199 = vmatprep.subr.mxu0 0.0
        %1200 = vmatpush1.xpose.msra.mxu0 0.0
        %1201 = vmatprep.subr.mxu0 0.0
        %1202 = vmatpush1.xpose.msra.mxu0 0.0
        %1203 = vmatprep.subr.mxu0 0.0
        %1204 = vmatpush1.xpose.msra.mxu0 0.0
        %1205 = vmatprep.subr.mxu0 0.0
        %1206 = vmatpush1.xpose.msra.mxu0 0.0
        %1207 = vmatprep.mubr.f32.mxu0 0.0
        %v1208 = vand.u32 %v715, 4294901760
        %1209 = vmatmul.mubr.f32.gmra.mrb[0].mxu0 %v1208
        %v1210 = vpop.f32.mrb[0].mxu0
        %v1211 = vadd.f32 %v1136, %v1210
        %v1212 = vpop.f32.mrb[0].mxu0
        %1213 = vdwg.mxu0
        %v1214 = vld [vmem:[#allocation8] sm:$0xff]
        %v1215 = vld [vmem:[#allocation8 + $0x8] sm:$0xff]
        %v1216 = vld [vmem:[#allocation8 + $0x10] sm:$0xff]
        %v1217 = vld [vmem:[#allocation8 + $0x18] sm:$0xff]
        %v1218 = vld [vmem:[%s6] sm:$0x1]
        %v1220 = vlaneseq
        %v1221 = vshrl.u32 %v1220, 7
        %v1222 = vsub.s32 0, %v1221
        %v1223 = vrot.slane %v1218, %v1222
        %v1226 = vsel %vm713, %v701, 0
        %v1229 = vsel %vm713, %v1214, 0
        %v1232 = vsel %vm713, %v1215, 0
        %v1235 = vsel %vm713, %v1216, 0
        %v1238 = vsel %vm713, %v1217, 0
        %1240 = vmatprep.subr.mxu0 0.0
        %v1241 = vand.u32 %v1229, 4294901760
        %1242 = vmatpush1.xpose.msra.mxu0 %v1241
        %1243 = vmatprep.subr.mxu0 0.0
        %v1244 = vand.u32 %v1232, 4294901760
        %1245 = vmatpush1.xpose.msra.mxu0 %v1244
        %1246 = vmatprep.subr.mxu0 0.0
        %v1247 = vand.u32 %v1235, 4294901760
        %1248 = vmatpush1.xpose.msra.mxu0 %v1247
        %1249 = vmatprep.subr.mxu0 0.0
        %v1250 = vand.u32 %v1238, 4294901760
        %1251 = vmatpush1.xpose.msra.mxu0 %v1250
        %1252 = vmatprep.subr.mxu0 0.0
        %1253 = vmatpush1.xpose.msra.mxu0 0.0
        %1254 = vmatprep.subr.mxu0 0.0
        %1255 = vmatpush1.xpose.msra.mxu0 0.0
        %1256 = vmatprep.subr.mxu0 0.0
        %1257 = vmatpush1.xpose.msra.mxu0 0.0
        %1258 = vmatprep.subr.mxu0 0.0
        %1259 = vmatpush1.xpose.msra.mxu0 0.0
        %1260 = vmatprep.subr.mxu0 0.0
        %1261 = vmatpush1.xpose.msra.mxu0 0.0
        %1262 = vmatprep.subr.mxu0 0.0
        %1263 = vmatpush1.xpose.msra.mxu0 0.0
        %1264 = vmatprep.subr.mxu0 0.0
        %1265 = vmatpush1.xpose.msra.mxu0 0.0
        %1266 = vmatprep.subr.mxu0 0.0
        %1267 = vmatpush1.xpose.msra.mxu0 0.0
        %1268 = vmatprep.subr.mxu0 0.0
        %1269 = vmatpush1.xpose.msra.mxu0 0.0
        %1270 = vmatprep.subr.mxu0 0.0
        %1271 = vmatpush1.xpose.msra.mxu0 0.0
        %1272 = vmatprep.subr.mxu0 0.0
        %1273 = vmatpush1.xpose.msra.mxu0 0.0
        %1274 = vmatprep.subr.mxu0 0.0
        %1275 = vmatpush1.xpose.msra.mxu0 0.0
        %1276 = vmatprep.subr.mxu0 0.0
        %1277 = vmatpush1.xpose.msra.mxu0 0.0
        %1278 = vmatprep.subr.mxu0 0.0
        %1279 = vmatpush1.xpose.msra.mxu0 0.0
        %1280 = vmatprep.subr.mxu0 0.0
        %1281 = vmatpush1.xpose.msra.mxu0 0.0
        %1282 = vmatprep.subr.mxu0 0.0
        %1283 = vmatpush1.xpose.msra.mxu0 0.0
        %1284 = vmatprep.subr.mxu0 0.0
        %1285 = vmatpush1.xpose.msra.mxu0 0.0
        %1286 = vmatprep.subr.mxu0 0.0
        %1287 = vmatpush1.xpose.msra.mxu0 0.0
        %1288 = vmatprep.subr.mxu0 0.0
        %1289 = vmatpush1.xpose.msra.mxu0 0.0
        %1290 = vmatprep.subr.mxu0 0.0
        %1291 = vmatpush1.xpose.msra.mxu0 0.0
        %1292 = vmatprep.subr.mxu0 0.0
        %1293 = vmatpush1.xpose.msra.mxu0 0.0
        %1294 = vmatprep.subr.mxu0 0.0
        %1295 = vmatpush1.xpose.msra.mxu0 0.0
        %1296 = vmatprep.subr.mxu0 0.0
        %1297 = vmatpush1.xpose.msra.mxu0 0.0
        %1298 = vmatprep.subr.mxu0 0.0
        %1299 = vmatpush1.xpose.msra.mxu0 0.0
        %1300 = vmatprep.subr.mxu0 0.0
        %1301 = vmatpush1.xpose.msra.mxu0 0.0
        %1302 = vmatprep.subr.mxu0 0.0
        %1303 = vmatpush1.xpose.msra.mxu0 0.0
        %1304 = vmatprep.subr.mxu0 0.0
        %1305 = vmatpush1.xpose.msra.mxu0 0.0
        %1306 = vmatprep.subr.mxu0 0.0
        %1307 = vmatpush1.xpose.msra.mxu0 0.0
        %1308 = vmatprep.mubr.f32.mxu0 0.0
        %v1309 = vand.u32 %v1226, 4294901760
        %v1310 = vsub.f32 %v1226, %v1309
        %v1311 = vand.u32 %v1310, 4294901760
        %v1312 = vsub.f32 %v1310, %v1311
        %v1313 = vand.u32 %v1312, 4294901760
        %1314 = vmatmul.mubr.f32.gmra.mrb[0].mxu0 %v1313
        %v1315 = vpop.f32.mrb[0].mxu0
        %v1316 = vadd.f32 %v1223, %v1315
        %v1317 = vpop.f32.mrb[0].mxu0
        %1318 = vdwg.mxu0
        %1319 = vmatprep.subr.mxu0 0.0
        %v1320 = vand.u32 %v1229, 4294901760
        %v1321 = vsub.f32 %v1229, %v1320
        %v1322 = vand.u32 %v1321, 4294901760
        %v1323 = vsub.f32 %v1321, %v1322
        %v1324 = vand.u32 %v1323, 4294901760
        %1325 = vmatpush1.xpose.msra.mxu0 %v1324
        %1326 = vmatprep.subr.mxu0 0.0
        %v1327 = vand.u32 %v1232, 4294901760
        %v1328 = vsub.f32 %v1232, %v1327
        %v1329 = vand.u32 %v1328, 4294901760
        %v1330 = vsub.f32 %v1328, %v1329
        %v1331 = vand.u32 %v1330, 4294901760
        %1332 = vmatpush1.xpose.msra.mxu0 %v1331
        %1333 = vmatprep.subr.mxu0 0.0
        %v1334 = vand.u32 %v1235, 4294901760
        %v1335 = vsub.f32 %v1235, %v1334
        %v1336 = vand.u32 %v1335, 4294901760
        %v1337 = vsub.f32 %v1335, %v1336
        %v1338 = vand.u32 %v1337, 4294901760
        %1339 = vmatpush1.xpose.msra.mxu0 %v1338
        %1340 = vmatprep.subr.mxu0 0.0
        %v1341 = vand.u32 %v1238, 4294901760
        %v1342 = vsub.f32 %v1238, %v1341
        %v1343 = vand.u32 %v1342, 4294901760
        %v1344 = vsub.f32 %v1342, %v1343
        %v1345 = vand.u32 %v1344, 4294901760
        %1346 = vmatpush1.xpose.msra.mxu0 %v1345
        %1347 = vmatprep.subr.mxu0 0.0
        %1348 = vmatpush1.xpose.msra.mxu0 0.0
        %1349 = vmatprep.subr.mxu0 0.0
        %1350 = vmatpush1.xpose.msra.mxu0 0.0
        %1351 = vmatprep.subr.mxu0 0.0
        %1352 = vmatpush1.xpose.msra.mxu0 0.0
        %1353 = vmatprep.subr.mxu0 0.0
        %1354 = vmatpush1.xpose.msra.mxu0 0.0
        %1355 = vmatprep.subr.mxu0 0.0
        %1356 = vmatpush1.xpose.msra.mxu0 0.0
        %1357 = vmatprep.subr.mxu0 0.0
        %1358 = vmatpush1.xpose.msra.mxu0 0.0
        %1359 = vmatprep.subr.mxu0 0.0
        %1360 = vmatpush1.xpose.msra.mxu0 0.0
        %1361 = vmatprep.subr.mxu0 0.0
        %1362 = vmatpush1.xpose.msra.mxu0 0.0
        %1363 = vmatprep.subr.mxu0 0.0
        %1364 = vmatpush1.xpose.msra.mxu0 0.0
        %1365 = vmatprep.subr.mxu0 0.0
        %1366 = vmatpush1.xpose.msra.mxu0 0.0
        %1367 = vmatprep.subr.mxu0 0.0
        %1368 = vmatpush1.xpose.msra.mxu0 0.0
        %1369 = vmatprep.subr.mxu0 0.0
        %1370 = vmatpush1.xpose.msra.mxu0 0.0
        %1371 = vmatprep.subr.mxu0 0.0
        %1372 = vmatpush1.xpose.msra.mxu0 0.0
        %1373 = vmatprep.subr.mxu0 0.0
        %1374 = vmatpush1.xpose.msra.mxu0 0.0
        %1375 = vmatprep.subr.mxu0 0.0
        %1376 = vmatpush1.xpose.msra.mxu0 0.0
        %1377 = vmatprep.subr.mxu0 0.0
        %1378 = vmatpush1.xpose.msra.mxu0 0.0
        %1379 = vmatprep.subr.mxu0 0.0
        %1380 = vmatpush1.xpose.msra.mxu0 0.0
        %1381 = vmatprep.subr.mxu0 0.0
        %1382 = vmatpush1.xpose.msra.mxu0 0.0
        %1383 = vmatprep.subr.mxu0 0.0
        %1384 = vmatpush1.xpose.msra.mxu0 0.0
        %1385 = vmatprep.subr.mxu0 0.0
        %1386 = vmatpush1.xpose.msra.mxu0 0.0
        %1387 = vmatprep.subr.mxu0 0.0
        %1388 = vmatpush1.xpose.msra.mxu0 0.0
        %1389 = vmatprep.subr.mxu0 0.0
        %1390 = vmatpush1.xpose.msra.mxu0 0.0
        %1391 = vmatprep.subr.mxu0 0.0
        %1392 = vmatpush1.xpose.msra.mxu0 0.0
        %1393 = vmatprep.subr.mxu0 0.0
        %1394 = vmatpush1.xpose.msra.mxu0 0.0
        %1395 = vmatprep.subr.mxu0 0.0
        %1396 = vmatpush1.xpose.msra.mxu0 0.0
        %1397 = vmatprep.subr.mxu0 0.0
        %1398 = vmatpush1.xpose.msra.mxu0 0.0
        %1399 = vmatprep.subr.mxu0 0.0
        %1400 = vmatpush1.xpose.msra.mxu0 0.0
        %1401 = vmatprep.subr.mxu0 0.0
        %1402 = vmatpush1.xpose.msra.mxu0 0.0
        %1403 = vmatprep.mubr.f32.mxu0 0.0
        %v1404 = vand.u32 %v1226, 4294901760
        %1405 = vmatmul.mubr.f32.gmra.mrb[0].mxu0 %v1404
        %v1406 = vpop.f32.mrb[0].mxu0
        %v1407 = vadd.f32 %v1316, %v1406
        %v1408 = vpop.f32.mrb[0].mxu0
        %1409 = vdwg.mxu0
        %1410 = vmatprep.subr.mxu0 0.0
        %v1411 = vand.u32 %v1229, 4294901760
        %v1412 = vsub.f32 %v1229, %v1411
        %1413 = vmatpush1.xpose.msra.mxu0 %v1412
        %1414 = vmatprep.subr.mxu0 0.0
        %v1415 = vand.u32 %v1232, 4294901760
        %v1416 = vsub.f32 %v1232, %v1415
        %1417 = vmatpush1.xpose.msra.mxu0 %v1416
        %1418 = vmatprep.subr.mxu0 0.0
        %v1419 = vand.u32 %v1235, 4294901760
        %v1420 = vsub.f32 %v1235, %v1419
        %1421 = vmatpush1.xpose.msra.mxu0 %v1420
        %1422 = vmatprep.subr.mxu0 0.0
        %v1423 = vand.u32 %v1238, 4294901760
        %v1424 = vsub.f32 %v1238, %v1423
        %1425 = vmatpush1.xpose.msra.mxu0 %v1424
        %1426 = vmatprep.subr.mxu0 0.0
        %1427 = vmatpush1.xpose.msra.mxu0 0.0
        %1428 = vmatprep.subr.mxu0 0.0
        %1429 = vmatpush1.xpose.msra.mxu0 0.0
        %1430 = vmatprep.subr.mxu0 0.0
        %1431 = vmatpush1.xpose.msra.mxu0 0.0
        %1432 = vmatprep.subr.mxu0 0.0
        %1433 = vmatpush1.xpose.msra.mxu0 0.0
        %1434 = vmatprep.subr.mxu0 0.0
        %1435 = vmatpush1.xpose.msra.mxu0 0.0
        %1436 = vmatprep.subr.mxu0 0.0
        %1437 = vmatpush1.xpose.msra.mxu0 0.0
        %1438 = vmatprep.subr.mxu0 0.0
        %1439 = vmatpush1.xpose.msra.mxu0 0.0
        %1440 = vmatprep.subr.mxu0 0.0
        %1441 = vmatpush1.xpose.msra.mxu0 0.0
        %1442 = vmatprep.subr.mxu0 0.0
        %1443 = vmatpush1.xpose.msra.mxu0 0.0
        %1444 = vmatprep.subr.mxu0 0.0
        %1445 = vmatpush1.xpose.msra.mxu0 0.0
        %1446 = vmatprep.subr.mxu0 0.0
        %1447 = vmatpush1.xpose.msra.mxu0 0.0
        %1448 = vmatprep.subr.mxu0 0.0
        %1449 = vmatpush1.xpose.msra.mxu0 0.0
        %1450 = vmatprep.subr.mxu0 0.0
        %1451 = vmatpush1.xpose.msra.mxu0 0.0
        %1452 = vmatprep.subr.mxu0 0.0
        %1453 = vmatpush1.xpose.msra.mxu0 0.0
        %1454 = vmatprep.subr.mxu0 0.0
        %1455 = vmatpush1.xpose.msra.mxu0 0.0
        %1456 = vmatprep.subr.mxu0 0.0
        %1457 = vmatpush1.xpose.msra.mxu0 0.0
        %1458 = vmatprep.subr.mxu0 0.0
        %1459 = vmatpush1.xpose.msra.mxu0 0.0
        %1460 = vmatprep.subr.mxu0 0.0
        %1461 = vmatpush1.xpose.msra.mxu0 0.0
        %1462 = vmatprep.subr.mxu0 0.0
        %1463 = vmatpush1.xpose.msra.mxu0 0.0
        %1464 = vmatprep.subr.mxu0 0.0
        %1465 = vmatpush1.xpose.msra.mxu0 0.0
        %1466 = vmatprep.subr.mxu0 0.0
        %1467 = vmatpush1.xpose.msra.mxu0 0.0
        %1468 = vmatprep.subr.mxu0 0.0
        %1469 = vmatpush1.xpose.msra.mxu0 0.0
        %1470 = vmatprep.subr.mxu0 0.0
        %1471 = vmatpush1.xpose.msra.mxu0 0.0
        %1472 = vmatprep.subr.mxu0 0.0
        %1473 = vmatpush1.xpose.msra.mxu0 0.0
        %1474 = vmatprep.subr.mxu0 0.0
        %1475 = vmatpush1.xpose.msra.mxu0 0.0
        %1476 = vmatprep.subr.mxu0 0.0
        %1477 = vmatpush1.xpose.msra.mxu0 0.0
        %1478 = vmatprep.subr.mxu0 0.0
        %1479 = vmatpush1.xpose.msra.mxu0 0.0
        %1480 = vmatprep.subr.mxu0 0.0
        %1481 = vmatpush1.xpose.msra.mxu0 0.0
        %1482 = vmatprep.mubr.f32.mxu0 0.0
        %v1483 = vand.u32 %v1226, 4294901760
        %v1484 = vsub.f32 %v1226, %v1483
        %1485 = vmatmul.mubr.f32.gmra.mrb[0].mxu0 %v1484
        %v1486 = vpop.f32.mrb[0].mxu0
        %v1487 = vadd.f32 %v1407, %v1486
        %v1488 = vpop.f32.mrb[0].mxu0
        %1489 = vdwg.mxu0
        %1490 = vmatprep.subr.mxu0 0.0
        %v1491 = vand.u32 %v1229, 4294901760
        %1492 = vmatpush1.xpose.msra.mxu0 %v1491
        %1493 = vmatprep.subr.mxu0 0.0
        %v1494 = vand.u32 %v1232, 4294901760
        %1495 = vmatpush1.xpose.msra.mxu0 %v1494
        %1496 = vmatprep.subr.mxu0 0.0
        %v1497 = vand.u32 %v1235, 4294901760
        %1498 = vmatpush1.xpose.msra.mxu0 %v1497
        %1499 = vmatprep.subr.mxu0 0.0
        %v1500 = vand.u32 %v1238, 4294901760
        %1501 = vmatpush1.xpose.msra.mxu0 %v1500
        %1502 = vmatprep.subr.mxu0 0.0
        %1503 = vmatpush1.xpose.msra.mxu0 0.0
        %1504 = vmatprep.subr.mxu0 0.0
        %1505 = vmatpush1.xpose.msra.mxu0 0.0
        %1506 = vmatprep.subr.mxu0 0.0
        %1507 = vmatpush1.xpose.msra.mxu0 0.0
        %1508 = vmatprep.subr.mxu0 0.0
        %1509 = vmatpush1.xpose.msra.mxu0 0.0
        %1510 = vmatprep.subr.mxu0 0.0
        %1511 = vmatpush1.xpose.msra.mxu0 0.0
        %1512 = vmatprep.subr.mxu0 0.0
        %1513 = vmatpush1.xpose.msra.mxu0 0.0
        %1514 = vmatprep.subr.mxu0 0.0
        %1515 = vmatpush1.xpose.msra.mxu0 0.0
        %1516 = vmatprep.subr.mxu0 0.0
        %1517 = vmatpush1.xpose.msra.mxu0 0.0
        %1518 = vmatprep.subr.mxu0 0.0
        %1519 = vmatpush1.xpose.msra.mxu0 0.0
        %1520 = vmatprep.subr.mxu0 0.0
        %1521 = vmatpush1.xpose.msra.mxu0 0.0
        %1522 = vmatprep.subr.mxu0 0.0
        %1523 = vmatpush1.xpose.msra.mxu0 0.0
        %1524 = vmatprep.subr.mxu0 0.0
        %1525 = vmatpush1.xpose.msra.mxu0 0.0
        %1526 = vmatprep.subr.mxu0 0.0
        %1527 = vmatpush1.xpose.msra.mxu0 0.0
        %1528 = vmatprep.subr.mxu0 0.0
        %1529 = vmatpush1.xpose.msra.mxu0 0.0
        %1530 = vmatprep.subr.mxu0 0.0
        %1531 = vmatpush1.xpose.msra.mxu0 0.0
        %1532 = vmatprep.subr.mxu0 0.0
        %1533 = vmatpush1.xpose.msra.mxu0 0.0
        %1534 = vmatprep.subr.mxu0 0.0
        %1535 = vmatpush1.xpose.msra.mxu0 0.0
        %1536 = vmatprep.subr.mxu0 0.0
        %1537 = vmatpush1.xpose.msra.mxu0 0.0
        %1538 = vmatprep.subr.mxu0 0.0
        %1539 = vmatpush1.xpose.msra.mxu0 0.0
        %1540 = vmatprep.subr.mxu0 0.0
        %1541 = vmatpush1.xpose.msra.mxu0 0.0
        %1542 = vmatprep.subr.mxu0 0.0
        %1543 = vmatpush1.xpose.msra.mxu0 0.0
        %1544 = vmatprep.subr.mxu0 0.0
        %1545 = vmatpush1.xpose.msra.mxu0 0.0
        %1546 = vmatprep.subr.mxu0 0.0
        %1547 = vmatpush1.xpose.msra.mxu0 0.0
        %1548 = vmatprep.subr.mxu0 0.0
        %1549 = vmatpush1.xpose.msra.mxu0 0.0
        %1550 = vmatprep.subr.mxu0 0.0
        %1551 = vmatpush1.xpose.msra.mxu0 0.0
        %1552 = vmatprep.subr.mxu0 0.0
        %1553 = vmatpush1.xpose.msra.mxu0 0.0
        %1554 = vmatprep.subr.mxu0 0.0
        %1555 = vmatpush1.xpose.msra.mxu0 0.0
        %1556 = vmatprep.subr.mxu0 0.0
        %1557 = vmatpush1.xpose.msra.mxu0 0.0
        %1558 = vmatprep.mubr.f32.mxu0 0.0
        %v1559 = vand.u32 %v1226, 4294901760
        %v1560 = vsub.f32 %v1226, %v1559
        %v1561 = vand.u32 %v1560, 4294901760
        %1562 = vmatmul.mubr.f32.gmra.mrb[0].mxu0 %v1561
        %v1563 = vpop.f32.mrb[0].mxu0
        %v1564 = vadd.f32 %v1487, %v1563
        %v1565 = vpop.f32.mrb[0].mxu0
        %1566 = vdwg.mxu0
        %1567 = vmatprep.subr.mxu0 0.0
        %v1568 = vand.u32 %v1229, 4294901760
        %v1569 = vsub.f32 %v1229, %v1568
        %v1570 = vand.u32 %v1569, 4294901760
        %1571 = vmatpush1.xpose.msra.mxu0 %v1570
        %1572 = vmatprep.subr.mxu0 0.0
        %v1573 = vand.u32 %v1232, 4294901760
        %v1574 = vsub.f32 %v1232, %v1573
        %v1575 = vand.u32 %v1574, 4294901760
        %1576 = vmatpush1.xpose.msra.mxu0 %v1575
        %1577 = vmatprep.subr.mxu0 0.0
        %v1578 = vand.u32 %v1235, 4294901760
        %v1579 = vsub.f32 %v1235, %v1578
        %v1580 = vand.u32 %v1579, 4294901760
        %1581 = vmatpush1.xpose.msra.mxu0 %v1580
        %1582 = vmatprep.subr.mxu0 0.0
        %v1583 = vand.u32 %v1238, 4294901760
        %v1584 = vsub.f32 %v1238, %v1583
        %v1585 = vand.u32 %v1584, 4294901760
        %1586 = vmatpush1.xpose.msra.mxu0 %v1585
        %1587 = vmatprep.subr.mxu0 0.0
        %1588 = vmatpush1.xpose.msra.mxu0 0.0
        %1589 = vmatprep.subr.mxu0 0.0
        %1590 = vmatpush1.xpose.msra.mxu0 0.0
        %1591 = vmatprep.subr.mxu0 0.0
        %1592 = vmatpush1.xpose.msra.mxu0 0.0
        %1593 = vmatprep.subr.mxu0 0.0
        %1594 = vmatpush1.xpose.msra.mxu0 0.0
        %1595 = vmatprep.subr.mxu0 0.0
        %1596 = vmatpush1.xpose.msra.mxu0 0.0
        %1597 = vmatprep.subr.mxu0 0.0
        %1598 = vmatpush1.xpose.msra.mxu0 0.0
        %1599 = vmatprep.subr.mxu0 0.0
        %1600 = vmatpush1.xpose.msra.mxu0 0.0
        %1601 = vmatprep.subr.mxu0 0.0
        %1602 = vmatpush1.xpose.msra.mxu0 0.0
        %1603 = vmatprep.subr.mxu0 0.0
        %1604 = vmatpush1.xpose.msra.mxu0 0.0
        %1605 = vmatprep.subr.mxu0 0.0
        %1606 = vmatpush1.xpose.msra.mxu0 0.0
        %1607 = vmatprep.subr.mxu0 0.0
        %1608 = vmatpush1.xpose.msra.mxu0 0.0
        %1609 = vmatprep.subr.mxu0 0.0
        %1610 = vmatpush1.xpose.msra.mxu0 0.0
        %1611 = vmatprep.subr.mxu0 0.0
        %1612 = vmatpush1.xpose.msra.mxu0 0.0
        %1613 = vmatprep.subr.mxu0 0.0
        %1614 = vmatpush1.xpose.msra.mxu0 0.0
        %1615 = vmatprep.subr.mxu0 0.0
        %1616 = vmatpush1.xpose.msra.mxu0 0.0
        %1617 = vmatprep.subr.mxu0 0.0
        %1618 = vmatpush1.xpose.msra.mxu0 0.0
        %1619 = vmatprep.subr.mxu0 0.0
        %1620 = vmatpush1.xpose.msra.mxu0 0.0
        %1621 = vmatprep.subr.mxu0 0.0
        %1622 = vmatpush1.xpose.msra.mxu0 0.0
        %1623 = vmatprep.subr.mxu0 0.0
        %1624 = vmatpush1.xpose.msra.mxu0 0.0
        %1625 = vmatprep.subr.mxu0 0.0
        %1626 = vmatpush1.xpose.msra.mxu0 0.0
        %1627 = vmatprep.subr.mxu0 0.0
        %1628 = vmatpush1.xpose.msra.mxu0 0.0
        %1629 = vmatprep.subr.mxu0 0.0
        %1630 = vmatpush1.xpose.msra.mxu0 0.0
        %1631 = vmatprep.subr.mxu0 0.0
        %1632 = vmatpush1.xpose.msra.mxu0 0.0
        %1633 = vmatprep.subr.mxu0 0.0
        %1634 = vmatpush1.xpose.msra.mxu0 0.0
        %1635 = vmatprep.subr.mxu0 0.0
        %1636 = vmatpush1.xpose.msra.mxu0 0.0
        %1637 = vmatprep.subr.mxu0 0.0
        %1638 = vmatpush1.xpose.msra.mxu0 0.0
        %1639 = vmatprep.subr.mxu0 0.0
        %1640 = vmatpush1.xpose.msra.mxu0 0.0
        %1641 = vmatprep.subr.mxu0 0.0
        %1642 = vmatpush1.xpose.msra.mxu0 0.0
        %1643 = vmatprep.mubr.f32.mxu0 0.0
        %v1644 = vand.u32 %v1226, 4294901760
        %1645 = vmatmul.mubr.f32.gmra.mrb[0].mxu0 %v1644
        %v1646 = vpop.f32.mrb[0].mxu0
        %v1647 = vadd.f32 %v1564, %v1646
        %v1648 = vpop.f32.mrb[0].mxu0
        %1649 = vdwg.mxu0
        %1650 = vmatprep.subr.mxu0 0.0
        %v1651 = vand.u32 %v1229, 4294901760
        %1652 = vmatpush1.xpose.msra.mxu0 %v1651
        %1653 = vmatprep.subr.mxu0 0.0
        %v1654 = vand.u32 %v1232, 4294901760
        %1655 = vmatpush1.xpose.msra.mxu0 %v1654
        %1656 = vmatprep.subr.mxu0 0.0
        %v1657 = vand.u32 %v1235, 4294901760
        %1658 = vmatpush1.xpose.msra.mxu0 %v1657
        %1659 = vmatprep.subr.mxu0 0.0
        %v1660 = vand.u32 %v1238, 4294901760
        %1661 = vmatpush1.xpose.msra.mxu0 %v1660
        %1662 = vmatprep.subr.mxu0 0.0
        %1663 = vmatpush1.xpose.msra.mxu0 0.0
        %1664 = vmatprep.subr.mxu0 0.0
        %1665 = vmatpush1.xpose.msra.mxu0 0.0
        %1666 = vmatprep.subr.mxu0 0.0
        %1667 = vmatpush1.xpose.msra.mxu0 0.0
        %1668 = vmatprep.subr.mxu0 0.0
        %1669 = vmatpush1.xpose.msra.mxu0 0.0
        %1670 = vmatprep.subr.mxu0 0.0
        %1671 = vmatpush1.xpose.msra.mxu0 0.0
        %1672 = vmatprep.subr.mxu0 0.0
        %1673 = vmatpush1.xpose.msra.mxu0 0.0
        %1674 = vmatprep.subr.mxu0 0.0
        %1675 = vmatpush1.xpose.msra.mxu0 0.0
        %1676 = vmatprep.subr.mxu0 0.0
        %1677 = vmatpush1.xpose.msra.mxu0 0.0
        %1678 = vmatprep.subr.mxu0 0.0
        %1679 = vmatpush1.xpose.msra.mxu0 0.0
        %1680 = vmatprep.subr.mxu0 0.0
        %1681 = vmatpush1.xpose.msra.mxu0 0.0
        %1682 = vmatprep.subr.mxu0 0.0
        %1683 = vmatpush1.xpose.msra.mxu0 0.0
        %1684 = vmatprep.subr.mxu0 0.0
        %1685 = vmatpush1.xpose.msra.mxu0 0.0
        %1686 = vmatprep.subr.mxu0 0.0
        %1687 = vmatpush1.xpose.msra.mxu0 0.0
        %1688 = vmatprep.subr.mxu0 0.0
        %1689 = vmatpush1.xpose.msra.mxu0 0.0
        %1690 = vmatprep.subr.mxu0 0.0
        %1691 = vmatpush1.xpose.msra.mxu0 0.0
        %1692 = vmatprep.subr.mxu0 0.0
        %1693 = vmatpush1.xpose.msra.mxu0 0.0
        %1694 = vmatprep.subr.mxu0 0.0
        %1695 = vmatpush1.xpose.msra.mxu0 0.0
        %1696 = vmatprep.subr.mxu0 0.0
        %1697 = vmatpush1.xpose.msra.mxu0 0.0
        %1698 = vmatprep.subr.mxu0 0.0
        %1699 = vmatpush1.xpose.msra.mxu0 0.0
        %1700 = vmatprep.subr.mxu0 0.0
        %1701 = vmatpush1.xpose.msra.mxu0 0.0
        %1702 = vmatprep.subr.mxu0 0.0
        %1703 = vmatpush1.xpose.msra.mxu0 0.0
        %1704 = vmatprep.subr.mxu0 0.0
        %1705 = vmatpush1.xpose.msra.mxu0 0.0
        %1706 = vmatprep.subr.mxu0 0.0
        %1707 = vmatpush1.xpose.msra.mxu0 0.0
        %1708 = vmatprep.subr.mxu0 0.0
        %1709 = vmatpush1.xpose.msra.mxu0 0.0
        %1710 = vmatprep.subr.mxu0 0.0
        %1711 = vmatpush1.xpose.msra.mxu0 0.0
        %1712 = vmatprep.subr.mxu0 0.0
        %1713 = vmatpush1.xpose.msra.mxu0 0.0
        %1714 = vmatprep.subr.mxu0 0.0
        %1715 = vmatpush1.xpose.msra.mxu0 0.0
        %1716 = vmatprep.subr.mxu0 0.0
        %1717 = vmatpush1.xpose.msra.mxu0 0.0
        %1718 = vmatprep.mubr.f32.mxu0 0.0
        %v1719 = vand.u32 %v1226, 4294901760
        %1720 = vmatmul.mubr.f32.gmra.mrb[0].mxu0 %v1719
        %v1721 = vpop.f32.mrb[0].mxu0
        %v1722 = vadd.f32 %v1647, %v1721
        %v1723 = vpop.f32.mrb[0].mxu0
        %1724 = vdwg.mxu0
        %v1725 = vld [vmem:[#allocation10] sm:$0xff]
        %v1726 = vld [vmem:[#allocation10 + $0x8] sm:$0xff]
        %v1727 = vld [vmem:[#allocation10 + $0x10] sm:$0xff]
        %v1728 = vld [vmem:[#allocation10 + $0x18] sm:$0xff]
        %v1729 = vld [vmem:[%s7] sm:$0x1]
        %v1731 = vlaneseq
        %v1732 = vshrl.u32 %v1731, 7
        %v1733 = vsub.s32 0, %v1732
        %v1734 = vrot.slane %v1729, %v1733
        %v1737 = vsel %vm713, %v1725, 0
        %v1740 = vsel %vm713, %v1726, 0
        %v1743 = vsel %vm713, %v1727, 0
        %v1746 = vsel %vm713, %v1728, 0
        %1748 = vmatprep.subr.mxu0 0.0
        %v1749 = vand.u32 %v1737, 4294901760
        %1750 = vmatpush1.xpose.msra.mxu0 %v1749
        %1751 = vmatprep.subr.mxu0 0.0
        %v1752 = vand.u32 %v1740, 4294901760
        %1753 = vmatpush1.xpose.msra.mxu0 %v1752
        %1754 = vmatprep.subr.mxu0 0.0
        %v1755 = vand.u32 %v1743, 4294901760
        %1756 = vmatpush1.xpose.msra.mxu0 %v1755
        %1757 = vmatprep.subr.mxu0 0.0
        %v1758 = vand.u32 %v1746, 4294901760
        %1759 = vmatpush1.xpose.msra.mxu0 %v1758
        %1760 = vmatprep.subr.mxu0 0.0
        %1761 = vmatpush1.xpose.msra.mxu0 0.0
        %1762 = vmatprep.subr.mxu0 0.0
        %1763 = vmatpush1.xpose.msra.mxu0 0.0
        %1764 = vmatprep.subr.mxu0 0.0
        %1765 = vmatpush1.xpose.msra.mxu0 0.0
        %1766 = vmatprep.subr.mxu0 0.0
        %1767 = vmatpush1.xpose.msra.mxu0 0.0
        %1768 = vmatprep.subr.mxu0 0.0
        %1769 = vmatpush1.xpose.msra.mxu0 0.0
        %1770 = vmatprep.subr.mxu0 0.0
        %1771 = vmatpush1.xpose.msra.mxu0 0.0
        %1772 = vmatprep.subr.mxu0 0.0
        %1773 = vmatpush1.xpose.msra.mxu0 0.0
        %1774 = vmatprep.subr.mxu0 0.0
        %1775 = vmatpush1.xpose.msra.mxu0 0.0
        %1776 = vmatprep.subr.mxu0 0.0
        %1777 = vmatpush1.xpose.msra.mxu0 0.0
        %1778 = vmatprep.subr.mxu0 0.0
        %1779 = vmatpush1.xpose.msra.mxu0 0.0
        %1780 = vmatprep.subr.mxu0 0.0
        %1781 = vmatpush1.xpose.msra.mxu0 0.0
        %1782 = vmatprep.subr.mxu0 0.0
        %1783 = vmatpush1.xpose.msra.mxu0 0.0
        %1784 = vmatprep.subr.mxu0 0.0
        %1785 = vmatpush1.xpose.msra.mxu0 0.0
        %1786 = vmatprep.subr.mxu0 0.0
        %1787 = vmatpush1.xpose.msra.mxu0 0.0
        %1788 = vmatprep.subr.mxu0 0.0
        %1789 = vmatpush1.xpose.msra.mxu0 0.0
        %1790 = vmatprep.subr.mxu0 0.0
        %1791 = vmatpush1.xpose.msra.mxu0 0.0
        %1792 = vmatprep.subr.mxu0 0.0
        %1793 = vmatpush1.xpose.msra.mxu0 0.0
        %1794 = vmatprep.subr.mxu0 0.0
        %1795 = vmatpush1.xpose.msra.mxu0 0.0
        %1796 = vmatprep.subr.mxu0 0.0
        %1797 = vmatpush1.xpose.msra.mxu0 0.0
        %1798 = vmatprep.subr.mxu0 0.0
        %1799 = vmatpush1.xpose.msra.mxu0 0.0
        %1800 = vmatprep.subr.mxu0 0.0
        %1801 = vmatpush1.xpose.msra.mxu0 0.0
        %1802 = vmatprep.subr.mxu0 0.0
        %1803 = vmatpush1.xpose.msra.mxu0 0.0
        %1804 = vmatprep.subr.mxu0 0.0
        %1805 = vmatpush1.xpose.msra.mxu0 0.0
        %1806 = vmatprep.subr.mxu0 0.0
        %1807 = vmatpush1.xpose.msra.mxu0 0.0
        %1808 = vmatprep.subr.mxu0 0.0
        %1809 = vmatpush1.xpose.msra.mxu0 0.0
        %1810 = vmatprep.subr.mxu0 0.0
        %1811 = vmatpush1.xpose.msra.mxu0 0.0
        %1812 = vmatprep.subr.mxu0 0.0
        %1813 = vmatpush1.xpose.msra.mxu0 0.0
        %1814 = vmatprep.subr.mxu0 0.0
        %1815 = vmatpush1.xpose.msra.mxu0 0.0
        %1816 = vmatprep.mubr.f32.mxu0 0.0
        %v1817 = vand.u32 %v1226, 4294901760
        %v1818 = vsub.f32 %v1226, %v1817
        %v1819 = vand.u32 %v1818, 4294901760
        %v1820 = vsub.f32 %v1818, %v1819
        %v1821 = vand.u32 %v1820, 4294901760
        %1822 = vmatmul.mubr.f32.gmra.mrb[0].mxu0 %v1821
        %v1823 = vpop.f32.mrb[0].mxu0
        %v1824 = vadd.f32 %v1734, %v1823
        %v1825 = vpop.f32.mrb[0].mxu0
        %1826 = vdwg.mxu0
        %1827 = vmatprep.subr.mxu0 0.0
        %v1828 = vand.u32 %v1737, 4294901760
        %v1829 = vsub.f32 %v1737, %v1828
        %v1830 = vand.u32 %v1829, 4294901760
        %v1831 = vsub.f32 %v1829, %v1830
        %v1832 = vand.u32 %v1831, 4294901760
        %1833 = vmatpush1.xpose.msra.mxu0 %v1832
        %1834 = vmatprep.subr.mxu0 0.0
        %v1835 = vand.u32 %v1740, 4294901760
        %v1836 = vsub.f32 %v1740, %v1835
        %v1837 = vand.u32 %v1836, 4294901760
        %v1838 = vsub.f32 %v1836, %v1837
        %v1839 = vand.u32 %v1838, 4294901760
        %1840 = vmatpush1.xpose.msra.mxu0 %v1839
        %1841 = vmatprep.subr.mxu0 0.0
        %v1842 = vand.u32 %v1743, 4294901760
        %v1843 = vsub.f32 %v1743, %v1842
        %v1844 = vand.u32 %v1843, 4294901760
        %v1845 = vsub.f32 %v1843, %v1844
        %v1846 = vand.u32 %v1845, 4294901760
        %1847 = vmatpush1.xpose.msra.mxu0 %v1846
        %1848 = vmatprep.subr.mxu0 0.0
        %v1849 = vand.u32 %v1746, 4294901760
        %v1850 = vsub.f32 %v1746, %v1849
        %v1851 = vand.u32 %v1850, 4294901760
        %v1852 = vsub.f32 %v1850, %v1851
        %v1853 = vand.u32 %v1852, 4294901760
        %1854 = vmatpush1.xpose.msra.mxu0 %v1853
        %1855 = vmatprep.subr.mxu0 0.0
        %1856 = vmatpush1.xpose.msra.mxu0 0.0
        %1857 = vmatprep.subr.mxu0 0.0
        %1858 = vmatpush1.xpose.msra.mxu0 0.0
        %1859 = vmatprep.subr.mxu0 0.0
        %1860 = vmatpush1.xpose.msra.mxu0 0.0
        %1861 = vmatprep.subr.mxu0 0.0
        %1862 = vmatpush1.xpose.msra.mxu0 0.0
        %1863 = vmatprep.subr.mxu0 0.0
        %1864 = vmatpush1.xpose.msra.mxu0 0.0
        %1865 = vmatprep.subr.mxu0 0.0
        %1866 = vmatpush1.xpose.msra.mxu0 0.0
        %1867 = vmatprep.subr.mxu0 0.0
        %1868 = vmatpush1.xpose.msra.mxu0 0.0
        %1869 = vmatprep.subr.mxu0 0.0
        %1870 = vmatpush1.xpose.msra.mxu0 0.0
        %1871 = vmatprep.subr.mxu0 0.0
        %1872 = vmatpush1.xpose.msra.mxu0 0.0
        %1873 = vmatprep.subr.mxu0 0.0
        %1874 = vmatpush1.xpose.msra.mxu0 0.0
        %1875 = vmatprep.subr.mxu0 0.0
        %1876 = vmatpush1.xpose.msra.mxu0 0.0
        %1877 = vmatprep.subr.mxu0 0.0
        %1878 = vmatpush1.xpose.msra.mxu0 0.0
        %1879 = vmatprep.subr.mxu0 0.0
        %1880 = vmatpush1.xpose.msra.mxu0 0.0
        %1881 = vmatprep.subr.mxu0 0.0
        %1882 = vmatpush1.xpose.msra.mxu0 0.0
        %1883 = vmatprep.subr.mxu0 0.0
        %1884 = vmatpush1.xpose.msra.mxu0 0.0
        %1885 = vmatprep.subr.mxu0 0.0
        %1886 = vmatpush1.xpose.msra.mxu0 0.0
        %1887 = vmatprep.subr.mxu0 0.0
        %1888 = vmatpush1.xpose.msra.mxu0 0.0
        %1889 = vmatprep.subr.mxu0 0.0
        %1890 = vmatpush1.xpose.msra.mxu0 0.0
        %1891 = vmatprep.subr.mxu0 0.0
        %1892 = vmatpush1.xpose.msra.mxu0 0.0
        %1893 = vmatprep.subr.mxu0 0.0
        %1894 = vmatpush1.xpose.msra.mxu0 0.0
        %1895 = vmatprep.subr.mxu0 0.0
        %1896 = vmatpush1.xpose.msra.mxu0 0.0
        %1897 = vmatprep.subr.mxu0 0.0
        %1898 = vmatpush1.xpose.msra.mxu0 0.0
        %1899 = vmatprep.subr.mxu0 0.0
        %1900 = vmatpush1.xpose.msra.mxu0 0.0
        %1901 = vmatprep.subr.mxu0 0.0
        %1902 = vmatpush1.xpose.msra.mxu0 0.0
        %1903 = vmatprep.subr.mxu0 0.0
        %1904 = vmatpush1.xpose.msra.mxu0 0.0
        %1905 = vmatprep.subr.mxu0 0.0
        %1906 = vmatpush1.xpose.msra.mxu0 0.0
        %1907 = vmatprep.subr.mxu0 0.0
        %1908 = vmatpush1.xpose.msra.mxu0 0.0
        %1909 = vmatprep.subr.mxu0 0.0
        %1910 = vmatpush1.xpose.msra.mxu0 0.0
        %1911 = vmatprep.mubr.f32.mxu0 0.0
        %v1912 = vand.u32 %v1226, 4294901760
        %1913 = vmatmul.mubr.f32.gmra.mrb[0].mxu0 %v1912
        %v1914 = vpop.f32.mrb[0].mxu0
        %v1915 = vadd.f32 %v1824, %v1914
        %v1916 = vpop.f32.mrb[0].mxu0
        %1917 = vdwg.mxu0
        %1918 = vmatprep.subr.mxu0 0.0
        %v1919 = vand.u32 %v1737, 4294901760
        %v1920 = vsub.f32 %v1737, %v1919
        %1921 = vmatpush1.xpose.msra.mxu0 %v1920
        %1922 = vmatprep.subr.mxu0 0.0
        %v1923 = vand.u32 %v1740, 4294901760
        %v1924 = vsub.f32 %v1740, %v1923
        %1925 = vmatpush1.xpose.msra.mxu0 %v1924
        %1926 = vmatprep.subr.mxu0 0.0
        %v1927 = vand.u32 %v1743, 4294901760
        %v1928 = vsub.f32 %v1743, %v1927
        %1929 = vmatpush1.xpose.msra.mxu0 %v1928
        %1930 = vmatprep.subr.mxu0 0.0
        %v1931 = vand.u32 %v1746, 4294901760
        %v1932 = vsub.f32 %v1746, %v1931
        %1933 = vmatpush1.xpose.msra.mxu0 %v1932
        %1934 = vmatprep.subr.mxu0 0.0
        %1935 = vmatpush1.xpose.msra.mxu0 0.0
        %1936 = vmatprep.subr.mxu0 0.0
        %1937 = vmatpush1.xpose.msra.mxu0 0.0
        %1938 = vmatprep.subr.mxu0 0.0
        %1939 = vmatpush1.xpose.msra.mxu0 0.0
        %1940 = vmatprep.subr.mxu0 0.0
        %1941 = vmatpush1.xpose.msra.mxu0 0.0
        %1942 = vmatprep.subr.mxu0 0.0
        %1943 = vmatpush1.xpose.msra.mxu0 0.0
        %1944 = vmatprep.subr.mxu0 0.0
        %1945 = vmatpush1.xpose.msra.mxu0 0.0
        %1946 = vmatprep.subr.mxu0 0.0
        %1947 = vmatpush1.xpose.msra.mxu0 0.0
        %1948 = vmatprep.subr.mxu0 0.0
        %1949 = vmatpush1.xpose.msra.mxu0 0.0
        %1950 = vmatprep.subr.mxu0 0.0
        %1951 = vmatpush1.xpose.msra.mxu0 0.0
        %1952 = vmatprep.subr.mxu0 0.0
        %1953 = vmatpush1.xpose.msra.mxu0 0.0
        %1954 = vmatprep.subr.mxu0 0.0
        %1955 = vmatpush1.xpose.msra.mxu0 0.0
        %1956 = vmatprep.subr.mxu0 0.0
        %1957 = vmatpush1.xpose.msra.mxu0 0.0
        %1958 = vmatprep.subr.mxu0 0.0
        %1959 = vmatpush1.xpose.msra.mxu0 0.0
        %1960 = vmatprep.subr.mxu0 0.0
        %1961 = vmatpush1.xpose.msra.mxu0 0.0
        %1962 = vmatprep.subr.mxu0 0.0
        %1963 = vmatpush1.xpose.msra.mxu0 0.0
        %1964 = vmatprep.subr.mxu0 0.0
        %1965 = vmatpush1.xpose.msra.mxu0 0.0
        %1966 = vmatprep.subr.mxu0 0.0
        %1967 = vmatpush1.xpose.msra.mxu0 0.0
        %1968 = vmatprep.subr.mxu0 0.0
        %1969 = vmatpush1.xpose.msra.mxu0 0.0
        %1970 = vmatprep.subr.mxu0 0.0
        %1971 = vmatpush1.xpose.msra.mxu0 0.0
        %1972 = vmatprep.subr.mxu0 0.0
        %1973 = vmatpush1.xpose.msra.mxu0 0.0
        %1974 = vmatprep.subr.mxu0 0.0
        %1975 = vmatpush1.xpose.msra.mxu0 0.0
        %1976 = vmatprep.subr.mxu0 0.0
        %1977 = vmatpush1.xpose.msra.mxu0 0.0
        %1978 = vmatprep.subr.mxu0 0.0
        %1979 = vmatpush1.xpose.msra.mxu0 0.0
        %1980 = vmatprep.subr.mxu0 0.0
        %1981 = vmatpush1.xpose.msra.mxu0 0.0
        %1982 = vmatprep.subr.mxu0 0.0
        %1983 = vmatpush1.xpose.msra.mxu0 0.0
        %1984 = vmatprep.subr.mxu0 0.0
        %1985 = vmatpush1.xpose.msra.mxu0 0.0
        %1986 = vmatprep.subr.mxu0 0.0
        %1987 = vmatpush1.xpose.msra.mxu0 0.0
        %1988 = vmatprep.subr.mxu0 0.0
        %1989 = vmatpush1.xpose.msra.mxu0 0.0
        %1990 = vmatprep.mubr.f32.mxu0 0.0
        %v1991 = vand.u32 %v1226, 4294901760
        %v1992 = vsub.f32 %v1226, %v1991
        %1993 = vmatmul.mubr.f32.gmra.mrb[0].mxu0 %v1992
        %v1994 = vpop.f32.mrb[0].mxu0
        %v1995 = vadd.f32 %v1915, %v1994
        %v1996 = vpop.f32.mrb[0].mxu0
        %1997 = vdwg.mxu0
        %1998 = vmatprep.subr.mxu0 0.0
        %v1999 = vand.u32 %v1737, 4294901760
        %2000 = vmatpush1.xpose.msra.mxu0 %v1999
        %2001 = vmatprep.subr.mxu0 0.0
        %v2002 = vand.u32 %v1740, 4294901760
        %2003 = vmatpush1.xpose.msra.mxu0 %v2002
        %2004 = vmatprep.subr.mxu0 0.0
        %v2005 = vand.u32 %v1743, 4294901760
        %2006 = vmatpush1.xpose.msra.mxu0 %v2005
        %2007 = vmatprep.subr.mxu0 0.0
        %v2008 = vand.u32 %v1746, 4294901760
        %2009 = vmatpush1.xpose.msra.mxu0 %v2008
        %2010 = vmatprep.subr.mxu0 0.0
        %2011 = vmatpush1.xpose.msra.mxu0 0.0
        %2012 = vmatprep.subr.mxu0 0.0
        %2013 = vmatpush1.xpose.msra.mxu0 0.0
        %2014 = vmatprep.subr.mxu0 0.0
        %2015 = vmatpush1.xpose.msra.mxu0 0.0
        %2016 = vmatprep.subr.mxu0 0.0
        %2017 = vmatpush1.xpose.msra.mxu0 0.0
        %2018 = vmatprep.subr.mxu0 0.0
        %2019 = vmatpush1.xpose.msra.mxu0 0.0
        %2020 = vmatprep.subr.mxu0 0.0
        %2021 = vmatpush1.xpose.msra.mxu0 0.0
        %2022 = vmatprep.subr.mxu0 0.0
        %2023 = vmatpush1.xpose.msra.mxu0 0.0
        %2024 = vmatprep.subr.mxu0 0.0
        %2025 = vmatpush1.xpose.msra.mxu0 0.0
        %2026 = vmatprep.subr.mxu0 0.0
        %2027 = vmatpush1.xpose.msra.mxu0 0.0
        %2028 = vmatprep.subr.mxu0 0.0
        %2029 = vmatpush1.xpose.msra.mxu0 0.0
        %2030 = vmatprep.subr.mxu0 0.0
        %2031 = vmatpush1.xpose.msra.mxu0 0.0
        %2032 = vmatprep.subr.mxu0 0.0
        %2033 = vmatpush1.xpose.msra.mxu0 0.0
        %2034 = vmatprep.subr.mxu0 0.0
        %2035 = vmatpush1.xpose.msra.mxu0 0.0
        %2036 = vmatprep.subr.mxu0 0.0
        %2037 = vmatpush1.xpose.msra.mxu0 0.0
        %2038 = vmatprep.subr.mxu0 0.0
        %2039 = vmatpush1.xpose.msra.mxu0 0.0
        %2040 = vmatprep.subr.mxu0 0.0
        %2041 = vmatpush1.xpose.msra.mxu0 0.0
        %2042 = vmatprep.subr.mxu0 0.0
        %2043 = vmatpush1.xpose.msra.mxu0 0.0
        %2044 = vmatprep.subr.mxu0 0.0
        %2045 = vmatpush1.xpose.msra.mxu0 0.0
        %2046 = vmatprep.subr.mxu0 0.0
        %2047 = vmatpush1.xpose.msra.mxu0 0.0
        %2048 = vmatprep.subr.mxu0 0.0
        %2049 = vmatpush1.xpose.msra.mxu0 0.0
        %2050 = vmatprep.subr.mxu0 0.0
        %2051 = vmatpush1.xpose.msra.mxu0 0.0
        %2052 = vmatprep.subr.mxu0 0.0
        %2053 = vmatpush1.xpose.msra.mxu0 0.0
        %2054 = vmatprep.subr.mxu0 0.0
        %2055 = vmatpush1.xpose.msra.mxu0 0.0
        %2056 = vmatprep.subr.mxu0 0.0
        %2057 = vmatpush1.xpose.msra.mxu0 0.0
        %2058 = vmatprep.subr.mxu0 0.0
        %2059 = vmatpush1.xpose.msra.mxu0 0.0
        %2060 = vmatprep.subr.mxu0 0.0
        %2061 = vmatpush1.xpose.msra.mxu0 0.0
        %2062 = vmatprep.subr.mxu0 0.0
        %2063 = vmatpush1.xpose.msra.mxu0 0.0
        %2064 = vmatprep.subr.mxu0 0.0
        %2065 = vmatpush1.xpose.msra.mxu0 0.0
        %2066 = vmatprep.mubr.f32.mxu0 0.0
        %v2067 = vand.u32 %v1226, 4294901760
        %v2068 = vsub.f32 %v1226, %v2067
        %v2069 = vand.u32 %v2068, 4294901760
        %2070 = vmatmul.mubr.f32.gmra.mrb[0].mxu0 %v2069
        %v2071 = vpop.f32.mrb[0].mxu0
        %v2072 = vadd.f32 %v1995, %v2071
        %v2073 = vpop.f32.mrb[0].mxu0
        %2074 = vdwg.mxu0
        %2075 = vmatprep.subr.mxu0 0.0
        %v2076 = vand.u32 %v1737, 4294901760
        %v2077 = vsub.f32 %v1737, %v2076
        %v2078 = vand.u32 %v2077, 4294901760
        %2079 = vmatpush1.xpose.msra.mxu0 %v2078
        %2080 = vmatprep.subr.mxu0 0.0
        %v2081 = vand.u32 %v1740, 4294901760
        %v2082 = vsub.f32 %v1740, %v2081
        %v2083 = vand.u32 %v2082, 4294901760
        %2084 = vmatpush1.xpose.msra.mxu0 %v2083
        %2085 = vmatprep.subr.mxu0 0.0
        %v2086 = vand.u32 %v1743, 4294901760
        %v2087 = vsub.f32 %v1743, %v2086
        %v2088 = vand.u32 %v2087, 4294901760
        %2089 = vmatpush1.xpose.msra.mxu0 %v2088
        %2090 = vmatprep.subr.mxu0 0.0
        %v2091 = vand.u32 %v1746, 4294901760
        %v2092 = vsub.f32 %v1746, %v2091
        %v2093 = vand.u32 %v2092, 4294901760
        %2094 = vmatpush1.xpose.msra.mxu0 %v2093
        %2095 = vmatprep.subr.mxu0 0.0
        %2096 = vmatpush1.xpose.msra.mxu0 0.0
        %2097 = vmatprep.subr.mxu0 0.0
        %2098 = vmatpush1.xpose.msra.mxu0 0.0
        %2099 = vmatprep.subr.mxu0 0.0
        %2100 = vmatpush1.xpose.msra.mxu0 0.0
        %2101 = vmatprep.subr.mxu0 0.0
        %2102 = vmatpush1.xpose.msra.mxu0 0.0
        %2103 = vmatprep.subr.mxu0 0.0
        %2104 = vmatpush1.xpose.msra.mxu0 0.0
        %2105 = vmatprep.subr.mxu0 0.0
        %2106 = vmatpush1.xpose.msra.mxu0 0.0
        %2107 = vmatprep.subr.mxu0 0.0
        %2108 = vmatpush1.xpose.msra.mxu0 0.0
        %2109 = vmatprep.subr.mxu0 0.0
        %2110 = vmatpush1.xpose.msra.mxu0 0.0
        %2111 = vmatprep.subr.mxu0 0.0
        %2112 = vmatpush1.xpose.msra.mxu0 0.0
        %2113 = vmatprep.subr.mxu0 0.0
        %2114 = vmatpush1.xpose.msra.mxu0 0.0
        %2115 = vmatprep.subr.mxu0 0.0
        %2116 = vmatpush1.xpose.msra.mxu0 0.0
        %2117 = vmatprep.subr.mxu0 0.0
        %2118 = vmatpush1.xpose.msra.mxu0 0.0
        %2119 = vmatprep.subr.mxu0 0.0
        %2120 = vmatpush1.xpose.msra.mxu0 0.0
        %2121 = vmatprep.subr.mxu0 0.0
        %2122 = vmatpush1.xpose.msra.mxu0 0.0
        %2123 = vmatprep.subr.mxu0 0.0
        %2124 = vmatpush1.xpose.msra.mxu0 0.0
        %2125 = vmatprep.subr.mxu0 0.0
        %2126 = vmatpush1.xpose.msra.mxu0 0.0
        %2127 = vmatprep.subr.mxu0 0.0
        %2128 = vmatpush1.xpose.msra.mxu0 0.0
        %2129 = vmatprep.subr.mxu0 0.0
        %2130 = vmatpush1.xpose.msra.mxu0 0.0
        %2131 = vmatprep.subr.mxu0 0.0
        %2132 = vmatpush1.xpose.msra.mxu0 0.0
        %2133 = vmatprep.subr.mxu0 0.0
        %2134 = vmatpush1.xpose.msra.mxu0 0.0
        %2135 = vmatprep.subr.mxu0 0.0
        %2136 = vmatpush1.xpose.msra.mxu0 0.0
        %2137 = vmatprep.subr.mxu0 0.0
        %2138 = vmatpush1.xpose.msra.mxu0 0.0
        %2139 = vmatprep.subr.mxu0 0.0
        %2140 = vmatpush1.xpose.msra.mxu0 0.0
        %2141 = vmatprep.subr.mxu0 0.0
        %2142 = vmatpush1.xpose.msra.mxu0 0.0
        %2143 = vmatprep.subr.mxu0 0.0
        %2144 = vmatpush1.xpose.msra.mxu0 0.0
        %2145 = vmatprep.subr.mxu0 0.0
        %2146 = vmatpush1.xpose.msra.mxu0 0.0
        %2147 = vmatprep.subr.mxu0 0.0
        %2148 = vmatpush1.xpose.msra.mxu0 0.0
        %2149 = vmatprep.subr.mxu0 0.0
        %2150 = vmatpush1.xpose.msra.mxu0 0.0
        %2151 = vmatprep.mubr.f32.mxu0 0.0
        %v2152 = vand.u32 %v1226, 4294901760
        %2153 = vmatmul.mubr.f32.gmra.mrb[0].mxu0 %v2152
        %v2154 = vpop.f32.mrb[0].mxu0
        %v2155 = vadd.f32 %v2072, %v2154
        %v2156 = vpop.f32.mrb[0].mxu0
        %2157 = vdwg.mxu0
        %2158 = vmatprep.subr.mxu0 0.0
        %v2159 = vand.u32 %v1737, 4294901760
        %2160 = vmatpush1.xpose.msra.mxu0 %v2159
        %2161 = vmatprep.subr.mxu0 0.0
        %v2162 = vand.u32 %v1740, 4294901760
        %2163 = vmatpush1.xpose.msra.mxu0 %v2162
        %2164 = vmatprep.subr.mxu0 0.0
        %v2165 = vand.u32 %v1743, 4294901760
        %2166 = vmatpush1.xpose.msra.mxu0 %v2165
        %2167 = vmatprep.subr.mxu0 0.0
        %v2168 = vand.u32 %v1746, 4294901760
        %2169 = vmatpush1.xpose.msra.mxu0 %v2168
        %2170 = vmatprep.subr.mxu0 0.0
        %2171 = vmatpush1.xpose.msra.mxu0 0.0
        %2172 = vmatprep.subr.mxu0 0.0
        %2173 = vmatpush1.xpose.msra.mxu0 0.0
        %2174 = vmatprep.subr.mxu0 0.0
        %2175 = vmatpush1.xpose.msra.mxu0 0.0
        %2176 = vmatprep.subr.mxu0 0.0
        %2177 = vmatpush1.xpose.msra.mxu0 0.0
        %2178 = vmatprep.subr.mxu0 0.0
        %2179 = vmatpush1.xpose.msra.mxu0 0.0
        %2180 = vmatprep.subr.mxu0 0.0
        %2181 = vmatpush1.xpose.msra.mxu0 0.0
        %2182 = vmatprep.subr.mxu0 0.0
        %2183 = vmatpush1.xpose.msra.mxu0 0.0
        %2184 = vmatprep.subr.mxu0 0.0
        %2185 = vmatpush1.xpose.msra.mxu0 0.0
        %2186 = vmatprep.subr.mxu0 0.0
        %2187 = vmatpush1.xpose.msra.mxu0 0.0
        %2188 = vmatprep.subr.mxu0 0.0
        %2189 = vmatpush1.xpose.msra.mxu0 0.0
        %2190 = vmatprep.subr.mxu0 0.0
        %2191 = vmatpush1.xpose.msra.mxu0 0.0
        %2192 = vmatprep.subr.mxu0 0.0
        %2193 = vmatpush1.xpose.msra.mxu0 0.0
        %2194 = vmatprep.subr.mxu0 0.0
        %2195 = vmatpush1.xpose.msra.mxu0 0.0
        %2196 = vmatprep.subr.mxu0 0.0
        %2197 = vmatpush1.xpose.msra.mxu0 0.0
        %2198 = vmatprep.subr.mxu0 0.0
        %2199 = vmatpush1.xpose.msra.mxu0 0.0
        %2200 = vmatprep.subr.mxu0 0.0
        %2201 = vmatpush1.xpose.msra.mxu0 0.0
        %2202 = vmatprep.subr.mxu0 0.0
        %2203 = vmatpush1.xpose.msra.mxu0 0.0
        %2204 = vmatprep.subr.mxu0 0.0
        %2205 = vmatpush1.xpose.msra.mxu0 0.0
        %2206 = vmatprep.subr.mxu0 0.0
        %2207 = vmatpush1.xpose.msra.mxu0 0.0
        %2208 = vmatprep.subr.mxu0 0.0
        %2209 = vmatpush1.xpose.msra.mxu0 0.0
        %2210 = vmatprep.subr.mxu0 0.0
        %2211 = vmatpush1.xpose.msra.mxu0 0.0
        %2212 = vmatprep.subr.mxu0 0.0
        %2213 = vmatpush1.xpose.msra.mxu0 0.0
        %2214 = vmatprep.subr.mxu0 0.0
        %2215 = vmatpush1.xpose.msra.mxu0 0.0
        %2216 = vmatprep.subr.mxu0 0.0
        %2217 = vmatpush1.xpose.msra.mxu0 0.0
        %2218 = vmatprep.subr.mxu0 0.0
        %2219 = vmatpush1.xpose.msra.mxu0 0.0
        %2220 = vmatprep.subr.mxu0 0.0
        %2221 = vmatpush1.xpose.msra.mxu0 0.0
        %2222 = vmatprep.subr.mxu0 0.0
        %2223 = vmatpush1.xpose.msra.mxu0 0.0
        %2224 = vmatprep.subr.mxu0 0.0
        %2225 = vmatpush1.xpose.msra.mxu0 0.0
        %2226 = vmatprep.mubr.f32.mxu0 0.0
        %v2227 = vand.u32 %v1226, 4294901760
        %2228 = vmatmul.mubr.f32.gmra.mrb[0].mxu0 %v2227
        %v2229 = vpop.f32.mrb[0].mxu0
        %v2230 = vadd.f32 %v2155, %v2229
        %v2231 = vpop.f32.mrb[0].mxu0
        %2232 = vdwg.mxu0
        %v2233 = vlaneseq
        %v2234 = vshrl.u32 %v2233, 7
        %v2235 = vlaneseq
        %v2236 = vand.u32 %v2235, 127
        %vm2237 = vcmp.le.s32.totalorder %v2236, %v2234
        %vm2238 = vcmask 64512
        %v2240 = vsel %vm2238, %v1211, 0
        %v2243 = vsel %vm2238, %v1722, 0
        %2245 = vmatprep.subr.mxu0 0.0
        %v2246 = vand.u32 %v2243, 4294901760
        %2247 = vmatpush1.xpose.msra.mxu0 %v2246
        %2248 = vmatprep.subr.mxu0 0.0
        %2249 = vmatpush1.xpose.msra.mxu0 0.0
        %2250 = vmatprep.subr.mxu0 0.0
        %2251 = vmatpush1.xpose.msra.mxu0 0.0
        %2252 = vmatprep.subr.mxu0 0.0
        %2253 = vmatpush1.xpose.msra.mxu0 0.0
        %2254 = vmatprep.subr.mxu0 0.0
        %2255 = vmatpush1.xpose.msra.mxu0 0.0
        %2256 = vmatprep.subr.mxu0 0.0
        %2257 = vmatpush1.xpose.msra.mxu0 0.0
        %2258 = vmatprep.subr.mxu0 0.0
        %2259 = vmatpush1.xpose.msra.mxu0 0.0
        %2260 = vmatprep.subr.mxu0 0.0
        %2261 = vmatpush1.xpose.msra.mxu0 0.0
        %2262 = vmatprep.subr.mxu0 0.0
        %2263 = vmatpush1.xpose.msra.mxu0 0.0
        %2264 = vmatprep.subr.mxu0 0.0
        %2265 = vmatpush1.xpose.msra.mxu0 0.0
        %2266 = vmatprep.subr.mxu0 0.0
        %2267 = vmatpush1.xpose.msra.mxu0 0.0
        %2268 = vmatprep.subr.mxu0 0.0
        %2269 = vmatpush1.xpose.msra.mxu0 0.0
        %2270 = vmatprep.subr.mxu0 0.0
        %2271 = vmatpush1.xpose.msra.mxu0 0.0
        %2272 = vmatprep.subr.mxu0 0.0
        %2273 = vmatpush1.xpose.msra.mxu0 0.0
        %2274 = vmatprep.subr.mxu0 0.0
        %2275 = vmatpush1.xpose.msra.mxu0 0.0
        %2276 = vmatprep.subr.mxu0 0.0
        %2277 = vmatpush1.xpose.msra.mxu0 0.0
        %2278 = vmatprep.subr.mxu0 0.0
        %2279 = vmatpush1.xpose.msra.mxu0 0.0
        %2280 = vmatprep.subr.mxu0 0.0
        %2281 = vmatpush1.xpose.msra.mxu0 0.0
        %2282 = vmatprep.subr.mxu0 0.0
        %2283 = vmatpush1.xpose.msra.mxu0 0.0
        %2284 = vmatprep.subr.mxu0 0.0
        %2285 = vmatpush1.xpose.msra.mxu0 0.0
        %2286 = vmatprep.subr.mxu0 0.0
        %2287 = vmatpush1.xpose.msra.mxu0 0.0
        %2288 = vmatprep.subr.mxu0 0.0
        %2289 = vmatpush1.xpose.msra.mxu0 0.0
        %2290 = vmatprep.subr.mxu0 0.0
        %2291 = vmatpush1.xpose.msra.mxu0 0.0
        %2292 = vmatprep.subr.mxu0 0.0
        %2293 = vmatpush1.xpose.msra.mxu0 0.0
        %2294 = vmatprep.subr.mxu0 0.0
        %2295 = vmatpush1.xpose.msra.mxu0 0.0
        %2296 = vmatprep.subr.mxu0 0.0
        %2297 = vmatpush1.xpose.msra.mxu0 0.0
        %2298 = vmatprep.subr.mxu0 0.0
        %2299 = vmatpush1.xpose.msra.mxu0 0.0
        %2300 = vmatprep.subr.mxu0 0.0
        %2301 = vmatpush1.xpose.msra.mxu0 0.0
        %2302 = vmatprep.subr.mxu0 0.0
        %2303 = vmatpush1.xpose.msra.mxu0 0.0
        %2304 = vmatprep.subr.mxu0 0.0
        %2305 = vmatpush1.xpose.msra.mxu0 0.0
        %2306 = vmatprep.subr.mxu0 0.0
        %2307 = vmatpush1.xpose.msra.mxu0 0.0
        %2308 = vmatprep.subr.mxu0 0.0
        %2309 = vmatpush1.xpose.msra.mxu0 0.0
        %2310 = vmatprep.mubr.f32.mxu0 0.0
        %v2311 = vand.u32 %v2240, 4294901760
        %v2312 = vsub.f32 %v2240, %v2311
        %v2313 = vand.u32 %v2312, 4294901760
        %v2314 = vsub.f32 %v2312, %v2313
        %v2315 = vand.u32 %v2314, 4294901760
        %2316 = vmatmul.mubr.f32.gmra.mrb[0].mxu0 %v2315
        %v2317 = vpop.f32.mrb[0].mxu0
        %v2318 = vadd.f32 0.0, %v2317
        %v2319 = vpop.f32.mrb[0].mxu0
        %2320 = vdwg.mxu0
        %2321 = vmatprep.subr.mxu0 0.0
        %v2322 = vand.u32 %v2243, 4294901760
        %v2323 = vsub.f32 %v2243, %v2322
        %v2324 = vand.u32 %v2323, 4294901760
        %v2325 = vsub.f32 %v2323, %v2324
        %v2326 = vand.u32 %v2325, 4294901760
        %2327 = vmatpush1.xpose.msra.mxu0 %v2326
        %2328 = vmatprep.subr.mxu0 0.0
        %2329 = vmatpush1.xpose.msra.mxu0 0.0
        %2330 = vmatprep.subr.mxu0 0.0
        %2331 = vmatpush1.xpose.msra.mxu0 0.0
        %2332 = vmatprep.subr.mxu0 0.0
        %2333 = vmatpush1.xpose.msra.mxu0 0.0
        %2334 = vmatprep.subr.mxu0 0.0
        %2335 = vmatpush1.xpose.msra.mxu0 0.0
        %2336 = vmatprep.subr.mxu0 0.0
        %2337 = vmatpush1.xpose.msra.mxu0 0.0
        %2338 = vmatprep.subr.mxu0 0.0
        %2339 = vmatpush1.xpose.msra.mxu0 0.0
        %2340 = vmatprep.subr.mxu0 0.0
        %2341 = vmatpush1.xpose.msra.mxu0 0.0
        %2342 = vmatprep.subr.mxu0 0.0
        %2343 = vmatpush1.xpose.msra.mxu0 0.0
        %2344 = vmatprep.subr.mxu0 0.0
        %2345 = vmatpush1.xpose.msra.mxu0 0.0
        %2346 = vmatprep.subr.mxu0 0.0
        %2347 = vmatpush1.xpose.msra.mxu0 0.0
        %2348 = vmatprep.subr.mxu0 0.0
        %2349 = vmatpush1.xpose.msra.mxu0 0.0
        %2350 = vmatprep.subr.mxu0 0.0
        %2351 = vmatpush1.xpose.msra.mxu0 0.0
        %2352 = vmatprep.subr.mxu0 0.0
        %2353 = vmatpush1.xpose.msra.mxu0 0.0
        %2354 = vmatprep.subr.mxu0 0.0
        %2355 = vmatpush1.xpose.msra.mxu0 0.0
        %2356 = vmatprep.subr.mxu0 0.0
        %2357 = vmatpush1.xpose.msra.mxu0 0.0
        %2358 = vmatprep.subr.mxu0 0.0
        %2359 = vmatpush1.xpose.msra.mxu0 0.0
        %2360 = vmatprep.subr.mxu0 0.0
        %2361 = vmatpush1.xpose.msra.mxu0 0.0
        %2362 = vmatprep.subr.mxu0 0.0
        %2363 = vmatpush1.xpose.msra.mxu0 0.0
        %2364 = vmatprep.subr.mxu0 0.0
        %2365 = vmatpush1.xpose.msra.mxu0 0.0
        %2366 = vmatprep.subr.mxu0 0.0
        %2367 = vmatpush1.xpose.msra.mxu0 0.0
        %2368 = vmatprep.subr.mxu0 0.0
        %2369 = vmatpush1.xpose.msra.mxu0 0.0
        %2370 = vmatprep.subr.mxu0 0.0
        %2371 = vmatpush1.xpose.msra.mxu0 0.0
        %2372 = vmatprep.subr.mxu0 0.0
        %2373 = vmatpush1.xpose.msra.mxu0 0.0
        %2374 = vmatprep.subr.mxu0 0.0
        %2375 = vmatpush1.xpose.msra.mxu0 0.0
        %2376 = vmatprep.subr.mxu0 0.0
        %2377 = vmatpush1.xpose.msra.mxu0 0.0
        %2378 = vmatprep.subr.mxu0 0.0
        %2379 = vmatpush1.xpose.msra.mxu0 0.0
        %2380 = vmatprep.subr.mxu0 0.0
        %2381 = vmatpush1.xpose.msra.mxu0 0.0
        %2382 = vmatprep.subr.mxu0 0.0
        %2383 = vmatpush1.xpose.msra.mxu0 0.0
        %2384 = vmatprep.subr.mxu0 0.0
        %2385 = vmatpush1.xpose.msra.mxu0 0.0
        %2386 = vmatprep.subr.mxu0 0.0
        %2387 = vmatpush1.xpose.msra.mxu0 0.0
        %2388 = vmatprep.subr.mxu0 0.0
        %2389 = vmatpush1.xpose.msra.mxu0 0.0
        %2390 = vmatprep.mubr.f32.mxu0 0.0
        %v2391 = vand.u32 %v2240, 4294901760
        %2392 = vmatmul.mubr.f32.gmra.mrb[0].mxu0 %v2391
        %v2393 = vpop.f32.mrb[0].mxu0
        %v2394 = vadd.f32 %v2318, %v2393
        %v2395 = vpop.f32.mrb[0].mxu0
        %2396 = vdwg.mxu0
        %2397 = vmatprep.subr.mxu0 0.0
        %v2398 = vand.u32 %v2243, 4294901760
        %v2399 = vsub.f32 %v2243, %v2398
        %2400 = vmatpush1.xpose.msra.mxu0 %v2399
        %2401 = vmatprep.subr.mxu0 0.0
        %2402 = vmatpush1.xpose.msra.mxu0 0.0
        %2403 = vmatprep.subr.mxu0 0.0
        %2404 = vmatpush1.xpose.msra.mxu0 0.0
        %2405 = vmatprep.subr.mxu0 0.0
        %2406 = vmatpush1.xpose.msra.mxu0 0.0
        %2407 = vmatprep.subr.mxu0 0.0
        %2408 = vmatpush1.xpose.msra.mxu0 0.0
        %2409 = vmatprep.subr.mxu0 0.0
        %2410 = vmatpush1.xpose.msra.mxu0 0.0
        %2411 = vmatprep.subr.mxu0 0.0
        %2412 = vmatpush1.xpose.msra.mxu0 0.0
        %2413 = vmatprep.subr.mxu0 0.0
        %2414 = vmatpush1.xpose.msra.mxu0 0.0
        %2415 = vmatprep.subr.mxu0 0.0
        %2416 = vmatpush1.xpose.msra.mxu0 0.0
        %2417 = vmatprep.subr.mxu0 0.0
        %2418 = vmatpush1.xpose.msra.mxu0 0.0
        %2419 = vmatprep.subr.mxu0 0.0
        %2420 = vmatpush1.xpose.msra.mxu0 0.0
        %2421 = vmatprep.subr.mxu0 0.0
        %2422 = vmatpush1.xpose.msra.mxu0 0.0
        %2423 = vmatprep.subr.mxu0 0.0
        %2424 = vmatpush1.xpose.msra.mxu0 0.0
        %2425 = vmatprep.subr.mxu0 0.0
        %2426 = vmatpush1.xpose.msra.mxu0 0.0
        %2427 = vmatprep.subr.mxu0 0.0
        %2428 = vmatpush1.xpose.msra.mxu0 0.0
        %2429 = vmatprep.subr.mxu0 0.0
        %2430 = vmatpush1.xpose.msra.mxu0 0.0
        %2431 = vmatprep.subr.mxu0 0.0
        %2432 = vmatpush1.xpose.msra.mxu0 0.0
        %2433 = vmatprep.subr.mxu0 0.0
        %2434 = vmatpush1.xpose.msra.mxu0 0.0
        %2435 = vmatprep.subr.mxu0 0.0
        %2436 = vmatpush1.xpose.msra.mxu0 0.0
        %2437 = vmatprep.subr.mxu0 0.0
        %2438 = vmatpush1.xpose.msra.mxu0 0.0
        %2439 = vmatprep.subr.mxu0 0.0
        %2440 = vmatpush1.xpose.msra.mxu0 0.0
        %2441 = vmatprep.subr.mxu0 0.0
        %2442 = vmatpush1.xpose.msra.mxu0 0.0
        %2443 = vmatprep.subr.mxu0 0.0
        %2444 = vmatpush1.xpose.msra.mxu0 0.0
        %2445 = vmatprep.subr.mxu0 0.0
        %2446 = vmatpush1.xpose.msra.mxu0 0.0
        %2447 = vmatprep.subr.mxu0 0.0
        %2448 = vmatpush1.xpose.msra.mxu0 0.0
        %2449 = vmatprep.subr.mxu0 0.0
        %2450 = vmatpush1.xpose.msra.mxu0 0.0
        %2451 = vmatprep.subr.mxu0 0.0
        %2452 = vmatpush1.xpose.msra.mxu0 0.0
        %2453 = vmatprep.subr.mxu0 0.0
        %2454 = vmatpush1.xpose.msra.mxu0 0.0
        %2455 = vmatprep.subr.mxu0 0.0
        %2456 = vmatpush1.xpose.msra.mxu0 0.0
        %2457 = vmatprep.subr.mxu0 0.0
        %2458 = vmatpush1.xpose.msra.mxu0 0.0
        %2459 = vmatprep.subr.mxu0 0.0
        %2460 = vmatpush1.xpose.msra.mxu0 0.0
        %2461 = vmatprep.subr.mxu0 0.0
        %2462 = vmatpush1.xpose.msra.mxu0 0.0
        %2463 = vmatprep.mubr.f32.mxu0 0.0
        %v2464 = vand.u32 %v2240, 4294901760
        %v2465 = vsub.f32 %v2240, %v2464
        %2466 = vmatmul.mubr.f32.gmra.mrb[0].mxu0 %v2465
        %v2467 = vpop.f32.mrb[0].mxu0
        %v2468 = vadd.f32 %v2394, %v2467
        %v2469 = vpop.f32.mrb[0].mxu0
        %2470 = vdwg.mxu0
        %2471 = vmatprep.subr.mxu0 0.0
        %v2472 = vand.u32 %v2243, 4294901760
        %2473 = vmatpush1.xpose.msra.mxu0 %v2472
        %2474 = vmatprep.subr.mxu0 0.0
        %2475 = vmatpush1.xpose.msra.mxu0 0.0
        %2476 = vmatprep.subr.mxu0 0.0
        %2477 = vmatpush1.xpose.msra.mxu0 0.0
        %2478 = vmatprep.subr.mxu0 0.0
        %2479 = vmatpush1.xpose.msra.mxu0 0.0
        %2480 = vmatprep.subr.mxu0 0.0
        %2481 = vmatpush1.xpose.msra.mxu0 0.0
        %2482 = vmatprep.subr.mxu0 0.0
        %2483 = vmatpush1.xpose.msra.mxu0 0.0
        %2484 = vmatprep.subr.mxu0 0.0
        %2485 = vmatpush1.xpose.msra.mxu0 0.0
        %2486 = vmatprep.subr.mxu0 0.0
        %2487 = vmatpush1.xpose.msra.mxu0 0.0
        %2488 = vmatprep.subr.mxu0 0.0
        %2489 = vmatpush1.xpose.msra.mxu0 0.0
        %2490 = vmatprep.subr.mxu0 0.0
        %2491 = vmatpush1.xpose.msra.mxu0 0.0
        %2492 = vmatprep.subr.mxu0 0.0
        %2493 = vmatpush1.xpose.msra.mxu0 0.0
        %2494 = vmatprep.subr.mxu0 0.0
        %2495 = vmatpush1.xpose.msra.mxu0 0.0
        %2496 = vmatprep.subr.mxu0 0.0
        %2497 = vmatpush1.xpose.msra.mxu0 0.0
        %2498 = vmatprep.subr.mxu0 0.0
        %2499 = vmatpush1.xpose.msra.mxu0 0.0
        %2500 = vmatprep.subr.mxu0 0.0
        %2501 = vmatpush1.xpose.msra.mxu0 0.0
        %2502 = vmatprep.subr.mxu0 0.0
        %2503 = vmatpush1.xpose.msra.mxu0 0.0
        %2504 = vmatprep.subr.mxu0 0.0
        %2505 = vmatpush1.xpose.msra.mxu0 0.0
        %2506 = vmatprep.subr.mxu0 0.0
        %2507 = vmatpush1.xpose.msra.mxu0 0.0
        %2508 = vmatprep.subr.mxu0 0.0
        %2509 = vmatpush1.xpose.msra.mxu0 0.0
        %2510 = vmatprep.subr.mxu0 0.0
        %2511 = vmatpush1.xpose.msra.mxu0 0.0
        %2512 = vmatprep.subr.mxu0 0.0
        %2513 = vmatpush1.xpose.msra.mxu0 0.0
        %2514 = vmatprep.subr.mxu0 0.0
        %2515 = vmatpush1.xpose.msra.mxu0 0.0
        %2516 = vmatprep.subr.mxu0 0.0
        %2517 = vmatpush1.xpose.msra.mxu0 0.0
        %2518 = vmatprep.subr.mxu0 0.0
        %2519 = vmatpush1.xpose.msra.mxu0 0.0
        %2520 = vmatprep.subr.mxu0 0.0
        %2521 = vmatpush1.xpose.msra.mxu0 0.0
        %2522 = vmatprep.subr.mxu0 0.0
        %2523 = vmatpush1.xpose.msra.mxu0 0.0
        %2524 = vmatprep.subr.mxu0 0.0
        %2525 = vmatpush1.xpose.msra.mxu0 0.0
        %2526 = vmatprep.subr.mxu0 0.0
        %2527 = vmatpush1.xpose.msra.mxu0 0.0
        %2528 = vmatprep.subr.mxu0 0.0
        %2529 = vmatpush1.xpose.msra.mxu0 0.0
        %2530 = vmatprep.subr.mxu0 0.0
        %2531 = vmatpush1.xpose.msra.mxu0 0.0
        %2532 = vmatprep.subr.mxu0 0.0
        %2533 = vmatpush1.xpose.msra.mxu0 0.0
        %2534 = vmatprep.subr.mxu0 0.0
        %2535 = vmatpush1.xpose.msra.mxu0 0.0
        %2536 = vmatprep.mubr.f32.mxu0 0.0
        %v2537 = vand.u32 %v2240, 4294901760
        %v2538 = vsub.f32 %v2240, %v2537
        %v2539 = vand.u32 %v2538, 4294901760
        %2540 = vmatmul.mubr.f32.gmra.mrb[0].mxu0 %v2539
        %v2541 = vpop.f32.mrb[0].mxu0
        %v2542 = vadd.f32 %v2468, %v2541
        %v2543 = vpop.f32.mrb[0].mxu0
        %2544 = vdwg.mxu0
        %2545 = vmatprep.subr.mxu0 0.0
        %v2546 = vand.u32 %v2243, 4294901760
        %v2547 = vsub.f32 %v2243, %v2546
        %v2548 = vand.u32 %v2547, 4294901760
        %2549 = vmatpush1.xpose.msra.mxu0 %v2548
        %2550 = vmatprep.subr.mxu0 0.0
        %2551 = vmatpush1.xpose.msra.mxu0 0.0
        %2552 = vmatprep.subr.mxu0 0.0
        %2553 = vmatpush1.xpose.msra.mxu0 0.0
        %2554 = vmatprep.subr.mxu0 0.0
        %2555 = vmatpush1.xpose.msra.mxu0 0.0
        %2556 = vmatprep.subr.mxu0 0.0
        %2557 = vmatpush1.xpose.msra.mxu0 0.0
        %2558 = vmatprep.subr.mxu0 0.0
        %2559 = vmatpush1.xpose.msra.mxu0 0.0
        %2560 = vmatprep.subr.mxu0 0.0
        %2561 = vmatpush1.xpose.msra.mxu0 0.0
        %2562 = vmatprep.subr.mxu0 0.0
        %2563 = vmatpush1.xpose.msra.mxu0 0.0
        %2564 = vmatprep.subr.mxu0 0.0
        %2565 = vmatpush1.xpose.msra.mxu0 0.0
        %2566 = vmatprep.subr.mxu0 0.0
        %2567 = vmatpush1.xpose.msra.mxu0 0.0
        %2568 = vmatprep.subr.mxu0 0.0
        %2569 = vmatpush1.xpose.msra.mxu0 0.0
        %2570 = vmatprep.subr.mxu0 0.0
        %2571 = vmatpush1.xpose.msra.mxu0 0.0
        %2572 = vmatprep.subr.mxu0 0.0
        %2573 = vmatpush1.xpose.msra.mxu0 0.0
        %2574 = vmatprep.subr.mxu0 0.0
        %2575 = vmatpush1.xpose.msra.mxu0 0.0
        %2576 = vmatprep.subr.mxu0 0.0
        %2577 = vmatpush1.xpose.msra.mxu0 0.0
        %2578 = vmatprep.subr.mxu0 0.0
        %2579 = vmatpush1.xpose.msra.mxu0 0.0
        %2580 = vmatprep.subr.mxu0 0.0
        %2581 = vmatpush1.xpose.msra.mxu0 0.0
        %2582 = vmatprep.subr.mxu0 0.0
        %2583 = vmatpush1.xpose.msra.mxu0 0.0
        %2584 = vmatprep.subr.mxu0 0.0
        %2585 = vmatpush1.xpose.msra.mxu0 0.0
        %2586 = vmatprep.subr.mxu0 0.0
        %2587 = vmatpush1.xpose.msra.mxu0 0.0
        %2588 = vmatprep.subr.mxu0 0.0
        %2589 = vmatpush1.xpose.msra.mxu0 0.0
        %2590 = vmatprep.subr.mxu0 0.0
        %2591 = vmatpush1.xpose.msra.mxu0 0.0
        %2592 = vmatprep.subr.mxu0 0.0
        %2593 = vmatpush1.xpose.msra.mxu0 0.0
        %2594 = vmatprep.subr.mxu0 0.0
        %2595 = vmatpush1.xpose.msra.mxu0 0.0
        %2596 = vmatprep.subr.mxu0 0.0
        %2597 = vmatpush1.xpose.msra.mxu0 0.0
        %2598 = vmatprep.subr.mxu0 0.0
        %2599 = vmatpush1.xpose.msra.mxu0 0.0
        %2600 = vmatprep.subr.mxu0 0.0
        %2601 = vmatpush1.xpose.msra.mxu0 0.0
        %2602 = vmatprep.subr.mxu0 0.0
        %2603 = vmatpush1.xpose.msra.mxu0 0.0
        %2604 = vmatprep.subr.mxu0 0.0
        %2605 = vmatpush1.xpose.msra.mxu0 0.0
        %2606 = vmatprep.subr.mxu0 0.0
        %2607 = vmatpush1.xpose.msra.mxu0 0.0
        %2608 = vmatprep.subr.mxu0 0.0
        %2609 = vmatpush1.xpose.msra.mxu0 0.0
        %2610 = vmatprep.subr.mxu0 0.0
        %2611 = vmatpush1.xpose.msra.mxu0 0.0
        %2612 = vmatprep.mubr.f32.mxu0 0.0
        %v2613 = vand.u32 %v2240, 4294901760
        %2614 = vmatmul.mubr.f32.gmra.mrb[0].mxu0 %v2613
        %v2615 = vpop.f32.mrb[0].mxu0
        %v2616 = vadd.f32 %v2542, %v2615
        %v2617 = vpop.f32.mrb[0].mxu0
        %2618 = vdwg.mxu0
        %2619 = vmatprep.subr.mxu0 0.0
        %v2620 = vand.u32 %v2243, 4294901760
        %2621 = vmatpush1.xpose.msra.mxu0 %v2620
        %2622 = vmatprep.subr.mxu0 0.0
        %2623 = vmatpush1.xpose.msra.mxu0 0.0
        %2624 = vmatprep.subr.mxu0 0.0
        %2625 = vmatpush1.xpose.msra.mxu0 0.0
        %2626 = vmatprep.subr.mxu0 0.0
        %2627 = vmatpush1.xpose.msra.mxu0 0.0
        %2628 = vmatprep.subr.mxu0 0.0
        %2629 = vmatpush1.xpose.msra.mxu0 0.0
        %2630 = vmatprep.subr.mxu0 0.0
        %2631 = vmatpush1.xpose.msra.mxu0 0.0
        %2632 = vmatprep.subr.mxu0 0.0
        %2633 = vmatpush1.xpose.msra.mxu0 0.0
        %2634 = vmatprep.subr.mxu0 0.0
        %2635 = vmatpush1.xpose.msra.mxu0 0.0
        %2636 = vmatprep.subr.mxu0 0.0
        %2637 = vmatpush1.xpose.msra.mxu0 0.0
        %2638 = vmatprep.subr.mxu0 0.0
        %2639 = vmatpush1.xpose.msra.mxu0 0.0
        %2640 = vmatprep.subr.mxu0 0.0
        %2641 = vmatpush1.xpose.msra.mxu0 0.0
        %2642 = vmatprep.subr.mxu0 0.0
        %2643 = vmatpush1.xpose.msra.mxu0 0.0
        %2644 = vmatprep.subr.mxu0 0.0
        %2645 = vmatpush1.xpose.msra.mxu0 0.0
        %2646 = vmatprep.subr.mxu0 0.0
        %2647 = vmatpush1.xpose.msra.mxu0 0.0
        %2648 = vmatprep.subr.mxu0 0.0
        %2649 = vmatpush1.xpose.msra.mxu0 0.0
        %2650 = vmatprep.subr.mxu0 0.0
        %2651 = vmatpush1.xpose.msra.mxu0 0.0
        %2652 = vmatprep.subr.mxu0 0.0
        %2653 = vmatpush1.xpose.msra.mxu0 0.0
        %2654 = vmatprep.subr.mxu0 0.0
        %2655 = vmatpush1.xpose.msra.mxu0 0.0
        %2656 = vmatprep.subr.mxu0 0.0
        %2657 = vmatpush1.xpose.msra.mxu0 0.0
        %2658 = vmatprep.subr.mxu0 0.0
        %2659 = vmatpush1.xpose.msra.mxu0 0.0
        %2660 = vmatprep.subr.mxu0 0.0
        %2661 = vmatpush1.xpose.msra.mxu0 0.0
        %2662 = vmatprep.subr.mxu0 0.0
        %2663 = vmatpush1.xpose.msra.mxu0 0.0
        %2664 = vmatprep.subr.mxu0 0.0
        %2665 = vmatpush1.xpose.msra.mxu0 0.0
        %2666 = vmatprep.subr.mxu0 0.0
        %2667 = vmatpush1.xpose.msra.mxu0 0.0
        %2668 = vmatprep.subr.mxu0 0.0
        %2669 = vmatpush1.xpose.msra.mxu0 0.0
        %2670 = vmatprep.subr.mxu0 0.0
        %2671 = vmatpush1.xpose.msra.mxu0 0.0
        %2672 = vmatprep.subr.mxu0 0.0
        %2673 = vmatpush1.xpose.msra.mxu0 0.0
        %2674 = vmatprep.subr.mxu0 0.0
        %2675 = vmatpush1.xpose.msra.mxu0 0.0
        %2676 = vmatprep.subr.mxu0 0.0
        %2677 = vmatpush1.xpose.msra.mxu0 0.0
        %2678 = vmatprep.subr.mxu0 0.0
        %2679 = vmatpush1.xpose.msra.mxu0 0.0
        %2680 = vmatprep.subr.mxu0 0.0
        %2681 = vmatpush1.xpose.msra.mxu0 0.0
        %2682 = vmatprep.subr.mxu0 0.0
        %2683 = vmatpush1.xpose.msra.mxu0 0.0
        %2684 = vmatprep.mubr.f32.mxu0 0.0
        %v2685 = vand.u32 %v2240, 4294901760
        %2686 = vmatmul.mubr.f32.gmra.mrb[0].mxu0 %v2685
        %v2687 = vpop.f32.mrb[0].mxu0
        %v2688 = vadd.f32 %v2616, %v2687
        %v2689 = vpop.f32.mrb[0].mxu0
        %2690 = vdwg.mxu0
        %v2691 = vmul.f32 %v2688, 0.35355338
        %v2692 = vsel %vm2237, %v2691, -1e+30
        %v2693 = vsel %vm2238, %v2692, -inf
        %2694 = vmax.xlane.f32.xlu0 %v2693
        %v2695 = vpop.xlane.xlu0 %2694
        %v2696 = vsub.f32 %v2692, %v2695
        %v2697 = vmul.f32 %v2696, 1.442695
        %v2698 = vpow.pop %v2697
        %v2699 = vsel %vm2238, %v2698, 0.0
        %2700 = vadd.xlane.f32.xlu0 %v2699
        %v2701 = vpop.xlane.xlu0 %2700
        %v2702 = vrcp.pop %v2701
        %v2703 = vmul.f32 %v2698, %v2702
        %v2705 = vsel %vm2238, %v2703, 0
        %2707 = vmatprep.subr.mxu0 0.0
        %v2708 = vand.u32 %v2230, 4294901760
        %2709 = vmatpush1.msra.mxu0 %v2708
        %2710 = vmatprep.subr.mxu0 0.0
        %2711 = vmatpush1.msra.mxu0 0.0
        %2712 = vmatprep.subr.mxu0 0.0
        %2713 = vmatpush1.msra.mxu0 0.0
        %2714 = vmatprep.subr.mxu0 0.0
        %2715 = vmatpush1.msra.mxu0 0.0
        %2716 = vmatprep.subr.mxu0 0.0
        %2717 = vmatpush1.msra.mxu0 0.0
        %2718 = vmatprep.subr.mxu0 0.0
        %2719 = vmatpush1.msra.mxu0 0.0
        %2720 = vmatprep.subr.mxu0 0.0
        %2721 = vmatpush1.msra.mxu0 0.0
        %2722 = vmatprep.subr.mxu0 0.0
        %2723 = vmatpush1.msra.mxu0 0.0
        %2724 = vmatprep.subr.mxu0 0.0
        %2725 = vmatpush1.msra.mxu0 0.0
        %2726 = vmatprep.subr.mxu0 0.0
        %2727 = vmatpush1.msra.mxu0 0.0
        %2728 = vmatprep.subr.mxu0 0.0
        %2729 = vmatpush1.msra.mxu0 0.0
        %2730 = vmatprep.subr.mxu0 0.0
        %2731 = vmatpush1.msra.mxu0 0.0
        %2732 = vmatprep.subr.mxu0 0.0
        %2733 = vmatpush1.msra.mxu0 0.0
        %2734 = vmatprep.subr.mxu0 0.0
        %2735 = vmatpush1.msra.mxu0 0.0
        %2736 = vmatprep.subr.mxu0 0.0
        %2737 = vmatpush1.msra.mxu0 0.0
        %2738 = vmatprep.subr.mxu0 0.0
        %2739 = vmatpush1.msra.mxu0 0.0
        %2740 = vmatprep.subr.mxu0 0.0
        %2741 = vmatpush1.msra.mxu0 0.0
        %2742 = vmatprep.subr.mxu0 0.0
        %2743 = vmatpush1.msra.mxu0 0.0
        %2744 = vmatprep.subr.mxu0 0.0
        %2745 = vmatpush1.msra.mxu0 0.0
        %2746 = vmatprep.subr.mxu0 0.0
        %2747 = vmatpush1.msra.mxu0 0.0
        %2748 = vmatprep.subr.mxu0 0.0
        %2749 = vmatpush1.msra.mxu0 0.0
        %2750 = vmatprep.subr.mxu0 0.0
        %2751 = vmatpush1.msra.mxu0 0.0
        %2752 = vmatprep.subr.mxu0 0.0
        %2753 = vmatpush1.msra.mxu0 0.0
        %2754 = vmatprep.subr.mxu0 0.0
        %2755 = vmatpush1.msra.mxu0 0.0
        %2756 = vmatprep.subr.mxu0 0.0
        %2757 = vmatpush1.msra.mxu0 0.0
        %2758 = vmatprep.subr.mxu0 0.0
        %2759 = vmatpush1.msra.mxu0 0.0
        %2760 = vmatprep.subr.mxu0 0.0
        %2761 = vmatpush1.msra.mxu0 0.0
        %2762 = vmatprep.subr.mxu0 0.0
        %2763 = vmatpush1.msra.mxu0 0.0
        %2764 = vmatprep.subr.mxu0 0.0
        %2765 = vmatpush1.msra.mxu0 0.0
        %2766 = vmatprep.subr.mxu0 0.0
        %2767 = vmatpush1.msra.mxu0 0.0
        %2768 = vmatprep.subr.mxu0 0.0
        %2769 = vmatpush1.msra.mxu0 0.0
        %2770 = vmatprep.subr.mxu0 0.0
        %2771 = vmatpush1.msra.mxu0 0.0
        %2772 = vmatprep.mubr.f32.mxu0 0.0
        %v2773 = vand.u32 %v2705, 4294901760
        %v2774 = vsub.f32 %v2705, %v2773
        %v2775 = vand.u32 %v2774, 4294901760
        %v2776 = vsub.f32 %v2774, %v2775
        %v2777 = vand.u32 %v2776, 4294901760
        %2778 = vmatmul.mubr.f32.gmra.mrb[0].mxu0 %v2777
        %v2779 = vpop.f32.mrb[0].mxu0
        %v2780 = vadd.f32 0.0, %v2779
        %v2781 = vpop.f32.mrb[0].mxu0
        %2782 = vdwg.mxu0
        %2783 = vmatprep.subr.mxu0 0.0
        %v2784 = vand.u32 %v2230, 4294901760
        %v2785 = vsub.f32 %v2230, %v2784
        %v2786 = vand.u32 %v2785, 4294901760
        %v2787 = vsub.f32 %v2785, %v2786
        %v2788 = vand.u32 %v2787, 4294901760
        %2789 = vmatpush1.msra.mxu0 %v2788
        %2790 = vmatprep.subr.mxu0 0.0
        %2791 = vmatpush1.msra.mxu0 0.0
        %2792 = vmatprep.subr.mxu0 0.0
        %2793 = vmatpush1.msra.mxu0 0.0
        %2794 = vmatprep.subr.mxu0 0.0
        %2795 = vmatpush1.msra.mxu0 0.0
        %2796 = vmatprep.subr.mxu0 0.0
        %2797 = vmatpush1.msra.mxu0 0.0
        %2798 = vmatprep.subr.mxu0 0.0
        %2799 = vmatpush1.msra.mxu0 0.0
        %2800 = vmatprep.subr.mxu0 0.0
        %2801 = vmatpush1.msra.mxu0 0.0
        %2802 = vmatprep.subr.mxu0 0.0
        %2803 = vmatpush1.msra.mxu0 0.0
        %2804 = vmatprep.subr.mxu0 0.0
        %2805 = vmatpush1.msra.mxu0 0.0
        %2806 = vmatprep.subr.mxu0 0.0
        %2807 = vmatpush1.msra.mxu0 0.0
        %2808 = vmatprep.subr.mxu0 0.0
        %2809 = vmatpush1.msra.mxu0 0.0
        %2810 = vmatprep.subr.mxu0 0.0
        %2811 = vmatpush1.msra.mxu0 0.0
        %2812 = vmatprep.subr.mxu0 0.0
        %2813 = vmatpush1.msra.mxu0 0.0
        %2814 = vmatprep.subr.mxu0 0.0
        %2815 = vmatpush1.msra.mxu0 0.0
        %2816 = vmatprep.subr.mxu0 0.0
        %2817 = vmatpush1.msra.mxu0 0.0
        %2818 = vmatprep.subr.mxu0 0.0
        %2819 = vmatpush1.msra.mxu0 0.0
        %2820 = vmatprep.subr.mxu0 0.0
        %2821 = vmatpush1.msra.mxu0 0.0
        %2822 = vmatprep.subr.mxu0 0.0
        %2823 = vmatpush1.msra.mxu0 0.0
        %2824 = vmatprep.subr.mxu0 0.0
        %2825 = vmatpush1.msra.mxu0 0.0
        %2826 = vmatprep.subr.mxu0 0.0
        %2827 = vmatpush1.msra.mxu0 0.0
        %2828 = vmatprep.subr.mxu0 0.0
        %2829 = vmatpush1.msra.mxu0 0.0
        %2830 = vmatprep.subr.mxu0 0.0
        %2831 = vmatpush1.msra.mxu0 0.0
        %2832 = vmatprep.subr.mxu0 0.0
        %2833 = vmatpush1.msra.mxu0 0.0
        %2834 = vmatprep.subr.mxu0 0.0
        %2835 = vmatpush1.msra.mxu0 0.0
        %2836 = vmatprep.subr.mxu0 0.0
        %2837 = vmatpush1.msra.mxu0 0.0
        %2838 = vmatprep.subr.mxu0 0.0
        %2839 = vmatpush1.msra.mxu0 0.0
        %2840 = vmatprep.subr.mxu0 0.0
        %2841 = vmatpush1.msra.mxu0 0.0
        %2842 = vmatprep.subr.mxu0 0.0
        %2843 = vmatpush1.msra.mxu0 0.0
        %2844 = vmatprep.subr.mxu0 0.0
        %2845 = vmatpush1.msra.mxu0 0.0
        %2846 = vmatprep.subr.mxu0 0.0
        %2847 = vmatpush1.msra.mxu0 0.0
        %2848 = vmatprep.subr.mxu0 0.0
        %2849 = vmatpush1.msra.mxu0 0.0
        %2850 = vmatprep.subr.mxu0 0.0
        %2851 = vmatpush1.msra.mxu0 0.0
        %2852 = vmatprep.mubr.f32.mxu0 0.0
        %v2853 = vand.u32 %v2705, 4294901760
        %2854 = vmatmul.mubr.f32.gmra.mrb[0].mxu0 %v2853
        %v2855 = vpop.f32.mrb[0].mxu0
        %v2856 = vadd.f32 %v2780, %v2855
        %v2857 = vpop.f32.mrb[0].mxu0
        %2858 = vdwg.mxu0
        %2859 = vmatprep.subr.mxu0 0.0
        %v2860 = vand.u32 %v2230, 4294901760
        %v2861 = vsub.f32 %v2230, %v2860
        %2862 = vmatpush1.msra.mxu0 %v2861
        %2863 = vmatprep.subr.mxu0 0.0
        %2864 = vmatpush1.msra.mxu0 0.0
        %2865 = vmatprep.subr.mxu0 0.0
        %2866 = vmatpush1.msra.mxu0 0.0
        %2867 = vmatprep.subr.mxu0 0.0
        %2868 = vmatpush1.msra.mxu0 0.0
        %2869 = vmatprep.subr.mxu0 0.0
        %2870 = vmatpush1.msra.mxu0 0.0
        %2871 = vmatprep.subr.mxu0 0.0
        %2872 = vmatpush1.msra.mxu0 0.0
        %2873 = vmatprep.subr.mxu0 0.0
        %2874 = vmatpush1.msra.mxu0 0.0
        %2875 = vmatprep.subr.mxu0 0.0
        %2876 = vmatpush1.msra.mxu0 0.0
        %2877 = vmatprep.subr.mxu0 0.0
        %2878 = vmatpush1.msra.mxu0 0.0
        %2879 = vmatprep.subr.mxu0 0.0
        %2880 = vmatpush1.msra.mxu0 0.0
        %2881 = vmatprep.subr.mxu0 0.0
        %2882 = vmatpush1.msra.mxu0 0.0
        %2883 = vmatprep.subr.mxu0 0.0
        %2884 = vmatpush1.msra.mxu0 0.0
        %2885 = vmatprep.subr.mxu0 0.0
        %2886 = vmatpush1.msra.mxu0 0.0
        %2887 = vmatprep.subr.mxu0 0.0
        %2888 = vmatpush1.msra.mxu0 0.0
        %2889 = vmatprep.subr.mxu0 0.0
        %2890 = vmatpush1.msra.mxu0 0.0
        %2891 = vmatprep.subr.mxu0 0.0
        %2892 = vmatpush1.msra.mxu0 0.0
        %2893 = vmatprep.subr.mxu0 0.0
        %2894 = vmatpush1.msra.mxu0 0.0
        %2895 = vmatprep.subr.mxu0 0.0
        %2896 = vmatpush1.msra.mxu0 0.0
        %2897 = vmatprep.subr.mxu0 0.0
        %2898 = vmatpush1.msra.mxu0 0.0
        %2899 = vmatprep.subr.mxu0 0.0
        %2900 = vmatpush1.msra.mxu0 0.0
        %2901 = vmatprep.subr.mxu0 0.0
        %2902 = vmatpush1.msra.mxu0 0.0
        %2903 = vmatprep.subr.mxu0 0.0
        %2904 = vmatpush1.msra.mxu0 0.0
        %2905 = vmatprep.subr.mxu0 0.0
        %2906 = vmatpush1.msra.mxu0 0.0
        %2907 = vmatprep.subr.mxu0 0.0
        %2908 = vmatpush1.msra.mxu0 0.0
        %2909 = vmatprep.subr.mxu0 0.0
        %2910 = vmatpush1.msra.mxu0 0.0
        %2911 = vmatprep.subr.mxu0 0.0
        %2912 = vmatpush1.msra.mxu0 0.0
        %2913 = vmatprep.subr.mxu0 0.0
        %2914 = vmatpush1.msra.mxu0 0.0
        %2915 = vmatprep.subr.mxu0 0.0
        %2916 = vmatpush1.msra.mxu0 0.0
        %2917 = vmatprep.subr.mxu0 0.0
        %2918 = vmatpush1.msra.mxu0 0.0
        %2919 = vmatprep.subr.mxu0 0.0
        %2920 = vmatpush1.msra.mxu0 0.0
        %2921 = vmatprep.subr.mxu0 0.0
        %2922 = vmatpush1.msra.mxu0 0.0
        %2923 = vmatprep.subr.mxu0 0.0
        %2924 = vmatpush1.msra.mxu0 0.0
        %2925 = vmatprep.mubr.f32.mxu0 0.0
        %v2926 = vand.u32 %v2705, 4294901760
        %v2927 = vsub.f32 %v2705, %v2926
        %2928 = vmatmul.mubr.f32.gmra.mrb[0].mxu0 %v2927
        %v2929 = vpop.f32.mrb[0].mxu0
        %v2930 = vadd.f32 %v2856, %v2929
        %v2931 = vpop.f32.mrb[0].mxu0
        %2932 = vdwg.mxu0
        %2933 = vmatprep.subr.mxu0 0.0
        %v2934 = vand.u32 %v2230, 4294901760
        %2935 = vmatpush1.msra.mxu0 %v2934
        %2936 = vmatprep.subr.mxu0 0.0
        %2937 = vmatpush1.msra.mxu0 0.0
        %2938 = vmatprep.subr.mxu0 0.0
        %2939 = vmatpush1.msra.mxu0 0.0
        %2940 = vmatprep.subr.mxu0 0.0
        %2941 = vmatpush1.msra.mxu0 0.0
        %2942 = vmatprep.subr.mxu0 0.0
        %2943 = vmatpush1.msra.mxu0 0.0
        %2944 = vmatprep.subr.mxu0 0.0
        %2945 = vmatpush1.msra.mxu0 0.0
        %2946 = vmatprep.subr.mxu0 0.0
        %2947 = vmatpush1.msra.mxu0 0.0
        %2948 = vmatprep.subr.mxu0 0.0
        %2949 = vmatpush1.msra.mxu0 0.0
        %2950 = vmatprep.subr.mxu0 0.0
        %2951 = vmatpush1.msra.mxu0 0.0
        %2952 = vmatprep.subr.mxu0 0.0
        %2953 = vmatpush1.msra.mxu0 0.0
        %2954 = vmatprep.subr.mxu0 0.0
        %2955 = vmatpush1.msra.mxu0 0.0
        %2956 = vmatprep.subr.mxu0 0.0
        %2957 = vmatpush1.msra.mxu0 0.0
        %2958 = vmatprep.subr.mxu0 0.0
        %2959 = vmatpush1.msra.mxu0 0.0
        %2960 = vmatprep.subr.mxu0 0.0
        %2961 = vmatpush1.msra.mxu0 0.0
        %2962 = vmatprep.subr.mxu0 0.0
        %2963 = vmatpush1.msra.mxu0 0.0
        %2964 = vmatprep.subr.mxu0 0.0
        %2965 = vmatpush1.msra.mxu0 0.0
        %2966 = vmatprep.subr.mxu0 0.0
        %2967 = vmatpush1.msra.mxu0 0.0
        %2968 = vmatprep.subr.mxu0 0.0
        %2969 = vmatpush1.msra.mxu0 0.0
        %2970 = vmatprep.subr.mxu0 0.0
        %2971 = vmatpush1.msra.mxu0 0.0
        %2972 = vmatprep.subr.mxu0 0.0
        %2973 = vmatpush1.msra.mxu0 0.0
        %2974 = vmatprep.subr.mxu0 0.0
        %2975 = vmatpush1.msra.mxu0 0.0
        %2976 = vmatprep.subr.mxu0 0.0
        %2977 = vmatpush1.msra.mxu0 0.0
        %2978 = vmatprep.subr.mxu0 0.0
        %2979 = vmatpush1.msra.mxu0 0.0
        %2980 = vmatprep.subr.mxu0 0.0
        %2981 = vmatpush1.msra.mxu0 0.0
        %2982 = vmatprep.subr.mxu0 0.0
        %2983 = vmatpush1.msra.mxu0 0.0
        %2984 = vmatprep.subr.mxu0 0.0
        %2985 = vmatpush1.msra.mxu0 0.0
        %2986 = vmatprep.subr.mxu0 0.0
        %2987 = vmatpush1.msra.mxu0 0.0
        %2988 = vmatprep.subr.mxu0 0.0
        %2989 = vmatpush1.msra.mxu0 0.0
        %2990 = vmatprep.subr.mxu0 0.0
        %2991 = vmatpush1.msra.mxu0 0.0
        %2992 = vmatprep.subr.mxu0 0.0
        %2993 = vmatpush1.msra.mxu0 0.0
        %2994 = vmatprep.subr.mxu0 0.0
        %2995 = vmatpush1.msra.mxu0 0.0
        %2996 = vmatprep.subr.mxu0 0.0
        %2997 = vmatpush1.msra.mxu0 0.0
        %2998 = vmatprep.mubr.f32.mxu0 0.0
        %v2999 = vand.u32 %v2705, 4294901760
        %v3000 = vsub.f32 %v2705, %v2999
        %v3001 = vand.u32 %v3000, 4294901760
        %3002 = vmatmul.mubr.f32.gmra.mrb[0].mxu0 %v3001
        %v3003 = vpop.f32.mrb[0].mxu0
        %v3004 = vadd.f32 %v2930, %v3003
        %v3005 = vpop.f32.mrb[0].mxu0
        %3006 = vdwg.mxu0
        %3007 = vmatprep.subr.mxu0 0.0
        %v3008 = vand.u32 %v2230, 4294901760
        %v3009 = vsub.f32 %v2230, %v3008
        %v3010 = vand.u32 %v3009, 4294901760
        %3011 = vmatpush1.msra.mxu0 %v3010
        %3012 = vmatprep.subr.mxu0 0.0
        %3013 = vmatpush1.msra.mxu0 0.0
        %3014 = vmatprep.subr.mxu0 0.0
        %3015 = vmatpush1.msra.mxu0 0.0
        %3016 = vmatprep.subr.mxu0 0.0
        %3017 = vmatpush1.msra.mxu0 0.0
        %3018 = vmatprep.subr.mxu0 0.0
        %3019 = vmatpush1.msra.mxu0 0.0
        %3020 = vmatprep.subr.mxu0 0.0
        %3021 = vmatpush1.msra.mxu0 0.0
        %3022 = vmatprep.subr.mxu0 0.0
        %3023 = vmatpush1.msra.mxu0 0.0
        %3024 = vmatprep.subr.mxu0 0.0
        %3025 = vmatpush1.msra.mxu0 0.0
        %3026 = vmatprep.subr.mxu0 0.0
        %3027 = vmatpush1.msra.mxu0 0.0
        %3028 = vmatprep.subr.mxu0 0.0
        %3029 = vmatpush1.msra.mxu0 0.0
        %3030 = vmatprep.subr.mxu0 0.0
        %3031 = vmatpush1.msra.mxu0 0.0
        %3032 = vmatprep.subr.mxu0 0.0
        %3033 = vmatpush1.msra.mxu0 0.0
        %3034 = vmatprep.subr.mxu0 0.0
        %3035 = vmatpush1.msra.mxu0 0.0
        %3036 = vmatprep.subr.mxu0 0.0
        %3037 = vmatpush1.msra.mxu0 0.0
        %3038 = vmatprep.subr.mxu0 0.0
        %3039 = vmatpush1.msra.mxu0 0.0
        %3040 = vmatprep.subr.mxu0 0.0
        %3041 = vmatpush1.msra.mxu0 0.0
        %3042 = vmatprep.subr.mxu0 0.0
        %3043 = vmatpush1.msra.mxu0 0.0
        %3044 = vmatprep.subr.mxu0 0.0
        %3045 = vmatpush1.msra.mxu0 0.0
        %3046 = vmatprep.subr.mxu0 0.0
        %3047 = vmatpush1.msra.mxu0 0.0
        %3048 = vmatprep.subr.mxu0 0.0
        %3049 = vmatpush1.msra.mxu0 0.0
        %3050 = vmatprep.subr.mxu0 0.0
        %3051 = vmatpush1.msra.mxu0 0.0
        %3052 = vmatprep.subr.mxu0 0.0
        %3053 = vmatpush1.msra.mxu0 0.0
        %3054 = vmatprep.subr.mxu0 0.0
        %3055 = vmatpush1.msra.mxu0 0.0
        %3056 = vmatprep.subr.mxu0 0.0
        %3057 = vmatpush1.msra.mxu0 0.0
        %3058 = vmatprep.subr.mxu0 0.0
        %3059 = vmatpush1.msra.mxu0 0.0
        %3060 = vmatprep.subr.mxu0 0.0
        %3061 = vmatpush1.msra.mxu0 0.0
        %3062 = vmatprep.subr.mxu0 0.0
        %3063 = vmatpush1.msra.mxu0 0.0
        %3064 = vmatprep.subr.mxu0 0.0
        %3065 = vmatpush1.msra.mxu0 0.0
        %3066 = vmatprep.subr.mxu0 0.0
        %3067 = vmatpush1.msra.mxu0 0.0
        %3068 = vmatprep.subr.mxu0 0.0
        %3069 = vmatpush1.msra.mxu0 0.0
        %3070 = vmatprep.subr.mxu0 0.0
        %3071 = vmatpush1.msra.mxu0 0.0
        %3072 = vmatprep.subr.mxu0 0.0
        %3073 = vmatpush1.msra.mxu0 0.0
        %3074 = vmatprep.mubr.f32.mxu0 0.0
        %v3075 = vand.u32 %v2705, 4294901760
        %3076 = vmatmul.mubr.f32.gmra.mrb[0].mxu0 %v3075
        %v3077 = vpop.f32.mrb[0].mxu0
        %v3078 = vadd.f32 %v3004, %v3077
        %v3079 = vpop.f32.mrb[0].mxu0
        %3080 = vdwg.mxu0
        %3081 = vmatprep.subr.mxu0 0.0
        %v3082 = vand.u32 %v2230, 4294901760
        %3083 = vmatpush1.msra.mxu0 %v3082
        %3084 = vmatprep.subr.mxu0 0.0
        %3085 = vmatpush1.msra.mxu0 0.0
        %3086 = vmatprep.subr.mxu0 0.0
        %3087 = vmatpush1.msra.mxu0 0.0
        %3088 = vmatprep.subr.mxu0 0.0
        %3089 = vmatpush1.msra.mxu0 0.0
        %3090 = vmatprep.subr.mxu0 0.0
        %3091 = vmatpush1.msra.mxu0 0.0
        %3092 = vmatprep.subr.mxu0 0.0
        %3093 = vmatpush1.msra.mxu0 0.0
        %3094 = vmatprep.subr.mxu0 0.0
        %3095 = vmatpush1.msra.mxu0 0.0
        %3096 = vmatprep.subr.mxu0 0.0
        %3097 = vmatpush1.msra.mxu0 0.0
        %3098 = vmatprep.subr.mxu0 0.0
        %3099 = vmatpush1.msra.mxu0 0.0
        %3100 = vmatprep.subr.mxu0 0.0
        %3101 = vmatpush1.msra.mxu0 0.0
        %3102 = vmatprep.subr.mxu0 0.0
        %3103 = vmatpush1.msra.mxu0 0.0
        %3104 = vmatprep.subr.mxu0 0.0
        %3105 = vmatpush1.msra.mxu0 0.0
        %3106 = vmatprep.subr.mxu0 0.0
        %3107 = vmatpush1.msra.mxu0 0.0
        %3108 = vmatprep.subr.mxu0 0.0
        %3109 = vmatpush1.msra.mxu0 0.0
        %3110 = vmatprep.subr.mxu0 0.0
        %3111 = vmatpush1.msra.mxu0 0.0
        %3112 = vmatprep.subr.mxu0 0.0
        %3113 = vmatpush1.msra.mxu0 0.0
        %3114 = vmatprep.subr.mxu0 0.0
        %3115 = vmatpush1.msra.mxu0 0.0
        %3116 = vmatprep.subr.mxu0 0.0
        %3117 = vmatpush1.msra.mxu0 0.0
        %3118 = vmatprep.subr.mxu0 0.0
        %3119 = vmatpush1.msra.mxu0 0.0
        %3120 = vmatprep.subr.mxu0 0.0
        %3121 = vmatpush1.msra.mxu0 0.0
        %3122 = vmatprep.subr.mxu0 0.0
        %3123 = vmatpush1.msra.mxu0 0.0
        %3124 = vmatprep.subr.mxu0 0.0
        %3125 = vmatpush1.msra.mxu0 0.0
        %3126 = vmatprep.subr.mxu0 0.0
        %3127 = vmatpush1.msra.mxu0 0.0
        %3128 = vmatprep.subr.mxu0 0.0
        %3129 = vmatpush1.msra.mxu0 0.0
        %3130 = vmatprep.subr.mxu0 0.0
        %3131 = vmatpush1.msra.mxu0 0.0
        %3132 = vmatprep.subr.mxu0 0.0
        %3133 = vmatpush1.msra.mxu0 0.0
        %3134 = vmatprep.subr.mxu0 0.0
        %3135 = vmatpush1.msra.mxu0 0.0
        %3136 = vmatprep.subr.mxu0 0.0
        %3137 = vmatpush1.msra.mxu0 0.0
        %3138 = vmatprep.subr.mxu0 0.0
        %3139 = vmatpush1.msra.mxu0 0.0
        %3140 = vmatprep.subr.mxu0 0.0
        %3141 = vmatpush1.msra.mxu0 0.0
        %3142 = vmatprep.subr.mxu0 0.0
        %3143 = vmatpush1.msra.mxu0 0.0
        %3144 = vmatprep.subr.mxu0 0.0
        %3145 = vmatpush1.msra.mxu0 0.0
        %3146 = vmatprep.mubr.f32.mxu0 0.0
        %v3147 = vand.u32 %v2705, 4294901760
        %3148 = vmatmul.mubr.f32.gmra.mrb[0].mxu0 %v3147
        %v3149 = vpop.f32.mrb[0].mxu0
        %v3150 = vadd.f32 %v3078, %v3149
        %v3151 = vpop.f32.mrb[0].mxu0
        %3152 = vdwg.mxu0
        %3153 = vrot.lane.b32.xlu0 %v1211, 120
        %v3154 = vpop.permute.xlu0 %3153
        %3155 = vrot.lane.b32.xlu0 %v1722, 120
        %v3156 = vpop.permute.xlu0 %3155
        %v3157 = vsel %vm2238, %v3154, 0
        %v3159 = vsel %vm2238, %v3156, 0
        %3161 = vmatprep.subr.mxu0 0.0
        %v3162 = vand.u32 %v3159, 4294901760
        %3163 = vmatpush1.xpose.msra.mxu0 %v3162
        %3164 = vmatprep.subr.mxu0 0.0
        %3165 = vmatpush1.xpose.msra.mxu0 0.0
        %3166 = vmatprep.subr.mxu0 0.0
        %3167 = vmatpush1.xpose.msra.mxu0 0.0
        %3168 = vmatprep.subr.mxu0 0.0
        %3169 = vmatpush1.xpose.msra.mxu0 0.0
        %3170 = vmatprep.subr.mxu0 0.0
        %3171 = vmatpush1.xpose.msra.mxu0 0.0
        %3172 = vmatprep.subr.mxu0 0.0
        %3173 = vmatpush1.xpose.msra.mxu0 0.0
        %3174 = vmatprep.subr.mxu0 0.0
        %3175 = vmatpush1.xpose.msra.mxu0 0.0
        %3176 = vmatprep.subr.mxu0 0.0
        %3177 = vmatpush1.xpose.msra.mxu0 0.0
        %3178 = vmatprep.subr.mxu0 0.0
        %3179 = vmatpush1.xpose.msra.mxu0 0.0
        %3180 = vmatprep.subr.mxu0 0.0
        %3181 = vmatpush1.xpose.msra.mxu0 0.0
        %3182 = vmatprep.subr.mxu0 0.0
        %3183 = vmatpush1.xpose.msra.mxu0 0.0
        %3184 = vmatprep.subr.mxu0 0.0
        %3185 = vmatpush1.xpose.msra.mxu0 0.0
        %3186 = vmatprep.subr.mxu0 0.0
        %3187 = vmatpush1.xpose.msra.mxu0 0.0
        %3188 = vmatprep.subr.mxu0 0.0
        %3189 = vmatpush1.xpose.msra.mxu0 0.0
        %3190 = vmatprep.subr.mxu0 0.0
        %3191 = vmatpush1.xpose.msra.mxu0 0.0
        %3192 = vmatprep.subr.mxu0 0.0
        %3193 = vmatpush1.xpose.msra.mxu0 0.0
        %3194 = vmatprep.subr.mxu0 0.0
        %3195 = vmatpush1.xpose.msra.mxu0 0.0
        %3196 = vmatprep.subr.mxu0 0.0
        %3197 = vmatpush1.xpose.msra.mxu0 0.0
        %3198 = vmatprep.subr.mxu0 0.0
        %3199 = vmatpush1.xpose.msra.mxu0 0.0
        %3200 = vmatprep.subr.mxu0 0.0
        %3201 = vmatpush1.xpose.msra.mxu0 0.0
        %3202 = vmatprep.subr.mxu0 0.0
        %3203 = vmatpush1.xpose.msra.mxu0 0.0
        %3204 = vmatprep.subr.mxu0 0.0
        %3205 = vmatpush1.xpose.msra.mxu0 0.0
        %3206 = vmatprep.subr.mxu0 0.0
        %3207 = vmatpush1.xpose.msra.mxu0 0.0
        %3208 = vmatprep.subr.mxu0 0.0
        %3209 = vmatpush1.xpose.msra.mxu0 0.0
        %3210 = vmatprep.subr.mxu0 0.0
        %3211 = vmatpush1.xpose.msra.mxu0 0.0
        %3212 = vmatprep.subr.mxu0 0.0
        %3213 = vmatpush1.xpose.msra.mxu0 0.0
        %3214 = vmatprep.subr.mxu0 0.0
        %3215 = vmatpush1.xpose.msra.mxu0 0.0
        %3216 = vmatprep.subr.mxu0 0.0
        %3217 = vmatpush1.xpose.msra.mxu0 0.0
        %3218 = vmatprep.subr.mxu0 0.0
        %3219 = vmatpush1.xpose.msra.mxu0 0.0
        %3220 = vmatprep.subr.mxu0 0.0
        %3221 = vmatpush1.xpose.msra.mxu0 0.0
        %3222 = vmatprep.subr.mxu0 0.0
        %3223 = vmatpush1.xpose.msra.mxu0 0.0
        %3224 = vmatprep.subr.mxu0 0.0
        %3225 = vmatpush1.xpose.msra.mxu0 0.0
        %3226 = vmatprep.mubr.f32.mxu0 0.0
        %v3227 = vand.u32 %v3157, 4294901760
        %v3228 = vsub.f32 %v3157, %v3227
        %v3229 = vand.u32 %v3228, 4294901760
        %v3230 = vsub.f32 %v3228, %v3229
        %v3231 = vand.u32 %v3230, 4294901760
        %3232 = vmatmul.mubr.f32.gmra.mrb[0].mxu0 %v3231
        %v3233 = vpop.f32.mrb[0].mxu0
        %v3234 = vadd.f32 0.0, %v3233
        %v3235 = vpop.f32.mrb[0].mxu0
        %3236 = vdwg.mxu0
        %3237 = vmatprep.subr.mxu0 0.0
        %v3238 = vand.u32 %v3159, 4294901760
        %v3239 = vsub.f32 %v3159, %v3238
        %v3240 = vand.u32 %v3239, 4294901760
        %v3241 = vsub.f32 %v3239, %v3240
        %v3242 = vand.u32 %v3241, 4294901760
        %3243 = vmatpush1.xpose.msra.mxu0 %v3242
        %3244 = vmatprep.subr.mxu0 0.0
        %3245 = vmatpush1.xpose.msra.mxu0 0.0
        %3246 = vmatprep.subr.mxu0 0.0
        %3247 = vmatpush1.xpose.msra.mxu0 0.0
        %3248 = vmatprep.subr.mxu0 0.0
        %3249 = vmatpush1.xpose.msra.mxu0 0.0
        %3250 = vmatprep.subr.mxu0 0.0
        %3251 = vmatpush1.xpose.msra.mxu0 0.0
        %3252 = vmatprep.subr.mxu0 0.0
        %3253 = vmatpush1.xpose.msra.mxu0 0.0
        %3254 = vmatprep.subr.mxu0 0.0
        %3255 = vmatpush1.xpose.msra.mxu0 0.0
        %3256 = vmatprep.subr.mxu0 0.0
        %3257 = vmatpush1.xpose.msra.mxu0 0.0
        %3258 = vmatprep.subr.mxu0 0.0
        %3259 = vmatpush1.xpose.msra.mxu0 0.0
        %3260 = vmatprep.subr.mxu0 0.0
        %3261 = vmatpush1.xpose.msra.mxu0 0.0
        %3262 = vmatprep.subr.mxu0 0.0
        %3263 = vmatpush1.xpose.msra.mxu0 0.0
        %3264 = vmatprep.subr.mxu0 0.0
        %3265 = vmatpush1.xpose.msra.mxu0 0.0
        %3266 = vmatprep.subr.mxu0 0.0
        %3267 = vmatpush1.xpose.msra.mxu0 0.0
        %3268 = vmatprep.subr.mxu0 0.0
        %3269 = vmatpush1.xpose.msra.mxu0 0.0
        %3270 = vmatprep.subr.mxu0 0.0
        %3271 = vmatpush1.xpose.msra.mxu0 0.0
        %3272 = vmatprep.subr.mxu0 0.0
        %3273 = vmatpush1.xpose.msra.mxu0 0.0
        %3274 = vmatprep.subr.mxu0 0.0
        %3275 = vmatpush1.xpose.msra.mxu0 0.0
        %3276 = vmatprep.subr.mxu0 0.0
        %3277 = vmatpush1.xpose.msra.mxu0 0.0
        %3278 = vmatprep.subr.mxu0 0.0
        %3279 = vmatpush1.xpose.msra.mxu0 0.0
        %3280 = vmatprep.subr.mxu0 0.0
        %3281 = vmatpush1.xpose.msra.mxu0 0.0
        %3282 = vmatprep.subr.mxu0 0.0
        %3283 = vmatpush1.xpose.msra.mxu0 0.0
        %3284 = vmatprep.subr.mxu0 0.0
        %3285 = vmatpush1.xpose.msra.mxu0 0.0
        %3286 = vmatprep.subr.mxu0 0.0
        %3287 = vmatpush1.xpose.msra.mxu0 0.0
        %3288 = vmatprep.subr.mxu0 0.0
        %3289 = vmatpush1.xpose.msra.mxu0 0.0
        %3290 = vmatprep.subr.mxu0 0.0
        %3291 = vmatpush1.xpose.msra.mxu0 0.0
        %3292 = vmatprep.subr.mxu0 0.0
        %3293 = vmatpush1.xpose.msra.mxu0 0.0
        %3294 = vmatprep.subr.mxu0 0.0
        %3295 = vmatpush1.xpose.msra.mxu0 0.0
        %3296 = vmatprep.subr.mxu0 0.0
        %3297 = vmatpush1.xpose.msra.mxu0 0.0
        %3298 = vmatprep.subr.mxu0 0.0
        %3299 = vmatpush1.xpose.msra.mxu0 0.0
        %3300 = vmatprep.subr.mxu0 0.0
        %3301 = vmatpush1.xpose.msra.mxu0 0.0
        %3302 = vmatprep.subr.mxu0 0.0
        %3303 = vmatpush1.xpose.msra.mxu0 0.0
        %3304 = vmatprep.subr.mxu0 0.0
        %3305 = vmatpush1.xpose.msra.mxu0 0.0
        %3306 = vmatprep.mubr.f32.mxu0 0.0
        %v3307 = vand.u32 %v3157, 4294901760
        %3308 = vmatmul.mubr.f32.gmra.mrb[0].mxu0 %v3307
        %v3309 = vpop.f32.mrb[0].mxu0
        %v3310 = vadd.f32 %v3234, %v3309
        %v3311 = vpop.f32.mrb[0].mxu0
        %3312 = vdwg.mxu0
        %3313 = vmatprep.subr.mxu0 0.0
        %v3314 = vand.u32 %v3159, 4294901760
        %v3315 = vsub.f32 %v3159, %v3314
        %3316 = vmatpush1.xpose.msra.mxu0 %v3315
        %3317 = vmatprep.subr.mxu0 0.0
        %3318 = vmatpush1.xpose.msra.mxu0 0.0
        %3319 = vmatprep.subr.mxu0 0.0
        %3320 = vmatpush1.xpose.msra.mxu0 0.0
        %3321 = vmatprep.subr.mxu0 0.0
        %3322 = vmatpush1.xpose.msra.mxu0 0.0
        %3323 = vmatprep.subr.mxu0 0.0
        %3324 = vmatpush1.xpose.msra.mxu0 0.0
        %3325 = vmatprep.subr.mxu0 0.0
        %3326 = vmatpush1.xpose.msra.mxu0 0.0
        %3327 = vmatprep.subr.mxu0 0.0
        %3328 = vmatpush1.xpose.msra.mxu0 0.0
        %3329 = vmatprep.subr.mxu0 0.0
        %3330 = vmatpush1.xpose.msra.mxu0 0.0
        %3331 = vmatprep.subr.mxu0 0.0
        %3332 = vmatpush1.xpose.msra.mxu0 0.0
        %3333 = vmatprep.subr.mxu0 0.0
        %3334 = vmatpush1.xpose.msra.mxu0 0.0
        %3335 = vmatprep.subr.mxu0 0.0
        %3336 = vmatpush1.xpose.msra.mxu0 0.0
        %3337 = vmatprep.subr.mxu0 0.0
        %3338 = vmatpush1.xpose.msra.mxu0 0.0
        %3339 = vmatprep.subr.mxu0 0.0
        %3340 = vmatpush1.xpose.msra.mxu0 0.0
        %3341 = vmatprep.subr.mxu0 0.0
        %3342 = vmatpush1.xpose.msra.mxu0 0.0
        %3343 = vmatprep.subr.mxu0 0.0
        %3344 = vmatpush1.xpose.msra.mxu0 0.0
        %3345 = vmatprep.subr.mxu0 0.0
        %3346 = vmatpush1.xpose.msra.mxu0 0.0
        %3347 = vmatprep.subr.mxu0 0.0
        %3348 = vmatpush1.xpose.msra.mxu0 0.0
        %3349 = vmatprep.subr.mxu0 0.0
        %3350 = vmatpush1.xpose.msra.mxu0 0.0
        %3351 = vmatprep.subr.mxu0 0.0
        %3352 = vmatpush1.xpose.msra.mxu0 0.0
        %3353 = vmatprep.subr.mxu0 0.0
        %3354 = vmatpush1.xpose.msra.mxu0 0.0
        %3355 = vmatprep.subr.mxu0 0.0
        %3356 = vmatpush1.xpose.msra.mxu0 0.0
        %3357 = vmatprep.subr.mxu0 0.0
        %3358 = vmatpush1.xpose.msra.mxu0 0.0
        %3359 = vmatprep.subr.mxu0 0.0
        %3360 = vmatpush1.xpose.msra.mxu0 0.0
        %3361 = vmatprep.subr.mxu0 0.0
        %3362 = vmatpush1.xpose.msra.mxu0 0.0
        %3363 = vmatprep.subr.mxu0 0.0
        %3364 = vmatpush1.xpose.msra.mxu0 0.0
        %3365 = vmatprep.subr.mxu0 0.0
        %3366 = vmatpush1.xpose.msra.mxu0 0.0
        %3367 = vmatprep.subr.mxu0 0.0
        %3368 = vmatpush1.xpose.msra.mxu0 0.0
        %3369 = vmatprep.subr.mxu0 0.0
        %3370 = vmatpush1.xpose.msra.mxu0 0.0
        %3371 = vmatprep.subr.mxu0 0.0
        %3372 = vmatpush1.xpose.msra.mxu0 0.0
        %3373 = vmatprep.subr.mxu0 0.0
        %3374 = vmatpush1.xpose.msra.mxu0 0.0
        %3375 = vmatprep.subr.mxu0 0.0
        %3376 = vmatpush1.xpose.msra.mxu0 0.0
        %3377 = vmatprep.subr.mxu0 0.0
        %3378 = vmatpush1.xpose.msra.mxu0 0.0
        %3379 = vmatprep.mubr.f32.mxu0 0.0
        %v3380 = vand.u32 %v3157, 4294901760
        %v3381 = vsub.f32 %v3157, %v3380
        %3382 = vmatmul.mubr.f32.gmra.mrb[0].mxu0 %v3381
        %v3383 = vpop.f32.mrb[0].mxu0
        %v3384 = vadd.f32 %v3310, %v3383
        %v3385 = vpop.f32.mrb[0].mxu0
        %3386 = vdwg.mxu0
        %3387 = vmatprep.subr.mxu0 0.0
        %v3388 = vand.u32 %v3159, 4294901760
        %3389 = vmatpush1.xpose.msra.mxu0 %v3388
        %3390 = vmatprep.subr.mxu0 0.0
        %3391 = vmatpush1.xpose.msra.mxu0 0.0
        %3392 = vmatprep.subr.mxu0 0.0
        %3393 = vmatpush1.xpose.msra.mxu0 0.0
        %3394 = vmatprep.subr.mxu0 0.0
        %3395 = vmatpush1.xpose.msra.mxu0 0.0
        %3396 = vmatprep.subr.mxu0 0.0
        %3397 = vmatpush1.xpose.msra.mxu0 0.0
        %3398 = vmatprep.subr.mxu0 0.0
        %3399 = vmatpush1.xpose.msra.mxu0 0.0
        %3400 = vmatprep.subr.mxu0 0.0
        %3401 = vmatpush1.xpose.msra.mxu0 0.0
        %3402 = vmatprep.subr.mxu0 0.0
        %3403 = vmatpush1.xpose.msra.mxu0 0.0
        %3404 = vmatprep.subr.mxu0 0.0
        %3405 = vmatpush1.xpose.msra.mxu0 0.0
        %3406 = vmatprep.subr.mxu0 0.0
        %3407 = vmatpush1.xpose.msra.mxu0 0.0
        %3408 = vmatprep.subr.mxu0 0.0
        %3409 = vmatpush1.xpose.msra.mxu0 0.0
        %3410 = vmatprep.subr.mxu0 0.0
        %3411 = vmatpush1.xpose.msra.mxu0 0.0
        %3412 = vmatprep.subr.mxu0 0.0
        %3413 = vmatpush1.xpose.msra.mxu0 0.0
        %3414 = vmatprep.subr.mxu0 0.0
        %3415 = vmatpush1.xpose.msra.mxu0 0.0
        %3416 = vmatprep.subr.mxu0 0.0
        %3417 = vmatpush1.xpose.msra.mxu0 0.0
        %3418 = vmatprep.subr.mxu0 0.0
        %3419 = vmatpush1.xpose.msra.mxu0 0.0
        %3420 = vmatprep.subr.mxu0 0.0
        %3421 = vmatpush1.xpose.msra.mxu0 0.0
        %3422 = vmatprep.subr.mxu0 0.0
        %3423 = vmatpush1.xpose.msra.mxu0 0.0
        %3424 = vmatprep.subr.mxu0 0.0
        %3425 = vmatpush1.xpose.msra.mxu0 0.0
        %3426 = vmatprep.subr.mxu0 0.0
        %3427 = vmatpush1.xpose.msra.mxu0 0.0
        %3428 = vmatprep.subr.mxu0 0.0
        %3429 = vmatpush1.xpose.msra.mxu0 0.0
        %3430 = vmatprep.subr.mxu0 0.0
        %3431 = vmatpush1.xpose.msra.mxu0 0.0
        %3432 = vmatprep.subr.mxu0 0.0
        %3433 = vmatpush1.xpose.msra.mxu0 0.0
        %3434 = vmatprep.subr.mxu0 0.0
        %3435 = vmatpush1.xpose.msra.mxu0 0.0
        %3436 = vmatprep.subr.mxu0 0.0
        %3437 = vmatpush1.xpose.msra.mxu0 0.0
        %3438 = vmatprep.subr.mxu0 0.0
        %3439 = vmatpush1.xpose.msra.mxu0 0.0
        %3440 = vmatprep.subr.mxu0 0.0
        %3441 = vmatpush1.xpose.msra.mxu0 0.0
        %3442 = vmatprep.subr.mxu0 0.0
        %3443 = vmatpush1.xpose.msra.mxu0 0.0
        %3444 = vmatprep.subr.mxu0 0.0
        %3445 = vmatpush1.xpose.msra.mxu0 0.0
        %3446 = vmatprep.subr.mxu0 0.0
        %3447 = vmatpush1.xpose.msra.mxu0 0.0
        %3448 = vmatprep.subr.mxu0 0.0
        %3449 = vmatpush1.xpose.msra.mxu0 0.0
        %3450 = vmatprep.subr.mxu0 0.0
        %3451 = vmatpush1.xpose.msra.mxu0 0.0
        %3452 = vmatprep.mubr.f32.mxu0 0.0
        %v3453 = vand.u32 %v3157, 4294901760
        %v3454 = vsub.f32 %v3157, %v3453
        %v3455 = vand.u32 %v3454, 4294901760
        %3456 = vmatmul.mubr.f32.gmra.mrb[0].mxu0 %v3455
        %v3457 = vpop.f32.mrb[0].mxu0
        %v3458 = vadd.f32 %v3384, %v3457
        %v3459 = vpop.f32.mrb[0].mxu0
        %3460 = vdwg.mxu0
        %3461 = vmatprep.subr.mxu0 0.0
        %v3462 = vand.u32 %v3159, 4294901760
        %v3463 = vsub.f32 %v3159, %v3462
        %v3464 = vand.u32 %v3463, 4294901760
        %3465 = vmatpush1.xpose.msra.mxu0 %v3464
        %3466 = vmatprep.subr.mxu0 0.0
        %3467 = vmatpush1.xpose.msra.mxu0 0.0
        %3468 = vmatprep.subr.mxu0 0.0
        %3469 = vmatpush1.xpose.msra.mxu0 0.0
        %3470 = vmatprep.subr.mxu0 0.0
        %3471 = vmatpush1.xpose.msra.mxu0 0.0
        %3472 = vmatprep.subr.mxu0 0.0
        %3473 = vmatpush1.xpose.msra.mxu0 0.0
        %3474 = vmatprep.subr.mxu0 0.0
        %3475 = vmatpush1.xpose.msra.mxu0 0.0
        %3476 = vmatprep.subr.mxu0 0.0
        %3477 = vmatpush1.xpose.msra.mxu0 0.0
        %3478 = vmatprep.subr.mxu0 0.0
        %3479 = vmatpush1.xpose.msra.mxu0 0.0
        %3480 = vmatprep.subr.mxu0 0.0
        %3481 = vmatpush1.xpose.msra.mxu0 0.0
        %3482 = vmatprep.subr.mxu0 0.0
        %3483 = vmatpush1.xpose.msra.mxu0 0.0
        %3484 = vmatprep.subr.mxu0 0.0
        %3485 = vmatpush1.xpose.msra.mxu0 0.0
        %3486 = vmatprep.subr.mxu0 0.0
        %3487 = vmatpush1.xpose.msra.mxu0 0.0
        %3488 = vmatprep.subr.mxu0 0.0
        %3489 = vmatpush1.xpose.msra.mxu0 0.0
        %3490 = vmatprep.subr.mxu0 0.0
        %3491 = vmatpush1.xpose.msra.mxu0 0.0
        %3492 = vmatprep.subr.mxu0 0.0
        %3493 = vmatpush1.xpose.msra.mxu0 0.0
        %3494 = vmatprep.subr.mxu0 0.0
        %3495 = vmatpush1.xpose.msra.mxu0 0.0
        %3496 = vmatprep.subr.mxu0 0.0
        %3497 = vmatpush1.xpose.msra.mxu0 0.0
        %3498 = vmatprep.subr.mxu0 0.0
        %3499 = vmatpush1.xpose.msra.mxu0 0.0
        %3500 = vmatprep.subr.mxu0 0.0
        %3501 = vmatpush1.xpose.msra.mxu0 0.0
        %3502 = vmatprep.subr.mxu0 0.0
        %3503 = vmatpush1.xpose.msra.mxu0 0.0
        %3504 = vmatprep.subr.mxu0 0.0
        %3505 = vmatpush1.xpose.msra.mxu0 0.0
        %3506 = vmatprep.subr.mxu0 0.0
        %3507 = vmatpush1.xpose.msra.mxu0 0.0
        %3508 = vmatprep.subr.mxu0 0.0
        %3509 = vmatpush1.xpose.msra.mxu0 0.0
        %3510 = vmatprep.subr.mxu0 0.0
        %3511 = vmatpush1.xpose.msra.mxu0 0.0
        %3512 = vmatprep.subr.mxu0 0.0
        %3513 = vmatpush1.xpose.msra.mxu0 0.0
        %3514 = vmatprep.subr.mxu0 0.0
        %3515 = vmatpush1.xpose.msra.mxu0 0.0
        %3516 = vmatprep.subr.mxu0 0.0
        %3517 = vmatpush1.xpose.msra.mxu0 0.0
        %3518 = vmatprep.subr.mxu0 0.0
        %3519 = vmatpush1.xpose.msra.mxu0 0.0
        %3520 = vmatprep.subr.mxu0 0.0
        %3521 = vmatpush1.xpose.msra.mxu0 0.0
        %3522 = vmatprep.subr.mxu0 0.0
        %3523 = vmatpush1.xpose.msra.mxu0 0.0
        %3524 = vmatprep.subr.mxu0 0.0
        %3525 = vmatpush1.xpose.msra.mxu0 0.0
        %3526 = vmatprep.subr.mxu0 0.0
        %3527 = vmatpush1.xpose.msra.mxu0 0.0
        %3528 = vmatprep.mubr.f32.mxu0 0.0
        %v3529 = vand.u32 %v3157, 4294901760
        %3530 = vmatmul.mubr.f32.gmra.mrb[0].mxu0 %v3529
        %v3531 = vpop.f32.mrb[0].mxu0
        %v3532 = vadd.f32 %v3458, %v3531
        %v3533 = vpop.f32.mrb[0].mxu0
        %3534 = vdwg.mxu0
        %3535 = vmatprep.subr.mxu0 0.0
        %v3536 = vand.u32 %v3159, 4294901760
        %3537 = vmatpush1.xpose.msra.mxu0 %v3536
        %3538 = vmatprep.subr.mxu0 0.0
        %3539 = vmatpush1.xpose.msra.mxu0 0.0
        %3540 = vmatprep.subr.mxu0 0.0
        %3541 = vmatpush1.xpose.msra.mxu0 0.0
        %3542 = vmatprep.subr.mxu0 0.0
        %3543 = vmatpush1.xpose.msra.mxu0 0.0
        %3544 = vmatprep.subr.mxu0 0.0
        %3545 = vmatpush1.xpose.msra.mxu0 0.0
        %3546 = vmatprep.subr.mxu0 0.0
        %3547 = vmatpush1.xpose.msra.mxu0 0.0
        %3548 = vmatprep.subr.mxu0 0.0
        %3549 = vmatpush1.xpose.msra.mxu0 0.0
        %3550 = vmatprep.subr.mxu0 0.0
        %3551 = vmatpush1.xpose.msra.mxu0 0.0
        %3552 = vmatprep.subr.mxu0 0.0
        %3553 = vmatpush1.xpose.msra.mxu0 0.0
        %3554 = vmatprep.subr.mxu0 0.0
        %3555 = vmatpush1.xpose.msra.mxu0 0.0
        %3556 = vmatprep.subr.mxu0 0.0
        %3557 = vmatpush1.xpose.msra.mxu0 0.0
        %3558 = vmatprep.subr.mxu0 0.0
        %3559 = vmatpush1.xpose.msra.mxu0 0.0
        %3560 = vmatprep.subr.mxu0 0.0
        %3561 = vmatpush1.xpose.msra.mxu0 0.0
        %3562 = vmatprep.subr.mxu0 0.0
        %3563 = vmatpush1.xpose.msra.mxu0 0.0
        %3564 = vmatprep.subr.mxu0 0.0
        %3565 = vmatpush1.xpose.msra.mxu0 0.0
        %3566 = vmatprep.subr.mxu0 0.0
        %3567 = vmatpush1.xpose.msra.mxu0 0.0
        %3568 = vmatprep.subr.mxu0 0.0
        %3569 = vmatpush1.xpose.msra.mxu0 0.0
        %3570 = vmatprep.subr.mxu0 0.0
        %3571 = vmatpush1.xpose.msra.mxu0 0.0
        %3572 = vmatprep.subr.mxu0 0.0
        %3573 = vmatpush1.xpose.msra.mxu0 0.0
        %3574 = vmatprep.subr.mxu0 0.0
        %3575 = vmatpush1.xpose.msra.mxu0 0.0
        %3576 = vmatprep.subr.mxu0 0.0
        %3577 = vmatpush1.xpose.msra.mxu0 0.0
        %3578 = vmatprep.subr.mxu0 0.0
        %3579 = vmatpush1.xpose.msra.mxu0 0.0
        %3580 = vmatprep.subr.mxu0 0.0
        %3581 = vmatpush1.xpose.msra.mxu0 0.0
        %3582 = vmatprep.subr.mxu0 0.0
        %3583 = vmatpush1.xpose.msra.mxu0 0.0
        %3584 = vmatprep.subr.mxu0 0.0
        %3585 = vmatpush1.xpose.msra.mxu0 0.0
        %3586 = vmatprep.subr.mxu0 0.0
        %3587 = vmatpush1.xpose.msra.mxu0 0.0
        %3588 = vmatprep.subr.mxu0 0.0
        %3589 = vmatpush1.xpose.msra.mxu0 0.0
        %3590 = vmatprep.subr.mxu0 0.0
        %3591 = vmatpush1.xpose.msra.mxu0 0.0
        %3592 = vmatprep.subr.mxu0 0.0
        %3593 = vmatpush1.xpose.msra.mxu0 0.0
        %3594 = vmatprep.subr.mxu0 0.0
        %3595 = vmatpush1.xpose.msra.mxu0 0.0
        %3596 = vmatprep.subr.mxu0 0.0
        %3597 = vmatpush1.xpose.msra.mxu0 0.0
        %3598 = vmatprep.subr.mxu0 0.0
        %3599 = vmatpush1.xpose.msra.mxu0 0.0
        %3600 = vmatprep.mubr.f32.mxu0 0.0
        %v3601 = vand.u32 %v3157, 4294901760
        %3602 = vmatmul.mubr.f32.gmra.mrb[0].mxu0 %v3601
        %v3603 = vpop.f32.mrb[0].mxu0
        %v3604 = vadd.f32 %v3532, %v3603
        %v3605 = vpop.f32.mrb[0].mxu0
        %3606 = vdwg.mxu0
        %v3607 = vmul.f32 %v3604, 0.35355338
        %v3608 = vsel %vm2237, %v3607, -1e+30
        %v3609 = vsel %vm2238, %v3608, -inf
        %3610 = vmax.xlane.f32.xlu0 %v3609
        %v3611 = vpop.xlane.xlu0 %3610
        %v3612 = vsub.f32 %v3608, %v3611
        %v3613 = vmul.f32 %v3612, 1.442695
        %v3614 = vpow.pop %v3613
        %v3615 = vsel %vm2238, %v3614, 0.0
        %3616 = vadd.xlane.f32.xlu0 %v3615
        %v3617 = vpop.xlane.xlu0 %3616
        %v3618 = vrcp.pop %v3617
        %v3619 = vmul.f32 %v3614, %v3618
        %3621 = vrot.lane.b32.xlu0 %v2230, 120
        %v3622 = vpop.permute.xlu0 %3621
        %v3625 = vsel %vm2238, %v3619, 0
        %3627 = vmatprep.subr.mxu0 0.0
        %v3628 = vand.u32 %v3622, 4294901760
        %3629 = vmatpush1.msra.mxu0 %v3628
        %3630 = vmatprep.subr.mxu0 0.0
        %3631 = vmatpush1.msra.mxu0 0.0
        %3632 = vmatprep.subr.mxu0 0.0
        %3633 = vmatpush1.msra.mxu0 0.0
        %3634 = vmatprep.subr.mxu0 0.0
        %3635 = vmatpush1.msra.mxu0 0.0
        %3636 = vmatprep.subr.mxu0 0.0
        %3637 = vmatpush1.msra.mxu0 0.0
        %3638 = vmatprep.subr.mxu0 0.0
        %3639 = vmatpush1.msra.mxu0 0.0
        %3640 = vmatprep.subr.mxu0 0.0
        %3641 = vmatpush1.msra.mxu0 0.0
        %3642 = vmatprep.subr.mxu0 0.0
        %3643 = vmatpush1.msra.mxu0 0.0
        %3644 = vmatprep.subr.mxu0 0.0
        %3645 = vmatpush1.msra.mxu0 0.0
        %3646 = vmatprep.subr.mxu0 0.0
        %3647 = vmatpush1.msra.mxu0 0.0
        %3648 = vmatprep.subr.mxu0 0.0
        %3649 = vmatpush1.msra.mxu0 0.0
        %3650 = vmatprep.subr.mxu0 0.0
        %3651 = vmatpush1.msra.mxu0 0.0
        %3652 = vmatprep.subr.mxu0 0.0
        %3653 = vmatpush1.msra.mxu0 0.0
        %3654 = vmatprep.subr.mxu0 0.0
        %3655 = vmatpush1.msra.mxu0 0.0
        %3656 = vmatprep.subr.mxu0 0.0
        %3657 = vmatpush1.msra.mxu0 0.0
        %3658 = vmatprep.subr.mxu0 0.0
        %3659 = vmatpush1.msra.mxu0 0.0
        %3660 = vmatprep.subr.mxu0 0.0
        %3661 = vmatpush1.msra.mxu0 0.0
        %3662 = vmatprep.subr.mxu0 0.0
        %3663 = vmatpush1.msra.mxu0 0.0
        %3664 = vmatprep.subr.mxu0 0.0
        %3665 = vmatpush1.msra.mxu0 0.0
        %3666 = vmatprep.subr.mxu0 0.0
        %3667 = vmatpush1.msra.mxu0 0.0
        %3668 = vmatprep.subr.mxu0 0.0
        %3669 = vmatpush1.msra.mxu0 0.0
        %3670 = vmatprep.subr.mxu0 0.0
        %3671 = vmatpush1.msra.mxu0 0.0
        %3672 = vmatprep.subr.mxu0 0.0
        %3673 = vmatpush1.msra.mxu0 0.0
        %3674 = vmatprep.subr.mxu0 0.0
        %3675 = vmatpush1.msra.mxu0 0.0
        %3676 = vmatprep.subr.mxu0 0.0
        %3677 = vmatpush1.msra.mxu0 0.0
        %3678 = vmatprep.subr.mxu0 0.0
        %3679 = vmatpush1.msra.mxu0 0.0
        %3680 = vmatprep.subr.mxu0 0.0
        %3681 = vmatpush1.msra.mxu0 0.0
        %3682 = vmatprep.subr.mxu0 0.0
        %3683 = vmatpush1.msra.mxu0 0.0
        %3684 = vmatprep.subr.mxu0 0.0
        %3685 = vmatpush1.msra.mxu0 0.0
        %3686 = vmatprep.subr.mxu0 0.0
        %3687 = vmatpush1.msra.mxu0 0.0
        %3688 = vmatprep.subr.mxu0 0.0
        %3689 = vmatpush1.msra.mxu0 0.0
        %3690 = vmatprep.subr.mxu0 0.0
        %3691 = vmatpush1.msra.mxu0 0.0
        %3692 = vmatprep.mubr.f32.mxu0 0.0
        %v3693 = vand.u32 %v3625, 4294901760
        %v3694 = vsub.f32 %v3625, %v3693
        %v3695 = vand.u32 %v3694, 4294901760
        %v3696 = vsub.f32 %v3694, %v3695
        %v3697 = vand.u32 %v3696, 4294901760
        %3698 = vmatmul.mubr.f32.gmra.mrb[0].mxu0 %v3697
        %v3699 = vpop.f32.mrb[0].mxu0
        %v3700 = vadd.f32 0.0, %v3699
        %v3701 = vpop.f32.mrb[0].mxu0
        %3702 = vdwg.mxu0
        %3703 = vmatprep.subr.mxu0 0.0
        %v3704 = vand.u32 %v3622, 4294901760
        %v3705 = vsub.f32 %v3622, %v3704
        %v3706 = vand.u32 %v3705, 4294901760
        %v3707 = vsub.f32 %v3705, %v3706
        %v3708 = vand.u32 %v3707, 4294901760
        %3709 = vmatpush1.msra.mxu0 %v3708
        %3710 = vmatprep.subr.mxu0 0.0
        %3711 = vmatpush1.msra.mxu0 0.0
        %3712 = vmatprep.subr.mxu0 0.0
        %3713 = vmatpush1.msra.mxu0 0.0
        %3714 = vmatprep.subr.mxu0 0.0
        %3715 = vmatpush1.msra.mxu0 0.0
        %3716 = vmatprep.subr.mxu0 0.0
        %3717 = vmatpush1.msra.mxu0 0.0
        %3718 = vmatprep.subr.mxu0 0.0
        %3719 = vmatpush1.msra.mxu0 0.0
        %3720 = vmatprep.subr.mxu0 0.0
        %3721 = vmatpush1.msra.mxu0 0.0
        %3722 = vmatprep.subr.mxu0 0.0
        %3723 = vmatpush1.msra.mxu0 0.0
        %3724 = vmatprep.subr.mxu0 0.0
        %3725 = vmatpush1.msra.mxu0 0.0
        %3726 = vmatprep.subr.mxu0 0.0
        %3727 = vmatpush1.msra.mxu0 0.0
        %3728 = vmatprep.subr.mxu0 0.0
        %3729 = vmatpush1.msra.mxu0 0.0
        %3730 = vmatprep.subr.mxu0 0.0
        %3731 = vmatpush1.msra.mxu0 0.0
        %3732 = vmatprep.subr.mxu0 0.0
        %3733 = vmatpush1.msra.mxu0 0.0
        %3734 = vmatprep.subr.mxu0 0.0
        %3735 = vmatpush1.msra.mxu0 0.0
        %3736 = vmatprep.subr.mxu0 0.0
        %3737 = vmatpush1.msra.mxu0 0.0
        %3738 = vmatprep.subr.mxu0 0.0
        %3739 = vmatpush1.msra.mxu0 0.0
        %3740 = vmatprep.subr.mxu0 0.0
        %3741 = vmatpush1.msra.mxu0 0.0
        %3742 = vmatprep.subr.mxu0 0.0
        %3743 = vmatpush1.msra.mxu0 0.0
        %3744 = vmatprep.subr.mxu0 0.0
        %3745 = vmatpush1.msra.mxu0 0.0
        %3746 = vmatprep.subr.mxu0 0.0
        %3747 = vmatpush1.msra.mxu0 0.0
        %3748 = vmatprep.subr.mxu0 0.0
        %3749 = vmatpush1.msra.mxu0 0.0
        %3750 = vmatprep.subr.mxu0 0.0
        %3751 = vmatpush1.msra.mxu0 0.0
        %3752 = vmatprep.subr.mxu0 0.0
        %3753 = vmatpush1.msra.mxu0 0.0
        %3754 = vmatprep.subr.mxu0 0.0
        %3755 = vmatpush1.msra.mxu0 0.0
        %3756 = vmatprep.subr.mxu0 0.0
        %3757 = vmatpush1.msra.mxu0 0.0
        %3758 = vmatprep.subr.mxu0 0.0
        %3759 = vmatpush1.msra.mxu0 0.0
        %3760 = vmatprep.subr.mxu0 0.0
        %3761 = vmatpush1.msra.mxu0 0.0
        %3762 = vmatprep.subr.mxu0 0.0
        %3763 = vmatpush1.msra.mxu0 0.0
        %3764 = vmatprep.subr.mxu0 0.0
        %3765 = vmatpush1.msra.mxu0 0.0
        %3766 = vmatprep.subr.mxu0 0.0
        %3767 = vmatpush1.msra.mxu0 0.0
        %3768 = vmatprep.subr.mxu0 0.0
        %3769 = vmatpush1.msra.mxu0 0.0
        %3770 = vmatprep.subr.mxu0 0.0
        %3771 = vmatpush1.msra.mxu0 0.0
        %3772 = vmatprep.mubr.f32.mxu0 0.0
        %v3773 = vand.u32 %v3625, 4294901760
        %3774 = vmatmul.mubr.f32.gmra.mrb[0].mxu0 %v3773
        %v3775 = vpop.f32.mrb[0].mxu0
        %v3776 = vadd.f32 %v3700, %v3775
        %v3777 = vpop.f32.mrb[0].mxu0
        %3778 = vdwg.mxu0
        %3779 = vmatprep.subr.mxu0 0.0
        %v3780 = vand.u32 %v3622, 4294901760
        %v3781 = vsub.f32 %v3622, %v3780
        %3782 = vmatpush1.msra.mxu0 %v3781
        %3783 = vmatprep.subr.mxu0 0.0
        %3784 = vmatpush1.msra.mxu0 0.0
        %3785 = vmatprep.subr.mxu0 0.0
        %3786 = vmatpush1.msra.mxu0 0.0
        %3787 = vmatprep.subr.mxu0 0.0
        %3788 = vmatpush1.msra.mxu0 0.0
        %3789 = vmatprep.subr.mxu0 0.0
        %3790 = vmatpush1.msra.mxu0 0.0
        %3791 = vmatprep.subr.mxu0 0.0
        %3792 = vmatpush1.msra.mxu0 0.0
        %3793 = vmatprep.subr.mxu0 0.0
        %3794 = vmatpush1.msra.mxu0 0.0
        %3795 = vmatprep.subr.mxu0 0.0
        %3796 = vmatpush1.msra.mxu0 0.0
        %3797 = vmatprep.subr.mxu0 0.0
        %3798 = vmatpush1.msra.mxu0 0.0
        %3799 = vmatprep.subr.mxu0 0.0
        %3800 = vmatpush1.msra.mxu0 0.0
        %3801 = vmatprep.subr.mxu0 0.0
        %3802 = vmatpush1.msra.mxu0 0.0
        %3803 = vmatprep.subr.mxu0 0.0
        %3804 = vmatpush1.msra.mxu0 0.0
        %3805 = vmatprep.subr.mxu0 0.0
        %3806 = vmatpush1.msra.mxu0 0.0
        %3807 = vmatprep.subr.mxu0 0.0
        %3808 = vmatpush1.msra.mxu0 0.0
        %3809 = vmatprep.subr.mxu0 0.0
        %3810 = vmatpush1.msra.mxu0 0.0
        %3811 = vmatprep.subr.mxu0 0.0
        %3812 = vmatpush1.msra.mxu0 0.0
        %3813 = vmatprep.subr.mxu0 0.0
        %3814 = vmatpush1.msra.mxu0 0.0
        %3815 = vmatprep.subr.mxu0 0.0
        %3816 = vmatpush1.msra.mxu0 0.0
        %3817 = vmatprep.subr.mxu0 0.0
        %3818 = vmatpush1.msra.mxu0 0.0
        %3819 = vmatprep.subr.mxu0 0.0
        %3820 = vmatpush1.msra.mxu0 0.0
        %3821 = vmatprep.subr.mxu0 0.0
        %3822 = vmatpush1.msra.mxu0 0.0
        %3823 = vmatprep.subr.mxu0 0.0
        %3824 = vmatpush1.msra.mxu0 0.0
        %3825 = vmatprep.subr.mxu0 0.0
        %3826 = vmatpush1.msra.mxu0 0.0
        %3827 = vmatprep.subr.mxu0 0.0
        %3828 = vmatpush1.msra.mxu0 0.0
        %3829 = vmatprep.subr.mxu0 0.0
        %3830 = vmatpush1.msra.mxu0 0.0
        %3831 = vmatprep.subr.mxu0 0.0
        %3832 = vmatpush1.msra.mxu0 0.0
        %3833 = vmatprep.subr.mxu0 0.0
        %3834 = vmatpush1.msra.mxu0 0.0
        %3835 = vmatprep.subr.mxu0 0.0
        %3836 = vmatpush1.msra.mxu0 0.0
        %3837 = vmatprep.subr.mxu0 0.0
        %3838 = vmatpush1.msra.mxu0 0.0
        %3839 = vmatprep.subr.mxu0 0.0
        %3840 = vmatpush1.msra.mxu0 0.0
        %3841 = vmatprep.subr.mxu0 0.0
        %3842 = vmatpush1.msra.mxu0 0.0
        %3843 = vmatprep.subr.mxu0 0.0
        %3844 = vmatpush1.msra.mxu0 0.0
        %3845 = vmatprep.mubr.f32.mxu0 0.0
        %v3846 = vand.u32 %v3625, 4294901760
        %v3847 = vsub.f32 %v3625, %v3846
        %3848 = vmatmul.mubr.f32.gmra.mrb[0].mxu0 %v3847
        %v3849 = vpop.f32.mrb[0].mxu0
        %v3850 = vadd.f32 %v3776, %v3849
        %v3851 = vpop.f32.mrb[0].mxu0
        %3852 = vdwg.mxu0
        %3853 = vmatprep.subr.mxu0 0.0
        %v3854 = vand.u32 %v3622, 4294901760
        %3855 = vmatpush1.msra.mxu0 %v3854
        %3856 = vmatprep.subr.mxu0 0.0
        %3857 = vmatpush1.msra.mxu0 0.0
        %3858 = vmatprep.subr.mxu0 0.0
        %3859 = vmatpush1.msra.mxu0 0.0
        %3860 = vmatprep.subr.mxu0 0.0
        %3861 = vmatpush1.msra.mxu0 0.0
        %3862 = vmatprep.subr.mxu0 0.0
        %3863 = vmatpush1.msra.mxu0 0.0
        %3864 = vmatprep.subr.mxu0 0.0
        %3865 = vmatpush1.msra.mxu0 0.0
        %3866 = vmatprep.subr.mxu0 0.0
        %3867 = vmatpush1.msra.mxu0 0.0
        %3868 = vmatprep.subr.mxu0 0.0
        %3869 = vmatpush1.msra.mxu0 0.0
        %3870 = vmatprep.subr.mxu0 0.0
        %3871 = vmatpush1.msra.mxu0 0.0
        %3872 = vmatprep.subr.mxu0 0.0
        %3873 = vmatpush1.msra.mxu0 0.0
        %3874 = vmatprep.subr.mxu0 0.0
        %3875 = vmatpush1.msra.mxu0 0.0
        %3876 = vmatprep.subr.mxu0 0.0
        %3877 = vmatpush1.msra.mxu0 0.0
        %3878 = vmatprep.subr.mxu0 0.0
        %3879 = vmatpush1.msra.mxu0 0.0
        %3880 = vmatprep.subr.mxu0 0.0
        %3881 = vmatpush1.msra.mxu0 0.0
        %3882 = vmatprep.subr.mxu0 0.0
        %3883 = vmatpush1.msra.mxu0 0.0
        %3884 = vmatprep.subr.mxu0 0.0
        %3885 = vmatpush1.msra.mxu0 0.0
        %3886 = vmatprep.subr.mxu0 0.0
        %3887 = vmatpush1.msra.mxu0 0.0
        %3888 = vmatprep.subr.mxu0 0.0
        %3889 = vmatpush1.msra.mxu0 0.0
        %3890 = vmatprep.subr.mxu0 0.0
        %3891 = vmatpush1.msra.mxu0 0.0
        %3892 = vmatprep.subr.mxu0 0.0
        %3893 = vmatpush1.msra.mxu0 0.0
        %3894 = vmatprep.subr.mxu0 0.0
        %3895 = vmatpush1.msra.mxu0 0.0
        %3896 = vmatprep.subr.mxu0 0.0
        %3897 = vmatpush1.msra.mxu0 0.0
        %3898 = vmatprep.subr.mxu0 0.0
        %3899 = vmatpush1.msra.mxu0 0.0
        %3900 = vmatprep.subr.mxu0 0.0
        %3901 = vmatpush1.msra.mxu0 0.0
        %3902 = vmatprep.subr.mxu0 0.0
        %3903 = vmatpush1.msra.mxu0 0.0
        %3904 = vmatprep.subr.mxu0 0.0
        %3905 = vmatpush1.msra.mxu0 0.0
        %3906 = vmatprep.subr.mxu0 0.0
        %3907 = vmatpush1.msra.mxu0 0.0
        %3908 = vmatprep.subr.mxu0 0.0
        %3909 = vmatpush1.msra.mxu0 0.0
        %3910 = vmatprep.subr.mxu0 0.0
        %3911 = vmatpush1.msra.mxu0 0.0
        %3912 = vmatprep.subr.mxu0 0.0
        %3913 = vmatpush1.msra.mxu0 0.0
        %3914 = vmatprep.subr.mxu0 0.0
        %3915 = vmatpush1.msra.mxu0 0.0
        %3916 = vmatprep.subr.mxu0 0.0
        %3917 = vmatpush1.msra.mxu0 0.0
        %3918 = vmatprep.mubr.f32.mxu0 0.0
        %v3919 = vand.u32 %v3625, 4294901760
        %v3920 = vsub.f32 %v3625, %v3919
        %v3921 = vand.u32 %v3920, 4294901760
        %3922 = vmatmul.mubr.f32.gmra.mrb[0].mxu0 %v3921
        %v3923 = vpop.f32.mrb[0].mxu0
        %v3924 = vadd.f32 %v3850, %v3923
        %v3925 = vpop.f32.mrb[0].mxu0
        %3926 = vdwg.mxu0
        %3927 = vmatprep.subr.mxu0 0.0
        %v3928 = vand.u32 %v3622, 4294901760
        %v3929 = vsub.f32 %v3622, %v3928
        %v3930 = vand.u32 %v3929, 4294901760
        %3931 = vmatpush1.msra.mxu0 %v3930
        %3932 = vmatprep.subr.mxu0 0.0
        %3933 = vmatpush1.msra.mxu0 0.0
        %3934 = vmatprep.subr.mxu0 0.0
        %3935 = vmatpush1.msra.mxu0 0.0
        %3936 = vmatprep.subr.mxu0 0.0
        %3937 = vmatpush1.msra.mxu0 0.0
        %3938 = vmatprep.subr.mxu0 0.0
        %3939 = vmatpush1.msra.mxu0 0.0
        %3940 = vmatprep.subr.mxu0 0.0
        %3941 = vmatpush1.msra.mxu0 0.0
        %3942 = vmatprep.subr.mxu0 0.0
        %3943 = vmatpush1.msra.mxu0 0.0
        %3944 = vmatprep.subr.mxu0 0.0
        %3945 = vmatpush1.msra.mxu0 0.0
        %3946 = vmatprep.subr.mxu0 0.0
        %3947 = vmatpush1.msra.mxu0 0.0
        %3948 = vmatprep.subr.mxu0 0.0
        %3949 = vmatpush1.msra.mxu0 0.0
        %3950 = vmatprep.subr.mxu0 0.0
        %3951 = vmatpush1.msra.mxu0 0.0
        %3952 = vmatprep.subr.mxu0 0.0
        %3953 = vmatpush1.msra.mxu0 0.0
        %3954 = vmatprep.subr.mxu0 0.0
        %3955 = vmatpush1.msra.mxu0 0.0
        %3956 = vmatprep.subr.mxu0 0.0
        %3957 = vmatpush1.msra.mxu0 0.0
        %3958 = vmatprep.subr.mxu0 0.0
        %3959 = vmatpush1.msra.mxu0 0.0
        %3960 = vmatprep.subr.mxu0 0.0
        %3961 = vmatpush1.msra.mxu0 0.0
        %3962 = vmatprep.subr.mxu0 0.0
        %3963 = vmatpush1.msra.mxu0 0.0
        %3964 = vmatprep.subr.mxu0 0.0
        %3965 = vmatpush1.msra.mxu0 0.0
        %3966 = vmatprep.subr.mxu0 0.0
        %3967 = vmatpush1.msra.mxu0 0.0
        %3968 = vmatprep.subr.mxu0 0.0
        %3969 = vmatpush1.msra.mxu0 0.0
        %3970 = vmatprep.subr.mxu0 0.0
        %3971 = vmatpush1.msra.mxu0 0.0
        %3972 = vmatprep.subr.mxu0 0.0
        %3973 = vmatpush1.msra.mxu0 0.0
        %3974 = vmatprep.subr.mxu0 0.0
        %3975 = vmatpush1.msra.mxu0 0.0
        %3976 = vmatprep.subr.mxu0 0.0
        %3977 = vmatpush1.msra.mxu0 0.0
        %3978 = vmatprep.subr.mxu0 0.0
        %3979 = vmatpush1.msra.mxu0 0.0
        %3980 = vmatprep.subr.mxu0 0.0
        %3981 = vmatpush1.msra.mxu0 0.0
        %3982 = vmatprep.subr.mxu0 0.0
        %3983 = vmatpush1.msra.mxu0 0.0
        %3984 = vmatprep.subr.mxu0 0.0
        %3985 = vmatpush1.msra.mxu0 0.0
        %3986 = vmatprep.subr.mxu0 0.0
        %3987 = vmatpush1.msra.mxu0 0.0
        %3988 = vmatprep.subr.mxu0 0.0
        %3989 = vmatpush1.msra.mxu0 0.0
        %3990 = vmatprep.subr.mxu0 0.0
        %3991 = vmatpush1.msra.mxu0 0.0
        %3992 = vmatprep.subr.mxu0 0.0
        %3993 = vmatpush1.msra.mxu0 0.0
        %3994 = vmatprep.mubr.f32.mxu0 0.0
        %v3995 = vand.u32 %v3625, 4294901760
        %3996 = vmatmul.mubr.f32.gmra.mrb[0].mxu0 %v3995
        %v3997 = vpop.f32.mrb[0].mxu0
        %v3998 = vadd.f32 %v3924, %v3997
        %v3999 = vpop.f32.mrb[0].mxu0
        %4000 = vdwg.mxu0
        %4001 = vmatprep.subr.mxu0 0.0
        %v4002 = vand.u32 %v3622, 4294901760
        %4003 = vmatpush1.msra.mxu0 %v4002
        %4004 = vmatprep.subr.mxu0 0.0
        %4005 = vmatpush1.msra.mxu0 0.0
        %4006 = vmatprep.subr.mxu0 0.0
        %4007 = vmatpush1.msra.mxu0 0.0
        %4008 = vmatprep.subr.mxu0 0.0
        %4009 = vmatpush1.msra.mxu0 0.0
        %4010 = vmatprep.subr.mxu0 0.0
        %4011 = vmatpush1.msra.mxu0 0.0
        %4012 = vmatprep.subr.mxu0 0.0
        %4013 = vmatpush1.msra.mxu0 0.0
        %4014 = vmatprep.subr.mxu0 0.0
        %4015 = vmatpush1.msra.mxu0 0.0
        %4016 = vmatprep.subr.mxu0 0.0
        %4017 = vmatpush1.msra.mxu0 0.0
        %4018 = vmatprep.subr.mxu0 0.0
        %4019 = vmatpush1.msra.mxu0 0.0
        %4020 = vmatprep.subr.mxu0 0.0
        %4021 = vmatpush1.msra.mxu0 0.0
        %4022 = vmatprep.subr.mxu0 0.0
        %4023 = vmatpush1.msra.mxu0 0.0
        %4024 = vmatprep.subr.mxu0 0.0
        %4025 = vmatpush1.msra.mxu0 0.0
        %4026 = vmatprep.subr.mxu0 0.0
        %4027 = vmatpush1.msra.mxu0 0.0
        %4028 = vmatprep.subr.mxu0 0.0
        %4029 = vmatpush1.msra.mxu0 0.0
        %4030 = vmatprep.subr.mxu0 0.0
        %4031 = vmatpush1.msra.mxu0 0.0
        %4032 = vmatprep.subr.mxu0 0.0
        %4033 = vmatpush1.msra.mxu0 0.0
        %4034 = vmatprep.subr.mxu0 0.0
        %4035 = vmatpush1.msra.mxu0 0.0
        %4036 = vmatprep.subr.mxu0 0.0
        %4037 = vmatpush1.msra.mxu0 0.0
        %4038 = vmatprep.subr.mxu0 0.0
        %4039 = vmatpush1.msra.mxu0 0.0
        %4040 = vmatprep.subr.mxu0 0.0
        %4041 = vmatpush1.msra.mxu0 0.0
        %4042 = vmatprep.subr.mxu0 0.0
        %4043 = vmatpush1.msra.mxu0 0.0
        %4044 = vmatprep.subr.mxu0 0.0
        %4045 = vmatpush1.msra.mxu0 0.0
        %4046 = vmatprep.subr.mxu0 0.0
        %4047 = vmatpush1.msra.mxu0 0.0
        %4048 = vmatprep.subr.mxu0 0.0
        %4049 = vmatpush1.msra.mxu0 0.0
        %4050 = vmatprep.subr.mxu0 0.0
        %4051 = vmatpush1.msra.mxu0 0.0
        %4052 = vmatprep.subr.mxu0 0.0
        %4053 = vmatpush1.msra.mxu0 0.0
        %4054 = vmatprep.subr.mxu0 0.0
        %4055 = vmatpush1.msra.mxu0 0.0
        %4056 = vmatprep.subr.mxu0 0.0
        %4057 = vmatpush1.msra.mxu0 0.0
        %4058 = vmatprep.subr.mxu0 0.0
        %4059 = vmatpush1.msra.mxu0 0.0
        %4060 = vmatprep.subr.mxu0 0.0
        %4061 = vmatpush1.msra.mxu0 0.0
        %4062 = vmatprep.subr.mxu0 0.0
        %4063 = vmatpush1.msra.mxu0 0.0
        %4064 = vmatprep.subr.mxu0 0.0
        %4065 = vmatpush1.msra.mxu0 0.0
        %4066 = vmatprep.mubr.f32.mxu0 0.0
        %v4067 = vand.u32 %v3625, 4294901760
        %4068 = vmatmul.mubr.f32.gmra.mrb[0].mxu0 %v4067
        %v4069 = vpop.f32.mrb[0].mxu0
        %v4070 = vadd.f32 %v3998, %v4069
        %v4071 = vpop.f32.mrb[0].mxu0
        %4072 = vdwg.mxu0
        %4073 = vrot.lane.b32.xlu0 %v1211, 112
        %v4074 = vpop.permute.xlu0 %4073
        %4075 = vrot.lane.b32.xlu0 %v1722, 112
        %v4076 = vpop.permute.xlu0 %4075
        %v4077 = vsel %vm2238, %v4074, 0
        %v4079 = vsel %vm2238, %v4076, 0
        %4081 = vmatprep.subr.mxu0 0.0
        %v4082 = vand.u32 %v4079, 4294901760
        %4083 = vmatpush1.xpose.msra.mxu0 %v4082
        %4084 = vmatprep.subr.mxu0 0.0
        %4085 = vmatpush1.xpose.msra.mxu0 0.0
        %4086 = vmatprep.subr.mxu0 0.0
        %4087 = vmatpush1.xpose.msra.mxu0 0.0
        %4088 = vmatprep.subr.mxu0 0.0
        %4089 = vmatpush1.xpose.msra.mxu0 0.0
        %4090 = vmatprep.subr.mxu0 0.0
        %4091 = vmatpush1.xpose.msra.mxu0 0.0
        %4092 = vmatprep.subr.mxu0 0.0
        %4093 = vmatpush1.xpose.msra.mxu0 0.0
        %4094 = vmatprep.subr.mxu0 0.0
        %4095 = vmatpush1.xpose.msra.mxu0 0.0
        %4096 = vmatprep.subr.mxu0 0.0
        %4097 = vmatpush1.xpose.msra.mxu0 0.0
        %4098 = vmatprep.subr.mxu0 0.0
        %4099 = vmatpush1.xpose.msra.mxu0 0.0
        %4100 = vmatprep.subr.mxu0 0.0
        %4101 = vmatpush1.xpose.msra.mxu0 0.0
        %4102 = vmatprep.subr.mxu0 0.0
        %4103 = vmatpush1.xpose.msra.mxu0 0.0
        %4104 = vmatprep.subr.mxu0 0.0
        %4105 = vmatpush1.xpose.msra.mxu0 0.0
        %4106 = vmatprep.subr.mxu0 0.0
        %4107 = vmatpush1.xpose.msra.mxu0 0.0
        %4108 = vmatprep.subr.mxu0 0.0
        %4109 = vmatpush1.xpose.msra.mxu0 0.0
        %4110 = vmatprep.subr.mxu0 0.0
        %4111 = vmatpush1.xpose.msra.mxu0 0.0
        %4112 = vmatprep.subr.mxu0 0.0
        %4113 = vmatpush1.xpose.msra.mxu0 0.0
        %4114 = vmatprep.subr.mxu0 0.0
        %4115 = vmatpush1.xpose.msra.mxu0 0.0
        %4116 = vmatprep.subr.mxu0 0.0
        %4117 = vmatpush1.xpose.msra.mxu0 0.0
        %4118 = vmatprep.subr.mxu0 0.0
        %4119 = vmatpush1.xpose.msra.mxu0 0.0
        %4120 = vmatprep.subr.mxu0 0.0
        %4121 = vmatpush1.xpose.msra.mxu0 0.0
        %4122 = vmatprep.subr.mxu0 0.0
        %4123 = vmatpush1.xpose.msra.mxu0 0.0
        %4124 = vmatprep.subr.mxu0 0.0
        %4125 = vmatpush1.xpose.msra.mxu0 0.0
        %4126 = vmatprep.subr.mxu0 0.0
        %4127 = vmatpush1.xpose.msra.mxu0 0.0
        %4128 = vmatprep.subr.mxu0 0.0
        %4129 = vmatpush1.xpose.msra.mxu0 0.0
        %4130 = vmatprep.subr.mxu0 0.0
        %4131 = vmatpush1.xpose.msra.mxu0 0.0
        %4132 = vmatprep.subr.mxu0 0.0
        %4133 = vmatpush1.xpose.msra.mxu0 0.0
        %4134 = vmatprep.subr.mxu0 0.0
        %4135 = vmatpush1.xpose.msra.mxu0 0.0
        %4136 = vmatprep.subr.mxu0 0.0
        %4137 = vmatpush1.xpose.msra.mxu0 0.0
        %4138 = vmatprep.subr.mxu0 0.0
        %4139 = vmatpush1.xpose.msra.mxu0 0.0
        %4140 = vmatprep.subr.mxu0 0.0
        %4141 = vmatpush1.xpose.msra.mxu0 0.0
        %4142 = vmatprep.subr.mxu0 0.0
        %4143 = vmatpush1.xpose.msra.mxu0 0.0
        %4144 = vmatprep.subr.mxu0 0.0
        %4145 = vmatpush1.xpose.msra.mxu0 0.0
        %4146 = vmatprep.mubr.f32.mxu0 0.0
        %v4147 = vand.u32 %v4077, 4294901760
        %v4148 = vsub.f32 %v4077, %v4147
        %v4149 = vand.u32 %v4148, 4294901760
        %v4150 = vsub.f32 %v4148, %v4149
        %v4151 = vand.u32 %v4150, 4294901760
        %4152 = vmatmul.mubr.f32.gmra.mrb[0].mxu0 %v4151
        %v4153 = vpop.f32.mrb[0].mxu0
        %v4154 = vadd.f32 0.0, %v4153
        %v4155 = vpop.f32.mrb[0].mxu0
        %4156 = vdwg.mxu0
        %4157 = vmatprep.subr.mxu0 0.0
        %v4158 = vand.u32 %v4079, 4294901760
        %v4159 = vsub.f32 %v4079, %v4158
        %v4160 = vand.u32 %v4159, 4294901760
        %v4161 = vsub.f32 %v4159, %v4160
        %v4162 = vand.u32 %v4161, 4294901760
        %4163 = vmatpush1.xpose.msra.mxu0 %v4162
        %4164 = vmatprep.subr.mxu0 0.0
        %4165 = vmatpush1.xpose.msra.mxu0 0.0
        %4166 = vmatprep.subr.mxu0 0.0
        %4167 = vmatpush1.xpose.msra.mxu0 0.0
        %4168 = vmatprep.subr.mxu0 0.0
        %4169 = vmatpush1.xpose.msra.mxu0 0.0
        %4170 = vmatprep.subr.mxu0 0.0
        %4171 = vmatpush1.xpose.msra.mxu0 0.0
        %4172 = vmatprep.subr.mxu0 0.0
        %4173 = vmatpush1.xpose.msra.mxu0 0.0
        %4174 = vmatprep.subr.mxu0 0.0
        %4175 = vmatpush1.xpose.msra.mxu0 0.0
        %4176 = vmatprep.subr.mxu0 0.0
        %4177 = vmatpush1.xpose.msra.mxu0 0.0
        %4178 = vmatprep.subr.mxu0 0.0
        %4179 = vmatpush1.xpose.msra.mxu0 0.0
        %4180 = vmatprep.subr.mxu0 0.0
        %4181 = vmatpush1.xpose.msra.mxu0 0.0
        %4182 = vmatprep.subr.mxu0 0.0
        %4183 = vmatpush1.xpose.msra.mxu0 0.0
        %4184 = vmatprep.subr.mxu0 0.0
        %4185 = vmatpush1.xpose.msra.mxu0 0.0
        %4186 = vmatprep.subr.mxu0 0.0
        %4187 = vmatpush1.xpose.msra.mxu0 0.0
        %4188 = vmatprep.subr.mxu0 0.0
        %4189 = vmatpush1.xpose.msra.mxu0 0.0
        %4190 = vmatprep.subr.mxu0 0.0
        %4191 = vmatpush1.xpose.msra.mxu0 0.0
        %4192 = vmatprep.subr.mxu0 0.0
        %4193 = vmatpush1.xpose.msra.mxu0 0.0
        %4194 = vmatprep.subr.mxu0 0.0
        %4195 = vmatpush1.xpose.msra.mxu0 0.0
        %4196 = vmatprep.subr.mxu0 0.0
        %4197 = vmatpush1.xpose.msra.mxu0 0.0
        %4198 = vmatprep.subr.mxu0 0.0
        %4199 = vmatpush1.xpose.msra.mxu0 0.0
        %4200 = vmatprep.subr.mxu0 0.0
        %4201 = vmatpush1.xpose.msra.mxu0 0.0
        %4202 = vmatprep.subr.mxu0 0.0
        %4203 = vmatpush1.xpose.msra.mxu0 0.0
        %4204 = vmatprep.subr.mxu0 0.0
        %4205 = vmatpush1.xpose.msra.mxu0 0.0
        %4206 = vmatprep.subr.mxu0 0.0
        %4207 = vmatpush1.xpose.msra.mxu0 0.0
        %4208 = vmatprep.subr.mxu0 0.0
        %4209 = vmatpush1.xpose.msra.mxu0 0.0
        %4210 = vmatprep.subr.mxu0 0.0
        %4211 = vmatpush1.xpose.msra.mxu0 0.0
        %4212 = vmatprep.subr.mxu0 0.0
        %4213 = vmatpush1.xpose.msra.mxu0 0.0
        %4214 = vmatprep.subr.mxu0 0.0
        %4215 = vmatpush1.xpose.msra.mxu0 0.0
        %4216 = vmatprep.subr.mxu0 0.0
        %4217 = vmatpush1.xpose.msra.mxu0 0.0
        %4218 = vmatprep.subr.mxu0 0.0
        %4219 = vmatpush1.xpose.msra.mxu0 0.0
        %4220 = vmatprep.subr.mxu0 0.0
        %4221 = vmatpush1.xpose.msra.mxu0 0.0
        %4222 = vmatprep.subr.mxu0 0.0
        %4223 = vmatpush1.xpose.msra.mxu0 0.0
        %4224 = vmatprep.subr.mxu0 0.0
        %4225 = vmatpush1.xpose.msra.mxu0 0.0
        %4226 = vmatprep.mubr.f32.mxu0 0.0
        %v4227 = vand.u32 %v4077, 4294901760
        %4228 = vmatmul.mubr.f32.gmra.mrb[0].mxu0 %v4227
        %v4229 = vpop.f32.mrb[0].mxu0
        %v4230 = vadd.f32 %v4154, %v4229
        %v4231 = vpop.f32.mrb[0].mxu0
        %4232 = vdwg.mxu0
        %4233 = vmatprep.subr.mxu0 0.0
        %v4234 = vand.u32 %v4079, 4294901760
        %v4235 = vsub.f32 %v4079, %v4234
        %4236 = vmatpush1.xpose.msra.mxu0 %v4235
        %4237 = vmatprep.subr.mxu0 0.0
        %4238 = vmatpush1.xpose.msra.mxu0 0.0
        %4239 = vmatprep.subr.mxu0 0.0
        %4240 = vmatpush1.xpose.msra.mxu0 0.0
        %4241 = vmatprep.subr.mxu0 0.0
        %4242 = vmatpush1.xpose.msra.mxu0 0.0
        %4243 = vmatprep.subr.mxu0 0.0
        %4244 = vmatpush1.xpose.msra.mxu0 0.0
        %4245 = vmatprep.subr.mxu0 0.0
        %4246 = vmatpush1.xpose.msra.mxu0 0.0
        %4247 = vmatprep.subr.mxu0 0.0
        %4248 = vmatpush1.xpose.msra.mxu0 0.0
        %4249 = vmatprep.subr.mxu0 0.0
        %4250 = vmatpush1.xpose.msra.mxu0 0.0
        %4251 = vmatprep.subr.mxu0 0.0
        %4252 = vmatpush1.xpose.msra.mxu0 0.0
        %4253 = vmatprep.subr.mxu0 0.0
        %4254 = vmatpush1.xpose.msra.mxu0 0.0
        %4255 = vmatprep.subr.mxu0 0.0
        %4256 = vmatpush1.xpose.msra.mxu0 0.0
        %4257 = vmatprep.subr.mxu0 0.0
        %4258 = vmatpush1.xpose.msra.mxu0 0.0
        %4259 = vmatprep.subr.mxu0 0.0
        %4260 = vmatpush1.xpose.msra.mxu0 0.0
        %4261 = vmatprep.subr.mxu0 0.0
        %4262 = vmatpush1.xpose.msra.mxu0 0.0
        %4263 = vmatprep.subr.mxu0 0.0
        %4264 = vmatpush1.xpose.msra.mxu0 0.0
        %4265 = vmatprep.subr.mxu0 0.0
        %4266 = vmatpush1.xpose.msra.mxu0 0.0
        %4267 = vmatprep.subr.mxu0 0.0
        %4268 = vmatpush1.xpose.msra.mxu0 0.0
        %4269 = vmatprep.subr.mxu0 0.0
        %4270 = vmatpush1.xpose.msra.mxu0 0.0
        %4271 = vmatprep.subr.mxu0 0.0
        %4272 = vmatpush1.xpose.msra.mxu0 0.0
        %4273 = vmatprep.subr.mxu0 0.0
        %4274 = vmatpush1.xpose.msra.mxu0 0.0
        %4275 = vmatprep.subr.mxu0 0.0
        %4276 = vmatpush1.xpose.msra.mxu0 0.0
        %4277 = vmatprep.subr.mxu0 0.0
        %4278 = vmatpush1.xpose.msra.mxu0 0.0
        %4279 = vmatprep.subr.mxu0 0.0
        %4280 = vmatpush1.xpose.msra.mxu0 0.0
        %4281 = vmatprep.subr.mxu0 0.0
        %4282 = vmatpush1.xpose.msra.mxu0 0.0
        %4283 = vmatprep.subr.mxu0 0.0
        %4284 = vmatpush1.xpose.msra.mxu0 0.0
        %4285 = vmatprep.subr.mxu0 0.0
        %4286 = vmatpush1.xpose.msra.mxu0 0.0
        %4287 = vmatprep.subr.mxu0 0.0
        %4288 = vmatpush1.xpose.msra.mxu0 0.0
        %4289 = vmatprep.subr.mxu0 0.0
        %4290 = vmatpush1.xpose.msra.mxu0 0.0
        %4291 = vmatprep.subr.mxu0 0.0
        %4292 = vmatpush1.xpose.msra.mxu0 0.0
        %4293 = vmatprep.subr.mxu0 0.0
        %4294 = vmatpush1.xpose.msra.mxu0 0.0
        %4295 = vmatprep.subr.mxu0 0.0
        %4296 = vmatpush1.xpose.msra.mxu0 0.0
        %4297 = vmatprep.subr.mxu0 0.0
        %4298 = vmatpush1.xpose.msra.mxu0 0.0
        %4299 = vmatprep.mubr.f32.mxu0 0.0
        %v4300 = vand.u32 %v4077, 4294901760
        %v4301 = vsub.f32 %v4077, %v4300
        %4302 = vmatmul.mubr.f32.gmra.mrb[0].mxu0 %v4301
        %v4303 = vpop.f32.mrb[0].mxu0
        %v4304 = vadd.f32 %v4230, %v4303
        %v4305 = vpop.f32.mrb[0].mxu0
        %4306 = vdwg.mxu0
        %4307 = vmatprep.subr.mxu0 0.0
        %v4308 = vand.u32 %v4079, 4294901760
        %4309 = vmatpush1.xpose.msra.mxu0 %v4308
        %4310 = vmatprep.subr.mxu0 0.0
        %4311 = vmatpush1.xpose.msra.mxu0 0.0
        %4312 = vmatprep.subr.mxu0 0.0
        %4313 = vmatpush1.xpose.msra.mxu0 0.0
        %4314 = vmatprep.subr.mxu0 0.0
        %4315 = vmatpush1.xpose.msra.mxu0 0.0
        %4316 = vmatprep.subr.mxu0 0.0
        %4317 = vmatpush1.xpose.msra.mxu0 0.0
        %4318 = vmatprep.subr.mxu0 0.0
        %4319 = vmatpush1.xpose.msra.mxu0 0.0
        %4320 = vmatprep.subr.mxu0 0.0
        %4321 = vmatpush1.xpose.msra.mxu0 0.0
        %4322 = vmatprep.subr.mxu0 0.0
        %4323 = vmatpush1.xpose.msra.mxu0 0.0
        %4324 = vmatprep.subr.mxu0 0.0
        %4325 = vmatpush1.xpose.msra.mxu0 0.0
        %4326 = vmatprep.subr.mxu0 0.0
        %4327 = vmatpush1.xpose.msra.mxu0 0.0
        %4328 = vmatprep.subr.mxu0 0.0
        %4329 = vmatpush1.xpose.msra.mxu0 0.0
        %4330 = vmatprep.subr.mxu0 0.0
        %4331 = vmatpush1.xpose.msra.mxu0 0.0
        %4332 = vmatprep.subr.mxu0 0.0
        %4333 = vmatpush1.xpose.msra.mxu0 0.0
        %4334 = vmatprep.subr.mxu0 0.0
        %4335 = vmatpush1.xpose.msra.mxu0 0.0
        %4336 = vmatprep.subr.mxu0 0.0
        %4337 = vmatpush1.xpose.msra.mxu0 0.0
        %4338 = vmatprep.subr.mxu0 0.0
        %4339 = vmatpush1.xpose.msra.mxu0 0.0
        %4340 = vmatprep.subr.mxu0 0.0
        %4341 = vmatpush1.xpose.msra.mxu0 0.0
        %4342 = vmatprep.subr.mxu0 0.0
        %4343 = vmatpush1.xpose.msra.mxu0 0.0
        %4344 = vmatprep.subr.mxu0 0.0
        %4345 = vmatpush1.xpose.msra.mxu0 0.0
        %4346 = vmatprep.subr.mxu0 0.0
        %4347 = vmatpush1.xpose.msra.mxu0 0.0
        %4348 = vmatprep.subr.mxu0 0.0
        %4349 = vmatpush1.xpose.msra.mxu0 0.0
        %4350 = vmatprep.subr.mxu0 0.0
        %4351 = vmatpush1.xpose.msra.mxu0 0.0
        %4352 = vmatprep.subr.mxu0 0.0
        %4353 = vmatpush1.xpose.msra.mxu0 0.0
        %4354 = vmatprep.subr.mxu0 0.0
        %4355 = vmatpush1.xpose.msra.mxu0 0.0
        %4356 = vmatprep.subr.mxu0 0.0
        %4357 = vmatpush1.xpose.msra.mxu0 0.0
        %4358 = vmatprep.subr.mxu0 0.0
        %4359 = vmatpush1.xpose.msra.mxu0 0.0
        %4360 = vmatprep.subr.mxu0 0.0
        %4361 = vmatpush1.xpose.msra.mxu0 0.0
        %4362 = vmatprep.subr.mxu0 0.0
        %4363 = vmatpush1.xpose.msra.mxu0 0.0
        %4364 = vmatprep.subr.mxu0 0.0
        %4365 = vmatpush1.xpose.msra.mxu0 0.0
        %4366 = vmatprep.subr.mxu0 0.0
        %4367 = vmatpush1.xpose.msra.mxu0 0.0
        %4368 = vmatprep.subr.mxu0 0.0
        %4369 = vmatpush1.xpose.msra.mxu0 0.0
        %4370 = vmatprep.subr.mxu0 0.0
        %4371 = vmatpush1.xpose.msra.mxu0 0.0
        %4372 = vmatprep.mubr.f32.mxu0 0.0
        %v4373 = vand.u32 %v4077, 4294901760
        %v4374 = vsub.f32 %v4077, %v4373
        %v4375 = vand.u32 %v4374, 4294901760
        %4376 = vmatmul.mubr.f32.gmra.mrb[0].mxu0 %v4375
        %v4377 = vpop.f32.mrb[0].mxu0
        %v4378 = vadd.f32 %v4304, %v4377
        %v4379 = vpop.f32.mrb[0].mxu0
        %4380 = vdwg.mxu0
        %4381 = vmatprep.subr.mxu0 0.0
        %v4382 = vand.u32 %v4079, 4294901760
        %v4383 = vsub.f32 %v4079, %v4382
        %v4384 = vand.u32 %v4383, 4294901760
        %4385 = vmatpush1.xpose.msra.mxu0 %v4384
        %4386 = vmatprep.subr.mxu0 0.0
        %4387 = vmatpush1.xpose.msra.mxu0 0.0
        %4388 = vmatprep.subr.mxu0 0.0
        %4389 = vmatpush1.xpose.msra.mxu0 0.0
        %4390 = vmatprep.subr.mxu0 0.0
        %4391 = vmatpush1.xpose.msra.mxu0 0.0
        %4392 = vmatprep.subr.mxu0 0.0
        %4393 = vmatpush1.xpose.msra.mxu0 0.0
        %4394 = vmatprep.subr.mxu0 0.0
        %4395 = vmatpush1.xpose.msra.mxu0 0.0
        %4396 = vmatprep.subr.mxu0 0.0
        %4397 = vmatpush1.xpose.msra.mxu0 0.0
        %4398 = vmatprep.subr.mxu0 0.0
        %4399 = vmatpush1.xpose.msra.mxu0 0.0
        %4400 = vmatprep.subr.mxu0 0.0
        %4401 = vmatpush1.xpose.msra.mxu0 0.0
        %4402 = vmatprep.subr.mxu0 0.0
        %4403 = vmatpush1.xpose.msra.mxu0 0.0
        %4404 = vmatprep.subr.mxu0 0.0
        %4405 = vmatpush1.xpose.msra.mxu0 0.0
        %4406 = vmatprep.subr.mxu0 0.0
        %4407 = vmatpush1.xpose.msra.mxu0 0.0
        %4408 = vmatprep.subr.mxu0 0.0
        %4409 = vmatpush1.xpose.msra.mxu0 0.0
        %4410 = vmatprep.subr.mxu0 0.0
        %4411 = vmatpush1.xpose.msra.mxu0 0.0
        %4412 = vmatprep.subr.mxu0 0.0
        %4413 = vmatpush1.xpose.msra.mxu0 0.0
        %4414 = vmatprep.subr.mxu0 0.0
        %4415 = vmatpush1.xpose.msra.mxu0 0.0
        %4416 = vmatprep.subr.mxu0 0.0
        %4417 = vmatpush1.xpose.msra.mxu0 0.0
        %4418 = vmatprep.subr.mxu0 0.0
        %4419 = vmatpush1.xpose.msra.mxu0 0.0
        %4420 = vmatprep.subr.mxu0 0.0
        %4421 = vmatpush1.xpose.msra.mxu0 0.0
        %4422 = vmatprep.subr.mxu0 0.0
        %4423 = vmatpush1.xpose.msra.mxu0 0.0
        %4424 = vmatprep.subr.mxu0 0.0
        %4425 = vmatpush1.xpose.msra.mxu0 0.0
        %4426 = vmatprep.subr.mxu0 0.0
        %4427 = vmatpush1.xpose.msra.mxu0 0.0
        %4428 = vmatprep.subr.mxu0 0.0
        %4429 = vmatpush1.xpose.msra.mxu0 0.0
        %4430 = vmatprep.subr.mxu0 0.0
        %4431 = vmatpush1.xpose.msra.mxu0 0.0
        %4432 = vmatprep.subr.mxu0 0.0
        %4433 = vmatpush1.xpose.msra.mxu0 0.0
        %4434 = vmatprep.subr.mxu0 0.0
        %4435 = vmatpush1.xpose.msra.mxu0 0.0
        %4436 = vmatprep.subr.mxu0 0.0
        %4437 = vmatpush1.xpose.msra.mxu0 0.0
        %4438 = vmatprep.subr.mxu0 0.0
        %4439 = vmatpush1.xpose.msra.mxu0 0.0
        %4440 = vmatprep.subr.mxu0 0.0
        %4441 = vmatpush1.xpose.msra.mxu0 0.0
        %4442 = vmatprep.subr.mxu0 0.0
        %4443 = vmatpush1.xpose.msra.mxu0 0.0
        %4444 = vmatprep.subr.mxu0 0.0
        %4445 = vmatpush1.xpose.msra.mxu0 0.0
        %4446 = vmatprep.subr.mxu0 0.0
        %4447 = vmatpush1.xpose.msra.mxu0 0.0
        %4448 = vmatprep.mubr.f32.mxu0 0.0
        %v4449 = vand.u32 %v4077, 4294901760
        %4450 = vmatmul.mubr.f32.gmra.mrb[0].mxu0 %v4449
        %v4451 = vpop.f32.mrb[0].mxu0
        %v4452 = vadd.f32 %v4378, %v4451
        %v4453 = vpop.f32.mrb[0].mxu0
        %4454 = vdwg.mxu0
        %4455 = vmatprep.subr.mxu0 0.0
        %v4456 = vand.u32 %v4079, 4294901760
        %4457 = vmatpush1.xpose.msra.mxu0 %v4456
        %4458 = vmatprep.subr.mxu0 0.0
        %4459 = vmatpush1.xpose.msra.mxu0 0.0
        %4460 = vmatprep.subr.mxu0 0.0
        %4461 = vmatpush1.xpose.msra.mxu0 0.0
        %4462 = vmatprep.subr.mxu0 0.0
        %4463 = vmatpush1.xpose.msra.mxu0 0.0
        %4464 = vmatprep.subr.mxu0 0.0
        %4465 = vmatpush1.xpose.msra.mxu0 0.0
        %4466 = vmatprep.subr.mxu0 0.0
        %4467 = vmatpush1.xpose.msra.mxu0 0.0
        %4468 = vmatprep.subr.mxu0 0.0
        %4469 = vmatpush1.xpose.msra.mxu0 0.0
        %4470 = vmatprep.subr.mxu0 0.0
        %4471 = vmatpush1.xpose.msra.mxu0 0.0
        %4472 = vmatprep.subr.mxu0 0.0
        %4473 = vmatpush1.xpose.msra.mxu0 0.0
        %4474 = vmatprep.subr.mxu0 0.0
        %4475 = vmatpush1.xpose.msra.mxu0 0.0
        %4476 = vmatprep.subr.mxu0 0.0
        %4477 = vmatpush1.xpose.msra.mxu0 0.0
        %4478 = vmatprep.subr.mxu0 0.0
        %4479 = vmatpush1.xpose.msra.mxu0 0.0
        %4480 = vmatprep.subr.mxu0 0.0
        %4481 = vmatpush1.xpose.msra.mxu0 0.0
        %4482 = vmatprep.subr.mxu0 0.0
        %4483 = vmatpush1.xpose.msra.mxu0 0.0
        %4484 = vmatprep.subr.mxu0 0.0
        %4485 = vmatpush1.xpose.msra.mxu0 0.0
        %4486 = vmatprep.subr.mxu0 0.0
        %4487 = vmatpush1.xpose.msra.mxu0 0.0
        %4488 = vmatprep.subr.mxu0 0.0
        %4489 = vmatpush1.xpose.msra.mxu0 0.0
        %4490 = vmatprep.subr.mxu0 0.0
        %4491 = vmatpush1.xpose.msra.mxu0 0.0
        %4492 = vmatprep.subr.mxu0 0.0
        %4493 = vmatpush1.xpose.msra.mxu0 0.0
        %4494 = vmatprep.subr.mxu0 0.0
        %4495 = vmatpush1.xpose.msra.mxu0 0.0
        %4496 = vmatprep.subr.mxu0 0.0
        %4497 = vmatpush1.xpose.msra.mxu0 0.0
        %4498 = vmatprep.subr.mxu0 0.0
        %4499 = vmatpush1.xpose.msra.mxu0 0.0
        %4500 = vmatprep.subr.mxu0 0.0
        %4501 = vmatpush1.xpose.msra.mxu0 0.0
        %4502 = vmatprep.subr.mxu0 0.0
        %4503 = vmatpush1.xpose.msra.mxu0 0.0
        %4504 = vmatprep.subr.mxu0 0.0
        %4505 = vmatpush1.xpose.msra.mxu0 0.0
        %4506 = vmatprep.subr.mxu0 0.0
        %4507 = vmatpush1.xpose.msra.mxu0 0.0
        %4508 = vmatprep.subr.mxu0 0.0
        %4509 = vmatpush1.xpose.msra.mxu0 0.0
        %4510 = vmatprep.subr.mxu0 0.0
        %4511 = vmatpush1.xpose.msra.mxu0 0.0
        %4512 = vmatprep.subr.mxu0 0.0
        %4513 = vmatpush1.xpose.msra.mxu0 0.0
        %4514 = vmatprep.subr.mxu0 0.0
        %4515 = vmatpush1.xpose.msra.mxu0 0.0
        %4516 = vmatprep.subr.mxu0 0.0
        %4517 = vmatpush1.xpose.msra.mxu0 0.0
        %4518 = vmatprep.subr.mxu0 0.0
        %4519 = vmatpush1.xpose.msra.mxu0 0.0
        %4520 = vmatprep.mubr.f32.mxu0 0.0
        %v4521 = vand.u32 %v4077, 4294901760
        %4522 = vmatmul.mubr.f32.gmra.mrb[0].mxu0 %v4521
        %v4523 = vpop.f32.mrb[0].mxu0
        %v4524 = vadd.f32 %v4452, %v4523
        %v4525 = vpop.f32.mrb[0].mxu0
        %4526 = vdwg.mxu0
        %v4527 = vmul.f32 %v4524, 0.35355338
        %v4528 = vsel %vm2237, %v4527, -1e+30
        %v4529 = vsel %vm2238, %v4528, -inf
        %4530 = vmax.xlane.f32.xlu0 %v4529
        %v4531 = vpop.xlane.xlu0 %4530
        %v4532 = vsub.f32 %v4528, %v4531
        %v4533 = vmul.f32 %v4532, 1.442695
        %v4534 = vpow.pop %v4533
        %v4535 = vsel %vm2238, %v4534, 0.0
        %4536 = vadd.xlane.f32.xlu0 %v4535
        %v4537 = vpop.xlane.xlu0 %4536
        %v4538 = vrcp.pop %v4537
        %v4539 = vmul.f32 %v4534, %v4538
        %4540 = vrot.lane.b32.xlu0 %v2230, 112
        %v4541 = vpop.permute.xlu0 %4540
        %v4544 = vsel %vm2238, %v4539, 0
        %4546 = vmatprep.subr.mxu0 0.0
        %v4547 = vand.u32 %v4541, 4294901760
        %4548 = vmatpush1.msra.mxu0 %v4547
        %4549 = vmatprep.subr.mxu0 0.0
        %4550 = vmatpush1.msra.mxu0 0.0
        %4551 = vmatprep.subr.mxu0 0.0
        %4552 = vmatpush1.msra.mxu0 0.0
        %4553 = vmatprep.subr.mxu0 0.0
        %4554 = vmatpush1.msra.mxu0 0.0
        %4555 = vmatprep.subr.mxu0 0.0
        %4556 = vmatpush1.msra.mxu0 0.0
        %4557 = vmatprep.subr.mxu0 0.0
        %4558 = vmatpush1.msra.mxu0 0.0
        %4559 = vmatprep.subr.mxu0 0.0
        %4560 = vmatpush1.msra.mxu0 0.0
        %4561 = vmatprep.subr.mxu0 0.0
        %4562 = vmatpush1.msra.mxu0 0.0
        %4563 = vmatprep.subr.mxu0 0.0
        %4564 = vmatpush1.msra.mxu0 0.0
        %4565 = vmatprep.subr.mxu0 0.0
        %4566 = vmatpush1.msra.mxu0 0.0
        %4567 = vmatprep.subr.mxu0 0.0
        %4568 = vmatpush1.msra.mxu0 0.0
        %4569 = vmatprep.subr.mxu0 0.0
        %4570 = vmatpush1.msra.mxu0 0.0
        %4571 = vmatprep.subr.mxu0 0.0
        %4572 = vmatpush1.msra.mxu0 0.0
        %4573 = vmatprep.subr.mxu0 0.0
        %4574 = vmatpush1.msra.mxu0 0.0
        %4575 = vmatprep.subr.mxu0 0.0
        %4576 = vmatpush1.msra.mxu0 0.0
        %4577 = vmatprep.subr.mxu0 0.0
        %4578 = vmatpush1.msra.mxu0 0.0
        %4579 = vmatprep.subr.mxu0 0.0
        %4580 = vmatpush1.msra.mxu0 0.0
        %4581 = vmatprep.subr.mxu0 0.0
        %4582 = vmatpush1.msra.mxu0 0.0
        %4583 = vmatprep.subr.mxu0 0.0
        %4584 = vmatpush1.msra.mxu0 0.0
        %4585 = vmatprep.subr.mxu0 0.0
        %4586 = vmatpush1.msra.mxu0 0.0
        %4587 = vmatprep.subr.mxu0 0.0
        %4588 = vmatpush1.msra.mxu0 0.0
        %4589 = vmatprep.subr.mxu0 0.0
        %4590 = vmatpush1.msra.mxu0 0.0
        %4591 = vmatprep.subr.mxu0 0.0
        %4592 = vmatpush1.msra.mxu0 0.0
        %4593 = vmatprep.subr.mxu0 0.0
        %4594 = vmatpush1.msra.mxu0 0.0
        %4595 = vmatprep.subr.mxu0 0.0
        %4596 = vmatpush1.msra.mxu0 0.0
        %4597 = vmatprep.subr.mxu0 0.0
        %4598 = vmatpush1.msra.mxu0 0.0
        %4599 = vmatprep.subr.mxu0 0.0
        %4600 = vmatpush1.msra.mxu0 0.0
        %4601 = vmatprep.subr.mxu0 0.0
        %4602 = vmatpush1.msra.mxu0 0.0
        %4603 = vmatprep.subr.mxu0 0.0
        %4604 = vmatpush1.msra.mxu0 0.0
        %4605 = vmatprep.subr.mxu0 0.0
        %4606 = vmatpush1.msra.mxu0 0.0
        %4607 = vmatprep.subr.mxu0 0.0
        %4608 = vmatpush1.msra.mxu0 0.0
        %4609 = vmatprep.subr.mxu0 0.0
        %4610 = vmatpush1.msra.mxu0 0.0
        %4611 = vmatprep.mubr.f32.mxu0 0.0
        %v4612 = vand.u32 %v4544, 4294901760
        %v4613 = vsub.f32 %v4544, %v4612
        %v4614 = vand.u32 %v4613, 4294901760
        %v4615 = vsub.f32 %v4613, %v4614
        %v4616 = vand.u32 %v4615, 4294901760
        %4617 = vmatmul.mubr.f32.gmra.mrb[0].mxu0 %v4616
        %v4618 = vpop.f32.mrb[0].mxu0
        %v4619 = vadd.f32 0.0, %v4618
        %v4620 = vpop.f32.mrb[0].mxu0
        %4621 = vdwg.mxu0
        %4622 = vmatprep.subr.mxu0 0.0
        %v4623 = vand.u32 %v4541, 4294901760
        %v4624 = vsub.f32 %v4541, %v4623
        %v4625 = vand.u32 %v4624, 4294901760
        %v4626 = vsub.f32 %v4624, %v4625
        %v4627 = vand.u32 %v4626, 4294901760
        %4628 = vmatpush1.msra.mxu0 %v4627
        %4629 = vmatprep.subr.mxu0 0.0
        %4630 = vmatpush1.msra.mxu0 0.0
        %4631 = vmatprep.subr.mxu0 0.0
        %4632 = vmatpush1.msra.mxu0 0.0
        %4633 = vmatprep.subr.mxu0 0.0
        %4634 = vmatpush1.msra.mxu0 0.0
        %4635 = vmatprep.subr.mxu0 0.0
        %4636 = vmatpush1.msra.mxu0 0.0
        %4637 = vmatprep.subr.mxu0 0.0
        %4638 = vmatpush1.msra.mxu0 0.0
        %4639 = vmatprep.subr.mxu0 0.0
        %4640 = vmatpush1.msra.mxu0 0.0
        %4641 = vmatprep.subr.mxu0 0.0
        %4642 = vmatpush1.msra.mxu0 0.0
        %4643 = vmatprep.subr.mxu0 0.0
        %4644 = vmatpush1.msra.mxu0 0.0
        %4645 = vmatprep.subr.mxu0 0.0
        %4646 = vmatpush1.msra.mxu0 0.0
        %4647 = vmatprep.subr.mxu0 0.0
        %4648 = vmatpush1.msra.mxu0 0.0
        %4649 = vmatprep.subr.mxu0 0.0
        %4650 = vmatpush1.msra.mxu0 0.0
        %4651 = vmatprep.subr.mxu0 0.0
        %4652 = vmatpush1.msra.mxu0 0.0
        %4653 = vmatprep.subr.mxu0 0.0
        %4654 = vmatpush1.msra.mxu0 0.0
        %4655 = vmatprep.subr.mxu0 0.0
        %4656 = vmatpush1.msra.mxu0 0.0
        %4657 = vmatprep.subr.mxu0 0.0
        %4658 = vmatpush1.msra.mxu0 0.0
        %4659 = vmatprep.subr.mxu0 0.0
        %4660 = vmatpush1.msra.mxu0 0.0
        %4661 = vmatprep.subr.mxu0 0.0
        %4662 = vmatpush1.msra.mxu0 0.0
        %4663 = vmatprep.subr.mxu0 0.0
        %4664 = vmatpush1.msra.mxu0 0.0
        %4665 = vmatprep.subr.mxu0 0.0
        %4666 = vmatpush1.msra.mxu0 0.0
        %4667 = vmatprep.subr.mxu0 0.0
        %4668 = vmatpush1.msra.mxu0 0.0
        %4669 = vmatprep.subr.mxu0 0.0
        %4670 = vmatpush1.msra.mxu0 0.0
        %4671 = vmatprep.subr.mxu0 0.0
        %4672 = vmatpush1.msra.mxu0 0.0
        %4673 = vmatprep.subr.mxu0 0.0
        %4674 = vmatpush1.msra.mxu0 0.0
        %4675 = vmatprep.subr.mxu0 0.0
        %4676 = vmatpush1.msra.mxu0 0.0
        %4677 = vmatprep.subr.mxu0 0.0
        %4678 = vmatpush1.msra.mxu0 0.0
        %4679 = vmatprep.subr.mxu0 0.0
        %4680 = vmatpush1.msra.mxu0 0.0
        %4681 = vmatprep.subr.mxu0 0.0
        %4682 = vmatpush1.msra.mxu0 0.0
        %4683 = vmatprep.subr.mxu0 0.0
        %4684 = vmatpush1.msra.mxu0 0.0
        %4685 = vmatprep.subr.mxu0 0.0
        %4686 = vmatpush1.msra.mxu0 0.0
        %4687 = vmatprep.subr.mxu0 0.0
        %4688 = vmatpush1.msra.mxu0 0.0
        %4689 = vmatprep.subr.mxu0 0.0
        %4690 = vmatpush1.msra.mxu0 0.0
        %4691 = vmatprep.mubr.f32.mxu0 0.0
        %v4692 = vand.u32 %v4544, 4294901760
        %4693 = vmatmul.mubr.f32.gmra.mrb[0].mxu0 %v4692
        %v4694 = vpop.f32.mrb[0].mxu0
        %v4695 = vadd.f32 %v4619, %v4694
        %v4696 = vpop.f32.mrb[0].mxu0
        %4697 = vdwg.mxu0
        %4698 = vmatprep.subr.mxu0 0.0
        %v4699 = vand.u32 %v4541, 4294901760
        %v4700 = vsub.f32 %v4541, %v4699
        %4701 = vmatpush1.msra.mxu0 %v4700
        %4702 = vmatprep.subr.mxu0 0.0
        %4703 = vmatpush1.msra.mxu0 0.0
        %4704 = vmatprep.subr.mxu0 0.0
        %4705 = vmatpush1.msra.mxu0 0.0
        %4706 = vmatprep.subr.mxu0 0.0
        %4707 = vmatpush1.msra.mxu0 0.0
        %4708 = vmatprep.subr.mxu0 0.0
        %4709 = vmatpush1.msra.mxu0 0.0
        %4710 = vmatprep.subr.mxu0 0.0
        %4711 = vmatpush1.msra.mxu0 0.0
        %4712 = vmatprep.subr.mxu0 0.0
        %4713 = vmatpush1.msra.mxu0 0.0
        %4714 = vmatprep.subr.mxu0 0.0
        %4715 = vmatpush1.msra.mxu0 0.0
        %4716 = vmatprep.subr.mxu0 0.0
        %4717 = vmatpush1.msra.mxu0 0.0
        %4718 = vmatprep.subr.mxu0 0.0
        %4719 = vmatpush1.msra.mxu0 0.0
        %4720 = vmatprep.subr.mxu0 0.0
        %4721 = vmatpush1.msra.mxu0 0.0
        %4722 = vmatprep.subr.mxu0 0.0
        %4723 = vmatpush1.msra.mxu0 0.0
        %4724 = vmatprep.subr.mxu0 0.0
        %4725 = vmatpush1.msra.mxu0 0.0
        %4726 = vmatprep.subr.mxu0 0.0
        %4727 = vmatpush1.msra.mxu0 0.0
        %4728 = vmatprep.subr.mxu0 0.0
        %4729 = vmatpush1.msra.mxu0 0.0
        %4730 = vmatprep.subr.mxu0 0.0
        %4731 = vmatpush1.msra.mxu0 0.0
        %4732 = vmatprep.subr.mxu0 0.0
        %4733 = vmatpush1.msra.mxu0 0.0
        %4734 = vmatprep.subr.mxu0 0.0
        %4735 = vmatpush1.msra.mxu0 0.0
        %4736 = vmatprep.subr.mxu0 0.0
        %4737 = vmatpush1.msra.mxu0 0.0
        %4738 = vmatprep.subr.mxu0 0.0
        %4739 = vmatpush1.msra.mxu0 0.0
        %4740 = vmatprep.subr.mxu0 0.0
        %4741 = vmatpush1.msra.mxu0 0.0
        %4742 = vmatprep.subr.mxu0 0.0
        %4743 = vmatpush1.msra.mxu0 0.0
        %4744 = vmatprep.subr.mxu0 0.0
        %4745 = vmatpush1.msra.mxu0 0.0
        %4746 = vmatprep.subr.mxu0 0.0
        %4747 = vmatpush1.msra.mxu0 0.0
        %4748 = vmatprep.subr.mxu0 0.0
        %4749 = vmatpush1.msra.mxu0 0.0
        %4750 = vmatprep.subr.mxu0 0.0
        %4751 = vmatpush1.msra.mxu0 0.0
        %4752 = vmatprep.subr.mxu0 0.0
        %4753 = vmatpush1.msra.mxu0 0.0
        %4754 = vmatprep.subr.mxu0 0.0
        %4755 = vmatpush1.msra.mxu0 0.0
        %4756 = vmatprep.subr.mxu0 0.0
        %4757 = vmatpush1.msra.mxu0 0.0
        %4758 = vmatprep.subr.mxu0 0.0
        %4759 = vmatpush1.msra.mxu0 0.0
        %4760 = vmatprep.subr.mxu0 0.0
        %4761 = vmatpush1.msra.mxu0 0.0
        %4762 = vmatprep.subr.mxu0 0.0
        %4763 = vmatpush1.msra.mxu0 0.0
        %4764 = vmatprep.mubr.f32.mxu0 0.0
        %v4765 = vand.u32 %v4544, 4294901760
        %v4766 = vsub.f32 %v4544, %v4765
        %4767 = vmatmul.mubr.f32.gmra.mrb[0].mxu0 %v4766
        %v4768 = vpop.f32.mrb[0].mxu0
        %v4769 = vadd.f32 %v4695, %v4768
        %v4770 = vpop.f32.mrb[0].mxu0
        %4771 = vdwg.mxu0
        %4772 = vmatprep.subr.mxu0 0.0
        %v4773 = vand.u32 %v4541, 4294901760
        %4774 = vmatpush1.msra.mxu0 %v4773
        %4775 = vmatprep.subr.mxu0 0.0
        %4776 = vmatpush1.msra.mxu0 0.0
        %4777 = vmatprep.subr.mxu0 0.0
        %4778 = vmatpush1.msra.mxu0 0.0
        %4779 = vmatprep.subr.mxu0 0.0
        %4780 = vmatpush1.msra.mxu0 0.0
        %4781 = vmatprep.subr.mxu0 0.0
        %4782 = vmatpush1.msra.mxu0 0.0
        %4783 = vmatprep.subr.mxu0 0.0
        %4784 = vmatpush1.msra.mxu0 0.0
        %4785 = vmatprep.subr.mxu0 0.0
        %4786 = vmatpush1.msra.mxu0 0.0
        %4787 = vmatprep.subr.mxu0 0.0
        %4788 = vmatpush1.msra.mxu0 0.0
        %4789 = vmatprep.subr.mxu0 0.0
        %4790 = vmatpush1.msra.mxu0 0.0
        %4791 = vmatprep.subr.mxu0 0.0
        %4792 = vmatpush1.msra.mxu0 0.0
        %4793 = vmatprep.subr.mxu0 0.0
        %4794 = vmatpush1.msra.mxu0 0.0
        %4795 = vmatprep.subr.mxu0 0.0
        %4796 = vmatpush1.msra.mxu0 0.0
        %4797 = vmatprep.subr.mxu0 0.0
        %4798 = vmatpush1.msra.mxu0 0.0
        %4799 = vmatprep.subr.mxu0 0.0
        %4800 = vmatpush1.msra.mxu0 0.0
        %4801 = vmatprep.subr.mxu0 0.0
        %4802 = vmatpush1.msra.mxu0 0.0
        %4803 = vmatprep.subr.mxu0 0.0
        %4804 = vmatpush1.msra.mxu0 0.0
        %4805 = vmatprep.subr.mxu0 0.0
        %4806 = vmatpush1.msra.mxu0 0.0
        %4807 = vmatprep.subr.mxu0 0.0
        %4808 = vmatpush1.msra.mxu0 0.0
        %4809 = vmatprep.subr.mxu0 0.0
        %4810 = vmatpush1.msra.mxu0 0.0
        %4811 = vmatprep.subr.mxu0 0.0
        %4812 = vmatpush1.msra.mxu0 0.0
        %4813 = vmatprep.subr.mxu0 0.0
        %4814 = vmatpush1.msra.mxu0 0.0
        %4815 = vmatprep.subr.mxu0 0.0
        %4816 = vmatpush1.msra.mxu0 0.0
        %4817 = vmatprep.subr.mxu0 0.0
        %4818 = vmatpush1.msra.mxu0 0.0
        %4819 = vmatprep.subr.mxu0 0.0
        %4820 = vmatpush1.msra.mxu0 0.0
        %4821 = vmatprep.subr.mxu0 0.0
        %4822 = vmatpush1.msra.mxu0 0.0
        %4823 = vmatprep.subr.mxu0 0.0
        %4824 = vmatpush1.msra.mxu0 0.0
        %4825 = vmatprep.subr.mxu0 0.0
        %4826 = vmatpush1.msra.mxu0 0.0
        %4827 = vmatprep.subr.mxu0 0.0
        %4828 = vmatpush1.msra.mxu0 0.0
        %4829 = vmatprep.subr.mxu0 0.0
        %4830 = vmatpush1.msra.mxu0 0.0
        %4831 = vmatprep.subr.mxu0 0.0
        %4832 = vmatpush1.msra.mxu0 0.0
        %4833 = vmatprep.subr.mxu0 0.0
        %4834 = vmatpush1.msra.mxu0 0.0
        %4835 = vmatprep.subr.mxu0 0.0
        %4836 = vmatpush1.msra.mxu0 0.0
        %4837 = vmatprep.mubr.f32.mxu0 0.0
        %v4838 = vand.u32 %v4544, 4294901760
        %v4839 = vsub.f32 %v4544, %v4838
        %v4840 = vand.u32 %v4839, 4294901760
        %4841 = vmatmul.mubr.f32.gmra.mrb[0].mxu0 %v4840
        %v4842 = vpop.f32.mrb[0].mxu0
        %v4843 = vadd.f32 %v4769, %v4842
        %v4844 = vpop.f32.mrb[0].mxu0
        %4845 = vdwg.mxu0
        %4846 = vmatprep.subr.mxu0 0.0
        %v4847 = vand.u32 %v4541, 4294901760
        %v4848 = vsub.f32 %v4541, %v4847
        %v4849 = vand.u32 %v4848, 4294901760
        %4850 = vmatpush1.msra.mxu0 %v4849
        %4851 = vmatprep.subr.mxu0 0.0
        %4852 = vmatpush1.msra.mxu0 0.0
        %4853 = vmatprep.subr.mxu0 0.0
        %4854 = vmatpush1.msra.mxu0 0.0
        %4855 = vmatprep.subr.mxu0 0.0
        %4856 = vmatpush1.msra.mxu0 0.0
        %4857 = vmatprep.subr.mxu0 0.0
        %4858 = vmatpush1.msra.mxu0 0.0
        %4859 = vmatprep.subr.mxu0 0.0
        %4860 = vmatpush1.msra.mxu0 0.0
        %4861 = vmatprep.subr.mxu0 0.0
        %4862 = vmatpush1.msra.mxu0 0.0
        %4863 = vmatprep.subr.mxu0 0.0
        %4864 = vmatpush1.msra.mxu0 0.0
        %4865 = vmatprep.subr.mxu0 0.0
        %4866 = vmatpush1.msra.mxu0 0.0
        %4867 = vmatprep.subr.mxu0 0.0
        %4868 = vmatpush1.msra.mxu0 0.0
        %4869 = vmatprep.subr.mxu0 0.0
        %4870 = vmatpush1.msra.mxu0 0.0
        %4871 = vmatprep.subr.mxu0 0.0
        %4872 = vmatpush1.msra.mxu0 0.0
        %4873 = vmatprep.subr.mxu0 0.0
        %4874 = vmatpush1.msra.mxu0 0.0
        %4875 = vmatprep.subr.mxu0 0.0
        %4876 = vmatpush1.msra.mxu0 0.0
        %4877 = vmatprep.subr.mxu0 0.0
        %4878 = vmatpush1.msra.mxu0 0.0
        %4879 = vmatprep.subr.mxu0 0.0
        %4880 = vmatpush1.msra.mxu0 0.0
        %4881 = vmatprep.subr.mxu0 0.0
        %4882 = vmatpush1.msra.mxu0 0.0
        %4883 = vmatprep.subr.mxu0 0.0
        %4884 = vmatpush1.msra.mxu0 0.0
        %4885 = vmatprep.subr.mxu0 0.0
        %4886 = vmatpush1.msra.mxu0 0.0
        %4887 = vmatprep.subr.mxu0 0.0
        %4888 = vmatpush1.msra.mxu0 0.0
        %4889 = vmatprep.subr.mxu0 0.0
        %4890 = vmatpush1.msra.mxu0 0.0
        %4891 = vmatprep.subr.mxu0 0.0
        %4892 = vmatpush1.msra.mxu0 0.0
        %4893 = vmatprep.subr.mxu0 0.0
        %4894 = vmatpush1.msra.mxu0 0.0
        %4895 = vmatprep.subr.mxu0 0.0
        %4896 = vmatpush1.msra.mxu0 0.0
        %4897 = vmatprep.subr.mxu0 0.0
        %4898 = vmatpush1.msra.mxu0 0.0
        %4899 = vmatprep.subr.mxu0 0.0
        %4900 = vmatpush1.msra.mxu0 0.0
        %4901 = vmatprep.subr.mxu0 0.0
        %4902 = vmatpush1.msra.mxu0 0.0
        %4903 = vmatprep.subr.mxu0 0.0
        %4904 = vmatpush1.msra.mxu0 0.0
        %4905 = vmatprep.subr.mxu0 0.0
        %4906 = vmatpush1.msra.mxu0 0.0
        %4907 = vmatprep.subr.mxu0 0.0
        %4908 = vmatpush1.msra.mxu0 0.0
        %4909 = vmatprep.subr.mxu0 0.0
        %4910 = vmatpush1.msra.mxu0 0.0
        %4911 = vmatprep.subr.mxu0 0.0
        %4912 = vmatpush1.msra.mxu0 0.0
        %4913 = vmatprep.mubr.f32.mxu0 0.0
        %v4914 = vand.u32 %v4544, 4294901760
        %4915 = vmatmul.mubr.f32.gmra.mrb[0].mxu0 %v4914
        %v4916 = vpop.f32.mrb[0].mxu0
        %v4917 = vadd.f32 %v4843, %v4916
        %v4918 = vpop.f32.mrb[0].mxu0
        %4919 = vdwg.mxu0
        %4920 = vmatprep.subr.mxu0 0.0
        %v4921 = vand.u32 %v4541, 4294901760
        %4922 = vmatpush1.msra.mxu0 %v4921
        %4923 = vmatprep.subr.mxu0 0.0
        %4924 = vmatpush1.msra.mxu0 0.0
        %4925 = vmatprep.subr.mxu0 0.0
        %4926 = vmatpush1.msra.mxu0 0.0
        %4927 = vmatprep.subr.mxu0 0.0
        %4928 = vmatpush1.msra.mxu0 0.0
        %4929 = vmatprep.subr.mxu0 0.0
        %4930 = vmatpush1.msra.mxu0 0.0
        %4931 = vmatprep.subr.mxu0 0.0
        %4932 = vmatpush1.msra.mxu0 0.0
        %4933 = vmatprep.subr.mxu0 0.0
        %4934 = vmatpush1.msra.mxu0 0.0
        %4935 = vmatprep.subr.mxu0 0.0
        %4936 = vmatpush1.msra.mxu0 0.0
        %4937 = vmatprep.subr.mxu0 0.0
        %4938 = vmatpush1.msra.mxu0 0.0
        %4939 = vmatprep.subr.mxu0 0.0
        %4940 = vmatpush1.msra.mxu0 0.0
        %4941 = vmatprep.subr.mxu0 0.0
        %4942 = vmatpush1.msra.mxu0 0.0
        %4943 = vmatprep.subr.mxu0 0.0
        %4944 = vmatpush1.msra.mxu0 0.0
        %4945 = vmatprep.subr.mxu0 0.0
        %4946 = vmatpush1.msra.mxu0 0.0
        %4947 = vmatprep.subr.mxu0 0.0
        %4948 = vmatpush1.msra.mxu0 0.0
        %4949 = vmatprep.subr.mxu0 0.0
        %4950 = vmatpush1.msra.mxu0 0.0
        %4951 = vmatprep.subr.mxu0 0.0
        %4952 = vmatpush1.msra.mxu0 0.0
        %4953 = vmatprep.subr.mxu0 0.0
        %4954 = vmatpush1.msra.mxu0 0.0
        %4955 = vmatprep.subr.mxu0 0.0
        %4956 = vmatpush1.msra.mxu0 0.0
        %4957 = vmatprep.subr.mxu0 0.0
        %4958 = vmatpush1.msra.mxu0 0.0
        %4959 = vmatprep.subr.mxu0 0.0
        %4960 = vmatpush1.msra.mxu0 0.0
        %4961 = vmatprep.subr.mxu0 0.0
        %4962 = vmatpush1.msra.mxu0 0.0
        %4963 = vmatprep.subr.mxu0 0.0
        %4964 = vmatpush1.msra.mxu0 0.0
        %4965 = vmatprep.subr.mxu0 0.0
        %4966 = vmatpush1.msra.mxu0 0.0
        %4967 = vmatprep.subr.mxu0 0.0
        %4968 = vmatpush1.msra.mxu0 0.0
        %4969 = vmatprep.subr.mxu0 0.0
        %4970 = vmatpush1.msra.mxu0 0.0
        %4971 = vmatprep.subr.mxu0 0.0
        %4972 = vmatpush1.msra.mxu0 0.0
        %4973 = vmatprep.subr.mxu0 0.0
        %4974 = vmatpush1.msra.mxu0 0.0
        %4975 = vmatprep.subr.mxu0 0.0
        %4976 = vmatpush1.msra.mxu0 0.0
        %4977 = vmatprep.subr.mxu0 0.0
        %4978 = vmatpush1.msra.mxu0 0.0
        %4979 = vmatprep.subr.mxu0 0.0
        %4980 = vmatpush1.msra.mxu0 0.0
        %4981 = vmatprep.subr.mxu0 0.0
        %4982 = vmatpush1.msra.mxu0 0.0
        %4983 = vmatprep.subr.mxu0 0.0
        %4984 = vmatpush1.msra.mxu0 0.0
        %4985 = vmatprep.mubr.f32.mxu0 0.0
        %v4986 = vand.u32 %v4544, 4294901760
        %4987 = vmatmul.mubr.f32.gmra.mrb[0].mxu0 %v4986
        %v4988 = vpop.f32.mrb[0].mxu0
        %v4989 = vadd.f32 %v4917, %v4988
        %v4990 = vpop.f32.mrb[0].mxu0
        %4991 = vdwg.mxu0
        %4992 = vrot.lane.b32.xlu0 %v1211, 104
        %v4993 = vpop.permute.xlu0 %4992
        %4994 = vrot.lane.b32.xlu0 %v1722, 104
        %v4995 = vpop.permute.xlu0 %4994
        %v4996 = vsel %vm2238, %v4993, 0
        %v4998 = vsel %vm2238, %v4995, 0
        %5000 = vmatprep.subr.mxu0 0.0
        %v5001 = vand.u32 %v4998, 4294901760
        %5002 = vmatpush1.xpose.msra.mxu0 %v5001
        %5003 = vmatprep.subr.mxu0 0.0
        %5004 = vmatpush1.xpose.msra.mxu0 0.0
        %5005 = vmatprep.subr.mxu0 0.0
        %5006 = vmatpush1.xpose.msra.mxu0 0.0
        %5007 = vmatprep.subr.mxu0 0.0
        %5008 = vmatpush1.xpose.msra.mxu0 0.0
        %5009 = vmatprep.subr.mxu0 0.0
        %5010 = vmatpush1.xpose.msra.mxu0 0.0
        %5011 = vmatprep.subr.mxu0 0.0
        %5012 = vmatpush1.xpose.msra.mxu0 0.0
        %5013 = vmatprep.subr.mxu0 0.0
        %5014 = vmatpush1.xpose.msra.mxu0 0.0
        %5015 = vmatprep.subr.mxu0 0.0
        %5016 = vmatpush1.xpose.msra.mxu0 0.0
        %5017 = vmatprep.subr.mxu0 0.0
        %5018 = vmatpush1.xpose.msra.mxu0 0.0
        %5019 = vmatprep.subr.mxu0 0.0
        %5020 = vmatpush1.xpose.msra.mxu0 0.0
        %5021 = vmatprep.subr.mxu0 0.0
        %5022 = vmatpush1.xpose.msra.mxu0 0.0
        %5023 = vmatprep.subr.mxu0 0.0
        %5024 = vmatpush1.xpose.msra.mxu0 0.0
        %5025 = vmatprep.subr.mxu0 0.0
        %5026 = vmatpush1.xpose.msra.mxu0 0.0
        %5027 = vmatprep.subr.mxu0 0.0
        %5028 = vmatpush1.xpose.msra.mxu0 0.0
        %5029 = vmatprep.subr.mxu0 0.0
        %5030 = vmatpush1.xpose.msra.mxu0 0.0
        %5031 = vmatprep.subr.mxu0 0.0
        %5032 = vmatpush1.xpose.msra.mxu0 0.0
        %5033 = vmatprep.subr.mxu0 0.0
        %5034 = vmatpush1.xpose.msra.mxu0 0.0
        %5035 = vmatprep.subr.mxu0 0.0
        %5036 = vmatpush1.xpose.msra.mxu0 0.0
        %5037 = vmatprep.subr.mxu0 0.0
        %5038 = vmatpush1.xpose.msra.mxu0 0.0
        %5039 = vmatprep.subr.mxu0 0.0
        %5040 = vmatpush1.xpose.msra.mxu0 0.0
        %5041 = vmatprep.subr.mxu0 0.0
        %5042 = vmatpush1.xpose.msra.mxu0 0.0
        %5043 = vmatprep.subr.mxu0 0.0
        %5044 = vmatpush1.xpose.msra.mxu0 0.0
        %5045 = vmatprep.subr.mxu0 0.0
        %5046 = vmatpush1.xpose.msra.mxu0 0.0
        %5047 = vmatprep.subr.mxu0 0.0
        %5048 = vmatpush1.xpose.msra.mxu0 0.0
        %5049 = vmatprep.subr.mxu0 0.0
        %5050 = vmatpush1.xpose.msra.mxu0 0.0
        %5051 = vmatprep.subr.mxu0 0.0
        %5052 = vmatpush1.xpose.msra.mxu0 0.0
        %5053 = vmatprep.subr.mxu0 0.0
        %5054 = vmatpush1.xpose.msra.mxu0 0.0
        %5055 = vmatprep.subr.mxu0 0.0
        %5056 = vmatpush1.xpose.msra.mxu0 0.0
        %5057 = vmatprep.subr.mxu0 0.0
        %5058 = vmatpush1.xpose.msra.mxu0 0.0
        %5059 = vmatprep.subr.mxu0 0.0
        %5060 = vmatpush1.xpose.msra.mxu0 0.0
        %5061 = vmatprep.subr.mxu0 0.0
        %5062 = vmatpush1.xpose.msra.mxu0 0.0
        %5063 = vmatprep.subr.mxu0 0.0
        %5064 = vmatpush1.xpose.msra.mxu0 0.0
        %5065 = vmatprep.mubr.f32.mxu0 0.0
        %v5066 = vand.u32 %v4996, 4294901760
        %v5067 = vsub.f32 %v4996, %v5066
        %v5068 = vand.u32 %v5067, 4294901760
        %v5069 = vsub.f32 %v5067, %v5068
        %v5070 = vand.u32 %v5069, 4294901760
        %5071 = vmatmul.mubr.f32.gmra.mrb[0].mxu0 %v5070
        %v5072 = vpop.f32.mrb[0].mxu0
        %v5073 = vadd.f32 0.0, %v5072
        %v5074 = vpop.f32.mrb[0].mxu0
        %5075 = vdwg.mxu0
        %5076 = vmatprep.subr.mxu0 0.0
        %v5077 = vand.u32 %v4998, 4294901760
        %v5078 = vsub.f32 %v4998, %v5077
        %v5079 = vand.u32 %v5078, 4294901760
        %v5080 = vsub.f32 %v5078, %v5079
        %v5081 = vand.u32 %v5080, 4294901760
        %5082 = vmatpush1.xpose.msra.mxu0 %v5081
        %5083 = vmatprep.subr.mxu0 0.0
        %5084 = vmatpush1.xpose.msra.mxu0 0.0
        %5085 = vmatprep.subr.mxu0 0.0
        %5086 = vmatpush1.xpose.msra.mxu0 0.0
        %5087 = vmatprep.subr.mxu0 0.0
        %5088 = vmatpush1.xpose.msra.mxu0 0.0
        %5089 = vmatprep.subr.mxu0 0.0
        %5090 = vmatpush1.xpose.msra.mxu0 0.0
        %5091 = vmatprep.subr.mxu0 0.0
        %5092 = vmatpush1.xpose.msra.mxu0 0.0
        %5093 = vmatprep.subr.mxu0 0.0
        %5094 = vmatpush1.xpose.msra.mxu0 0.0
        %5095 = vmatprep.subr.mxu0 0.0
        %5096 = vmatpush1.xpose.msra.mxu0 0.0
        %5097 = vmatprep.subr.mxu0 0.0
        %5098 = vmatpush1.xpose.msra.mxu0 0.0
        %5099 = vmatprep.subr.mxu0 0.0
        %5100 = vmatpush1.xpose.msra.mxu0 0.0
        %5101 = vmatprep.subr.mxu0 0.0
        %5102 = vmatpush1.xpose.msra.mxu0 0.0
        %5103 = vmatprep.subr.mxu0 0.0
        %5104 = vmatpush1.xpose.msra.mxu0 0.0
        %5105 = vmatprep.subr.mxu0 0.0
        %5106 = vmatpush1.xpose.msra.mxu0 0.0
        %5107 = vmatprep.subr.mxu0 0.0
        %5108 = vmatpush1.xpose.msra.mxu0 0.0
        %5109 = vmatprep.subr.mxu0 0.0
        %5110 = vmatpush1.xpose.msra.mxu0 0.0
        %5111 = vmatprep.subr.mxu0 0.0
        %5112 = vmatpush1.xpose.msra.mxu0 0.0
        %5113 = vmatprep.subr.mxu0 0.0
        %5114 = vmatpush1.xpose.msra.mxu0 0.0
        %5115 = vmatprep.subr.mxu0 0.0
        %5116 = vmatpush1.xpose.msra.mxu0 0.0
        %5117 = vmatprep.subr.mxu0 0.0
        %5118 = vmatpush1.xpose.msra.mxu0 0.0
        %5119 = vmatprep.subr.mxu0 0.0
        %5120 = vmatpush1.xpose.msra.mxu0 0.0
        %5121 = vmatprep.subr.mxu0 0.0
        %5122 = vmatpush1.xpose.msra.mxu0 0.0
        %5123 = vmatprep.subr.mxu0 0.0
        %5124 = vmatpush1.xpose.msra.mxu0 0.0
        %5125 = vmatprep.subr.mxu0 0.0
        %5126 = vmatpush1.xpose.msra.mxu0 0.0
        %5127 = vmatprep.subr.mxu0 0.0
        %5128 = vmatpush1.xpose.msra.mxu0 0.0
        %5129 = vmatprep.subr.mxu0 0.0
        %5130 = vmatpush1.xpose.msra.mxu0 0.0
        %5131 = vmatprep.subr.mxu0 0.0
        %5132 = vmatpush1.xpose.msra.mxu0 0.0
        %5133 = vmatprep.subr.mxu0 0.0
        %5134 = vmatpush1.xpose.msra.mxu0 0.0
        %5135 = vmatprep.subr.mxu0 0.0
        %5136 = vmatpush1.xpose.msra.mxu0 0.0
        %5137 = vmatprep.subr.mxu0 0.0
        %5138 = vmatpush1.xpose.msra.mxu0 0.0
        %5139 = vmatprep.subr.mxu0 0.0
        %5140 = vmatpush1.xpose.msra.mxu0 0.0
        %5141 = vmatprep.subr.mxu0 0.0
        %5142 = vmatpush1.xpose.msra.mxu0 0.0
        %5143 = vmatprep.subr.mxu0 0.0
        %5144 = vmatpush1.xpose.msra.mxu0 0.0
        %5145 = vmatprep.mubr.f32.mxu0 0.0
        %v5146 = vand.u32 %v4996, 4294901760
        %5147 = vmatmul.mubr.f32.gmra.mrb[0].mxu0 %v5146
        %v5148 = vpop.f32.mrb[0].mxu0
        %v5149 = vadd.f32 %v5073, %v5148
        %v5150 = vpop.f32.mrb[0].mxu0
        %5151 = vdwg.mxu0
        %5152 = vmatprep.subr.mxu0 0.0
        %v5153 = vand.u32 %v4998, 4294901760
        %v5154 = vsub.f32 %v4998, %v5153
        %5155 = vmatpush1.xpose.msra.mxu0 %v5154
        %5156 = vmatprep.subr.mxu0 0.0
        %5157 = vmatpush1.xpose.msra.mxu0 0.0
        %5158 = vmatprep.subr.mxu0 0.0
        %5159 = vmatpush1.xpose.msra.mxu0 0.0
        %5160 = vmatprep.subr.mxu0 0.0
        %5161 = vmatpush1.xpose.msra.mxu0 0.0
        %5162 = vmatprep.subr.mxu0 0.0
        %5163 = vmatpush1.xpose.msra.mxu0 0.0
        %5164 = vmatprep.subr.mxu0 0.0
        %5165 = vmatpush1.xpose.msra.mxu0 0.0
        %5166 = vmatprep.subr.mxu0 0.0
        %5167 = vmatpush1.xpose.msra.mxu0 0.0
        %5168 = vmatprep.subr.mxu0 0.0
        %5169 = vmatpush1.xpose.msra.mxu0 0.0
        %5170 = vmatprep.subr.mxu0 0.0
        %5171 = vmatpush1.xpose.msra.mxu0 0.0
        %5172 = vmatprep.subr.mxu0 0.0
        %5173 = vmatpush1.xpose.msra.mxu0 0.0
        %5174 = vmatprep.subr.mxu0 0.0
        %5175 = vmatpush1.xpose.msra.mxu0 0.0
        %5176 = vmatprep.subr.mxu0 0.0
        %5177 = vmatpush1.xpose.msra.mxu0 0.0
        %5178 = vmatprep.subr.mxu0 0.0
        %5179 = vmatpush1.xpose.msra.mxu0 0.0
        %5180 = vmatprep.subr.mxu0 0.0
        %5181 = vmatpush1.xpose.msra.mxu0 0.0
        %5182 = vmatprep.subr.mxu0 0.0
        %5183 = vmatpush1.xpose.msra.mxu0 0.0
        %5184 = vmatprep.subr.mxu0 0.0
        %5185 = vmatpush1.xpose.msra.mxu0 0.0
        %5186 = vmatprep.subr.mxu0 0.0
        %5187 = vmatpush1.xpose.msra.mxu0 0.0
        %5188 = vmatprep.subr.mxu0 0.0
        %5189 = vmatpush1.xpose.msra.mxu0 0.0
        %5190 = vmatprep.subr.mxu0 0.0
        %5191 = vmatpush1.xpose.msra.mxu0 0.0
        %5192 = vmatprep.subr.mxu0 0.0
        %5193 = vmatpush1.xpose.msra.mxu0 0.0
        %5194 = vmatprep.subr.mxu0 0.0
        %5195 = vmatpush1.xpose.msra.mxu0 0.0
        %5196 = vmatprep.subr.mxu0 0.0
        %5197 = vmatpush1.xpose.msra.mxu0 0.0
        %5198 = vmatprep.subr.mxu0 0.0
        %5199 = vmatpush1.xpose.msra.mxu0 0.0
        %5200 = vmatprep.subr.mxu0 0.0
        %5201 = vmatpush1.xpose.msra.mxu0 0.0
        %5202 = vmatprep.subr.mxu0 0.0
        %5203 = vmatpush1.xpose.msra.mxu0 0.0
        %5204 = vmatprep.subr.mxu0 0.0
        %5205 = vmatpush1.xpose.msra.mxu0 0.0
        %5206 = vmatprep.subr.mxu0 0.0
        %5207 = vmatpush1.xpose.msra.mxu0 0.0
        %5208 = vmatprep.subr.mxu0 0.0
        %5209 = vmatpush1.xpose.msra.mxu0 0.0
        %5210 = vmatprep.subr.mxu0 0.0
        %5211 = vmatpush1.xpose.msra.mxu0 0.0
        %5212 = vmatprep.subr.mxu0 0.0
        %5213 = vmatpush1.xpose.msra.mxu0 0.0
        %5214 = vmatprep.subr.mxu0 0.0
        %5215 = vmatpush1.xpose.msra.mxu0 0.0
        %5216 = vmatprep.subr.mxu0 0.0
        %5217 = vmatpush1.xpose.msra.mxu0 0.0
        %5218 = vmatprep.mubr.f32.mxu0 0.0
        %v5219 = vand.u32 %v4996, 4294901760
        %v5220 = vsub.f32 %v4996, %v5219
        %5221 = vmatmul.mubr.f32.gmra.mrb[0].mxu0 %v5220
        %v5222 = vpop.f32.mrb[0].mxu0
        %v5223 = vadd.f32 %v5149, %v5222
        %v5224 = vpop.f32.mrb[0].mxu0
        %5225 = vdwg.mxu0
        %5226 = vmatprep.subr.mxu0 0.0
        %v5227 = vand.u32 %v4998, 4294901760
        %5228 = vmatpush1.xpose.msra.mxu0 %v5227
        %5229 = vmatprep.subr.mxu0 0.0
        %5230 = vmatpush1.xpose.msra.mxu0 0.0
        %5231 = vmatprep.subr.mxu0 0.0
        %5232 = vmatpush1.xpose.msra.mxu0 0.0
        %5233 = vmatprep.subr.mxu0 0.0
        %5234 = vmatpush1.xpose.msra.mxu0 0.0
        %5235 = vmatprep.subr.mxu0 0.0
        %5236 = vmatpush1.xpose.msra.mxu0 0.0
        %5237 = vmatprep.subr.mxu0 0.0
        %5238 = vmatpush1.xpose.msra.mxu0 0.0
        %5239 = vmatprep.subr.mxu0 0.0
        %5240 = vmatpush1.xpose.msra.mxu0 0.0
        %5241 = vmatprep.subr.mxu0 0.0
        %5242 = vmatpush1.xpose.msra.mxu0 0.0
        %5243 = vmatprep.subr.mxu0 0.0
        %5244 = vmatpush1.xpose.msra.mxu0 0.0
        %5245 = vmatprep.subr.mxu0 0.0
        %5246 = vmatpush1.xpose.msra.mxu0 0.0
        %5247 = vmatprep.subr.mxu0 0.0
        %5248 = vmatpush1.xpose.msra.mxu0 0.0
        %5249 = vmatprep.subr.mxu0 0.0
        %5250 = vmatpush1.xpose.msra.mxu0 0.0
        %5251 = vmatprep.subr.mxu0 0.0
        %5252 = vmatpush1.xpose.msra.mxu0 0.0
        %5253 = vmatprep.subr.mxu0 0.0
        %5254 = vmatpush1.xpose.msra.mxu0 0.0
        %5255 = vmatprep.subr.mxu0 0.0
        %5256 = vmatpush1.xpose.msra.mxu0 0.0
        %5257 = vmatprep.subr.mxu0 0.0
        %5258 = vmatpush1.xpose.msra.mxu0 0.0
        %5259 = vmatprep.subr.mxu0 0.0
        %5260 = vmatpush1.xpose.msra.mxu0 0.0
        %5261 = vmatprep.subr.mxu0 0.0
        %5262 = vmatpush1.xpose.msra.mxu0 0.0
        %5263 = vmatprep.subr.mxu0 0.0
        %5264 = vmatpush1.xpose.msra.mxu0 0.0
        %5265 = vmatprep.subr.mxu0 0.0
        %5266 = vmatpush1.xpose.msra.mxu0 0.0
        %5267 = vmatprep.subr.mxu0 0.0
        %5268 = vmatpush1.xpose.msra.mxu0 0.0
        %5269 = vmatprep.subr.mxu0 0.0
        %5270 = vmatpush1.xpose.msra.mxu0 0.0
        %5271 = vmatprep.subr.mxu0 0.0
        %5272 = vmatpush1.xpose.msra.mxu0 0.0
        %5273 = vmatprep.subr.mxu0 0.0
        %5274 = vmatpush1.xpose.msra.mxu0 0.0
        %5275 = vmatprep.subr.mxu0 0.0
        %5276 = vmatpush1.xpose.msra.mxu0 0.0
        %5277 = vmatprep.subr.mxu0 0.0
        %5278 = vmatpush1.xpose.msra.mxu0 0.0
        %5279 = vmatprep.subr.mxu0 0.0
        %5280 = vmatpush1.xpose.msra.mxu0 0.0
        %5281 = vmatprep.subr.mxu0 0.0
        %5282 = vmatpush1.xpose.msra.mxu0 0.0
        %5283 = vmatprep.subr.mxu0 0.0
        %5284 = vmatpush1.xpose.msra.mxu0 0.0
        %5285 = vmatprep.subr.mxu0 0.0
        %5286 = vmatpush1.xpose.msra.mxu0 0.0
        %5287 = vmatprep.subr.mxu0 0.0
        %5288 = vmatpush1.xpose.msra.mxu0 0.0
        %5289 = vmatprep.subr.mxu0 0.0
        %5290 = vmatpush1.xpose.msra.mxu0 0.0
        %5291 = vmatprep.mubr.f32.mxu0 0.0
        %v5292 = vand.u32 %v4996, 4294901760
        %v5293 = vsub.f32 %v4996, %v5292
        %v5294 = vand.u32 %v5293, 4294901760
        %5295 = vmatmul.mubr.f32.gmra.mrb[0].mxu0 %v5294
        %v5296 = vpop.f32.mrb[0].mxu0
        %v5297 = vadd.f32 %v5223, %v5296
        %v5298 = vpop.f32.mrb[0].mxu0
        %5299 = vdwg.mxu0
        %5300 = vmatprep.subr.mxu0 0.0
        %v5301 = vand.u32 %v4998, 4294901760
        %v5302 = vsub.f32 %v4998, %v5301
        %v5303 = vand.u32 %v5302, 4294901760
        %5304 = vmatpush1.xpose.msra.mxu0 %v5303
        %5305 = vmatprep.subr.mxu0 0.0
        %5306 = vmatpush1.xpose.msra.mxu0 0.0
        %5307 = vmatprep.subr.mxu0 0.0
        %5308 = vmatpush1.xpose.msra.mxu0 0.0
        %5309 = vmatprep.subr.mxu0 0.0
        %5310 = vmatpush1.xpose.msra.mxu0 0.0
        %5311 = vmatprep.subr.mxu0 0.0
        %5312 = vmatpush1.xpose.msra.mxu0 0.0
        %5313 = vmatprep.subr.mxu0 0.0
        %5314 = vmatpush1.xpose.msra.mxu0 0.0
        %5315 = vmatprep.subr.mxu0 0.0
        %5316 = vmatpush1.xpose.msra.mxu0 0.0
        %5317 = vmatprep.subr.mxu0 0.0
        %5318 = vmatpush1.xpose.msra.mxu0 0.0
        %5319 = vmatprep.subr.mxu0 0.0
        %5320 = vmatpush1.xpose.msra.mxu0 0.0
        %5321 = vmatprep.subr.mxu0 0.0
        %5322 = vmatpush1.xpose.msra.mxu0 0.0
        %5323 = vmatprep.subr.mxu0 0.0
        %5324 = vmatpush1.xpose.msra.mxu0 0.0
        %5325 = vmatprep.subr.mxu0 0.0
        %5326 = vmatpush1.xpose.msra.mxu0 0.0
        %5327 = vmatprep.subr.mxu0 0.0
        %5328 = vmatpush1.xpose.msra.mxu0 0.0
        %5329 = vmatprep.subr.mxu0 0.0
        %5330 = vmatpush1.xpose.msra.mxu0 0.0
        %5331 = vmatprep.subr.mxu0 0.0
        %5332 = vmatpush1.xpose.msra.mxu0 0.0
        %5333 = vmatprep.subr.mxu0 0.0
        %5334 = vmatpush1.xpose.msra.mxu0 0.0
        %5335 = vmatprep.subr.mxu0 0.0
        %5336 = vmatpush1.xpose.msra.mxu0 0.0
        %5337 = vmatprep.subr.mxu0 0.0
        %5338 = vmatpush1.xpose.msra.mxu0 0.0
        %5339 = vmatprep.subr.mxu0 0.0
        %5340 = vmatpush1.xpose.msra.mxu0 0.0
        %5341 = vmatprep.subr.mxu0 0.0
        %5342 = vmatpush1.xpose.msra.mxu0 0.0
        %5343 = vmatprep.subr.mxu0 0.0
        %5344 = vmatpush1.xpose.msra.mxu0 0.0
        %5345 = vmatprep.subr.mxu0 0.0
        %5346 = vmatpush1.xpose.msra.mxu0 0.0
        %5347 = vmatprep.subr.mxu0 0.0
        %5348 = vmatpush1.xpose.msra.mxu0 0.0
        %5349 = vmatprep.subr.mxu0 0.0
        %5350 = vmatpush1.xpose.msra.mxu0 0.0
        %5351 = vmatprep.subr.mxu0 0.0
        %5352 = vmatpush1.xpose.msra.mxu0 0.0
        %5353 = vmatprep.subr.mxu0 0.0
        %5354 = vmatpush1.xpose.msra.mxu0 0.0
        %5355 = vmatprep.subr.mxu0 0.0
        %5356 = vmatpush1.xpose.msra.mxu0 0.0
        %5357 = vmatprep.subr.mxu0 0.0
        %5358 = vmatpush1.xpose.msra.mxu0 0.0
        %5359 = vmatprep.subr.mxu0 0.0
        %5360 = vmatpush1.xpose.msra.mxu0 0.0
        %5361 = vmatprep.subr.mxu0 0.0
        %5362 = vmatpush1.xpose.msra.mxu0 0.0
        %5363 = vmatprep.subr.mxu0 0.0
        %5364 = vmatpush1.xpose.msra.mxu0 0.0
        %5365 = vmatprep.subr.mxu0 0.0
        %5366 = vmatpush1.xpose.msra.mxu0 0.0
        %5367 = vmatprep.mubr.f32.mxu0 0.0
        %v5368 = vand.u32 %v4996, 4294901760
        %5369 = vmatmul.mubr.f32.gmra.mrb[0].mxu0 %v5368
        %v5370 = vpop.f32.mrb[0].mxu0
        %v5371 = vadd.f32 %v5297, %v5370
        %v5372 = vpop.f32.mrb[0].mxu0
        %5373 = vdwg.mxu0
        %5374 = vmatprep.subr.mxu0 0.0
        %v5375 = vand.u32 %v4998, 4294901760
        %5376 = vmatpush1.xpose.msra.mxu0 %v5375
        %5377 = vmatprep.subr.mxu0 0.0
        %5378 = vmatpush1.xpose.msra.mxu0 0.0
        %5379 = vmatprep.subr.mxu0 0.0
        %5380 = vmatpush1.xpose.msra.mxu0 0.0
        %5381 = vmatprep.subr.mxu0 0.0
        %5382 = vmatpush1.xpose.msra.mxu0 0.0
        %5383 = vmatprep.subr.mxu0 0.0
        %5384 = vmatpush1.xpose.msra.mxu0 0.0
        %5385 = vmatprep.subr.mxu0 0.0
        %5386 = vmatpush1.xpose.msra.mxu0 0.0
        %5387 = vmatprep.subr.mxu0 0.0
        %5388 = vmatpush1.xpose.msra.mxu0 0.0
        %5389 = vmatprep.subr.mxu0 0.0
        %5390 = vmatpush1.xpose.msra.mxu0 0.0
        %5391 = vmatprep.subr.mxu0 0.0
        %5392 = vmatpush1.xpose.msra.mxu0 0.0
        %5393 = vmatprep.subr.mxu0 0.0
        %5394 = vmatpush1.xpose.msra.mxu0 0.0
        %5395 = vmatprep.subr.mxu0 0.0
        %5396 = vmatpush1.xpose.msra.mxu0 0.0
        %5397 = vmatprep.subr.mxu0 0.0
        %5398 = vmatpush1.xpose.msra.mxu0 0.0
        %5399 = vmatprep.subr.mxu0 0.0
        %5400 = vmatpush1.xpose.msra.mxu0 0.0
        %5401 = vmatprep.subr.mxu0 0.0
        %5402 = vmatpush1.xpose.msra.mxu0 0.0
        %5403 = vmatprep.subr.mxu0 0.0
        %5404 = vmatpush1.xpose.msra.mxu0 0.0
        %5405 = vmatprep.subr.mxu0 0.0
        %5406 = vmatpush1.xpose.msra.mxu0 0.0
        %5407 = vmatprep.subr.mxu0 0.0
        %5408 = vmatpush1.xpose.msra.mxu0 0.0
        %5409 = vmatprep.subr.mxu0 0.0
        %5410 = vmatpush1.xpose.msra.mxu0 0.0
        %5411 = vmatprep.subr.mxu0 0.0
        %5412 = vmatpush1.xpose.msra.mxu0 0.0
        %5413 = vmatprep.subr.mxu0 0.0
        %5414 = vmatpush1.xpose.msra.mxu0 0.0
        %5415 = vmatprep.subr.mxu0 0.0
        %5416 = vmatpush1.xpose.msra.mxu0 0.0
        %5417 = vmatprep.subr.mxu0 0.0
        %5418 = vmatpush1.xpose.msra.mxu0 0.0
        %5419 = vmatprep.subr.mxu0 0.0
        %5420 = vmatpush1.xpose.msra.mxu0 0.0
        %5421 = vmatprep.subr.mxu0 0.0
        %5422 = vmatpush1.xpose.msra.mxu0 0.0
        %5423 = vmatprep.subr.mxu0 0.0
        %5424 = vmatpush1.xpose.msra.mxu0 0.0
        %5425 = vmatprep.subr.mxu0 0.0
        %5426 = vmatpush1.xpose.msra.mxu0 0.0
        %5427 = vmatprep.subr.mxu0 0.0
        %5428 = vmatpush1.xpose.msra.mxu0 0.0
        %5429 = vmatprep.subr.mxu0 0.0
        %5430 = vmatpush1.xpose.msra.mxu0 0.0
        %5431 = vmatprep.subr.mxu0 0.0
        %5432 = vmatpush1.xpose.msra.mxu0 0.0
        %5433 = vmatprep.subr.mxu0 0.0
        %5434 = vmatpush1.xpose.msra.mxu0 0.0
        %5435 = vmatprep.subr.mxu0 0.0
        %5436 = vmatpush1.xpose.msra.mxu0 0.0
        %5437 = vmatprep.subr.mxu0 0.0
        %5438 = vmatpush1.xpose.msra.mxu0 0.0
        %5439 = vmatprep.mubr.f32.mxu0 0.0
        %v5440 = vand.u32 %v4996, 4294901760
        %5441 = vmatmul.mubr.f32.gmra.mrb[0].mxu0 %v5440
        %v5442 = vpop.f32.mrb[0].mxu0
        %v5443 = vadd.f32 %v5371, %v5442
        %v5444 = vpop.f32.mrb[0].mxu0
        %5445 = vdwg.mxu0
        %v5446 = vmul.f32 %v5443, 0.35355338
        %v5447 = vsel %vm2237, %v5446, -1e+30
        %v5448 = vsel %vm2238, %v5447, -inf
        %5449 = vmax.xlane.f32.xlu0 %v5448
        %v5450 = vpop.xlane.xlu0 %5449
        %v5451 = vsub.f32 %v5447, %v5450
        %v5452 = vmul.f32 %v5451, 1.442695
        %v5453 = vpow.pop %v5452
        %v5454 = vsel %vm2238, %v5453, 0.0
        %5455 = vadd.xlane.f32.xlu0 %v5454
        %v5456 = vpop.xlane.xlu0 %5455
        %v5457 = vrcp.pop %v5456
        %v5458 = vmul.f32 %v5453, %v5457
        %5459 = vrot.lane.b32.xlu0 %v2230, 104
        %v5460 = vpop.permute.xlu0 %5459
        %v5463 = vsel %vm2238, %v5458, 0
        %5465 = vmatprep.subr.mxu0 0.0
        %v5466 = vand.u32 %v5460, 4294901760
        %5467 = vmatpush1.msra.mxu0 %v5466
        %5468 = vmatprep.subr.mxu0 0.0
        %5469 = vmatpush1.msra.mxu0 0.0
        %5470 = vmatprep.subr.mxu0 0.0
        %5471 = vmatpush1.msra.mxu0 0.0
        %5472 = vmatprep.subr.mxu0 0.0
        %5473 = vmatpush1.msra.mxu0 0.0
        %5474 = vmatprep.subr.mxu0 0.0
        %5475 = vmatpush1.msra.mxu0 0.0
        %5476 = vmatprep.subr.mxu0 0.0
        %5477 = vmatpush1.msra.mxu0 0.0
        %5478 = vmatprep.subr.mxu0 0.0
        %5479 = vmatpush1.msra.mxu0 0.0
        %5480 = vmatprep.subr.mxu0 0.0
        %5481 = vmatpush1.msra.mxu0 0.0
        %5482 = vmatprep.subr.mxu0 0.0
        %5483 = vmatpush1.msra.mxu0 0.0
        %5484 = vmatprep.subr.mxu0 0.0
        %5485 = vmatpush1.msra.mxu0 0.0
        %5486 = vmatprep.subr.mxu0 0.0
        %5487 = vmatpush1.msra.mxu0 0.0
        %5488 = vmatprep.subr.mxu0 0.0
        %5489 = vmatpush1.msra.mxu0 0.0
        %5490 = vmatprep.subr.mxu0 0.0
        %5491 = vmatpush1.msra.mxu0 0.0
        %5492 = vmatprep.subr.mxu0 0.0
        %5493 = vmatpush1.msra.mxu0 0.0
        %5494 = vmatprep.subr.mxu0 0.0
        %5495 = vmatpush1.msra.mxu0 0.0
        %5496 = vmatprep.subr.mxu0 0.0
        %5497 = vmatpush1.msra.mxu0 0.0
        %5498 = vmatprep.subr.mxu0 0.0
        %5499 = vmatpush1.msra.mxu0 0.0
        %5500 = vmatprep.subr.mxu0 0.0
        %5501 = vmatpush1.msra.mxu0 0.0
        %5502 = vmatprep.subr.mxu0 0.0
        %5503 = vmatpush1.msra.mxu0 0.0
        %5504 = vmatprep.subr.mxu0 0.0
        %5505 = vmatpush1.msra.mxu0 0.0
        %5506 = vmatprep.subr.mxu0 0.0
        %5507 = vmatpush1.msra.mxu0 0.0
        %5508 = vmatprep.subr.mxu0 0.0
        %5509 = vmatpush1.msra.mxu0 0.0
        %5510 = vmatprep.subr.mxu0 0.0
        %5511 = vmatpush1.msra.mxu0 0.0
        %5512 = vmatprep.subr.mxu0 0.0
        %5513 = vmatpush1.msra.mxu0 0.0
        %5514 = vmatprep.subr.mxu0 0.0
        %5515 = vmatpush1.msra.mxu0 0.0
        %5516 = vmatprep.subr.mxu0 0.0
        %5517 = vmatpush1.msra.mxu0 0.0
        %5518 = vmatprep.subr.mxu0 0.0
        %5519 = vmatpush1.msra.mxu0 0.0
        %5520 = vmatprep.subr.mxu0 0.0
        %5521 = vmatpush1.msra.mxu0 0.0
        %5522 = vmatprep.subr.mxu0 0.0
        %5523 = vmatpush1.msra.mxu0 0.0
        %5524 = vmatprep.subr.mxu0 0.0
        %5525 = vmatpush1.msra.mxu0 0.0
        %5526 = vmatprep.subr.mxu0 0.0
        %5527 = vmatpush1.msra.mxu0 0.0
        %5528 = vmatprep.subr.mxu0 0.0
        %5529 = vmatpush1.msra.mxu0 0.0
        %5530 = vmatprep.mubr.f32.mxu0 0.0
        %v5531 = vand.u32 %v5463, 4294901760
        %v5532 = vsub.f32 %v5463, %v5531
        %v5533 = vand.u32 %v5532, 4294901760
        %v5534 = vsub.f32 %v5532, %v5533
        %v5535 = vand.u32 %v5534, 4294901760
        %5536 = vmatmul.mubr.f32.gmra.mrb[0].mxu0 %v5535
        %v5537 = vpop.f32.mrb[0].mxu0
        %v5538 = vadd.f32 0.0, %v5537
        %v5539 = vpop.f32.mrb[0].mxu0
        %5540 = vdwg.mxu0
        %5541 = vmatprep.subr.mxu0 0.0
        %v5542 = vand.u32 %v5460, 4294901760
        %v5543 = vsub.f32 %v5460, %v5542
        %v5544 = vand.u32 %v5543, 4294901760
        %v5545 = vsub.f32 %v5543, %v5544
        %v5546 = vand.u32 %v5545, 4294901760
        %5547 = vmatpush1.msra.mxu0 %v5546
        %5548 = vmatprep.subr.mxu0 0.0
        %5549 = vmatpush1.msra.mxu0 0.0
        %5550 = vmatprep.subr.mxu0 0.0
        %5551 = vmatpush1.msra.mxu0 0.0
        %5552 = vmatprep.subr.mxu0 0.0
        %5553 = vmatpush1.msra.mxu0 0.0
        %5554 = vmatprep.subr.mxu0 0.0
        %5555 = vmatpush1.msra.mxu0 0.0
        %5556 = vmatprep.subr.mxu0 0.0
        %5557 = vmatpush1.msra.mxu0 0.0
        %5558 = vmatprep.subr.mxu0 0.0
        %5559 = vmatpush1.msra.mxu0 0.0
        %5560 = vmatprep.subr.mxu0 0.0
        %5561 = vmatpush1.msra.mxu0 0.0
        %5562 = vmatprep.subr.mxu0 0.0
        %5563 = vmatpush1.msra.mxu0 0.0
        %5564 = vmatprep.subr.mxu0 0.0
        %5565 = vmatpush1.msra.mxu0 0.0
        %5566 = vmatprep.subr.mxu0 0.0
        %5567 = vmatpush1.msra.mxu0 0.0
        %5568 = vmatprep.subr.mxu0 0.0
        %5569 = vmatpush1.msra.mxu0 0.0
        %5570 = vmatprep.subr.mxu0 0.0
        %5571 = vmatpush1.msra.mxu0 0.0
        %5572 = vmatprep.subr.mxu0 0.0
        %5573 = vmatpush1.msra.mxu0 0.0
        %5574 = vmatprep.subr.mxu0 0.0
        %5575 = vmatpush1.msra.mxu0 0.0
        %5576 = vmatprep.subr.mxu0 0.0
        %5577 = vmatpush1.msra.mxu0 0.0
        %5578 = vmatprep.subr.mxu0 0.0
        %5579 = vmatpush1.msra.mxu0 0.0
        %5580 = vmatprep.subr.mxu0 0.0
        %5581 = vmatpush1.msra.mxu0 0.0
        %5582 = vmatprep.subr.mxu0 0.0
        %5583 = vmatpush1.msra.mxu0 0.0
        %5584 = vmatprep.subr.mxu0 0.0
        %5585 = vmatpush1.msra.mxu0 0.0
        %5586 = vmatprep.subr.mxu0 0.0
        %5587 = vmatpush1.msra.mxu0 0.0
        %5588 = vmatprep.subr.mxu0 0.0
        %5589 = vmatpush1.msra.mxu0 0.0
        %5590 = vmatprep.subr.mxu0 0.0
        %5591 = vmatpush1.msra.mxu0 0.0
        %5592 = vmatprep.subr.mxu0 0.0
        %5593 = vmatpush1.msra.mxu0 0.0
        %5594 = vmatprep.subr.mxu0 0.0
        %5595 = vmatpush1.msra.mxu0 0.0
        %5596 = vmatprep.subr.mxu0 0.0
        %5597 = vmatpush1.msra.mxu0 0.0
        %5598 = vmatprep.subr.mxu0 0.0
        %5599 = vmatpush1.msra.mxu0 0.0
        %5600 = vmatprep.subr.mxu0 0.0
        %5601 = vmatpush1.msra.mxu0 0.0
        %5602 = vmatprep.subr.mxu0 0.0
        %5603 = vmatpush1.msra.mxu0 0.0
        %5604 = vmatprep.subr.mxu0 0.0
        %5605 = vmatpush1.msra.mxu0 0.0
        %5606 = vmatprep.subr.mxu0 0.0
        %5607 = vmatpush1.msra.mxu0 0.0
        %5608 = vmatprep.subr.mxu0 0.0
        %5609 = vmatpush1.msra.mxu0 0.0
        %5610 = vmatprep.mubr.f32.mxu0 0.0
        %v5611 = vand.u32 %v5463, 4294901760
        %5612 = vmatmul.mubr.f32.gmra.mrb[0].mxu0 %v5611
        %v5613 = vpop.f32.mrb[0].mxu0
        %v5614 = vadd.f32 %v5538, %v5613
        %v5615 = vpop.f32.mrb[0].mxu0
        %5616 = vdwg.mxu0
        %5617 = vmatprep.subr.mxu0 0.0
        %v5618 = vand.u32 %v5460, 4294901760
        %v5619 = vsub.f32 %v5460, %v5618
        %5620 = vmatpush1.msra.mxu0 %v5619
        %5621 = vmatprep.subr.mxu0 0.0
        %5622 = vmatpush1.msra.mxu0 0.0
        %5623 = vmatprep.subr.mxu0 0.0
        %5624 = vmatpush1.msra.mxu0 0.0
        %5625 = vmatprep.subr.mxu0 0.0
        %5626 = vmatpush1.msra.mxu0 0.0
        %5627 = vmatprep.subr.mxu0 0.0
        %5628 = vmatpush1.msra.mxu0 0.0
        %5629 = vmatprep.subr.mxu0 0.0
        %5630 = vmatpush1.msra.mxu0 0.0
        %5631 = vmatprep.subr.mxu0 0.0
        %5632 = vmatpush1.msra.mxu0 0.0
        %5633 = vmatprep.subr.mxu0 0.0
        %5634 = vmatpush1.msra.mxu0 0.0
        %5635 = vmatprep.subr.mxu0 0.0
        %5636 = vmatpush1.msra.mxu0 0.0
        %5637 = vmatprep.subr.mxu0 0.0
        %5638 = vmatpush1.msra.mxu0 0.0
        %5639 = vmatprep.subr.mxu0 0.0
        %5640 = vmatpush1.msra.mxu0 0.0
        %5641 = vmatprep.subr.mxu0 0.0
        %5642 = vmatpush1.msra.mxu0 0.0
        %5643 = vmatprep.subr.mxu0 0.0
        %5644 = vmatpush1.msra.mxu0 0.0
        %5645 = vmatprep.subr.mxu0 0.0
        %5646 = vmatpush1.msra.mxu0 0.0
        %5647 = vmatprep.subr.mxu0 0.0
        %5648 = vmatpush1.msra.mxu0 0.0
        %5649 = vmatprep.subr.mxu0 0.0
        %5650 = vmatpush1.msra.mxu0 0.0
        %5651 = vmatprep.subr.mxu0 0.0
        %5652 = vmatpush1.msra.mxu0 0.0
        %5653 = vmatprep.subr.mxu0 0.0
        %5654 = vmatpush1.msra.mxu0 0.0
        %5655 = vmatprep.subr.mxu0 0.0
        %5656 = vmatpush1.msra.mxu0 0.0
        %5657 = vmatprep.subr.mxu0 0.0
        %5658 = vmatpush1.msra.mxu0 0.0
        %5659 = vmatprep.subr.mxu0 0.0
        %5660 = vmatpush1.msra.mxu0 0.0
        %5661 = vmatprep.subr.mxu0 0.0
        %5662 = vmatpush1.msra.mxu0 0.0
        %5663 = vmatprep.subr.mxu0 0.0
        %5664 = vmatpush1.msra.mxu0 0.0
        %5665 = vmatprep.subr.mxu0 0.0
        %5666 = vmatpush1.msra.mxu0 0.0
        %5667 = vmatprep.subr.mxu0 0.0
        %5668 = vmatpush1.msra.mxu0 0.0
        %5669 = vmatprep.subr.mxu0 0.0
        %5670 = vmatpush1.msra.mxu0 0.0
        %5671 = vmatprep.subr.mxu0 0.0
        %5672 = vmatpush1.msra.mxu0 0.0
        %5673 = vmatprep.subr.mxu0 0.0
        %5674 = vmatpush1.msra.mxu0 0.0
        %5675 = vmatprep.subr.mxu0 0.0
        %5676 = vmatpush1.msra.mxu0 0.0
        %5677 = vmatprep.subr.mxu0 0.0
        %5678 = vmatpush1.msra.mxu0 0.0
        %5679 = vmatprep.subr.mxu0 0.0
        %5680 = vmatpush1.msra.mxu0 0.0
        %5681 = vmatprep.subr.mxu0 0.0
        %5682 = vmatpush1.msra.mxu0 0.0
        %5683 = vmatprep.mubr.f32.mxu0 0.0
        %v5684 = vand.u32 %v5463, 4294901760
        %v5685 = vsub.f32 %v5463, %v5684
        %5686 = vmatmul.mubr.f32.gmra.mrb[0].mxu0 %v5685
        %v5687 = vpop.f32.mrb[0].mxu0
        %v5688 = vadd.f32 %v5614, %v5687
        %v5689 = vpop.f32.mrb[0].mxu0
        %5690 = vdwg.mxu0
        %5691 = vmatprep.subr.mxu0 0.0
        %v5692 = vand.u32 %v5460, 4294901760
        %5693 = vmatpush1.msra.mxu0 %v5692
        %5694 = vmatprep.subr.mxu0 0.0
        %5695 = vmatpush1.msra.mxu0 0.0
        %5696 = vmatprep.subr.mxu0 0.0
        %5697 = vmatpush1.msra.mxu0 0.0
        %5698 = vmatprep.subr.mxu0 0.0
        %5699 = vmatpush1.msra.mxu0 0.0
        %5700 = vmatprep.subr.mxu0 0.0
        %5701 = vmatpush1.msra.mxu0 0.0
        %5702 = vmatprep.subr.mxu0 0.0
        %5703 = vmatpush1.msra.mxu0 0.0
        %5704 = vmatprep.subr.mxu0 0.0
        %5705 = vmatpush1.msra.mxu0 0.0
        %5706 = vmatprep.subr.mxu0 0.0
        %5707 = vmatpush1.msra.mxu0 0.0
        %5708 = vmatprep.subr.mxu0 0.0
        %5709 = vmatpush1.msra.mxu0 0.0
        %5710 = vmatprep.subr.mxu0 0.0
        %5711 = vmatpush1.msra.mxu0 0.0
        %5712 = vmatprep.subr.mxu0 0.0
        %5713 = vmatpush1.msra.mxu0 0.0
        %5714 = vmatprep.subr.mxu0 0.0
        %5715 = vmatpush1.msra.mxu0 0.0
        %5716 = vmatprep.subr.mxu0 0.0
        %5717 = vmatpush1.msra.mxu0 0.0
        %5718 = vmatprep.subr.mxu0 0.0
        %5719 = vmatpush1.msra.mxu0 0.0
        %5720 = vmatprep.subr.mxu0 0.0
        %5721 = vmatpush1.msra.mxu0 0.0
        %5722 = vmatprep.subr.mxu0 0.0
        %5723 = vmatpush1.msra.mxu0 0.0
        %5724 = vmatprep.subr.mxu0 0.0
        %5725 = vmatpush1.msra.mxu0 0.0
        %5726 = vmatprep.subr.mxu0 0.0
        %5727 = vmatpush1.msra.mxu0 0.0
        %5728 = vmatprep.subr.mxu0 0.0
        %5729 = vmatpush1.msra.mxu0 0.0
        %5730 = vmatprep.subr.mxu0 0.0
        %5731 = vmatpush1.msra.mxu0 0.0
        %5732 = vmatprep.subr.mxu0 0.0
        %5733 = vmatpush1.msra.mxu0 0.0
        %5734 = vmatprep.subr.mxu0 0.0
        %5735 = vmatpush1.msra.mxu0 0.0
        %5736 = vmatprep.subr.mxu0 0.0
        %5737 = vmatpush1.msra.mxu0 0.0
        %5738 = vmatprep.subr.mxu0 0.0
        %5739 = vmatpush1.msra.mxu0 0.0
        %5740 = vmatprep.subr.mxu0 0.0
        %5741 = vmatpush1.msra.mxu0 0.0
        %5742 = vmatprep.subr.mxu0 0.0
        %5743 = vmatpush1.msra.mxu0 0.0
        %5744 = vmatprep.subr.mxu0 0.0
        %5745 = vmatpush1.msra.mxu0 0.0
        %5746 = vmatprep.subr.mxu0 0.0
        %5747 = vmatpush1.msra.mxu0 0.0
        %5748 = vmatprep.subr.mxu0 0.0
        %5749 = vmatpush1.msra.mxu0 0.0
        %5750 = vmatprep.subr.mxu0 0.0
        %5751 = vmatpush1.msra.mxu0 0.0
        %5752 = vmatprep.subr.mxu0 0.0
        %5753 = vmatpush1.msra.mxu0 0.0
        %5754 = vmatprep.subr.mxu0 0.0
        %5755 = vmatpush1.msra.mxu0 0.0
        %5756 = vmatprep.mubr.f32.mxu0 0.0
        %v5757 = vand.u32 %v5463, 4294901760
        %v5758 = vsub.f32 %v5463, %v5757
        %v5759 = vand.u32 %v5758, 4294901760
        %5760 = vmatmul.mubr.f32.gmra.mrb[0].mxu0 %v5759
        %v5761 = vpop.f32.mrb[0].mxu0
        %v5762 = vadd.f32 %v5688, %v5761
        %v5763 = vpop.f32.mrb[0].mxu0
        %5764 = vdwg.mxu0
        %5765 = vmatprep.subr.mxu0 0.0
        %v5766 = vand.u32 %v5460, 4294901760
        %v5767 = vsub.f32 %v5460, %v5766
        %v5768 = vand.u32 %v5767, 4294901760
        %5769 = vmatpush1.msra.mxu0 %v5768
        %5770 = vmatprep.subr.mxu0 0.0
        %5771 = vmatpush1.msra.mxu0 0.0
        %5772 = vmatprep.subr.mxu0 0.0
        %5773 = vmatpush1.msra.mxu0 0.0
        %5774 = vmatprep.subr.mxu0 0.0
        %5775 = vmatpush1.msra.mxu0 0.0
        %5776 = vmatprep.subr.mxu0 0.0
        %5777 = vmatpush1.msra.mxu0 0.0
        %5778 = vmatprep.subr.mxu0 0.0
        %5779 = vmatpush1.msra.mxu0 0.0
        %5780 = vmatprep.subr.mxu0 0.0
        %5781 = vmatpush1.msra.mxu0 0.0
        %5782 = vmatprep.subr.mxu0 0.0
        %5783 = vmatpush1.msra.mxu0 0.0
        %5784 = vmatprep.subr.mxu0 0.0
        %5785 = vmatpush1.msra.mxu0 0.0
        %5786 = vmatprep.subr.mxu0 0.0
        %5787 = vmatpush1.msra.mxu0 0.0
        %5788 = vmatprep.subr.mxu0 0.0
        %5789 = vmatpush1.msra.mxu0 0.0
        %5790 = vmatprep.subr.mxu0 0.0
        %5791 = vmatpush1.msra.mxu0 0.0
        %5792 = vmatprep.subr.mxu0 0.0
        %5793 = vmatpush1.msra.mxu0 0.0
        %5794 = vmatprep.subr.mxu0 0.0
        %5795 = vmatpush1.msra.mxu0 0.0
        %5796 = vmatprep.subr.mxu0 0.0
        %5797 = vmatpush1.msra.mxu0 0.0
        %5798 = vmatprep.subr.mxu0 0.0
        %5799 = vmatpush1.msra.mxu0 0.0
        %5800 = vmatprep.subr.mxu0 0.0
        %5801 = vmatpush1.msra.mxu0 0.0
        %5802 = vmatprep.subr.mxu0 0.0
        %5803 = vmatpush1.msra.mxu0 0.0
        %5804 = vmatprep.subr.mxu0 0.0
        %5805 = vmatpush1.msra.mxu0 0.0
        %5806 = vmatprep.subr.mxu0 0.0
        %5807 = vmatpush1.msra.mxu0 0.0
        %5808 = vmatprep.subr.mxu0 0.0
        %5809 = vmatpush1.msra.mxu0 0.0
        %5810 = vmatprep.subr.mxu0 0.0
        %5811 = vmatpush1.msra.mxu0 0.0
        %5812 = vmatprep.subr.mxu0 0.0
        %5813 = vmatpush1.msra.mxu0 0.0
        %5814 = vmatprep.subr.mxu0 0.0
        %5815 = vmatpush1.msra.mxu0 0.0
        %5816 = vmatprep.subr.mxu0 0.0
        %5817 = vmatpush1.msra.mxu0 0.0
        %5818 = vmatprep.subr.mxu0 0.0
        %5819 = vmatpush1.msra.mxu0 0.0
        %5820 = vmatprep.subr.mxu0 0.0
        %5821 = vmatpush1.msra.mxu0 0.0
        %5822 = vmatprep.subr.mxu0 0.0
        %5823 = vmatpush1.msra.mxu0 0.0
        %5824 = vmatprep.subr.mxu0 0.0
        %5825 = vmatpush1.msra.mxu0 0.0
        %5826 = vmatprep.subr.mxu0 0.0
        %5827 = vmatpush1.msra.mxu0 0.0
        %5828 = vmatprep.subr.mxu0 0.0
        %5829 = vmatpush1.msra.mxu0 0.0
        %5830 = vmatprep.subr.mxu0 0.0
        %5831 = vmatpush1.msra.mxu0 0.0
        %5832 = vmatprep.mubr.f32.mxu0 0.0
        %v5833 = vand.u32 %v5463, 4294901760
        %5834 = vmatmul.mubr.f32.gmra.mrb[0].mxu0 %v5833
        %v5835 = vpop.f32.mrb[0].mxu0
        %v5836 = vadd.f32 %v5762, %v5835
        %v5837 = vpop.f32.mrb[0].mxu0
        %5838 = vdwg.mxu0
        %5839 = vmatprep.subr.mxu0 0.0
        %v5840 = vand.u32 %v5460, 4294901760
        %5841 = vmatpush1.msra.mxu0 %v5840
        %5842 = vmatprep.subr.mxu0 0.0
        %5843 = vmatpush1.msra.mxu0 0.0
        %5844 = vmatprep.subr.mxu0 0.0
        %5845 = vmatpush1.msra.mxu0 0.0
        %5846 = vmatprep.subr.mxu0 0.0
        %5847 = vmatpush1.msra.mxu0 0.0
        %5848 = vmatprep.subr.mxu0 0.0
        %5849 = vmatpush1.msra.mxu0 0.0
        %5850 = vmatprep.subr.mxu0 0.0
        %5851 = vmatpush1.msra.mxu0 0.0
        %5852 = vmatprep.subr.mxu0 0.0
        %5853 = vmatpush1.msra.mxu0 0.0
        %5854 = vmatprep.subr.mxu0 0.0
        %5855 = vmatpush1.msra.mxu0 0.0
        %5856 = vmatprep.subr.mxu0 0.0
        %5857 = vmatpush1.msra.mxu0 0.0
        %5858 = vmatprep.subr.mxu0 0.0
        %5859 = vmatpush1.msra.mxu0 0.0
        %5860 = vmatprep.subr.mxu0 0.0
        %5861 = vmatpush1.msra.mxu0 0.0
        %5862 = vmatprep.subr.mxu0 0.0
        %5863 = vmatpush1.msra.mxu0 0.0
        %5864 = vmatprep.subr.mxu0 0.0
        %5865 = vmatpush1.msra.mxu0 0.0
        %5866 = vmatprep.subr.mxu0 0.0
        %5867 = vmatpush1.msra.mxu0 0.0
        %5868 = vmatprep.subr.mxu0 0.0
        %5869 = vmatpush1.msra.mxu0 0.0
        %5870 = vmatprep.subr.mxu0 0.0
        %5871 = vmatpush1.msra.mxu0 0.0
        %5872 = vmatprep.subr.mxu0 0.0
        %5873 = vmatpush1.msra.mxu0 0.0
        %5874 = vmatprep.subr.mxu0 0.0
        %5875 = vmatpush1.msra.mxu0 0.0
        %5876 = vmatprep.subr.mxu0 0.0
        %5877 = vmatpush1.msra.mxu0 0.0
        %5878 = vmatprep.subr.mxu0 0.0
        %5879 = vmatpush1.msra.mxu0 0.0
        %5880 = vmatprep.subr.mxu0 0.0
        %5881 = vmatpush1.msra.mxu0 0.0
        %5882 = vmatprep.subr.mxu0 0.0
        %5883 = vmatpush1.msra.mxu0 0.0
        %5884 = vmatprep.subr.mxu0 0.0
        %5885 = vmatpush1.msra.mxu0 0.0
        %5886 = vmatprep.subr.mxu0 0.0
        %5887 = vmatpush1.msra.mxu0 0.0
        %5888 = vmatprep.subr.mxu0 0.0
        %5889 = vmatpush1.msra.mxu0 0.0
        %5890 = vmatprep.subr.mxu0 0.0
        %5891 = vmatpush1.msra.mxu0 0.0
        %5892 = vmatprep.subr.mxu0 0.0
        %5893 = vmatpush1.msra.mxu0 0.0
        %5894 = vmatprep.subr.mxu0 0.0
        %5895 = vmatpush1.msra.mxu0 0.0
        %5896 = vmatprep.subr.mxu0 0.0
        %5897 = vmatpush1.msra.mxu0 0.0
        %5898 = vmatprep.subr.mxu0 0.0
        %5899 = vmatpush1.msra.mxu0 0.0
        %5900 = vmatprep.subr.mxu0 0.0
        %5901 = vmatpush1.msra.mxu0 0.0
        %5902 = vmatprep.subr.mxu0 0.0
        %5903 = vmatpush1.msra.mxu0 0.0
        %5904 = vmatprep.mubr.f32.mxu0 0.0
        %v5905 = vand.u32 %v5463, 4294901760
        %5906 = vmatmul.mubr.f32.gmra.mrb[0].mxu0 %v5905
        %v5907 = vpop.f32.mrb[0].mxu0
        %v5908 = vadd.f32 %v5836, %v5907
        %v5909 = vpop.f32.mrb[0].mxu0
        %5910 = vdwg.mxu0
        %5912 = vrot.lane.b32.xlu0 %v4070, 8
        %v5913 = vpop.permute.xlu0 %5912
        %5916 = vrot.lane.b32.xlu0 %v4989, 16
        %v5917 = vpop.permute.xlu0 %5916
        %5920 = vrot.lane.b32.xlu0 %v5908, 24
        %v5921 = vpop.permute.xlu0 %5920
        %v5923 = vsel %vm2238, %v3150, %v5913
        %vm5924 = vcmask 130048
        %v5925 = vsel %vm5924, %v5923, %v5917
        %vm5926 = vcmask 195584
        %v5927 = vsel %vm5926, %v5925, %v5921
        %v5928 = vld [vmem:[#allocation11] sm:$0xff]
        %v5929 = vld [vmem:[#allocation11 + $0x8] sm:$0xff]
        %v5930 = vld [vmem:[#allocation11 + $0x10] sm:$0xff]
        %v5931 = vld [vmem:[#allocation11 + $0x18] sm:$0xff]
        %v5932 = vld [vmem:[%s9] sm:$0x1]
        %v5934 = vlaneseq
        %v5935 = vshrl.u32 %v5934, 7
        %v5936 = vsub.s32 0, %v5935
        %v5937 = vrot.slane %v5932, %v5936
        %v5940 = vsel %vm713, %v5927, 0
        %v5943 = vsel %vm713, %v5928, 0
        %v5946 = vsel %vm713, %v5929, 0
        %v5949 = vsel %vm713, %v5930, 0
        %v5952 = vsel %vm713, %v5931, 0
        %5954 = vmatprep.subr.mxu0 0.0
        %v5955 = vand.u32 %v5943, 4294901760
        %5956 = vmatpush1.xpose.msra.mxu0 %v5955
        %5957 = vmatprep.subr.mxu0 0.0
        %v5958 = vand.u32 %v5946, 4294901760
        %5959 = vmatpush1.xpose.msra.mxu0 %v5958
        %5960 = vmatprep.subr.mxu0 0.0
        %v5961 = vand.u32 %v5949, 4294901760
        %5962 = vmatpush1.xpose.msra.mxu0 %v5961
        %5963 = vmatprep.subr.mxu0 0.0
        %v5964 = vand.u32 %v5952, 4294901760
        %5965 = vmatpush1.xpose.msra.mxu0 %v5964
        %5966 = vmatprep.subr.mxu0 0.0
        %5967 = vmatpush1.xpose.msra.mxu0 0.0
        %5968 = vmatprep.subr.mxu0 0.0
        %5969 = vmatpush1.xpose.msra.mxu0 0.0
        %5970 = vmatprep.subr.mxu0 0.0
        %5971 = vmatpush1.xpose.msra.mxu0 0.0
        %5972 = vmatprep.subr.mxu0 0.0
        %5973 = vmatpush1.xpose.msra.mxu0 0.0
        %5974 = vmatprep.subr.mxu0 0.0
        %5975 = vmatpush1.xpose.msra.mxu0 0.0
        %5976 = vmatprep.subr.mxu0 0.0
        %5977 = vmatpush1.xpose.msra.mxu0 0.0
        %5978 = vmatprep.subr.mxu0 0.0
        %5979 = vmatpush1.xpose.msra.mxu0 0.0
        %5980 = vmatprep.subr.mxu0 0.0
        %5981 = vmatpush1.xpose.msra.mxu0 0.0
        %5982 = vmatprep.subr.mxu0 0.0
        %5983 = vmatpush1.xpose.msra.mxu0 0.0
        %5984 = vmatprep.subr.mxu0 0.0
        %5985 = vmatpush1.xpose.msra.mxu0 0.0
        %5986 = vmatprep.subr.mxu0 0.0
        %5987 = vmatpush1.xpose.msra.mxu0 0.0
        %5988 = vmatprep.subr.mxu0 0.0
        %5989 = vmatpush1.xpose.msra.mxu0 0.0
        %5990 = vmatprep.subr.mxu0 0.0
        %5991 = vmatpush1.xpose.msra.mxu0 0.0
        %5992 = vmatprep.subr.mxu0 0.0
        %5993 = vmatpush1.xpose.msra.mxu0 0.0
        %5994 = vmatprep.subr.mxu0 0.0
        %5995 = vmatpush1.xpose.msra.mxu0 0.0
        %5996 = vmatprep.subr.mxu0 0.0
        %5997 = vmatpush1.xpose.msra.mxu0 0.0
        %5998 = vmatprep.subr.mxu0 0.0
        %5999 = vmatpush1.xpose.msra.mxu0 0.0
        %6000 = vmatprep.subr.mxu0 0.0
        %6001 = vmatpush1.xpose.msra.mxu0 0.0
        %6002 = vmatprep.subr.mxu0 0.0
        %6003 = vmatpush1.xpose.msra.mxu0 0.0
        %6004 = vmatprep.subr.mxu0 0.0
        %6005 = vmatpush1.xpose.msra.mxu0 0.0
        %6006 = vmatprep.subr.mxu0 0.0
        %6007 = vmatpush1.xpose.msra.mxu0 0.0
        %6008 = vmatprep.subr.mxu0 0.0
        %6009 = vmatpush1.xpose.msra.mxu0 0.0
        %6010 = vmatprep.subr.mxu0 0.0
        %6011 = vmatpush1.xpose.msra.mxu0 0.0
        %6012 = vmatprep.subr.mxu0 0.0
        %6013 = vmatpush1.xpose.msra.mxu0 0.0
        %6014 = vmatprep.subr.mxu0 0.0
        %6015 = vmatpush1.xpose.msra.mxu0 0.0
        %6016 = vmatprep.subr.mxu0 0.0
        %6017 = vmatpush1.xpose.msra.mxu0 0.0
        %6018 = vmatprep.subr.mxu0 0.0
        %6019 = vmatpush1.xpose.msra.mxu0 0.0
        %6020 = vmatprep.subr.mxu0 0.0
        %6021 = vmatpush1.xpose.msra.mxu0 0.0
        %6022 = vmatprep.mubr.f32.mxu0 0.0
        %v6023 = vand.u32 %v5940, 4294901760
        %v6024 = vsub.f32 %v5940, %v6023
        %v6025 = vand.u32 %v6024, 4294901760
        %v6026 = vsub.f32 %v6024, %v6025
        %v6027 = vand.u32 %v6026, 4294901760
        %6028 = vmatmul.mubr.f32.gmra.mrb[0].mxu0 %v6027
        %v6029 = vpop.f32.mrb[0].mxu0
        %v6030 = vadd.f32 %v5937, %v6029
        %v6031 = vpop.f32.mrb[0].mxu0
        %6032 = vdwg.mxu0
        %6033 = vmatprep.subr.mxu0 0.0
        %v6034 = vand.u32 %v5943, 4294901760
        %v6035 = vsub.f32 %v5943, %v6034
        %v6036 = vand.u32 %v6035, 4294901760
        %v6037 = vsub.f32 %v6035, %v6036
        %v6038 = vand.u32 %v6037, 4294901760
        %6039 = vmatpush1.xpose.msra.mxu0 %v6038
        %6040 = vmatprep.subr.mxu0 0.0
        %v6041 = vand.u32 %v5946, 4294901760
        %v6042 = vsub.f32 %v5946, %v6041
        %v6043 = vand.u32 %v6042, 4294901760
        %v6044 = vsub.f32 %v6042, %v6043
        %v6045 = vand.u32 %v6044, 4294901760
        %6046 = vmatpush1.xpose.msra.mxu0 %v6045
        %6047 = vmatprep.subr.mxu0 0.0
        %v6048 = vand.u32 %v5949, 4294901760
        %v6049 = vsub.f32 %v5949, %v6048
        %v6050 = vand.u32 %v6049, 4294901760
        %v6051 = vsub.f32 %v6049, %v6050
        %v6052 = vand.u32 %v6051, 4294901760
        %6053 = vmatpush1.xpose.msra.mxu0 %v6052
        %6054 = vmatprep.subr.mxu0 0.0
        %v6055 = vand.u32 %v5952, 4294901760
        %v6056 = vsub.f32 %v5952, %v6055
        %v6057 = vand.u32 %v6056, 4294901760
        %v6058 = vsub.f32 %v6056, %v6057
        %v6059 = vand.u32 %v6058, 4294901760
        %6060 = vmatpush1.xpose.msra.mxu0 %v6059
        %6061 = vmatprep.subr.mxu0 0.0
        %6062 = vmatpush1.xpose.msra.mxu0 0.0
        %6063 = vmatprep.subr.mxu0 0.0
        %6064 = vmatpush1.xpose.msra.mxu0 0.0
        %6065 = vmatprep.subr.mxu0 0.0
        %6066 = vmatpush1.xpose.msra.mxu0 0.0
        %6067 = vmatprep.subr.mxu0 0.0
        %6068 = vmatpush1.xpose.msra.mxu0 0.0
        %6069 = vmatprep.subr.mxu0 0.0
        %6070 = vmatpush1.xpose.msra.mxu0 0.0
        %6071 = vmatprep.subr.mxu0 0.0
        %6072 = vmatpush1.xpose.msra.mxu0 0.0
        %6073 = vmatprep.subr.mxu0 0.0
        %6074 = vmatpush1.xpose.msra.mxu0 0.0
        %6075 = vmatprep.subr.mxu0 0.0
        %6076 = vmatpush1.xpose.msra.mxu0 0.0
        %6077 = vmatprep.subr.mxu0 0.0
        %6078 = vmatpush1.xpose.msra.mxu0 0.0
        %6079 = vmatprep.subr.mxu0 0.0
        %6080 = vmatpush1.xpose.msra.mxu0 0.0
        %6081 = vmatprep.subr.mxu0 0.0
        %6082 = vmatpush1.xpose.msra.mxu0 0.0
        %6083 = vmatprep.subr.mxu0 0.0
        %6084 = vmatpush1.xpose.msra.mxu0 0.0
        %6085 = vmatprep.subr.mxu0 0.0
        %6086 = vmatpush1.xpose.msra.mxu0 0.0
        %6087 = vmatprep.subr.mxu0 0.0
        %6088 = vmatpush1.xpose.msra.mxu0 0.0
        %6089 = vmatprep.subr.mxu0 0.0
        %6090 = vmatpush1.xpose.msra.mxu0 0.0
        %6091 = vmatprep.subr.mxu0 0.0
        %6092 = vmatpush1.xpose.msra.mxu0 0.0
        %6093 = vmatprep.subr.mxu0 0.0
        %6094 = vmatpush1.xpose.msra.mxu0 0.0
        %6095 = vmatprep.subr.mxu0 0.0
        %6096 = vmatpush1.xpose.msra.mxu0 0.0
        %6097 = vmatprep.subr.mxu0 0.0
        %6098 = vmatpush1.xpose.msra.mxu0 0.0
        %6099 = vmatprep.subr.mxu0 0.0
        %6100 = vmatpush1.xpose.msra.mxu0 0.0
        %6101 = vmatprep.subr.mxu0 0.0
        %6102 = vmatpush1.xpose.msra.mxu0 0.0
        %6103 = vmatprep.subr.mxu0 0.0
        %6104 = vmatpush1.xpose.msra.mxu0 0.0
        %6105 = vmatprep.subr.mxu0 0.0
        %6106 = vmatpush1.xpose.msra.mxu0 0.0
        %6107 = vmatprep.subr.mxu0 0.0
        %6108 = vmatpush1.xpose.msra.mxu0 0.0
        %6109 = vmatprep.subr.mxu0 0.0
        %6110 = vmatpush1.xpose.msra.mxu0 0.0
        %6111 = vmatprep.subr.mxu0 0.0
        %6112 = vmatpush1.xpose.msra.mxu0 0.0
        %6113 = vmatprep.subr.mxu0 0.0
        %6114 = vmatpush1.xpose.msra.mxu0 0.0
        %6115 = vmatprep.subr.mxu0 0.0
        %6116 = vmatpush1.xpose.msra.mxu0 0.0
        %6117 = vmatprep.mubr.f32.mxu0 0.0
        %v6118 = vand.u32 %v5940, 4294901760
        %6119 = vmatmul.mubr.f32.gmra.mrb[0].mxu0 %v6118
        %v6120 = vpop.f32.mrb[0].mxu0
        %v6121 = vadd.f32 %v6030, %v6120
        %v6122 = vpop.f32.mrb[0].mxu0
        %6123 = vdwg.mxu0
        %6124 = vmatprep.subr.mxu0 0.0
        %v6125 = vand.u32 %v5943, 4294901760
        %v6126 = vsub.f32 %v5943, %v6125
        %6127 = vmatpush1.xpose.msra.mxu0 %v6126
        %6128 = vmatprep.subr.mxu0 0.0
        %v6129 = vand.u32 %v5946, 4294901760
        %v6130 = vsub.f32 %v5946, %v6129
        %6131 = vmatpush1.xpose.msra.mxu0 %v6130
        %6132 = vmatprep.subr.mxu0 0.0
        %v6133 = vand.u32 %v5949, 4294901760
        %v6134 = vsub.f32 %v5949, %v6133
        %6135 = vmatpush1.xpose.msra.mxu0 %v6134
        %6136 = vmatprep.subr.mxu0 0.0
        %v6137 = vand.u32 %v5952, 4294901760
        %v6138 = vsub.f32 %v5952, %v6137
        %6139 = vmatpush1.xpose.msra.mxu0 %v6138
        %6140 = vmatprep.subr.mxu0 0.0
        %6141 = vmatpush1.xpose.msra.mxu0 0.0
        %6142 = vmatprep.subr.mxu0 0.0
        %6143 = vmatpush1.xpose.msra.mxu0 0.0
        %6144 = vmatprep.subr.mxu0 0.0
        %6145 = vmatpush1.xpose.msra.mxu0 0.0
        %6146 = vmatprep.subr.mxu0 0.0
        %6147 = vmatpush1.xpose.msra.mxu0 0.0
        %6148 = vmatprep.subr.mxu0 0.0
        %6149 = vmatpush1.xpose.msra.mxu0 0.0
        %6150 = vmatprep.subr.mxu0 0.0
        %6151 = vmatpush1.xpose.msra.mxu0 0.0
        %6152 = vmatprep.subr.mxu0 0.0
        %6153 = vmatpush1.xpose.msra.mxu0 0.0
        %6154 = vmatprep.subr.mxu0 0.0
        %6155 = vmatpush1.xpose.msra.mxu0 0.0
        %6156 = vmatprep.subr.mxu0 0.0
        %6157 = vmatpush1.xpose.msra.mxu0 0.0
        %6158 = vmatprep.subr.mxu0 0.0
        %6159 = vmatpush1.xpose.msra.mxu0 0.0
        %6160 = vmatprep.subr.mxu0 0.0
        %6161 = vmatpush1.xpose.msra.mxu0 0.0
        %6162 = vmatprep.subr.mxu0 0.0
        %6163 = vmatpush1.xpose.msra.mxu0 0.0
        %6164 = vmatprep.subr.mxu0 0.0
        %6165 = vmatpush1.xpose.msra.mxu0 0.0
        %6166 = vmatprep.subr.mxu0 0.0
        %6167 = vmatpush1.xpose.msra.mxu0 0.0
        %6168 = vmatprep.subr.mxu0 0.0
        %6169 = vmatpush1.xpose.msra.mxu0 0.0
        %6170 = vmatprep.subr.mxu0 0.0
        %6171 = vmatpush1.xpose.msra.mxu0 0.0
        %6172 = vmatprep.subr.mxu0 0.0
        %6173 = vmatpush1.xpose.msra.mxu0 0.0
        %6174 = vmatprep.subr.mxu0 0.0
        %6175 = vmatpush1.xpose.msra.mxu0 0.0
        %6176 = vmatprep.subr.mxu0 0.0
        %6177 = vmatpush1.xpose.msra.mxu0 0.0
        %6178 = vmatprep.subr.mxu0 0.0
        %6179 = vmatpush1.xpose.msra.mxu0 0.0
        %6180 = vmatprep.subr.mxu0 0.0
        %6181 = vmatpush1.xpose.msra.mxu0 0.0
        %6182 = vmatprep.subr.mxu0 0.0
        %6183 = vmatpush1.xpose.msra.mxu0 0.0
        %6184 = vmatprep.subr.mxu0 0.0
        %6185 = vmatpush1.xpose.msra.mxu0 0.0
        %6186 = vmatprep.subr.mxu0 0.0
        %6187 = vmatpush1.xpose.msra.mxu0 0.0
        %6188 = vmatprep.subr.mxu0 0.0
        %6189 = vmatpush1.xpose.msra.mxu0 0.0
        %6190 = vmatprep.subr.mxu0 0.0
        %6191 = vmatpush1.xpose.msra.mxu0 0.0
        %6192 = vmatprep.subr.mxu0 0.0
        %6193 = vmatpush1.xpose.msra.mxu0 0.0
        %6194 = vmatprep.subr.mxu0 0.0
        %6195 = vmatpush1.xpose.msra.mxu0 0.0
        %6196 = vmatprep.mubr.f32.mxu0 0.0
        %v6197 = vand.u32 %v5940, 4294901760
        %v6198 = vsub.f32 %v5940, %v6197
        %6199 = vmatmul.mubr.f32.gmra.mrb[0].mxu0 %v6198
        %v6200 = vpop.f32.mrb[0].mxu0
        %v6201 = vadd.f32 %v6121, %v6200
        %v6202 = vpop.f32.mrb[0].mxu0
        %6203 = vdwg.mxu0
        %6204 = vmatprep.subr.mxu0 0.0
        %v6205 = vand.u32 %v5943, 4294901760
        %6206 = vmatpush1.xpose.msra.mxu0 %v6205
        %6207 = vmatprep.subr.mxu0 0.0
        %v6208 = vand.u32 %v5946, 4294901760
        %6209 = vmatpush1.xpose.msra.mxu0 %v6208
        %6210 = vmatprep.subr.mxu0 0.0
        %v6211 = vand.u32 %v5949, 4294901760
        %6212 = vmatpush1.xpose.msra.mxu0 %v6211
        %6213 = vmatprep.subr.mxu0 0.0
        %v6214 = vand.u32 %v5952, 4294901760
        %6215 = vmatpush1.xpose.msra.mxu0 %v6214
        %6216 = vmatprep.subr.mxu0 0.0
        %6217 = vmatpush1.xpose.msra.mxu0 0.0
        %6218 = vmatprep.subr.mxu0 0.0
        %6219 = vmatpush1.xpose.msra.mxu0 0.0
        %6220 = vmatprep.subr.mxu0 0.0
        %6221 = vmatpush1.xpose.msra.mxu0 0.0
        %6222 = vmatprep.subr.mxu0 0.0
        %6223 = vmatpush1.xpose.msra.mxu0 0.0
        %6224 = vmatprep.subr.mxu0 0.0
        %6225 = vmatpush1.xpose.msra.mxu0 0.0
        %6226 = vmatprep.subr.mxu0 0.0
        %6227 = vmatpush1.xpose.msra.mxu0 0.0
        %6228 = vmatprep.subr.mxu0 0.0
        %6229 = vmatpush1.xpose.msra.mxu0 0.0
        %6230 = vmatprep.subr.mxu0 0.0
        %6231 = vmatpush1.xpose.msra.mxu0 0.0
        %6232 = vmatprep.subr.mxu0 0.0
        %6233 = vmatpush1.xpose.msra.mxu0 0.0
        %6234 = vmatprep.subr.mxu0 0.0
        %6235 = vmatpush1.xpose.msra.mxu0 0.0
        %6236 = vmatprep.subr.mxu0 0.0
        %6237 = vmatpush1.xpose.msra.mxu0 0.0
        %6238 = vmatprep.subr.mxu0 0.0
        %6239 = vmatpush1.xpose.msra.mxu0 0.0
        %6240 = vmatprep.subr.mxu0 0.0
        %6241 = vmatpush1.xpose.msra.mxu0 0.0
        %6242 = vmatprep.subr.mxu0 0.0
        %6243 = vmatpush1.xpose.msra.mxu0 0.0
        %6244 = vmatprep.subr.mxu0 0.0
        %6245 = vmatpush1.xpose.msra.mxu0 0.0
        %6246 = vmatprep.subr.mxu0 0.0
        %6247 = vmatpush1.xpose.msra.mxu0 0.0
        %6248 = vmatprep.subr.mxu0 0.0
        %6249 = vmatpush1.xpose.msra.mxu0 0.0
        %6250 = vmatprep.subr.mxu0 0.0
        %6251 = vmatpush1.xpose.msra.mxu0 0.0
        %6252 = vmatprep.subr.mxu0 0.0
        %6253 = vmatpush1.xpose.msra.mxu0 0.0
        %6254 = vmatprep.subr.mxu0 0.0
        %6255 = vmatpush1.xpose.msra.mxu0 0.0
        %6256 = vmatprep.subr.mxu0 0.0
        %6257 = vmatpush1.xpose.msra.mxu0 0.0
        %6258 = vmatprep.subr.mxu0 0.0
        %6259 = vmatpush1.xpose.msra.mxu0 0.0
        %6260 = vmatprep.subr.mxu0 0.0
        %6261 = vmatpush1.xpose.msra.mxu0 0.0
        %6262 = vmatprep.subr.mxu0 0.0
        %6263 = vmatpush1.xpose.msra.mxu0 0.0
        %6264 = vmatprep.subr.mxu0 0.0
        %6265 = vmatpush1.xpose.msra.mxu0 0.0
        %6266 = vmatprep.subr.mxu0 0.0
        %6267 = vmatpush1.xpose.msra.mxu0 0.0
        %6268 = vmatprep.subr.mxu0 0.0
        %6269 = vmatpush1.xpose.msra.mxu0 0.0
        %6270 = vmatprep.subr.mxu0 0.0
        %6271 = vmatpush1.xpose.msra.mxu0 0.0
        %6272 = vmatprep.mubr.f32.mxu0 0.0
        %v6273 = vand.u32 %v5940, 4294901760
        %v6274 = vsub.f32 %v5940, %v6273
        %v6275 = vand.u32 %v6274, 4294901760
        %6276 = vmatmul.mubr.f32.gmra.mrb[0].mxu0 %v6275
        %v6277 = vpop.f32.mrb[0].mxu0
        %v6278 = vadd.f32 %v6201, %v6277
        %v6279 = vpop.f32.mrb[0].mxu0
        %6280 = vdwg.mxu0
        %6281 = vmatprep.subr.mxu0 0.0
        %v6282 = vand.u32 %v5943, 4294901760
        %v6283 = vsub.f32 %v5943, %v6282
        %v6284 = vand.u32 %v6283, 4294901760
        %6285 = vmatpush1.xpose.msra.mxu0 %v6284
        %6286 = vmatprep.subr.mxu0 0.0
        %v6287 = vand.u32 %v5946, 4294901760
        %v6288 = vsub.f32 %v5946, %v6287
        %v6289 = vand.u32 %v6288, 4294901760
        %6290 = vmatpush1.xpose.msra.mxu0 %v6289
        %6291 = vmatprep.subr.mxu0 0.0
        %v6292 = vand.u32 %v5949, 4294901760
        %v6293 = vsub.f32 %v5949, %v6292
        %v6294 = vand.u32 %v6293, 4294901760
        %6295 = vmatpush1.xpose.msra.mxu0 %v6294
        %6296 = vmatprep.subr.mxu0 0.0
        %v6297 = vand.u32 %v5952, 4294901760
        %v6298 = vsub.f32 %v5952, %v6297
        %v6299 = vand.u32 %v6298, 4294901760
        %6300 = vmatpush1.xpose.msra.mxu0 %v6299
        %6301 = vmatprep.subr.mxu0 0.0
        %6302 = vmatpush1.xpose.msra.mxu0 0.0
        %6303 = vmatprep.subr.mxu0 0.0
        %6304 = vmatpush1.xpose.msra.mxu0 0.0
        %6305 = vmatprep.subr.mxu0 0.0
        %6306 = vmatpush1.xpose.msra.mxu0 0.0
        %6307 = vmatprep.subr.mxu0 0.0
        %6308 = vmatpush1.xpose.msra.mxu0 0.0
        %6309 = vmatprep.subr.mxu0 0.0
        %6310 = vmatpush1.xpose.msra.mxu0 0.0
        %6311 = vmatprep.subr.mxu0 0.0
        %6312 = vmatpush1.xpose.msra.mxu0 0.0
        %6313 = vmatprep.subr.mxu0 0.0
        %6314 = vmatpush1.xpose.msra.mxu0 0.0
        %6315 = vmatprep.subr.mxu0 0.0
        %6316 = vmatpush1.xpose.msra.mxu0 0.0
        %6317 = vmatprep.subr.mxu0 0.0
        %6318 = vmatpush1.xpose.msra.mxu0 0.0
        %6319 = vmatprep.subr.mxu0 0.0
        %6320 = vmatpush1.xpose.msra.mxu0 0.0
        %6321 = vmatprep.subr.mxu0 0.0
        %6322 = vmatpush1.xpose.msra.mxu0 0.0
        %6323 = vmatprep.subr.mxu0 0.0
        %6324 = vmatpush1.xpose.msra.mxu0 0.0
        %6325 = vmatprep.subr.mxu0 0.0
        %6326 = vmatpush1.xpose.msra.mxu0 0.0
        %6327 = vmatprep.subr.mxu0 0.0
        %6328 = vmatpush1.xpose.msra.mxu0 0.0
        %6329 = vmatprep.subr.mxu0 0.0
        %6330 = vmatpush1.xpose.msra.mxu0 0.0
        %6331 = vmatprep.subr.mxu0 0.0
        %6332 = vmatpush1.xpose.msra.mxu0 0.0
        %6333 = vmatprep.subr.mxu0 0.0
        %6334 = vmatpush1.xpose.msra.mxu0 0.0
        %6335 = vmatprep.subr.mxu0 0.0
        %6336 = vmatpush1.xpose.msra.mxu0 0.0
        %6337 = vmatprep.subr.mxu0 0.0
        %6338 = vmatpush1.xpose.msra.mxu0 0.0
        %6339 = vmatprep.subr.mxu0 0.0
        %6340 = vmatpush1.xpose.msra.mxu0 0.0
        %6341 = vmatprep.subr.mxu0 0.0
        %6342 = vmatpush1.xpose.msra.mxu0 0.0
        %6343 = vmatprep.subr.mxu0 0.0
        %6344 = vmatpush1.xpose.msra.mxu0 0.0
        %6345 = vmatprep.subr.mxu0 0.0
        %6346 = vmatpush1.xpose.msra.mxu0 0.0
        %6347 = vmatprep.subr.mxu0 0.0
        %6348 = vmatpush1.xpose.msra.mxu0 0.0
        %6349 = vmatprep.subr.mxu0 0.0
        %6350 = vmatpush1.xpose.msra.mxu0 0.0
        %6351 = vmatprep.subr.mxu0 0.0
        %6352 = vmatpush1.xpose.msra.mxu0 0.0
        %6353 = vmatprep.subr.mxu0 0.0
        %6354 = vmatpush1.xpose.msra.mxu0 0.0
        %6355 = vmatprep.subr.mxu0 0.0
        %6356 = vmatpush1.xpose.msra.mxu0 0.0
        %6357 = vmatprep.mubr.f32.mxu0 0.0
        %v6358 = vand.u32 %v5940, 4294901760
        %6359 = vmatmul.mubr.f32.gmra.mrb[0].mxu0 %v6358
        %v6360 = vpop.f32.mrb[0].mxu0
        %v6361 = vadd.f32 %v6278, %v6360
        %v6362 = vpop.f32.mrb[0].mxu0
        %6363 = vdwg.mxu0
        %6364 = vmatprep.subr.mxu0 0.0
        %v6365 = vand.u32 %v5943, 4294901760
        %6366 = vmatpush1.xpose.msra.mxu0 %v6365
        %6367 = vmatprep.subr.mxu0 0.0
        %v6368 = vand.u32 %v5946, 4294901760
        %6369 = vmatpush1.xpose.msra.mxu0 %v6368
        %6370 = vmatprep.subr.mxu0 0.0
        %v6371 = vand.u32 %v5949, 4294901760
        %6372 = vmatpush1.xpose.msra.mxu0 %v6371
        %6373 = vmatprep.subr.mxu0 0.0
        %v6374 = vand.u32 %v5952, 4294901760
        %6375 = vmatpush1.xpose.msra.mxu0 %v6374
        %6376 = vmatprep.subr.mxu0 0.0
        %6377 = vmatpush1.xpose.msra.mxu0 0.0
        %6378 = vmatprep.subr.mxu0 0.0
        %6379 = vmatpush1.xpose.msra.mxu0 0.0
        %6380 = vmatprep.subr.mxu0 0.0
        %6381 = vmatpush1.xpose.msra.mxu0 0.0
        %6382 = vmatprep.subr.mxu0 0.0
        %6383 = vmatpush1.xpose.msra.mxu0 0.0
        %6384 = vmatprep.subr.mxu0 0.0
        %6385 = vmatpush1.xpose.msra.mxu0 0.0
        %6386 = vmatprep.subr.mxu0 0.0
        %6387 = vmatpush1.xpose.msra.mxu0 0.0
        %6388 = vmatprep.subr.mxu0 0.0
        %6389 = vmatpush1.xpose.msra.mxu0 0.0
        %6390 = vmatprep.subr.mxu0 0.0
        %6391 = vmatpush1.xpose.msra.mxu0 0.0
        %6392 = vmatprep.subr.mxu0 0.0
        %6393 = vmatpush1.xpose.msra.mxu0 0.0
        %6394 = vmatprep.subr.mxu0 0.0
        %6395 = vmatpush1.xpose.msra.mxu0 0.0
        %6396 = vmatprep.subr.mxu0 0.0
        %6397 = vmatpush1.xpose.msra.mxu0 0.0
        %6398 = vmatprep.subr.mxu0 0.0
        %6399 = vmatpush1.xpose.msra.mxu0 0.0
        %6400 = vmatprep.subr.mxu0 0.0
        %6401 = vmatpush1.xpose.msra.mxu0 0.0
        %6402 = vmatprep.subr.mxu0 0.0
        %6403 = vmatpush1.xpose.msra.mxu0 0.0
        %6404 = vmatprep.subr.mxu0 0.0
        %6405 = vmatpush1.xpose.msra.mxu0 0.0
        %6406 = vmatprep.subr.mxu0 0.0
        %6407 = vmatpush1.xpose.msra.mxu0 0.0
        %6408 = vmatprep.subr.mxu0 0.0
        %6409 = vmatpush1.xpose.msra.mxu0 0.0
        %6410 = vmatprep.subr.mxu0 0.0
        %6411 = vmatpush1.xpose.msra.mxu0 0.0
        %6412 = vmatprep.subr.mxu0 0.0
        %6413 = vmatpush1.xpose.msra.mxu0 0.0
        %6414 = vmatprep.subr.mxu0 0.0
        %6415 = vmatpush1.xpose.msra.mxu0 0.0
        %6416 = vmatprep.subr.mxu0 0.0
        %6417 = vmatpush1.xpose.msra.mxu0 0.0
        %6418 = vmatprep.subr.mxu0 0.0
        %6419 = vmatpush1.xpose.msra.mxu0 0.0
        %6420 = vmatprep.subr.mxu0 0.0
        %6421 = vmatpush1.xpose.msra.mxu0 0.0
        %6422 = vmatprep.subr.mxu0 0.0
        %6423 = vmatpush1.xpose.msra.mxu0 0.0
        %6424 = vmatprep.subr.mxu0 0.0
        %6425 = vmatpush1.xpose.msra.mxu0 0.0
        %6426 = vmatprep.subr.mxu0 0.0
        %6427 = vmatpush1.xpose.msra.mxu0 0.0
        %6428 = vmatprep.subr.mxu0 0.0
        %6429 = vmatpush1.xpose.msra.mxu0 0.0
        %6430 = vmatprep.subr.mxu0 0.0
        %6431 = vmatpush1.xpose.msra.mxu0 0.0
        %6432 = vmatprep.mubr.f32.mxu0 0.0
        %v6433 = vand.u32 %v5940, 4294901760
        %6434 = vmatmul.mubr.f32.gmra.mrb[0].mxu0 %v6433
        %v6435 = vpop.f32.mrb[0].mxu0
        %v6436 = vadd.f32 %v6361, %v6435
        %v6437 = vpop.f32.mrb[0].mxu0
        %6438 = vdwg.mxu0
        %v6439 = vadd.f32 %v6436, %v700
        %v6440 = vsel %vm713, %v6439, 0.0
        %6441 = vadd.xlane.f32.xlu0 %v6440
        %v6442 = vpop.xlane.xlu0 %6441
        %v6443 = vrcp.pop 32.0
        %v6444 = vmul.f32 %v6442, %v6443
        %v6445 = vsub.f32 %v6439, %v6444
        %v6446 = vmul.f32 %v6445, %v6445
        %v6447 = vsel %vm713, %v6446, 0.0
        %6448 = vadd.xlane.f32.xlu0 %v6447
        %v6449 = vpop.xlane.xlu0 %6448
        %v6450 = vmul.f32 %v6449, %v6443
        %v6451 = vadd.f32 %v6450, 1e-05
        %v6452 = vrsqrt.pop %v6451
        %v6453 = vmul.f32 %v6445, %v6452
        %v6454 = vld [vmem:[%s10] sm:$0x1]
        %v6456 = vlaneseq
        %v6457 = vshrl.u32 %v6456, 7
        %v6458 = vsub.s32 0, %v6457
        %v6459 = vrot.slane %v6454, %v6458
        %v6461 = vmul.f32 %v6453, %v6459
        %v6462 = vld [vmem:[%s11] sm:$0x1]
        %v6464 = vlaneseq
        %v6465 = vshrl.u32 %v6464, 7
        %v6466 = vsub.s32 0, %v6465
        %v6467 = vrot.slane %v6462, %v6466
        %v6469 = vadd.f32 %v6461, %v6467
        %v6470 = vld [vmem:[%s12] sm:$0xff]
        %v6471 = vld [vmem:[%s12 + $0x8] sm:$0xff]
        %v6472 = vld [vmem:[%s12 + $0x10] sm:$0xff]
        %v6473 = vld [vmem:[%s12 + $0x18] sm:$0xff]
        %v6474 = vld [vmem:[%s13] sm:$0x1]
        %v6476 = vlaneseq
        %v6477 = vshrl.u32 %v6476, 7
        %v6478 = vsub.s32 0, %v6477
        %v6479 = vrot.slane %v6474, %v6478
        %v6482 = vsel %vm713, %v6469, 0
        %v6485 = vsel %vm713, %v6470, 0
        %v6488 = vsel %vm713, %v6471, 0
        %v6491 = vsel %vm713, %v6472, 0
        %v6494 = vsel %vm713, %v6473, 0
        %6496 = vmatprep.subr.mxu0 0.0
        %v6497 = vand.u32 %v6485, 4294901760
        %6498 = vmatpush1.xpose.msra.mxu0 %v6497
        %6499 = vmatprep.subr.mxu0 0.0
        %v6500 = vand.u32 %v6488, 4294901760
        %6501 = vmatpush1.xpose.msra.mxu0 %v6500
        %6502 = vmatprep.subr.mxu0 0.0
        %v6503 = vand.u32 %v6491, 4294901760
        %6504 = vmatpush1.xpose.msra.mxu0 %v6503
        %6505 = vmatprep.subr.mxu0 0.0
        %v6506 = vand.u32 %v6494, 4294901760
        %6507 = vmatpush1.xpose.msra.mxu0 %v6506
        %6508 = vmatprep.subr.mxu0 0.0
        %6509 = vmatpush1.xpose.msra.mxu0 0.0
        %6510 = vmatprep.subr.mxu0 0.0
        %6511 = vmatpush1.xpose.msra.mxu0 0.0
        %6512 = vmatprep.subr.mxu0 0.0
        %6513 = vmatpush1.xpose.msra.mxu0 0.0
        %6514 = vmatprep.subr.mxu0 0.0
        %6515 = vmatpush1.xpose.msra.mxu0 0.0
        %6516 = vmatprep.subr.mxu0 0.0
        %6517 = vmatpush1.xpose.msra.mxu0 0.0
        %6518 = vmatprep.subr.mxu0 0.0
        %6519 = vmatpush1.xpose.msra.mxu0 0.0
        %6520 = vmatprep.subr.mxu0 0.0
        %6521 = vmatpush1.xpose.msra.mxu0 0.0
        %6522 = vmatprep.subr.mxu0 0.0
        %6523 = vmatpush1.xpose.msra.mxu0 0.0
        %6524 = vmatprep.subr.mxu0 0.0
        %6525 = vmatpush1.xpose.msra.mxu0 0.0
        %6526 = vmatprep.subr.mxu0 0.0
        %6527 = vmatpush1.xpose.msra.mxu0 0.0
        %6528 = vmatprep.subr.mxu0 0.0
        %6529 = vmatpush1.xpose.msra.mxu0 0.0
        %6530 = vmatprep.subr.mxu0 0.0
        %6531 = vmatpush1.xpose.msra.mxu0 0.0
        %6532 = vmatprep.subr.mxu0 0.0
        %6533 = vmatpush1.xpose.msra.mxu0 0.0
        %6534 = vmatprep.subr.mxu0 0.0
        %6535 = vmatpush1.xpose.msra.mxu0 0.0
        %6536 = vmatprep.subr.mxu0 0.0
        %6537 = vmatpush1.xpose.msra.mxu0 0.0
        %6538 = vmatprep.subr.mxu0 0.0
        %6539 = vmatpush1.xpose.msra.mxu0 0.0
        %6540 = vmatprep.subr.mxu0 0.0
        %6541 = vmatpush1.xpose.msra.mxu0 0.0
        %6542 = vmatprep.subr.mxu0 0.0
        %6543 = vmatpush1.xpose.msra.mxu0 0.0
        %6544 = vmatprep.subr.mxu0 0.0
        %6545 = vmatpush1.xpose.msra.mxu0 0.0
        %6546 = vmatprep.subr.mxu0 0.0
        %6547 = vmatpush1.xpose.msra.mxu0 0.0
        %6548 = vmatprep.subr.mxu0 0.0
        %6549 = vmatpush1.xpose.msra.mxu0 0.0
        %6550 = vmatprep.subr.mxu0 0.0
        %6551 = vmatpush1.xpose.msra.mxu0 0.0
        %6552 = vmatprep.subr.mxu0 0.0
        %6553 = vmatpush1.xpose.msra.mxu0 0.0
        %6554 = vmatprep.subr.mxu0 0.0
        %6555 = vmatpush1.xpose.msra.mxu0 0.0
        %6556 = vmatprep.subr.mxu0 0.0
        %6557 = vmatpush1.xpose.msra.mxu0 0.0
        %6558 = vmatprep.subr.mxu0 0.0
        %6559 = vmatpush1.xpose.msra.mxu0 0.0
        %6560 = vmatprep.subr.mxu0 0.0
        %6561 = vmatpush1.xpose.msra.mxu0 0.0
        %6562 = vmatprep.subr.mxu0 0.0
        %6563 = vmatpush1.xpose.msra.mxu0 0.0
        %6564 = vmatprep.mubr.f32.mxu0 0.0
        %v6565 = vand.u32 %v6482, 4294901760
        %v6566 = vsub.f32 %v6482, %v6565
        %v6567 = vand.u32 %v6566, 4294901760
        %v6568 = vsub.f32 %v6566, %v6567
        %v6569 = vand.u32 %v6568, 4294901760
        %6570 = vmatmul.mubr.f32.gmra.mrb[0].mxu0 %v6569
        %v6571 = vpop.f32.mrb[0].mxu0
        %v6572 = vadd.f32 %v6479, %v6571
        %v6573 = vpop.f32.mrb[0].mxu0
        %6574 = vdwg.mxu0
        %6575 = vmatprep.subr.mxu0 0.0
        %v6576 = vand.u32 %v6485, 4294901760
        %v6577 = vsub.f32 %v6485, %v6576
        %v6578 = vand.u32 %v6577, 4294901760
        %v6579 = vsub.f32 %v6577, %v6578
        %v6580 = vand.u32 %v6579, 4294901760
        %6581 = vmatpush1.xpose.msra.mxu0 %v6580
        %6582 = vmatprep.subr.mxu0 0.0
        %v6583 = vand.u32 %v6488, 4294901760
        %v6584 = vsub.f32 %v6488, %v6583
        %v6585 = vand.u32 %v6584, 4294901760
        %v6586 = vsub.f32 %v6584, %v6585
        %v6587 = vand.u32 %v6586, 4294901760
        %6588 = vmatpush1.xpose.msra.mxu0 %v6587
        %6589 = vmatprep.subr.mxu0 0.0
        %v6590 = vand.u32 %v6491, 4294901760
        %v6591 = vsub.f32 %v6491, %v6590
        %v6592 = vand.u32 %v6591, 4294901760
        %v6593 = vsub.f32 %v6591, %v6592
        %v6594 = vand.u32 %v6593, 4294901760
        %6595 = vmatpush1.xpose.msra.mxu0 %v6594
        %6596 = vmatprep.subr.mxu0 0.0
        %v6597 = vand.u32 %v6494, 4294901760
        %v6598 = vsub.f32 %v6494, %v6597
        %v6599 = vand.u32 %v6598, 4294901760
        %v6600 = vsub.f32 %v6598, %v6599
        %v6601 = vand.u32 %v6600, 4294901760
        %6602 = vmatpush1.xpose.msra.mxu0 %v6601
        %6603 = vmatprep.subr.mxu0 0.0
        %6604 = vmatpush1.xpose.msra.mxu0 0.0
        %6605 = vmatprep.subr.mxu0 0.0
        %6606 = vmatpush1.xpose.msra.mxu0 0.0
        %6607 = vmatprep.subr.mxu0 0.0
        %6608 = vmatpush1.xpose.msra.mxu0 0.0
        %6609 = vmatprep.subr.mxu0 0.0
        %6610 = vmatpush1.xpose.msra.mxu0 0.0
        %6611 = vmatprep.subr.mxu0 0.0
        %6612 = vmatpush1.xpose.msra.mxu0 0.0
        %6613 = vmatprep.subr.mxu0 0.0
        %6614 = vmatpush1.xpose.msra.mxu0 0.0
        %6615 = vmatprep.subr.mxu0 0.0
        %6616 = vmatpush1.xpose.msra.mxu0 0.0
        %6617 = vmatprep.subr.mxu0 0.0
        %6618 = vmatpush1.xpose.msra.mxu0 0.0
        %6619 = vmatprep.subr.mxu0 0.0
        %6620 = vmatpush1.xpose.msra.mxu0 0.0
        %6621 = vmatprep.subr.mxu0 0.0
        %6622 = vmatpush1.xpose.msra.mxu0 0.0
        %6623 = vmatprep.subr.mxu0 0.0
        %6624 = vmatpush1.xpose.msra.mxu0 0.0
        %6625 = vmatprep.subr.mxu0 0.0
        %6626 = vmatpush1.xpose.msra.mxu0 0.0
        %6627 = vmatprep.subr.mxu0 0.0
        %6628 = vmatpush1.xpose.msra.mxu0 0.0
        %6629 = vmatprep.subr.mxu0 0.0
        %6630 = vmatpush1.xpose.msra.mxu0 0.0
        %6631 = vmatprep.subr.mxu0 0.0
        %6632 = vmatpush1.xpose.msra.mxu0 0.0
        %6633 = vmatprep.subr.mxu0 0.0
        %6634 = vmatpush1.xpose.msra.mxu0 0.0
        %6635 = vmatprep.subr.mxu0 0.0
        %6636 = vmatpush1.xpose.msra.mxu0 0.0
        %6637 = vmatprep.subr.mxu0 0.0
        %6638 = vmatpush1.xpose.msra.mxu0 0.0
        %6639 = vmatprep.subr.mxu0 0.0
        %6640 = vmatpush1.xpose.msra.mxu0 0.0
        %6641 = vmatprep.subr.mxu0 0.0
        %6642 = vmatpush1.xpose.msra.mxu0 0.0
        %6643 = vmatprep.subr.mxu0 0.0
        %6644 = vmatpush1.xpose.msra.mxu0 0.0
        %6645 = vmatprep.subr.mxu0 0.0
        %6646 = vmatpush1.xpose.msra.mxu0 0.0
        %6647 = vmatprep.subr.mxu0 0.0
        %6648 = vmatpush1.xpose.msra.mxu0 0.0
        %6649 = vmatprep.subr.mxu0 0.0
        %6650 = vmatpush1.xpose.msra.mxu0 0.0
        %6651 = vmatprep.subr.mxu0 0.0
        %6652 = vmatpush1.xpose.msra.mxu0 0.0
        %6653 = vmatprep.subr.mxu0 0.0
        %6654 = vmatpush1.xpose.msra.mxu0 0.0
        %6655 = vmatprep.subr.mxu0 0.0
        %6656 = vmatpush1.xpose.msra.mxu0 0.0
        %6657 = vmatprep.subr.mxu0 0.0
        %6658 = vmatpush1.xpose.msra.mxu0 0.0
        %6659 = vmatprep.mubr.f32.mxu0 0.0
        %v6660 = vand.u32 %v6482, 4294901760
        %6661 = vmatmul.mubr.f32.gmra.mrb[0].mxu0 %v6660
        %v6662 = vpop.f32.mrb[0].mxu0
        %v6663 = vadd.f32 %v6572, %v6662
        %v6664 = vpop.f32.mrb[0].mxu0
        %6665 = vdwg.mxu0
        %6666 = vmatprep.subr.mxu0 0.0
        %v6667 = vand.u32 %v6485, 4294901760
        %v6668 = vsub.f32 %v6485, %v6667
        %6669 = vmatpush1.xpose.msra.mxu0 %v6668
        %6670 = vmatprep.subr.mxu0 0.0
        %v6671 = vand.u32 %v6488, 4294901760
        %v6672 = vsub.f32 %v6488, %v6671
        %6673 = vmatpush1.xpose.msra.mxu0 %v6672
        %6674 = vmatprep.subr.mxu0 0.0
        %v6675 = vand.u32 %v6491, 4294901760
        %v6676 = vsub.f32 %v6491, %v6675
        %6677 = vmatpush1.xpose.msra.mxu0 %v6676
        %6678 = vmatprep.subr.mxu0 0.0
        %v6679 = vand.u32 %v6494, 4294901760
        %v6680 = vsub.f32 %v6494, %v6679
        %6681 = vmatpush1.xpose.msra.mxu0 %v6680
        %6682 = vmatprep.subr.mxu0 0.0
        %6683 = vmatpush1.xpose.msra.mxu0 0.0
        %6684 = vmatprep.subr.mxu0 0.0
        %6685 = vmatpush1.xpose.msra.mxu0 0.0
        %6686 = vmatprep.subr.mxu0 0.0
        %6687 = vmatpush1.xpose.msra.mxu0 0.0
        %6688 = vmatprep.subr.mxu0 0.0
        %6689 = vmatpush1.xpose.msra.mxu0 0.0
        %6690 = vmatprep.subr.mxu0 0.0
        %6691 = vmatpush1.xpose.msra.mxu0 0.0
        %6692 = vmatprep.subr.mxu0 0.0
        %6693 = vmatpush1.xpose.msra.mxu0 0.0
        %6694 = vmatprep.subr.mxu0 0.0
        %6695 = vmatpush1.xpose.msra.mxu0 0.0
        %6696 = vmatprep.subr.mxu0 0.0
        %6697 = vmatpush1.xpose.msra.mxu0 0.0
        %6698 = vmatprep.subr.mxu0 0.0
        %6699 = vmatpush1.xpose.msra.mxu0 0.0
        %6700 = vmatprep.subr.mxu0 0.0
        %6701 = vmatpush1.xpose.msra.mxu0 0.0
        %6702 = vmatprep.subr.mxu0 0.0
        %6703 = vmatpush1.xpose.msra.mxu0 0.0
        %6704 = vmatprep.subr.mxu0 0.0
        %6705 = vmatpush1.xpose.msra.mxu0 0.0
        %6706 = vmatprep.subr.mxu0 0.0
        %6707 = vmatpush1.xpose.msra.mxu0 0.0
        %6708 = vmatprep.subr.mxu0 0.0
        %6709 = vmatpush1.xpose.msra.mxu0 0.0
        %6710 = vmatprep.subr.mxu0 0.0
        %6711 = vmatpush1.xpose.msra.mxu0 0.0
        %6712 = vmatprep.subr.mxu0 0.0
        %6713 = vmatpush1.xpose.msra.mxu0 0.0
        %6714 = vmatprep.subr.mxu0 0.0
        %6715 = vmatpush1.xpose.msra.mxu0 0.0
        %6716 = vmatprep.subr.mxu0 0.0
        %6717 = vmatpush1.xpose.msra.mxu0 0.0
        %6718 = vmatprep.subr.mxu0 0.0
        %6719 = vmatpush1.xpose.msra.mxu0 0.0
        %6720 = vmatprep.subr.mxu0 0.0
        %6721 = vmatpush1.xpose.msra.mxu0 0.0
        %6722 = vmatprep.subr.mxu0 0.0
        %6723 = vmatpush1.xpose.msra.mxu0 0.0
        %6724 = vmatprep.subr.mxu0 0.0
        %6725 = vmatpush1.xpose.msra.mxu0 0.0
        %6726 = vmatprep.subr.mxu0 0.0
        %6727 = vmatpush1.xpose.msra.mxu0 0.0
        %6728 = vmatprep.subr.mxu0 0.0
        %6729 = vmatpush1.xpose.msra.mxu0 0.0
        %6730 = vmatprep.subr.mxu0 0.0
        %6731 = vmatpush1.xpose.msra.mxu0 0.0
        %6732 = vmatprep.subr.mxu0 0.0
        %6733 = vmatpush1.xpose.msra.mxu0 0.0
        %6734 = vmatprep.subr.mxu0 0.0
        %6735 = vmatpush1.xpose.msra.mxu0 0.0
        %6736 = vmatprep.subr.mxu0 0.0
        %6737 = vmatpush1.xpose.msra.mxu0 0.0
        %6738 = vmatprep.mubr.f32.mxu0 0.0
        %v6739 = vand.u32 %v6482, 4294901760
        %v6740 = vsub.f32 %v6482, %v6739
        %6741 = vmatmul.mubr.f32.gmra.mrb[0].mxu0 %v6740
        %v6742 = vpop.f32.mrb[0].mxu0
        %v6743 = vadd.f32 %v6663, %v6742
        %v6744 = vpop.f32.mrb[0].mxu0
        %6745 = vdwg.mxu0
        %6746 = vmatprep.subr.mxu0 0.0
        %v6747 = vand.u32 %v6485, 4294901760
        %6748 = vmatpush1.xpose.msra.mxu0 %v6747
        %6749 = vmatprep.subr.mxu0 0.0
        %v6750 = vand.u32 %v6488, 4294901760
        %6751 = vmatpush1.xpose.msra.mxu0 %v6750
        %6752 = vmatprep.subr.mxu0 0.0
        %v6753 = vand.u32 %v6491, 4294901760
        %6754 = vmatpush1.xpose.msra.mxu0 %v6753
        %6755 = vmatprep.subr.mxu0 0.0
        %v6756 = vand.u32 %v6494, 4294901760
        %6757 = vmatpush1.xpose.msra.mxu0 %v6756
        %6758 = vmatprep.subr.mxu0 0.0
        %6759 = vmatpush1.xpose.msra.mxu0 0.0
        %6760 = vmatprep.subr.mxu0 0.0
        %6761 = vmatpush1.xpose.msra.mxu0 0.0
        %6762 = vmatprep.subr.mxu0 0.0
        %6763 = vmatpush1.xpose.msra.mxu0 0.0
        %6764 = vmatprep.subr.mxu0 0.0
        %6765 = vmatpush1.xpose.msra.mxu0 0.0
        %6766 = vmatprep.subr.mxu0 0.0
        %6767 = vmatpush1.xpose.msra.mxu0 0.0
        %6768 = vmatprep.subr.mxu0 0.0
        %6769 = vmatpush1.xpose.msra.mxu0 0.0
        %6770 = vmatprep.subr.mxu0 0.0
        %6771 = vmatpush1.xpose.msra.mxu0 0.0
        %6772 = vmatprep.subr.mxu0 0.0
        %6773 = vmatpush1.xpose.msra.mxu0 0.0
        %6774 = vmatprep.subr.mxu0 0.0
        %6775 = vmatpush1.xpose.msra.mxu0 0.0
        %6776 = vmatprep.subr.mxu0 0.0
        %6777 = vmatpush1.xpose.msra.mxu0 0.0
        %6778 = vmatprep.subr.mxu0 0.0
        %6779 = vmatpush1.xpose.msra.mxu0 0.0
        %6780 = vmatprep.subr.mxu0 0.0
        %6781 = vmatpush1.xpose.msra.mxu0 0.0
        %6782 = vmatprep.subr.mxu0 0.0
        %6783 = vmatpush1.xpose.msra.mxu0 0.0
        %6784 = vmatprep.subr.mxu0 0.0
        %6785 = vmatpush1.xpose.msra.mxu0 0.0
        %6786 = vmatprep.subr.mxu0 0.0
        %6787 = vmatpush1.xpose.msra.mxu0 0.0
        %6788 = vmatprep.subr.mxu0 0.0
        %6789 = vmatpush1.xpose.msra.mxu0 0.0
        %6790 = vmatprep.subr.mxu0 0.0
        %6791 = vmatpush1.xpose.msra.mxu0 0.0
        %6792 = vmatprep.subr.mxu0 0.0
        %6793 = vmatpush1.xpose.msra.mxu0 0.0
        %6794 = vmatprep.subr.mxu0 0.0
        %6795 = vmatpush1.xpose.msra.mxu0 0.0
        %6796 = vmatprep.subr.mxu0 0.0
        %6797 = vmatpush1.xpose.msra.mxu0 0.0
        %6798 = vmatprep.subr.mxu0 0.0
        %6799 = vmatpush1.xpose.msra.mxu0 0.0
        %6800 = vmatprep.subr.mxu0 0.0
        %6801 = vmatpush1.xpose.msra.mxu0 0.0
        %6802 = vmatprep.subr.mxu0 0.0
        %6803 = vmatpush1.xpose.msra.mxu0 0.0
        %6804 = vmatprep.subr.mxu0 0.0
        %6805 = vmatpush1.xpose.msra.mxu0 0.0
        %6806 = vmatprep.subr.mxu0 0.0
        %6807 = vmatpush1.xpose.msra.mxu0 0.0
        %6808 = vmatprep.subr.mxu0 0.0
        %6809 = vmatpush1.xpose.msra.mxu0 0.0
        %6810 = vmatprep.subr.mxu0 0.0
        %6811 = vmatpush1.xpose.msra.mxu0 0.0
        %6812 = vmatprep.subr.mxu0 0.0
        %6813 = vmatpush1.xpose.msra.mxu0 0.0
        %6814 = vmatprep.mubr.f32.mxu0 0.0
        %v6815 = vand.u32 %v6482, 4294901760
        %v6816 = vsub.f32 %v6482, %v6815
        %v6817 = vand.u32 %v6816, 4294901760
        %6818 = vmatmul.mubr.f32.gmra.mrb[0].mxu0 %v6817
        %v6819 = vpop.f32.mrb[0].mxu0
        %v6820 = vadd.f32 %v6743, %v6819
        %v6821 = vpop.f32.mrb[0].mxu0
        %6822 = vdwg.mxu0
        %6823 = vmatprep.subr.mxu0 0.0
        %v6824 = vand.u32 %v6485, 4294901760
        %v6825 = vsub.f32 %v6485, %v6824
        %v6826 = vand.u32 %v6825, 4294901760
        %6827 = vmatpush1.xpose.msra.mxu0 %v6826
        %6828 = vmatprep.subr.mxu0 0.0
        %v6829 = vand.u32 %v6488, 4294901760
        %v6830 = vsub.f32 %v6488, %v6829
        %v6831 = vand.u32 %v6830, 4294901760
        %6832 = vmatpush1.xpose.msra.mxu0 %v6831
        %6833 = vmatprep.subr.mxu0 0.0
        %v6834 = vand.u32 %v6491, 4294901760
        %v6835 = vsub.f32 %v6491, %v6834
        %v6836 = vand.u32 %v6835, 4294901760
        %6837 = vmatpush1.xpose.msra.mxu0 %v6836
        %6838 = vmatprep.subr.mxu0 0.0
        %v6839 = vand.u32 %v6494, 4294901760
        %v6840 = vsub.f32 %v6494, %v6839
        %v6841 = vand.u32 %v6840, 4294901760
        %6842 = vmatpush1.xpose.msra.mxu0 %v6841
        %6843 = vmatprep.subr.mxu0 0.0
        %6844 = vmatpush1.xpose.msra.mxu0 0.0
        %6845 = vmatprep.subr.mxu0 0.0
        %6846 = vmatpush1.xpose.msra.mxu0 0.0
        %6847 = vmatprep.subr.mxu0 0.0
        %6848 = vmatpush1.xpose.msra.mxu0 0.0
        %6849 = vmatprep.subr.mxu0 0.0
        %6850 = vmatpush1.xpose.msra.mxu0 0.0
        %6851 = vmatprep.subr.mxu0 0.0
        %6852 = vmatpush1.xpose.msra.mxu0 0.0
        %6853 = vmatprep.subr.mxu0 0.0
        %6854 = vmatpush1.xpose.msra.mxu0 0.0
        %6855 = vmatprep.subr.mxu0 0.0
        %6856 = vmatpush1.xpose.msra.mxu0 0.0
        %6857 = vmatprep.subr.mxu0 0.0
        %6858 = vmatpush1.xpose.msra.mxu0 0.0
        %6859 = vmatprep.subr.mxu0 0.0
        %6860 = vmatpush1.xpose.msra.mxu0 0.0
        %6861 = vmatprep.subr.mxu0 0.0
        %6862 = vmatpush1.xpose.msra.mxu0 0.0
        %6863 = vmatprep.subr.mxu0 0.0
        %6864 = vmatpush1.xpose.msra.mxu0 0.0
        %6865 = vmatprep.subr.mxu0 0.0
        %6866 = vmatpush1.xpose.msra.mxu0 0.0
        %6867 = vmatprep.subr.mxu0 0.0
        %6868 = vmatpush1.xpose.msra.mxu0 0.0
        %6869 = vmatprep.subr.mxu0 0.0
        %6870 = vmatpush1.xpose.msra.mxu0 0.0
        %6871 = vmatprep.subr.mxu0 0.0
        %6872 = vmatpush1.xpose.msra.mxu0 0.0
        %6873 = vmatprep.subr.mxu0 0.0
        %6874 = vmatpush1.xpose.msra.mxu0 0.0
        %6875 = vmatprep.subr.mxu0 0.0
        %6876 = vmatpush1.xpose.msra.mxu0 0.0
        %6877 = vmatprep.subr.mxu0 0.0
        %6878 = vmatpush1.xpose.msra.mxu0 0.0
        %6879 = vmatprep.subr.mxu0 0.0
        %6880 = vmatpush1.xpose.msra.mxu0 0.0
        %6881 = vmatprep.subr.mxu0 0.0
        %6882 = vmatpush1.xpose.msra.mxu0 0.0
        %6883 = vmatprep.subr.mxu0 0.0
        %6884 = vmatpush1.xpose.msra.mxu0 0.0
        %6885 = vmatprep.subr.mxu0 0.0
        %6886 = vmatpush1.xpose.msra.mxu0 0.0
        %6887 = vmatprep.subr.mxu0 0.0
        %6888 = vmatpush1.xpose.msra.mxu0 0.0
        %6889 = vmatprep.subr.mxu0 0.0
        %6890 = vmatpush1.xpose.msra.mxu0 0.0
        %6891 = vmatprep.subr.mxu0 0.0
        %6892 = vmatpush1.xpose.msra.mxu0 0.0
        %6893 = vmatprep.subr.mxu0 0.0
        %6894 = vmatpush1.xpose.msra.mxu0 0.0
        %6895 = vmatprep.subr.mxu0 0.0
        %6896 = vmatpush1.xpose.msra.mxu0 0.0
        %6897 = vmatprep.subr.mxu0 0.0
        %6898 = vmatpush1.xpose.msra.mxu0 0.0
        %6899 = vmatprep.mubr.f32.mxu0 0.0
        %v6900 = vand.u32 %v6482, 4294901760
        %6901 = vmatmul.mubr.f32.gmra.mrb[0].mxu0 %v6900
        %v6902 = vpop.f32.mrb[0].mxu0
        %v6903 = vadd.f32 %v6820, %v6902
        %v6904 = vpop.f32.mrb[0].mxu0
        %6905 = vdwg.mxu0
        %6906 = vmatprep.subr.mxu0 0.0
        %v6907 = vand.u32 %v6485, 4294901760
        %6908 = vmatpush1.xpose.msra.mxu0 %v6907
        %6909 = vmatprep.subr.mxu0 0.0
        %v6910 = vand.u32 %v6488, 4294901760
        %6911 = vmatpush1.xpose.msra.mxu0 %v6910
        %6912 = vmatprep.subr.mxu0 0.0
        %v6913 = vand.u32 %v6491, 4294901760
        %6914 = vmatpush1.xpose.msra.mxu0 %v6913
        %6915 = vmatprep.subr.mxu0 0.0
        %v6916 = vand.u32 %v6494, 4294901760
        %6917 = vmatpush1.xpose.msra.mxu0 %v6916
        %6918 = vmatprep.subr.mxu0 0.0
        %6919 = vmatpush1.xpose.msra.mxu0 0.0
        %6920 = vmatprep.subr.mxu0 0.0
        %6921 = vmatpush1.xpose.msra.mxu0 0.0
        %6922 = vmatprep.subr.mxu0 0.0
        %6923 = vmatpush1.xpose.msra.mxu0 0.0
        %6924 = vmatprep.subr.mxu0 0.0
        %6925 = vmatpush1.xpose.msra.mxu0 0.0
        %6926 = vmatprep.subr.mxu0 0.0
        %6927 = vmatpush1.xpose.msra.mxu0 0.0
        %6928 = vmatprep.subr.mxu0 0.0
        %6929 = vmatpush1.xpose.msra.mxu0 0.0
        %6930 = vmatprep.subr.mxu0 0.0
        %6931 = vmatpush1.xpose.msra.mxu0 0.0
        %6932 = vmatprep.subr.mxu0 0.0
        %6933 = vmatpush1.xpose.msra.mxu0 0.0
        %6934 = vmatprep.subr.mxu0 0.0
        %6935 = vmatpush1.xpose.msra.mxu0 0.0
        %6936 = vmatprep.subr.mxu0 0.0
        %6937 = vmatpush1.xpose.msra.mxu0 0.0
        %6938 = vmatprep.subr.mxu0 0.0
        %6939 = vmatpush1.xpose.msra.mxu0 0.0
        %6940 = vmatprep.subr.mxu0 0.0
        %6941 = vmatpush1.xpose.msra.mxu0 0.0
        %6942 = vmatprep.subr.mxu0 0.0
        %6943 = vmatpush1.xpose.msra.mxu0 0.0
        %6944 = vmatprep.subr.mxu0 0.0
        %6945 = vmatpush1.xpose.msra.mxu0 0.0
        %6946 = vmatprep.subr.mxu0 0.0
        %6947 = vmatpush1.xpose.msra.mxu0 0.0
        %6948 = vmatprep.subr.mxu0 0.0
        %6949 = vmatpush1.xpose.msra.mxu0 0.0
        %6950 = vmatprep.subr.mxu0 0.0
        %6951 = vmatpush1.xpose.msra.mxu0 0.0
        %6952 = vmatprep.subr.mxu0 0.0
        %6953 = vmatpush1.xpose.msra.mxu0 0.0
        %6954 = vmatprep.subr.mxu0 0.0
        %6955 = vmatpush1.xpose.msra.mxu0 0.0
        %6956 = vmatprep.subr.mxu0 0.0
        %6957 = vmatpush1.xpose.msra.mxu0 0.0
        %6958 = vmatprep.subr.mxu0 0.0
        %6959 = vmatpush1.xpose.msra.mxu0 0.0
        %6960 = vmatprep.subr.mxu0 0.0
        %6961 = vmatpush1.xpose.msra.mxu0 0.0
        %6962 = vmatprep.subr.mxu0 0.0
        %6963 = vmatpush1.xpose.msra.mxu0 0.0
        %6964 = vmatprep.subr.mxu0 0.0
        %6965 = vmatpush1.xpose.msra.mxu0 0.0
        %6966 = vmatprep.subr.mxu0 0.0
        %6967 = vmatpush1.xpose.msra.mxu0 0.0
        %6968 = vmatprep.subr.mxu0 0.0
        %6969 = vmatpush1.xpose.msra.mxu0 0.0
        %6970 = vmatprep.subr.mxu0 0.0
        %6971 = vmatpush1.xpose.msra.mxu0 0.0
        %6972 = vmatprep.subr.mxu0 0.0
        %6973 = vmatpush1.xpose.msra.mxu0 0.0
        %6974 = vmatprep.mubr.f32.mxu0 0.0
        %v6975 = vand.u32 %v6482, 4294901760
        %6976 = vmatmul.mubr.f32.gmra.mrb[0].mxu0 %v6975
        %v6977 = vpop.f32.mrb[0].mxu0
        %v6978 = vadd.f32 %v6903, %v6977
        %v6979 = vpop.f32.mrb[0].mxu0
        %6980 = vdwg.mxu0
        %v6981 = vmax.f32 %v6978, 0.0
        %v6982 = vld [vmem:[#allocation13] sm:$0xff]
        %v6983 = vld [vmem:[#allocation13 + $0x8] sm:$0xff]
        %v6984 = vld [vmem:[#allocation13 + $0x10] sm:$0xff]
        %v6985 = vld [vmem:[#allocation13 + $0x18] sm:$0xff]
        %v6986 = vld [vmem:[%s15] sm:$0x1]
        %v6988 = vlaneseq
        %v6989 = vshrl.u32 %v6988, 7
        %v6990 = vsub.s32 0, %v6989
        %v6991 = vrot.slane %v6986, %v6990
        %v6994 = vsel %vm713, %v6981, 0
        %v6997 = vsel %vm713, %v6982, 0
        %v7000 = vsel %vm713, %v6983, 0
        %v7003 = vsel %vm713, %v6984, 0
        %v7006 = vsel %vm713, %v6985, 0
        %7008 = vmatprep.subr.mxu0 0.0
        %v7009 = vand.u32 %v6997, 4294901760
        %7010 = vmatpush1.xpose.msra.mxu0 %v7009
        %7011 = vmatprep.subr.mxu0 0.0
        %v7012 = vand.u32 %v7000, 4294901760
        %7013 = vmatpush1.xpose.msra.mxu0 %v7012
        %7014 = vmatprep.subr.mxu0 0.0
        %v7015 = vand.u32 %v7003, 4294901760
        %7016 = vmatpush1.xpose.msra.mxu0 %v7015
        %7017 = vmatprep.subr.mxu0 0.0
        %v7018 = vand.u32 %v7006, 4294901760
        %7019 = vmatpush1.xpose.msra.mxu0 %v7018
        %7020 = vmatprep.subr.mxu0 0.0
        %7021 = vmatpush1.xpose.msra.mxu0 0.0
        %7022 = vmatprep.subr.mxu0 0.0
        %7023 = vmatpush1.xpose.msra.mxu0 0.0
        %7024 = vmatprep.subr.mxu0 0.0
        %7025 = vmatpush1.xpose.msra.mxu0 0.0
        %7026 = vmatprep.subr.mxu0 0.0
        %7027 = vmatpush1.xpose.msra.mxu0 0.0
        %7028 = vmatprep.subr.mxu0 0.0
        %7029 = vmatpush1.xpose.msra.mxu0 0.0
        %7030 = vmatprep.subr.mxu0 0.0
        %7031 = vmatpush1.xpose.msra.mxu0 0.0
        %7032 = vmatprep.subr.mxu0 0.0
        %7033 = vmatpush1.xpose.msra.mxu0 0.0
        %7034 = vmatprep.subr.mxu0 0.0
        %7035 = vmatpush1.xpose.msra.mxu0 0.0
        %7036 = vmatprep.subr.mxu0 0.0
        %7037 = vmatpush1.xpose.msra.mxu0 0.0
        %7038 = vmatprep.subr.mxu0 0.0
        %7039 = vmatpush1.xpose.msra.mxu0 0.0
        %7040 = vmatprep.subr.mxu0 0.0
        %7041 = vmatpush1.xpose.msra.mxu0 0.0
        %7042 = vmatprep.subr.mxu0 0.0
        %7043 = vmatpush1.xpose.msra.mxu0 0.0
        %7044 = vmatprep.subr.mxu0 0.0
        %7045 = vmatpush1.xpose.msra.mxu0 0.0
        %7046 = vmatprep.subr.mxu0 0.0
        %7047 = vmatpush1.xpose.msra.mxu0 0.0
        %7048 = vmatprep.subr.mxu0 0.0
        %7049 = vmatpush1.xpose.msra.mxu0 0.0
        %7050 = vmatprep.subr.mxu0 0.0
        %7051 = vmatpush1.xpose.msra.mxu0 0.0
        %7052 = vmatprep.subr.mxu0 0.0
        %7053 = vmatpush1.xpose.msra.mxu0 0.0
        %7054 = vmatprep.subr.mxu0 0.0
        %7055 = vmatpush1.xpose.msra.mxu0 0.0
        %7056 = vmatprep.subr.mxu0 0.0
        %7057 = vmatpush1.xpose.msra.mxu0 0.0
        %7058 = vmatprep.subr.mxu0 0.0
        %7059 = vmatpush1.xpose.msra.mxu0 0.0
        %7060 = vmatprep.subr.mxu0 0.0
        %7061 = vmatpush1.xpose.msra.mxu0 0.0
        %7062 = vmatprep.subr.mxu0 0.0
        %7063 = vmatpush1.xpose.msra.mxu0 0.0
        %7064 = vmatprep.subr.mxu0 0.0
        %7065 = vmatpush1.xpose.msra.mxu0 0.0
        %7066 = vmatprep.subr.mxu0 0.0
        %7067 = vmatpush1.xpose.msra.mxu0 0.0
        %7068 = vmatprep.subr.mxu0 0.0
        %7069 = vmatpush1.xpose.msra.mxu0 0.0
        %7070 = vmatprep.subr.mxu0 0.0
        %7071 = vmatpush1.xpose.msra.mxu0 0.0
        %7072 = vmatprep.subr.mxu0 0.0
        %7073 = vmatpush1.xpose.msra.mxu0 0.0
        %7074 = vmatprep.subr.mxu0 0.0
        %7075 = vmatpush1.xpose.msra.mxu0 0.0
        %7076 = vmatprep.mubr.f32.mxu0 0.0
        %v7077 = vand.u32 %v6994, 4294901760
        %v7078 = vsub.f32 %v6994, %v7077
        %v7079 = vand.u32 %v7078, 4294901760
        %v7080 = vsub.f32 %v7078, %v7079
        %v7081 = vand.u32 %v7080, 4294901760
        %7082 = vmatmul.mubr.f32.gmra.mrb[0].mxu0 %v7081
        %v7083 = vpop.f32.mrb[0].mxu0
        %v7084 = vadd.f32 %v6991, %v7083
        %v7085 = vpop.f32.mrb[0].mxu0
        %7086 = vdwg.mxu0
        %7087 = vmatprep.subr.mxu0 0.0
        %v7088 = vand.u32 %v6997, 4294901760
        %v7089 = vsub.f32 %v6997, %v7088
        %v7090 = vand.u32 %v7089, 4294901760
        %v7091 = vsub.f32 %v7089, %v7090
        %v7092 = vand.u32 %v7091, 4294901760
        %7093 = vmatpush1.xpose.msra.mxu0 %v7092
        %7094 = vmatprep.subr.mxu0 0.0
        %v7095 = vand.u32 %v7000, 4294901760
        %v7096 = vsub.f32 %v7000, %v7095
        %v7097 = vand.u32 %v7096, 4294901760
        %v7098 = vsub.f32 %v7096, %v7097
        %v7099 = vand.u32 %v7098, 4294901760
        %7100 = vmatpush1.xpose.msra.mxu0 %v7099
        %7101 = vmatprep.subr.mxu0 0.0
        %v7102 = vand.u32 %v7003, 4294901760
        %v7103 = vsub.f32 %v7003, %v7102
        %v7104 = vand.u32 %v7103, 4294901760
        %v7105 = vsub.f32 %v7103, %v7104
        %v7106 = vand.u32 %v7105, 4294901760
        %7107 = vmatpush1.xpose.msra.mxu0 %v7106
        %7108 = vmatprep.subr.mxu0 0.0
        %v7109 = vand.u32 %v7006, 4294901760
        %v7110 = vsub.f32 %v7006, %v7109
        %v7111 = vand.u32 %v7110, 4294901760
        %v7112 = vsub.f32 %v7110, %v7111
        %v7113 = vand.u32 %v7112, 4294901760
        %7114 = vmatpush1.xpose.msra.mxu0 %v7113
        %7115 = vmatprep.subr.mxu0 0.0
        %7116 = vmatpush1.xpose.msra.mxu0 0.0
        %7117 = vmatprep.subr.mxu0 0.0
        %7118 = vmatpush1.xpose.msra.mxu0 0.0
        %7119 = vmatprep.subr.mxu0 0.0
        %7120 = vmatpush1.xpose.msra.mxu0 0.0
        %7121 = vmatprep.subr.mxu0 0.0
        %7122 = vmatpush1.xpose.msra.mxu0 0.0
        %7123 = vmatprep.subr.mxu0 0.0
        %7124 = vmatpush1.xpose.msra.mxu0 0.0
        %7125 = vmatprep.subr.mxu0 0.0
        %7126 = vmatpush1.xpose.msra.mxu0 0.0
        %7127 = vmatprep.subr.mxu0 0.0
        %7128 = vmatpush1.xpose.msra.mxu0 0.0
        %7129 = vmatprep.subr.mxu0 0.0
        %7130 = vmatpush1.xpose.msra.mxu0 0.0
        %7131 = vmatprep.subr.mxu0 0.0
        %7132 = vmatpush1.xpose.msra.mxu0 0.0
        %7133 = vmatprep.subr.mxu0 0.0
        %7134 = vmatpush1.xpose.msra.mxu0 0.0
        %7135 = vmatprep.subr.mxu0 0.0
        %7136 = vmatpush1.xpose.msra.mxu0 0.0
        %7137 = vmatprep.subr.mxu0 0.0
        %7138 = vmatpush1.xpose.msra.mxu0 0.0
        %7139 = vmatprep.subr.mxu0 0.0
        %7140 = vmatpush1.xpose.msra.mxu0 0.0
        %7141 = vmatprep.subr.mxu0 0.0
        %7142 = vmatpush1.xpose.msra.mxu0 0.0
        %7143 = vmatprep.subr.mxu0 0.0
        %7144 = vmatpush1.xpose.msra.mxu0 0.0
        %7145 = vmatprep.subr.mxu0 0.0
        %7146 = vmatpush1.xpose.msra.mxu0 0.0
        %7147 = vmatprep.subr.mxu0 0.0
        %7148 = vmatpush1.xpose.msra.mxu0 0.0
        %7149 = vmatprep.subr.mxu0 0.0
        %7150 = vmatpush1.xpose.msra.mxu0 0.0
        %7151 = vmatprep.subr.mxu0 0.0
        %7152 = vmatpush1.xpose.msra.mxu0 0.0
        %7153 = vmatprep.subr.mxu0 0.0
        %7154 = vmatpush1.xpose.msra.mxu0 0.0
        %7155 = vmatprep.subr.mxu0 0.0
        %7156 = vmatpush1.xpose.msra.mxu0 0.0
        %7157 = vmatprep.subr.mxu0 0.0
        %7158 = vmatpush1.xpose.msra.mxu0 0.0
        %7159 = vmatprep.subr.mxu0 0.0
        %7160 = vmatpush1.xpose.msra.mxu0 0.0
        %7161 = vmatprep.subr.mxu0 0.0
        %7162 = vmatpush1.xpose.msra.mxu0 0.0
        %7163 = vmatprep.subr.mxu0 0.0
        %7164 = vmatpush1.xpose.msra.mxu0 0.0
        %7165 = vmatprep.subr.mxu0 0.0
        %7166 = vmatpush1.xpose.msra.mxu0 0.0
        %7167 = vmatprep.subr.mxu0 0.0
        %7168 = vmatpush1.xpose.msra.mxu0 0.0
        %7169 = vmatprep.subr.mxu0 0.0
        %7170 = vmatpush1.xpose.msra.mxu0 0.0
        %7171 = vmatprep.mubr.f32.mxu0 0.0
        %v7172 = vand.u32 %v6994, 4294901760
        %7173 = vmatmul.mubr.f32.gmra.mrb[0].mxu0 %v7172
        %v7174 = vpop.f32.mrb[0].mxu0
        %v7175 = vadd.f32 %v7084, %v7174
        %v7176 = vpop.f32.mrb[0].mxu0
        %7177 = vdwg.mxu0
        %7178 = vmatprep.subr.mxu0 0.0
        %v7179 = vand.u32 %v6997, 4294901760
        %v7180 = vsub.f32 %v6997, %v7179
        %7181 = vmatpush1.xpose.msra.mxu0 %v7180
        %7182 = vmatprep.subr.mxu0 0.0
        %v7183 = vand.u32 %v7000, 4294901760
        %v7184 = vsub.f32 %v7000, %v7183
        %7185 = vmatpush1.xpose.msra.mxu0 %v7184
        %7186 = vmatprep.subr.mxu0 0.0
        %v7187 = vand.u32 %v7003, 4294901760
        %v7188 = vsub.f32 %v7003, %v7187
        %7189 = vmatpush1.xpose.msra.mxu0 %v7188
        %7190 = vmatprep.subr.mxu0 0.0
        %v7191 = vand.u32 %v7006, 4294901760
        %v7192 = vsub.f32 %v7006, %v7191
        %7193 = vmatpush1.xpose.msra.mxu0 %v7192
        %7194 = vmatprep.subr.mxu0 0.0
        %7195 = vmatpush1.xpose.msra.mxu0 0.0
        %7196 = vmatprep.subr.mxu0 0.0
        %7197 = vmatpush1.xpose.msra.mxu0 0.0
        %7198 = vmatprep.subr.mxu0 0.0
        %7199 = vmatpush1.xpose.msra.mxu0 0.0
        %7200 = vmatprep.subr.mxu0 0.0
        %7201 = vmatpush1.xpose.msra.mxu0 0.0
        %7202 = vmatprep.subr.mxu0 0.0
        %7203 = vmatpush1.xpose.msra.mxu0 0.0
        %7204 = vmatprep.subr.mxu0 0.0
        %7205 = vmatpush1.xpose.msra.mxu0 0.0
        %7206 = vmatprep.subr.mxu0 0.0
        %7207 = vmatpush1.xpose.msra.mxu0 0.0
        %7208 = vmatprep.subr.mxu0 0.0
        %7209 = vmatpush1.xpose.msra.mxu0 0.0
        %7210 = vmatprep.subr.mxu0 0.0
        %7211 = vmatpush1.xpose.msra.mxu0 0.0
        %7212 = vmatprep.subr.mxu0 0.0
        %7213 = vmatpush1.xpose.msra.mxu0 0.0
        %7214 = vmatprep.subr.mxu0 0.0
        %7215 = vmatpush1.xpose.msra.mxu0 0.0
        %7216 = vmatprep.subr.mxu0 0.0
        %7217 = vmatpush1.xpose.msra.mxu0 0.0
        %7218 = vmatprep.subr.mxu0 0.0
        %7219 = vmatpush1.xpose.msra.mxu0 0.0
        %7220 = vmatprep.subr.mxu0 0.0
        %7221 = vmatpush1.xpose.msra.mxu0 0.0
        %7222 = vmatprep.subr.mxu0 0.0
        %7223 = vmatpush1.xpose.msra.mxu0 0.0
        %7224 = vmatprep.subr.mxu0 0.0
        %7225 = vmatpush1.xpose.msra.mxu0 0.0
        %7226 = vmatprep.subr.mxu0 0.0
        %7227 = vmatpush1.xpose.msra.mxu0 0.0
        %7228 = vmatprep.subr.mxu0 0.0
        %7229 = vmatpush1.xpose.msra.mxu0 0.0
        %7230 = vmatprep.subr.mxu0 0.0
        %7231 = vmatpush1.xpose.msra.mxu0 0.0
        %7232 = vmatprep.subr.mxu0 0.0
        %7233 = vmatpush1.xpose.msra.mxu0 0.0
        %7234 = vmatprep.subr.mxu0 0.0
        %7235 = vmatpush1.xpose.msra.mxu0 0.0
        %7236 = vmatprep.subr.mxu0 0.0
        %7237 = vmatpush1.xpose.msra.mxu0 0.0
        %7238 = vmatprep.subr.mxu0 0.0
        %7239 = vmatpush1.xpose.msra.mxu0 0.0
        %7240 = vmatprep.subr.mxu0 0.0
        %7241 = vmatpush1.xpose.msra.mxu0 0.0
        %7242 = vmatprep.subr.mxu0 0.0
        %7243 = vmatpush1.xpose.msra.mxu0 0.0
        %7244 = vmatprep.subr.mxu0 0.0
        %7245 = vmatpush1.xpose.msra.mxu0 0.0
        %7246 = vmatprep.subr.mxu0 0.0
        %7247 = vmatpush1.xpose.msra.mxu0 0.0
        %7248 = vmatprep.subr.mxu0 0.0
        %7249 = vmatpush1.xpose.msra.mxu0 0.0
        %7250 = vmatprep.mubr.f32.mxu0 0.0
        %v7251 = vand.u32 %v6994, 4294901760
        %v7252 = vsub.f32 %v6994, %v7251
        %7253 = vmatmul.mubr.f32.gmra.mrb[0].mxu0 %v7252
        %v7254 = vpop.f32.mrb[0].mxu0
        %v7255 = vadd.f32 %v7175, %v7254
        %v7256 = vpop.f32.mrb[0].mxu0
        %7257 = vdwg.mxu0
        %7258 = vmatprep.subr.mxu0 0.0
        %v7259 = vand.u32 %v6997, 4294901760
        %7260 = vmatpush1.xpose.msra.mxu0 %v7259
        %7261 = vmatprep.subr.mxu0 0.0
        %v7262 = vand.u32 %v7000, 4294901760
        %7263 = vmatpush1.xpose.msra.mxu0 %v7262
        %7264 = vmatprep.subr.mxu0 0.0
        %v7265 = vand.u32 %v7003, 4294901760
        %7266 = vmatpush1.xpose.msra.mxu0 %v7265
        %7267 = vmatprep.subr.mxu0 0.0
        %v7268 = vand.u32 %v7006, 4294901760
        %7269 = vmatpush1.xpose.msra.mxu0 %v7268
        %7270 = vmatprep.subr.mxu0 0.0
        %7271 = vmatpush1.xpose.msra.mxu0 0.0
        %7272 = vmatprep.subr.mxu0 0.0
        %7273 = vmatpush1.xpose.msra.mxu0 0.0
        %7274 = vmatprep.subr.mxu0 0.0
        %7275 = vmatpush1.xpose.msra.mxu0 0.0
        %7276 = vmatprep.subr.mxu0 0.0
        %7277 = vmatpush1.xpose.msra.mxu0 0.0
        %7278 = vmatprep.subr.mxu0 0.0
        %7279 = vmatpush1.xpose.msra.mxu0 0.0
        %7280 = vmatprep.subr.mxu0 0.0
        %7281 = vmatpush1.xpose.msra.mxu0 0.0
        %7282 = vmatprep.subr.mxu0 0.0
        %7283 = vmatpush1.xpose.msra.mxu0 0.0
        %7284 = vmatprep.subr.mxu0 0.0
        %7285 = vmatpush1.xpose.msra.mxu0 0.0
        %7286 = vmatprep.subr.mxu0 0.0
        %7287 = vmatpush1.xpose.msra.mxu0 0.0
        %7288 = vmatprep.subr.mxu0 0.0
        %7289 = vmatpush1.xpose.msra.mxu0 0.0
        %7290 = vmatprep.subr.mxu0 0.0
        %7291 = vmatpush1.xpose.msra.mxu0 0.0
        %7292 = vmatprep.subr.mxu0 0.0
        %7293 = vmatpush1.xpose.msra.mxu0 0.0
        %7294 = vmatprep.subr.mxu0 0.0
        %7295 = vmatpush1.xpose.msra.mxu0 0.0
        %7296 = vmatprep.subr.mxu0 0.0
        %7297 = vmatpush1.xpose.msra.mxu0 0.0
        %7298 = vmatprep.subr.mxu0 0.0
        %7299 = vmatpush1.xpose.msra.mxu0 0.0
        %7300 = vmatprep.subr.mxu0 0.0
        %7301 = vmatpush1.xpose.msra.mxu0 0.0
        %7302 = vmatprep.subr.mxu0 0.0
        %7303 = vmatpush1.xpose.msra.mxu0 0.0
        %7304 = vmatprep.subr.mxu0 0.0
        %7305 = vmatpush1.xpose.msra.mxu0 0.0
        %7306 = vmatprep.subr.mxu0 0.0
        %7307 = vmatpush1.xpose.msra.mxu0 0.0
        %7308 = vmatprep.subr.mxu0 0.0
        %7309 = vmatpush1.xpose.msra.mxu0 0.0
        %7310 = vmatprep.subr.mxu0 0.0
        %7311 = vmatpush1.xpose.msra.mxu0 0.0
        %7312 = vmatprep.subr.mxu0 0.0
        %7313 = vmatpush1.xpose.msra.mxu0 0.0
        %7314 = vmatprep.subr.mxu0 0.0
        %7315 = vmatpush1.xpose.msra.mxu0 0.0
        %7316 = vmatprep.subr.mxu0 0.0
        %7317 = vmatpush1.xpose.msra.mxu0 0.0
        %7318 = vmatprep.subr.mxu0 0.0
        %7319 = vmatpush1.xpose.msra.mxu0 0.0
        %7320 = vmatprep.subr.mxu0 0.0
        %7321 = vmatpush1.xpose.msra.mxu0 0.0
        %7322 = vmatprep.subr.mxu0 0.0
        %7323 = vmatpush1.xpose.msra.mxu0 0.0
        %7324 = vmatprep.subr.mxu0 0.0
        %7325 = vmatpush1.xpose.msra.mxu0 0.0
        %7326 = vmatprep.mubr.f32.mxu0 0.0
        %v7327 = vand.u32 %v6994, 4294901760
        %v7328 = vsub.f32 %v6994, %v7327
        %v7329 = vand.u32 %v7328, 4294901760
        %7330 = vmatmul.mubr.f32.gmra.mrb[0].mxu0 %v7329
        %v7331 = vpop.f32.mrb[0].mxu0
        %v7332 = vadd.f32 %v7255, %v7331
        %v7333 = vpop.f32.mrb[0].mxu0
        %7334 = vdwg.mxu0
        %7335 = vmatprep.subr.mxu0 0.0
        %v7336 = vand.u32 %v6997, 4294901760
        %v7337 = vsub.f32 %v6997, %v7336
        %v7338 = vand.u32 %v7337, 4294901760
        %7339 = vmatpush1.xpose.msra.mxu0 %v7338
        %7340 = vmatprep.subr.mxu0 0.0
        %v7341 = vand.u32 %v7000, 4294901760
        %v7342 = vsub.f32 %v7000, %v7341
        %v7343 = vand.u32 %v7342, 4294901760
        %7344 = vmatpush1.xpose.msra.mxu0 %v7343
        %7345 = vmatprep.subr.mxu0 0.0
        %v7346 = vand.u32 %v7003, 4294901760
        %v7347 = vsub.f32 %v7003, %v7346
        %v7348 = vand.u32 %v7347, 4294901760
        %7349 = vmatpush1.xpose.msra.mxu0 %v7348
        %7350 = vmatprep.subr.mxu0 0.0
        %v7351 = vand.u32 %v7006, 4294901760
        %v7352 = vsub.f32 %v7006, %v7351
        %v7353 = vand.u32 %v7352, 4294901760
        %7354 = vmatpush1.xpose.msra.mxu0 %v7353
        %7355 = vmatprep.subr.mxu0 0.0
        %7356 = vmatpush1.xpose.msra.mxu0 0.0
        %7357 = vmatprep.subr.mxu0 0.0
        %7358 = vmatpush1.xpose.msra.mxu0 0.0
        %7359 = vmatprep.subr.mxu0 0.0
        %7360 = vmatpush1.xpose.msra.mxu0 0.0
        %7361 = vmatprep.subr.mxu0 0.0
        %7362 = vmatpush1.xpose.msra.mxu0 0.0
        %7363 = vmatprep.subr.mxu0 0.0
        %7364 = vmatpush1.xpose.msra.mxu0 0.0
        %7365 = vmatprep.subr.mxu0 0.0
        %7366 = vmatpush1.xpose.msra.mxu0 0.0
        %7367 = vmatprep.subr.mxu0 0.0
        %7368 = vmatpush1.xpose.msra.mxu0 0.0
        %7369 = vmatprep.subr.mxu0 0.0
        %7370 = vmatpush1.xpose.msra.mxu0 0.0
        %7371 = vmatprep.subr.mxu0 0.0
        %7372 = vmatpush1.xpose.msra.mxu0 0.0
        %7373 = vmatprep.subr.mxu0 0.0
        %7374 = vmatpush1.xpose.msra.mxu0 0.0
        %7375 = vmatprep.subr.mxu0 0.0
        %7376 = vmatpush1.xpose.msra.mxu0 0.0
        %7377 = vmatprep.subr.mxu0 0.0
        %7378 = vmatpush1.xpose.msra.mxu0 0.0
        %7379 = vmatprep.subr.mxu0 0.0
        %7380 = vmatpush1.xpose.msra.mxu0 0.0
        %7381 = vmatprep.subr.mxu0 0.0
        %7382 = vmatpush1.xpose.msra.mxu0 0.0
        %7383 = vmatprep.subr.mxu0 0.0
        %7384 = vmatpush1.xpose.msra.mxu0 0.0
        %7385 = vmatprep.subr.mxu0 0.0
        %7386 = vmatpush1.xpose.msra.mxu0 0.0
        %7387 = vmatprep.subr.mxu0 0.0
        %7388 = vmatpush1.xpose.msra.mxu0 0.0
        %7389 = vmatprep.subr.mxu0 0.0
        %7390 = vmatpush1.xpose.msra.mxu0 0.0
        %7391 = vmatprep.subr.mxu0 0.0
        %7392 = vmatpush1.xpose.msra.mxu0 0.0
        %7393 = vmatprep.subr.mxu0 0.0
        %7394 = vmatpush1.xpose.msra.mxu0 0.0
        %7395 = vmatprep.subr.mxu0 0.0
        %7396 = vmatpush1.xpose.msra.mxu0 0.0
        %7397 = vmatprep.subr.mxu0 0.0
        %7398 = vmatpush1.xpose.msra.mxu0 0.0
        %7399 = vmatprep.subr.mxu0 0.0
        %7400 = vmatpush1.xpose.msra.mxu0 0.0
        %7401 = vmatprep.subr.mxu0 0.0
        %7402 = vmatpush1.xpose.msra.mxu0 0.0
        %7403 = vmatprep.subr.mxu0 0.0
        %7404 = vmatpush1.xpose.msra.mxu0 0.0
        %7405 = vmatprep.subr.mxu0 0.0
        %7406 = vmatpush1.xpose.msra.mxu0 0.0
        %7407 = vmatprep.subr.mxu0 0.0
        %7408 = vmatpush1.xpose.msra.mxu0 0.0
        %7409 = vmatprep.subr.mxu0 0.0
        %7410 = vmatpush1.xpose.msra.mxu0 0.0
        %7411 = vmatprep.mubr.f32.mxu0 0.0
        %v7412 = vand.u32 %v6994, 4294901760
        %7413 = vmatmul.mubr.f32.gmra.mrb[0].mxu0 %v7412
        %v7414 = vpop.f32.mrb[0].mxu0
        %v7415 = vadd.f32 %v7332, %v7414
        %v7416 = vpop.f32.mrb[0].mxu0
        %7417 = vdwg.mxu0
        %7418 = vmatprep.subr.mxu0 0.0
        %v7419 = vand.u32 %v6997, 4294901760
        %7420 = vmatpush1.xpose.msra.mxu0 %v7419
        %7421 = vmatprep.subr.mxu0 0.0
        %v7422 = vand.u32 %v7000, 4294901760
        %7423 = vmatpush1.xpose.msra.mxu0 %v7422
        %7424 = vmatprep.subr.mxu0 0.0
        %v7425 = vand.u32 %v7003, 4294901760
        %7426 = vmatpush1.xpose.msra.mxu0 %v7425
        %7427 = vmatprep.subr.mxu0 0.0
        %v7428 = vand.u32 %v7006, 4294901760
        %7429 = vmatpush1.xpose.msra.mxu0 %v7428
        %7430 = vmatprep.subr.mxu0 0.0
        %7431 = vmatpush1.xpose.msra.mxu0 0.0
        %7432 = vmatprep.subr.mxu0 0.0
        %7433 = vmatpush1.xpose.msra.mxu0 0.0
        %7434 = vmatprep.subr.mxu0 0.0
        %7435 = vmatpush1.xpose.msra.mxu0 0.0
        %7436 = vmatprep.subr.mxu0 0.0
        %7437 = vmatpush1.xpose.msra.mxu0 0.0
        %7438 = vmatprep.subr.mxu0 0.0
        %7439 = vmatpush1.xpose.msra.mxu0 0.0
        %7440 = vmatprep.subr.mxu0 0.0
        %7441 = vmatpush1.xpose.msra.mxu0 0.0
        %7442 = vmatprep.subr.mxu0 0.0
        %7443 = vmatpush1.xpose.msra.mxu0 0.0
        %7444 = vmatprep.subr.mxu0 0.0
        %7445 = vmatpush1.xpose.msra.mxu0 0.0
        %7446 = vmatprep.subr.mxu0 0.0
        %7447 = vmatpush1.xpose.msra.mxu0 0.0
        %7448 = vmatprep.subr.mxu0 0.0
        %7449 = vmatpush1.xpose.msra.mxu0 0.0
        %7450 = vmatprep.subr.mxu0 0.0
        %7451 = vmatpush1.xpose.msra.mxu0 0.0
        %7452 = vmatprep.subr.mxu0 0.0
        %7453 = vmatpush1.xpose.msra.mxu0 0.0
        %7454 = vmatprep.subr.mxu0 0.0
        %7455 = vmatpush1.xpose.msra.mxu0 0.0
        %7456 = vmatprep.subr.mxu0 0.0
        %7457 = vmatpush1.xpose.msra.mxu0 0.0
        %7458 = vmatprep.subr.mxu0 0.0
        %7459 = vmatpush1.xpose.msra.mxu0 0.0
        %7460 = vmatprep.subr.mxu0 0.0
        %7461 = vmatpush1.xpose.msra.mxu0 0.0
        %7462 = vmatprep.subr.mxu0 0.0
        %7463 = vmatpush1.xpose.msra.mxu0 0.0
        %7464 = vmatprep.subr.mxu0 0.0
        %7465 = vmatpush1.xpose.msra.mxu0 0.0
        %7466 = vmatprep.subr.mxu0 0.0
        %7467 = vmatpush1.xpose.msra.mxu0 0.0
        %7468 = vmatprep.subr.mxu0 0.0
        %7469 = vmatpush1.xpose.msra.mxu0 0.0
        %7470 = vmatprep.subr.mxu0 0.0
        %7471 = vmatpush1.xpose.msra.mxu0 0.0
        %7472 = vmatprep.subr.mxu0 0.0
        %7473 = vmatpush1.xpose.msra.mxu0 0.0
        %7474 = vmatprep.subr.mxu0 0.0
        %7475 = vmatpush1.xpose.msra.mxu0 0.0
        %7476 = vmatprep.subr.mxu0 0.0
        %7477 = vmatpush1.xpose.msra.mxu0 0.0
        %7478 = vmatprep.subr.mxu0 0.0
        %7479 = vmatpush1.xpose.msra.mxu0 0.0
        %7480 = vmatprep.subr.mxu0 0.0
        %7481 = vmatpush1.xpose.msra.mxu0 0.0
        %7482 = vmatprep.subr.mxu0 0.0
        %7483 = vmatpush1.xpose.msra.mxu0 0.0
        %7484 = vmatprep.subr.mxu0 0.0
        %7485 = vmatpush1.xpose.msra.mxu0 0.0
        %7486 = vmatprep.mubr.f32.mxu0 0.0
        %v7487 = vand.u32 %v6994, 4294901760
        %7488 = vmatmul.mubr.f32.gmra.mrb[0].mxu0 %v7487
        %v7489 = vpop.f32.mrb[0].mxu0
        %v7490 = vadd.f32 %v7415, %v7489
        %v7491 = vpop.f32.mrb[0].mxu0
        %7492 = vdwg.mxu0
        %v7493 = vadd.f32 %v7490, %v6469
        %v7494 = vsel %vm713, %v7493, 0.0
        %7495 = vadd.xlane.f32.xlu0 %v7494
        %v7496 = vpop.xlane.xlu0 %7495
        %v7497 = vmul.f32 %v7496, %v6443
        %v7498 = vsub.f32 %v7493, %v7497
        %v7499 = vmul.f32 %v7498, %v7498
        %v7500 = vsel %vm713, %v7499, 0.0
        %7501 = vadd.xlane.f32.xlu0 %v7500
        %v7502 = vpop.xlane.xlu0 %7501
        %v7503 = vmul.f32 %v7502, %v6443
        %v7504 = vadd.f32 %v7503, 1e-05
        %v7505 = vrsqrt.pop %v7504
        %v7506 = vmul.f32 %v7498, %v7505
        %v7507 = vld [vmem:[%s16] sm:$0x1]
        %v7509 = vlaneseq
        %v7510 = vshrl.u32 %v7509, 7
        %v7511 = vsub.s32 0, %v7510
        %v7512 = vrot.slane %v7507, %v7511
        %v7514 = vmul.f32 %v7506, %v7512
        %v7515 = vld [vmem:[%s17] sm:$0x1]
        %v7517 = vlaneseq
        %v7518 = vshrl.u32 %v7517, 7
        %v7519 = vsub.s32 0, %v7518
        %v7520 = vrot.slane %v7515, %v7519
        %v7522 = vadd.f32 %v7514, %v7520
        %7523 = vst.msk [vmem:[%s699] sm:$0xff] %vm713, %v7522
        %s7524 = sand.u32 %s436, 1
        %s7525 = scalar_lea.sflag [#allocation4], %s7524
        %s7526 = sand.u32 %s436, 1
        %s7527 = smul.addr %s7526, 8
        %s7528 = scalar_lea.vmem [#allocation14], %s7527
        // Predicated region
        $region121: #{tpu_custom_call.1} parent=91 // pred_check
          %p7529 = pneg %p446
        $region122: #{tpu_custom_call.1} parent=91 // pred_check_branch
          %7531 = sbr.rel (%p7529) target = $region124
        $region123: #{tpu_custom_call.1} parent=91 // pred_region
          %s7533 = ssub.s32 128, 128
          %7534 = vsyncadd %s7525, %s7533
          %s7535 = smul.addr %s40, 128
          %s7536 = scalar_lea.hbm %s18, %s7535
          %s7538 = sshll.u32 %s7528, 4
          %s7539 = int_to_ptr.vmem [resolvable:$true] %s7538
          %7541 = dma.vmem_to_hbm [thread:$0]  %s7539, 128, %s7536, %s7525
        $region124: #{tpu_custom_call.1} parent=91 // pred_fallthru
          _
      $region92: #{tpu_custom_call.1} parent=5 // pred_fallthru
        _
      %p7542 = scmp.le.s32.totalorder 2, %s35
      // Predicated region
      $region125: #{tpu_custom_call.1} parent=5 // pred_check
        %p7543 = pneg %p7542
      $region126: #{tpu_custom_call.1} parent=5 // pred_check_branch
        %7545 = sbr.rel (%p7543) target = $region128
      $region127: #{tpu_custom_call.1} parent=5 // pred_region
        %s7546 = ssub.s32 %s35, 2
        // Predicated region
        $region129: #{tpu_custom_call.1} parent=127 // pred_check
          %p7547 = pneg %p452
        $region130: #{tpu_custom_call.1} parent=127 // pred_check_branch
          %7549 = sbr.rel (%p7547) target = $region132
        $region131: #{tpu_custom_call.1} parent=127 // pred_region
          %s7550 = sand.u32 %s437, 1
          %s7551 = scalar_lea.sflag [#allocation4], %s7550
          %s7552 = sand.u32 %s437, 1
          %s7553 = smul.addr %s7552, 8
          %s7554 = scalar_lea.vmem [#allocation14], %s7553
          %7555 = dma.done %s7551, 128
        $region132: #{tpu_custom_call.1} parent=127 // pred_fallthru
          _
      $region128: #{tpu_custom_call.1} parent=5 // pred_fallthru
        _
    $region6: #{tpu_custom_call.1} parent=1 // loop_footer
      %s39 = sadd.s32 1, %s35
    $region7: #{tpu_custom_call.1} parent=1 // loop_footer_branch
      %34 = sbr.rel target = $region3
    $region8: #{tpu_custom_call.1} parent=1 // loop_exit
      _
    %7556 = vsyncpa [#allocation3], 1
    %s7557 = scalar_lea.sflag [#allocation3], 1
    %7558 = vsyncpa %s7557, 1
    %7559 = vsyncpa [#allocation6], 1
    %s7560 = scalar_lea.sflag [#allocation6], 1
    %7561 = vsyncpa %s7560, 1
    %7562 = vsyncpa [#allocation9], 1
    %7563 = vsyncpa [#allocation12], 1
    %7564 = vsyncpa [#allocation4], 1
    %s7565 = scalar_lea.sflag [#allocation4], 1
    %7566 = vsyncpa %s7565, 1

</llo_original>
